<compile_context>
chip_gen: v5e
topology: v5e:2x2
jax: 0.10.0
libtpu: 0.0.40
codegen_flags: <defaults>
</compile_context>

<pallas_src>
import functools

import jax
import jax.numpy as jnp
from jax.experimental import pallas as pl
from jax.experimental.pallas import tpu as pltpu

LANE = 128
_BN_EPS = 1e-5
_VMEM_LIMIT = 32 * 1024 * 1024  # safe on v5e/v6e (128 MiB) and v7x (64 MiB physical)


def _round_up(x, m):
    return ((x + m - 1) // m) * m


# ----------------------------- Pallas kernels ------------------------------

def _conv_mm_stats_kernel(a_ref, b_ref, o_ref, sum_ref, ssq_ref, acc_ref):
    """bf16 matmul tile with f32 accumulation over the K grid axis, plus fused
    BatchNorm statistics (per-channel sum and sum-of-squares) accumulated into
    resident (1, C) outputs across the whole grid (P3 accumulator pattern)."""
    m = pl.program_id(0)
    k = pl.program_id(1)
    nk = pl.num_programs(1)

    @pl.when(jnp.logical_and(m == 0, k == 0))
    def _():
        sum_ref[...] = jnp.zeros_like(sum_ref)
        ssq_ref[...] = jnp.zeros_like(ssq_ref)

    @pl.when(k == 0)
    def _():
        acc_ref[...] = jnp.zeros_like(acc_ref)

    acc_ref[...] += jnp.dot(a_ref[...], b_ref[...],
                            preferred_element_type=jnp.float32)

    @pl.when(k == nk - 1)
    def _():
        acc = acc_ref[...]
        o_ref[...] = acc
        sum_ref[...] += jnp.sum(acc, axis=0, keepdims=True)
        ssq_ref[...] += jnp.sum(acc * acc, axis=0, keepdims=True)


def conv_matmul_stats(patches, w_mat, *, tm_max=512, tk_max=2048):
    """patches: (M, K) bf16, w_mat: (K, Cp) bf16 with Cp % 128 == 0.

    Returns (conv_out (Mp, Cp) f32, sum (1, Cp) f32, sumsq (1, Cp) f32, tm).
    M is padded up to a multiple of tm with zero rows (zero rows contribute
    nothing to sum/sumsq, so dividing by the true M later is exact)."""
    M, K = patches.shape
    K2, Cp = w_mat.shape
    assert K == K2 and Cp % LANE == 0

    tm = tm_max if M >= tm_max else _round_up(M, 8)
    Mp = _round_up(M, tm)
    if Mp != M:
        patches = jnp.pad(patches, ((0, Mp - M), (0, 0)))

    if K > tk_max:
        tk = tk_max                      # multiple of 128 -> lane/sublane legal
        Kp = _round_up(K, tk)
        if Kp != K:
            patches = jnp.pad(patches, ((0, 0), (0, Kp - K)))
            w_mat = jnp.pad(w_mat, ((0, Kp - K), (0, 0)))
    else:
        tk, Kp = K, K                    # single full-extent K block

    nm, nk = Mp // tm, Kp // tk

    conv_out, csum, cssq = pl.pallas_call(
        _conv_mm_stats_kernel,
        out_shape=(
            jax.ShapeDtypeStruct((Mp, Cp), jnp.float32),
            jax.ShapeDtypeStruct((1, Cp), jnp.float32),
            jax.ShapeDtypeStruct((1, Cp), jnp.float32),
        ),
        grid_spec=pltpu.PrefetchScalarGridSpec(
            num_scalar_prefetch=0,
            grid=(nm, nk),
            in_specs=[
                pl.BlockSpec((tm, tk), lambda m, k: (m, k)),
                pl.BlockSpec((tk, Cp), lambda m, k: (k, 0)),
            ],
            out_specs=[
                pl.BlockSpec((tm, Cp), lambda m, k: (m, 0)),
                pl.BlockSpec((1, Cp), lambda m, k: (0, 0)),   # resident accumulator
                pl.BlockSpec((1, Cp), lambda m, k: (0, 0)),   # resident accumulator
            ],
            scratch_shapes=[pltpu.VMEM((tm, Cp), jnp.float32)],
        ),
        compiler_params=pltpu.CompilerParams(
            # Stats outputs are resident across both axes -> both "arbitrary".
            dimension_semantics=("arbitrary", "arbitrary"),
            vmem_limit_bytes=_VMEM_LIMIT),
    )(patches, w_mat)
    return conv_out, csum, cssq, tm


def _bn_apply_kernel(x_ref, scale_ref, shift_ref, o_ref, *, leaky):
    # f32 VPU math (v5e has no bf16 VPU path); downcast only at the store.
    y = x_ref[...] * scale_ref[...] + shift_ref[...]
    if leaky:
        y = jnp.where(y >= 0.0, y, 0.01 * y)
    o_ref[...] = y.astype(o_ref.dtype)


def pallas_bn_apply(x, scale, shift, *, leaky, tm, out_dtype):
    """x: (Mp, Cp) f32 conv output; scale/shift: (1, Cp) f32 precomputed
    per-channel BN affine. Tiled over M with 'parallel' semantics (shards over
    both TensorCores on v7x)."""
    Mp, Cp = x.shape
    assert Mp % tm == 0
    kernel = functools.partial(_bn_apply_kernel, leaky=leaky)
    return pl.pallas_call(
        kernel,
        out_shape=jax.ShapeDtypeStruct((Mp, Cp), out_dtype),
        grid_spec=pltpu.PrefetchScalarGridSpec(
            num_scalar_prefetch=0,
            grid=(Mp // tm,),
            in_specs=[
                pl.BlockSpec((tm, Cp), lambda i: (i, 0)),
                pl.BlockSpec((1, Cp), lambda i: (0, 0)),
                pl.BlockSpec((1, Cp), lambda i: (0, 0)),
            ],
            out_specs=pl.BlockSpec((tm, Cp), lambda i: (i, 0)),
        ),
        compiler_params=pltpu.CompilerParams(
            dimension_semantics=("parallel",),
            vmem_limit_bytes=_VMEM_LIMIT),
    )(x, scale, shift)


# ------------------------------- JAX glue -----------------------------------

def im2col_nhwc(x, k, stride, pad):
    """x: (N, H, W, C) -> patches (N*Ho*Wo, k*k*C) in (kh, kw, C) order, plus
    (Ho, Wo). Matches a conv weight transposed to (kh, kw, Cin, Cout)."""
    # TODO(synk): replace with an implicit-GEMM conv (grid axis over taps with
    # shifted-window BlockSpecs / manual DMA) to eliminate the 9x/16x patch
    # slab inflation entirely.
    N, H, W, C = x.shape
    xp = jnp.pad(x, ((0, 0), (pad, pad), (pad, pad), (0, 0)))
    Ho = (H + 2 * pad - k) // stride + 1
    Wo = (W + 2 * pad - k) // stride + 1
    cols = []
    for di in range(k):
        for dj in range(k):
            cols.append(xp[:, di:di + Ho * stride:stride,
                           dj:dj + Wo * stride:stride, :])
    patches = jnp.stack(cols, axis=3)                 # (N, Ho, Wo, k*k, C)
    return patches.reshape(N * Ho * Wo, k * k * C), Ho, Wo


def conv_bn_layer(x_nhwc, w_mat, gamma, beta, *, k, stride, pad, leaky, out_dtype):
    """Conv2d (bias=False) + training-mode BatchNorm2d (+ optional LeakyReLU).

    Conv runs as a bf16 im2col GEMM with the BN sum/sumsq reduction fused into
    the matmul epilogue; the normalization is applied in a second tiled pass
    with precomputed per-channel scale/shift (global over N*H*W, not per-tile).
    """
    N = x_nhwc.shape[0]
    Cp = w_mat.shape[1]
    patches, Ho, Wo = im2col_nhwc(x_nhwc.astype(jnp.bfloat16), k, stride, pad)
    M = N * Ho * Wo

    conv_out, csum, cssq, tm = conv_matmul_stats(patches, w_mat)

    # Tiny (1, Cp) per-channel math; global mean/var over the true M rows
    # (zero-padded rows contribute 0 to both sums).
    mean = csum / M
    var = jnp.maximum(cssq / M - mean * mean, 0.0)     # biased variance
    scale = gamma * jax.lax.rsqrt(var + _BN_EPS)
    shift = beta - mean * scale

    y = pallas_bn_apply(conv_out, scale, shift, leaky=leaky, tm=tm,
                        out_dtype=out_dtype)
    return y[:M].reshape(N, Ho, Wo, Cp)


def conv_down_block_forward(x_nchw, params, *, dim_out):
    """ConvDownBlock forward: (N, C_in, H, W) -> (N, C_out, H/2, W/2)."""
    x = jnp.transpose(x_nchw, (0, 2, 3, 1)).astype(jnp.float32)  # NHWC

    h = conv_bn_layer(x, params["w1"], params["g1"], params["b1"],
                      k=3, stride=1, pad=1, leaky=True, out_dtype=jnp.bfloat16)
    h = conv_bn_layer(h, params["w2"], params["g2"], params["b2"],
                      k=3, stride=1, pad=1, leaky=True, out_dtype=jnp.bfloat16)
    h = conv_bn_layer(h, params["w3"], params["g3"], params["b3"],
                      k=4, stride=2, pad=1, leaky=False, out_dtype=jnp.float32)

    h = h[..., :dim_out]                       # drop lane-padding channels
    return jnp.transpose(h, (0, 3, 1, 2))      # back to NCHW


# ------------------------------- Parameters ---------------------------------

def _prep_conv_weight(w_oihw, cin_pad, cout_pad):
    """(Cout, Cin, kh, kw) f32 -> (kh*kw*cin_pad, cout_pad) bf16, zero-padded."""
    cout, cin, kh, kw = w_oihw.shape
    w = jnp.transpose(w_oihw, (2, 3, 1, 0))                      # (kh, kw, Cin, Cout)
    w = jnp.pad(w, ((0, 0), (0, 0), (0, cin_pad - cin), (0, cout_pad - cout)))
    return w.reshape(kh * kw * cin_pad, cout_pad).astype(jnp.bfloat16)


def init_params(key, dim_in, dim_out):
    k1, k2, k3 = jax.random.split(key, 3)
    cp = _round_up(dim_out, LANE)

    w1 = 0.1 * jax.random.normal(k1, (dim_out, dim_in, 3, 3), jnp.float32)
    w2 = 0.1 * jax.random.normal(k2, (dim_out, dim_out, 3, 3), jnp.float32)
    w3 = 0.1 * jax.random.normal(k3, (dim_out, dim_out, 4, 4), jnp.float32)

    def affine(c):
        g = 1.0 + 0.01 * jnp.arange(c, dtype=jnp.float32)
        b = 0.01 * jnp.arange(c, dtype=jnp.float32)
        gp = jnp.concatenate([g, jnp.ones((cp - c,), jnp.float32)]).reshape(1, cp)
        bp = jnp.concatenate([b, jnp.zeros((cp - c,), jnp.float32)]).reshape(1, cp)
        return gp, bp

    g1, b1 = affine(dim_out)
    g2, b2 = affine(dim_out)
    g3, b3 = affine(dim_out)
    return {
        # Pre-transposed / channel-padded / bf16 GEMM weights (built once).
        "w1": _prep_conv_weight(w1, dim_in, cp),
        "w2": _prep_conv_weight(w2, cp, cp),
        "w3": _prep_conv_weight(w3, cp, cp),
        # Raw PyTorch-layout weights, kept only for the pure-JAX reference.
        "w1_oihw": w1, "w2_oihw": w2, "w3_oihw": w3,
        "g1": g1, "b1": b1, "g2": g2, "b2": b2, "g3": g3, "b3": b3,
    }
    # TODO(synk): spec_norm=False branch (SpectralNorm power-iteration weight
    # normalization) is not implemented; only the plain-conv branch is covered.
    # TODO(synk): BN running_mean/running_var are not tracked (training-mode
    # batch statistics only); eval-mode BN would need the running buffers.


# ------------------------------- Reference ----------------------------------

def _reference_forward(x_nchw, params, dim_out):
    """Pure-JAX f32 reference (lax.conv + training-mode BN) for validation."""
    x = jnp.transpose(x_nchw, (0, 2, 3, 1))

    def conv(h, w_oihw, stride, pad):
        w = jnp.transpose(w_oihw, (2, 3, 1, 0))  # HWIO
        return jax.lax.conv_general_dilated(
            h, w, window_strides=(stride, stride),
            padding=[(pad, pad), (pad, pad)],
            dimension_numbers=("NHWC", "HWIO", "NHWC"))

    def bn(h, g, b, leaky):
        mean = jnp.mean(h, axis=(0, 1, 2), keepdims=True)
        var = jnp.mean((h - mean) ** 2, axis=(0, 1, 2), keepdims=True)
        y = (h - mean) * jax.lax.rsqrt(var + _BN_EPS) * g + b
        return jnp.where(y >= 0.0, y, 0.01 * y) if leaky else y

    c = dim_out
    h = bn(conv(x, params["w1_oihw"], 1, 1),
           params["g1"][0, :c], params["b1"][0, :c], True)
    h = bn(conv(h, params["w2_oihw"], 1, 1),
           params["g2"][0, :c], params["b2"][0, :c], True)
    h = bn(conv(h, params["w3_oihw"], 2, 1),
           params["g3"][0, :c], params["b3"][0, :c], False)
    return jnp.transpose(h, (0, 3, 1, 2))


if __name__ == "__main__":
    key = jax.random.PRNGKey(0)
    kx, kp = jax.random.split(key)

    batch, dim_in, dim_out, H, W = 2, 4, 8, 16, 16
    x = jax.random.normal(kx, (batch, dim_in, H, W), jnp.float32)
    params = init_params(kp, dim_in, dim_out)

    fwd = jax.jit(functools.partial(conv_down_block_forward, dim_out=dim_out))
    out = jax.block_until_ready(fwd(x, params))

    assert out.shape == (batch, dim_out, H // 2, W // 2), out.shape
    assert bool(jnp.all(jnp.isfinite(out)))

    # Validate against the f32 reference (loose tolerance for bf16 matmuls).
    ref = _reference_forward(x, params, dim_out)
    err = float(jnp.max(jnp.abs(out - ref)))
    assert err < 0.25, err

    print("KERNEL_OK")
</pallas_src>

<mosaic_0001>
module attributes {stable_mosaic.version = 11 : i64} {
  func.func @_conv_mm_stats_kernel(%arg0: i32, %arg1: i32, %arg2: memref<512x36xbf16, #tpu.memory_space<vmem>>, %arg3: memref<36x128xbf16, #tpu.memory_space<vmem>>, %arg4: memref<512x128xf32, #tpu.memory_space<vmem>>, %arg5: memref<1x128xf32, #tpu.memory_space<vmem>>, %arg6: memref<1x128xf32, #tpu.memory_space<vmem>>, %arg7: memref<512x128xf32, #tpu.memory_space<vmem>>) attributes {dimension_semantics = [#tpu.dimension_semantics<arbitrary>, #tpu.dimension_semantics<arbitrary>], iteration_bounds = array<i64: 1, 1>, scalar_prefetch = 0 : i64, scratch_operands = 1 : i64, tpu.core_type = #tpu.core_type<tc>, window_params = [{transform_indices = @transform_0, window_bounds = array<i64: 512, 36>}, {transform_indices = @transform_1, window_bounds = array<i64: 36, 128>}, {transform_indices = @transform_2, window_bounds = array<i64: 512, 128>}, {pipeline_mode = #tpu.pipeline_mode<synchronous>, transform_indices = @transform_3, window_bounds = array<i64: 1, 128>}, {pipeline_mode = #tpu.pipeline_mode<synchronous>, transform_indices = @transform_4, window_bounds = array<i64: 1, 128>}]} {
    %c0_i32 = arith.constant 0 : i32
    %0 = arith.cmpi eq, %arg0, %c0_i32 : i32
    %c0_i32_0 = arith.constant 0 : i32
    %1 = arith.cmpi eq, %arg1, %c0_i32_0 : i32
    %2 = arith.andi %0, %1 : i1
    %3 = arith.extui %2 : i1 to i32
    %c0_i32_1 = arith.constant 0 : i32
    %4 = arith.cmpi ne, %3, %c0_i32_1 : i32
    scf.if %4 {
      %cst_13 = arith.constant 0.000000e+00 : f32
      %17 = vector.broadcast %cst_13 : f32 to vector<1x128xf32>
      %c0_14 = arith.constant 0 : index
      %c0_15 = arith.constant 0 : index
      %18 = vector.load %arg5[%c0_14, %c0_15] : memref<1x128xf32, #tpu.memory_space<vmem>>, vector<1x128xf32>
      tpu.vector_store %arg5[%c0_14, %c0_15], %17 {strides = array<i32>} : memref<1x128xf32, #tpu.memory_space<vmem>>, vector<1x128xf32>,
      %cst_16 = arith.constant 0.000000e+00 : f32
      %19 = vector.broadcast %cst_16 : f32 to vector<1x128xf32>
      %c0_17 = arith.constant 0 : index
      %c0_18 = arith.constant 0 : index
      %20 = vector.load %arg6[%c0_17, %c0_18] : memref<1x128xf32, #tpu.memory_space<vmem>>, vector<1x128xf32>
      tpu.vector_store %arg6[%c0_17, %c0_18], %19 {strides = array<i32>} : memref<1x128xf32, #tpu.memory_space<vmem>>, vector<1x128xf32>,
    } else {
    }
    %c0_i32_2 = arith.constant 0 : i32
    %5 = arith.cmpi eq, %arg1, %c0_i32_2 : i32
    %6 = arith.extui %5 : i1 to i32
    %c0_i32_3 = arith.constant 0 : i32
    %7 = arith.cmpi ne, %6, %c0_i32_3 : i32
    scf.if %7 {
      %cst_13 = arith.constant 0.000000e+00 : f32
      %17 = vector.broadcast %cst_13 : f32 to vector<512x128xf32>
      %c0_14 = arith.constant 0 : index
      %c0_15 = arith.constant 0 : index
      %18 = vector.load %arg7[%c0_14, %c0_15] : memref<512x128xf32, #tpu.memory_space<vmem>>, vector<512x128xf32>
      tpu.vector_store %arg7[%c0_14, %c0_15], %17 {strides = array<i32>} : memref<512x128xf32, #tpu.memory_space<vmem>>, vector<512x128xf32>,
    } else {
    }
    %c0 = arith.constant 0 : index
    %c0_4 = arith.constant 0 : index
    %8 = vector.load %arg7[%c0, %c0_4] : memref<512x128xf32, #tpu.memory_space<vmem>>, vector<512x128xf32>
    %c0_5 = arith.constant 0 : index
    %c0_6 = arith.constant 0 : index
    %9 = vector.load %arg2[%c0_5, %c0_6] : memref<512x36xbf16, #tpu.memory_space<vmem>>, vector<512x36xbf16>
    %c0_7 = arith.constant 0 : index
    %c0_8 = arith.constant 0 : index
    %10 = vector.load %arg3[%c0_7, %c0_8] : memref<36x128xbf16, #tpu.memory_space<vmem>>, vector<36x128xbf16>
    %cst = arith.constant dense<0.000000e+00> : vector<512x128xf32>
    %11 = tpu.matmul %9, %10, %cst {dimension_numbers = #tpu.dot_dimension_numbers<[1], [0], [0], [1], [0, 0, 1, 1], [], []>} : vector<512x36xbf16>, vector<36x128xbf16>, vector<512x128xf32> -> vector<512x128xf32>
    %12 = arith.addf %8, %11 : vector<512x128xf32>
    %c0_9 = arith.constant 0 : index
    %c0_10 = arith.constant 0 : index
    %13 = vector.load %arg7[%c0_9, %c0_10] : memref<512x128xf32, #tpu.memory_space<vmem>>, vector<512x128xf32>
    tpu.vector_store %arg7[%c0_9, %c0_10], %12 {strides = array<i32>} : memref<512x128xf32, #tpu.memory_space<vmem>>, vector<512x128xf32>,
    %c0_i32_11 = arith.constant 0 : i32
    %14 = arith.cmpi eq, %arg1, %c0_i32_11 : i32
    %15 = arith.extui %14 : i1 to i32
    %c0_i32_12 = arith.constant 0 : i32
    %16 = arith.cmpi ne, %15, %c0_i32_12 : i32
    scf.if %16 {
      %c0_13 = arith.constant 0 : index
      %c0_14 = arith.constant 0 : index
      %17 = vector.load %arg7[%c0_13, %c0_14] : memref<512x128xf32, #tpu.memory_space<vmem>>, vector<512x128xf32>
      %c0_15 = arith.constant 0 : index
      %c0_16 = arith.constant 0 : index
      %18 = vector.load %arg4[%c0_15, %c0_16] : memref<512x128xf32, #tpu.memory_space<vmem>>, vector<512x128xf32>
      tpu.vector_store %arg4[%c0_15, %c0_16], %17 {strides = array<i32>} : memref<512x128xf32, #tpu.memory_space<vmem>>, vector<512x128xf32>,
      %c0_17 = arith.constant 0 : index
      %c0_18 = arith.constant 0 : index
      %19 = vector.load %arg5[%c0_17, %c0_18] : memref<1x128xf32, #tpu.memory_space<vmem>>, vector<1x128xf32>
      %cst_19 = arith.constant dense<0.000000e+00> : vector<128xf32>
      %20 = vector.multi_reduction <add>, %17, %cst_19 [0] : vector<512x128xf32> to vector<128xf32>
      %21 = vector.shape_cast %20 : vector<128xf32> to vector<1x128xf32>
      %22 = arith.addf %19, %21 : vector<1x128xf32>
      %c0_20 = arith.constant 0 : index
      %c0_21 = arith.constant 0 : index
      %23 = vector.load %arg5[%c0_20, %c0_21] : memref<1x128xf32, #tpu.memory_space<vmem>>, vector<1x128xf32>
      tpu.vector_store %arg5[%c0_20, %c0_21], %22 {strides = array<i32>} : memref<1x128xf32, #tpu.memory_space<vmem>>, vector<1x128xf32>,
      %c0_22 = arith.constant 0 : index
      %c0_23 = arith.constant 0 : index
      %24 = vector.load %arg6[%c0_22, %c0_23] : memref<1x128xf32, #tpu.memory_space<vmem>>, vector<1x128xf32>
      %25 = arith.mulf %17, %17 : vector<512x128xf32>
      %cst_24 = arith.constant dense<0.000000e+00> : vector<128xf32>
      %26 = vector.multi_reduction <add>, %25, %cst_24 [0] : vector<512x128xf32> to vector<128xf32>
      %27 = vector.shape_cast %26 : vector<128xf32> to vector<1x128xf32>
      %28 = arith.addf %24, %27 : vector<1x128xf32>
      %c0_25 = arith.constant 0 : index
      %c0_26 = arith.constant 0 : index
      %29 = vector.load %arg6[%c0_25, %c0_26] : memref<1x128xf32, #tpu.memory_space<vmem>>, vector<1x128xf32>
      tpu.vector_store %arg6[%c0_25, %c0_26], %28 {strides = array<i32>} : memref<1x128xf32, #tpu.memory_space<vmem>>, vector<1x128xf32>,
    } else {
    }
    return
  }
  func.func @transform_0(%arg0: i32, %arg1: i32) -> (i32, i32) {
    %c0_i32 = arith.constant 0 : i32
    return %arg0, %arg1 : i32, i32
  }
  func.func @transform_1(%arg0: i32, %arg1: i32) -> (i32, i32) {
    %c0_i32 = arith.constant 0 : i32
    %c0_i32_0 = arith.constant 0 : i32
    return %arg1, %c0_i32 : i32, i32
  }
  func.func @transform_2(%arg0: i32, %arg1: i32) -> (i32, i32) {
    %c0_i32 = arith.constant 0 : i32
    %c0_i32_0 = arith.constant 0 : i32
    return %arg0, %c0_i32 : i32, i32
  }
  func.func @transform_3(%arg0: i32, %arg1: i32) -> (i32, i32) {
    %c0_i32 = arith.constant 0 : i32
    %c0_i32_0 = arith.constant 0 : i32
    %c0_i32_1 = arith.constant 0 : i32
    return %c0_i32, %c0_i32_0 : i32, i32
  }
  func.func @transform_4(%arg0: i32, %arg1: i32) -> (i32, i32) {
    %c0_i32 = arith.constant 0 : i32
    %c0_i32_0 = arith.constant 0 : i32
    %c0_i32_1 = arith.constant 0 : i32
    return %c0_i32, %c0_i32_0 : i32, i32
  }
}

module attributes {stable_mosaic.version = 11 : i64} {
  func.func @_bn_apply_kernel(%arg0: i32, %arg1: memref<512x128xf32, #tpu.memory_space<vmem>>, %arg2: memref<1x128xf32, #tpu.memory_space<vmem>>, %arg3: memref<1x128xf32, #tpu.memory_space<vmem>>, %arg4: memref<512x128xbf16, #tpu.memory_space<vmem>>) attributes {dimension_semantics = [#tpu.dimension_semantics<parallel>], iteration_bounds = array<i64: 1>, scalar_prefetch = 0 : i64, scratch_operands = 0 : i64, tpu.core_type = #tpu.core_type<tc>, window_params = [{transform_indices = @transform_0, window_bounds = array<i64: 512, 128>}, {pipeline_mode = #tpu.pipeline_mode<synchronous>, transform_indices = @transform_1, window_bounds = array<i64: 1, 128>}, {pipeline_mode = #tpu.pipeline_mode<synchronous>, transform_indices = @transform_2, window_bounds = array<i64: 1, 128>}, {transform_indices = @transform_3, window_bounds = array<i64: 512, 128>}]} {
    %c0 = arith.constant 0 : index
    %c0_0 = arith.constant 0 : index
    %0 = vector.load %arg1[%c0, %c0_0] : memref<512x128xf32, #tpu.memory_space<vmem>>, vector<512x128xf32>
    %c0_1 = arith.constant 0 : index
    %c0_2 = arith.constant 0 : index
    %1 = vector.load %arg2[%c0_1, %c0_2] : memref<1x128xf32, #tpu.memory_space<vmem>>, vector<1x128xf32>
    %2 = vector.broadcast %1 : vector<1x128xf32> to vector<512x128xf32>
    %3 = arith.mulf %0, %2 : vector<512x128xf32>
    %c0_3 = arith.constant 0 : index
    %c0_4 = arith.constant 0 : index
    %4 = vector.load %arg3[%c0_3, %c0_4] : memref<1x128xf32, #tpu.memory_space<vmem>>, vector<1x128xf32>
    %5 = vector.broadcast %4 : vector<1x128xf32> to vector<512x128xf32>
    %6 = arith.addf %3, %5 : vector<512x128xf32>
    %cst = arith.constant 0.000000e+00 : f32
    %7 = vector.broadcast %cst : f32 to vector<512x128xf32>
    %8 = arith.cmpf oge, %6, %7 : vector<512x128xf32>
    %cst_5 = arith.constant 0.00999999977 : f32
    %9 = vector.broadcast %cst_5 : f32 to vector<512x128xf32>
    %10 = arith.mulf %9, %6 : vector<512x128xf32>
    %11 = arith.select %8, %6, %10 : vector<512x128xi1>, vector<512x128xf32>
    %12 = arith.truncf %11 : vector<512x128xf32> to vector<512x128xbf16>
    %c0_6 = arith.constant 0 : index
    %c0_7 = arith.constant 0 : index
    %13 = vector.load %arg4[%c0_6, %c0_7] : memref<512x128xbf16, #tpu.memory_space<vmem>>, vector<512x128xbf16>
    tpu.vector_store %arg4[%c0_6, %c0_7], %12 {strides = array<i32>} : memref<512x128xbf16, #tpu.memory_space<vmem>>, vector<512x128xbf16>,
    return
  }
  func.func @transform_0(%arg0: i32) -> (i32, i32) {
    %c0_i32 = arith.constant 0 : i32
    %c0_i32_0 = arith.constant 0 : i32
    return %arg0, %c0_i32 : i32, i32
  }
  func.func @transform_1(%arg0: i32) -> (i32, i32) {
    %c0_i32 = arith.constant 0 : i32
    %c0_i32_0 = arith.constant 0 : i32
    %c0_i32_1 = arith.constant 0 : i32
    return %c0_i32, %c0_i32_0 : i32, i32
  }
  func.func @transform_2(%arg0: i32) -> (i32, i32) {
    %c0_i32 = arith.constant 0 : i32
    %c0_i32_0 = arith.constant 0 : i32
    %c0_i32_1 = arith.constant 0 : i32
    return %c0_i32, %c0_i32_0 : i32, i32
  }
  func.func @transform_3(%arg0: i32) -> (i32, i32) {
    %c0_i32 = arith.constant 0 : i32
    %c0_i32_0 = arith.constant 0 : i32
    return %arg0, %c0_i32 : i32, i32
  }
}

module attributes {stable_mosaic.version = 11 : i64} {
  func.func @_conv_mm_stats_kernel(%arg0: i32, %arg1: i32, %arg2: memref<512x1152xbf16, #tpu.memory_space<vmem>>, %arg3: memref<1152x128xbf16, #tpu.memory_space<vmem>>, %arg4: memref<512x128xf32, #tpu.memory_space<vmem>>, %arg5: memref<1x128xf32, #tpu.memory_space<vmem>>, %arg6: memref<1x128xf32, #tpu.memory_space<vmem>>, %arg7: memref<512x128xf32, #tpu.memory_space<vmem>>) attributes {dimension_semantics = [#tpu.dimension_semantics<arbitrary>, #tpu.dimension_semantics<arbitrary>], iteration_bounds = array<i64: 1, 1>, scalar_prefetch = 0 : i64, scratch_operands = 1 : i64, tpu.core_type = #tpu.core_type<tc>, window_params = [{transform_indices = @transform_0, window_bounds = array<i64: 512, 1152>}, {transform_indices = @transform_1, window_bounds = array<i64: 1152, 128>}, {transform_indices = @transform_2, window_bounds = array<i64: 512, 128>}, {pipeline_mode = #tpu.pipeline_mode<synchronous>, transform_indices = @transform_3, window_bounds = array<i64: 1, 128>}, {pipeline_mode = #tpu.pipeline_mode<synchronous>, transform_indices = @transform_4, window_bounds = array<i64: 1, 128>}]} {
    %c0_i32 = arith.constant 0 : i32
    %0 = arith.cmpi eq, %arg0, %c0_i32 : i32
    %c0_i32_0 = arith.constant 0 : i32
    %1 = arith.cmpi eq, %arg1, %c0_i32_0 : i32
    %2 = arith.andi %0, %1 : i1
    %3 = arith.extui %2 : i1 to i32
    %c0_i32_1 = arith.constant 0 : i32
    %4 = arith.cmpi ne, %3, %c0_i32_1 : i32
    scf.if %4 {
      %cst_13 = arith.constant 0.000000e+00 : f32
      %17 = vector.broadcast %cst_13 : f32 to vector<1x128xf32>
      %c0_14 = arith.constant 0 : index
      %c0_15 = arith.constant 0 : index
      %18 = vector.load %arg5[%c0_14, %c0_15] : memref<1x128xf32, #tpu.memory_space<vmem>>, vector<1x128xf32>
      tpu.vector_store %arg5[%c0_14, %c0_15], %17 {strides = array<i32>} : memref<1x128xf32, #tpu.memory_space<vmem>>, vector<1x128xf32>,
      %cst_16 = arith.constant 0.000000e+00 : f32
      %19 = vector.broadcast %cst_16 : f32 to vector<1x128xf32>
      %c0_17 = arith.constant 0 : index
      %c0_18 = arith.constant 0 : index
      %20 = vector.load %arg6[%c0_17, %c0_18] : memref<1x128xf32, #tpu.memory_space<vmem>>, vector<1x128xf32>
      tpu.vector_store %arg6[%c0_17, %c0_18], %19 {strides = array<i32>} : memref<1x128xf32, #tpu.memory_space<vmem>>, vector<1x128xf32>,
    } else {
    }
    %c0_i32_2 = arith.constant 0 : i32
    %5 = arith.cmpi eq, %arg1, %c0_i32_2 : i32
    %6 = arith.extui %5 : i1 to i32
    %c0_i32_3 = arith.constant 0 : i32
    %7 = arith.cmpi ne, %6, %c0_i32_3 : i32
    scf.if %7 {
      %cst_13 = arith.constant 0.000000e+00 : f32
      %17 = vector.broadcast %cst_13 : f32 to vector<512x128xf32>
      %c0_14 = arith.constant 0 : index
      %c0_15 = arith.constant 0 : index
      %18 = vector.load %arg7[%c0_14, %c0_15] : memref<512x128xf32, #tpu.memory_space<vmem>>, vector<512x128xf32>
      tpu.vector_store %arg7[%c0_14, %c0_15], %17 {strides = array<i32>} : memref<512x128xf32, #tpu.memory_space<vmem>>, vector<512x128xf32>,
    } else {
    }
    %c0 = arith.constant 0 : index
    %c0_4 = arith.constant 0 : index
    %8 = vector.load %arg7[%c0, %c0_4] : memref<512x128xf32, #tpu.memory_space<vmem>>, vector<512x128xf32>
    %c0_5 = arith.constant 0 : index
    %c0_6 = arith.constant 0 : index
    %9 = vector.load %arg2[%c0_5, %c0_6] : memref<512x1152xbf16, #tpu.memory_space<vmem>>, vector<512x1152xbf16>
    %c0_7 = arith.constant 0 : index
    %c0_8 = arith.constant 0 : index
    %10 = vector.load %arg3[%c0_7, %c0_8] : memref<1152x128xbf16, #tpu.memory_space<vmem>>, vector<1152x128xbf16>
    %cst = arith.constant dense<0.000000e+00> : vector<512x128xf32>
    %11 = tpu.matmul %9, %10, %cst {dimension_numbers = #tpu.dot_dimension_numbers<[1], [0], [0], [1], [0, 0, 1, 1], [], []>} : vector<512x1152xbf16>, vector<1152x128xbf16>, vector<512x128xf32> -> vector<512x128xf32>
    %12 = arith.addf %8, %11 : vector<512x128xf32>
    %c0_9 = arith.constant 0 : index
    %c0_10 = arith.constant 0 : index
    %13 = vector.load %arg7[%c0_9, %c0_10] : memref<512x128xf32, #tpu.memory_space<vmem>>, vector<512x128xf32>
    tpu.vector_store %arg7[%c0_9, %c0_10], %12 {strides = array<i32>} : memref<512x128xf32, #tpu.memory_space<vmem>>, vector<512x128xf32>,
    %c0_i32_11 = arith.constant 0 : i32
    %14 = arith.cmpi eq, %arg1, %c0_i32_11 : i32
    %15 = arith.extui %14 : i1 to i32
    %c0_i32_12 = arith.constant 0 : i32
    %16 = arith.cmpi ne, %15, %c0_i32_12 : i32
    scf.if %16 {
      %c0_13 = arith.constant 0 : index
      %c0_14 = arith.constant 0 : index
      %17 = vector.load %arg7[%c0_13, %c0_14] : memref<512x128xf32, #tpu.memory_space<vmem>>, vector<512x128xf32>
      %c0_15 = arith.constant 0 : index
      %c0_16 = arith.constant 0 : index
      %18 = vector.load %arg4[%c0_15, %c0_16] : memref<512x128xf32, #tpu.memory_space<vmem>>, vector<512x128xf32>
      tpu.vector_store %arg4[%c0_15, %c0_16], %17 {strides = array<i32>} : memref<512x128xf32, #tpu.memory_space<vmem>>, vector<512x128xf32>,
      %c0_17 = arith.constant 0 : index
      %c0_18 = arith.constant 0 : index
      %19 = vector.load %arg5[%c0_17, %c0_18] : memref<1x128xf32, #tpu.memory_space<vmem>>, vector<1x128xf32>
      %cst_19 = arith.constant dense<0.000000e+00> : vector<128xf32>
      %20 = vector.multi_reduction <add>, %17, %cst_19 [0] : vector<512x128xf32> to vector<128xf32>
      %21 = vector.shape_cast %20 : vector<128xf32> to vector<1x128xf32>
      %22 = arith.addf %19, %21 : vector<1x128xf32>
      %c0_20 = arith.constant 0 : index
      %c0_21 = arith.constant 0 : index
      %23 = vector.load %arg5[%c0_20, %c0_21] : memref<1x128xf32, #tpu.memory_space<vmem>>, vector<1x128xf32>
      tpu.vector_store %arg5[%c0_20, %c0_21], %22 {strides = array<i32>} : memref<1x128xf32, #tpu.memory_space<vmem>>, vector<1x128xf32>,
      %c0_22 = arith.constant 0 : index
      %c0_23 = arith.constant 0 : index
      %24 = vector.load %arg6[%c0_22, %c0_23] : memref<1x128xf32, #tpu.memory_space<vmem>>, vector<1x128xf32>
      %25 = arith.mulf %17, %17 : vector<512x128xf32>
      %cst_24 = arith.constant dense<0.000000e+00> : vector<128xf32>
      %26 = vector.multi_reduction <add>, %25, %cst_24 [0] : vector<512x128xf32> to vector<128xf32>
      %27 = vector.shape_cast %26 : vector<128xf32> to vector<1x128xf32>
      %28 = arith.addf %24, %27 : vector<1x128xf32>
      %c0_25 = arith.constant 0 : index
      %c0_26 = arith.constant 0 : index
      %29 = vector.load %arg6[%c0_25, %c0_26] : memref<1x128xf32, #tpu.memory_space<vmem>>, vector<1x128xf32>
      tpu.vector_store %arg6[%c0_25, %c0_26], %28 {strides = array<i32>} : memref<1x128xf32, #tpu.memory_space<vmem>>, vector<1x128xf32>,
    } else {
    }
    return
  }
  func.func @transform_0(%arg0: i32, %arg1: i32) -> (i32, i32) {
    %c0_i32 = arith.constant 0 : i32
    return %arg0, %arg1 : i32, i32
  }
  func.func @transform_1(%arg0: i32, %arg1: i32) -> (i32, i32) {
    %c0_i32 = arith.constant 0 : i32
    %c0_i32_0 = arith.constant 0 : i32
    return %arg1, %c0_i32 : i32, i32
  }
  func.func @transform_2(%arg0: i32, %arg1: i32) -> (i32, i32) {
    %c0_i32 = arith.constant 0 : i32
    %c0_i32_0 = arith.constant 0 : i32
    return %arg0, %c0_i32 : i32, i32
  }
  func.func @transform_3(%arg0: i32, %arg1: i32) -> (i32, i32) {
    %c0_i32 = arith.constant 0 : i32
    %c0_i32_0 = arith.constant 0 : i32
    %c0_i32_1 = arith.constant 0 : i32
    return %c0_i32, %c0_i32_0 : i32, i32
  }
  func.func @transform_4(%arg0: i32, %arg1: i32) -> (i32, i32) {
    %c0_i32 = arith.constant 0 : i32
    %c0_i32_0 = arith.constant 0 : i32
    %c0_i32_1 = arith.constant 0 : i32
    return %c0_i32, %c0_i32_0 : i32, i32
  }
}

module attributes {stable_mosaic.version = 11 : i64} {
  func.func @_conv_mm_stats_kernel(%arg0: i32, %arg1: i32, %arg2: memref<128x2048xbf16, #tpu.memory_space<vmem>>, %arg3: memref<2048x128xbf16, #tpu.memory_space<vmem>>, %arg4: memref<128x128xf32, #tpu.memory_space<vmem>>, %arg5: memref<1x128xf32, #tpu.memory_space<vmem>>, %arg6: memref<1x128xf32, #tpu.memory_space<vmem>>, %arg7: memref<128x128xf32, #tpu.memory_space<vmem>>) attributes {dimension_semantics = [#tpu.dimension_semantics<arbitrary>, #tpu.dimension_semantics<arbitrary>], iteration_bounds = array<i64: 1, 1>, scalar_prefetch = 0 : i64, scratch_operands = 1 : i64, tpu.core_type = #tpu.core_type<tc>, window_params = [{transform_indices = @transform_0, window_bounds = array<i64: 128, 2048>}, {transform_indices = @transform_1, window_bounds = array<i64: 2048, 128>}, {transform_indices = @transform_2, window_bounds = array<i64: 128, 128>}, {pipeline_mode = #tpu.pipeline_mode<synchronous>, transform_indices = @transform_3, window_bounds = array<i64: 1, 128>}, {pipeline_mode = #tpu.pipeline_mode<synchronous>, transform_indices = @transform_4, window_bounds = array<i64: 1, 128>}]} {
    %c0_i32 = arith.constant 0 : i32
    %0 = arith.cmpi eq, %arg0, %c0_i32 : i32
    %c0_i32_0 = arith.constant 0 : i32
    %1 = arith.cmpi eq, %arg1, %c0_i32_0 : i32
    %2 = arith.andi %0, %1 : i1
    %3 = arith.extui %2 : i1 to i32
    %c0_i32_1 = arith.constant 0 : i32
    %4 = arith.cmpi ne, %3, %c0_i32_1 : i32
    scf.if %4 {
      %cst_13 = arith.constant 0.000000e+00 : f32
      %17 = vector.broadcast %cst_13 : f32 to vector<1x128xf32>
      %c0_14 = arith.constant 0 : index
      %c0_15 = arith.constant 0 : index
      %18 = vector.load %arg5[%c0_14, %c0_15] : memref<1x128xf32, #tpu.memory_space<vmem>>, vector<1x128xf32>
      tpu.vector_store %arg5[%c0_14, %c0_15], %17 {strides = array<i32>} : memref<1x128xf32, #tpu.memory_space<vmem>>, vector<1x128xf32>,
      %cst_16 = arith.constant 0.000000e+00 : f32
      %19 = vector.broadcast %cst_16 : f32 to vector<1x128xf32>
      %c0_17 = arith.constant 0 : index
      %c0_18 = arith.constant 0 : index
      %20 = vector.load %arg6[%c0_17, %c0_18] : memref<1x128xf32, #tpu.memory_space<vmem>>, vector<1x128xf32>
      tpu.vector_store %arg6[%c0_17, %c0_18], %19 {strides = array<i32>} : memref<1x128xf32, #tpu.memory_space<vmem>>, vector<1x128xf32>,
    } else {
    }
    %c0_i32_2 = arith.constant 0 : i32
    %5 = arith.cmpi eq, %arg1, %c0_i32_2 : i32
    %6 = arith.extui %5 : i1 to i32
    %c0_i32_3 = arith.constant 0 : i32
    %7 = arith.cmpi ne, %6, %c0_i32_3 : i32
    scf.if %7 {
      %cst_13 = arith.constant 0.000000e+00 : f32
      %17 = vector.broadcast %cst_13 : f32 to vector<128x128xf32>
      %c0_14 = arith.constant 0 : index
      %c0_15 = arith.constant 0 : index
      %18 = vector.load %arg7[%c0_14, %c0_15] : memref<128x128xf32, #tpu.memory_space<vmem>>, vector<128x128xf32>
      tpu.vector_store %arg7[%c0_14, %c0_15], %17 {strides = array<i32>} : memref<128x128xf32, #tpu.memory_space<vmem>>, vector<128x128xf32>,
    } else {
    }
    %c0 = arith.constant 0 : index
    %c0_4 = arith.constant 0 : index
    %8 = vector.load %arg7[%c0, %c0_4] : memref<128x128xf32, #tpu.memory_space<vmem>>, vector<128x128xf32>
    %c0_5 = arith.constant 0 : index
    %c0_6 = arith.constant 0 : index
    %9 = vector.load %arg2[%c0_5, %c0_6] : memref<128x2048xbf16, #tpu.memory_space<vmem>>, vector<128x2048xbf16>
    %c0_7 = arith.constant 0 : index
    %c0_8 = arith.constant 0 : index
    %10 = vector.load %arg3[%c0_7, %c0_8] : memref<2048x128xbf16, #tpu.memory_space<vmem>>, vector<2048x128xbf16>
    %cst = arith.constant dense<0.000000e+00> : vector<128x128xf32>
    %11 = tpu.matmul %9, %10, %cst {dimension_numbers = #tpu.dot_dimension_numbers<[1], [0], [0], [1], [0, 0, 1, 1], [], []>} : vector<128x2048xbf16>, vector<2048x128xbf16>, vector<128x128xf32> -> vector<128x128xf32>
    %12 = arith.addf %8, %11 : vector<128x128xf32>
    %c0_9 = arith.constant 0 : index
    %c0_10 = arith.constant 0 : index
    %13 = vector.load %arg7[%c0_9, %c0_10] : memref<128x128xf32, #tpu.memory_space<vmem>>, vector<128x128xf32>
    tpu.vector_store %arg7[%c0_9, %c0_10], %12 {strides = array<i32>} : memref<128x128xf32, #tpu.memory_space<vmem>>, vector<128x128xf32>,
    %c0_i32_11 = arith.constant 0 : i32
    %14 = arith.cmpi eq, %arg1, %c0_i32_11 : i32
    %15 = arith.extui %14 : i1 to i32
    %c0_i32_12 = arith.constant 0 : i32
    %16 = arith.cmpi ne, %15, %c0_i32_12 : i32
    scf.if %16 {
      %c0_13 = arith.constant 0 : index
      %c0_14 = arith.constant 0 : index
      %17 = vector.load %arg7[%c0_13, %c0_14] : memref<128x128xf32, #tpu.memory_space<vmem>>, vector<128x128xf32>
      %c0_15 = arith.constant 0 : index
      %c0_16 = arith.constant 0 : index
      %18 = vector.load %arg4[%c0_15, %c0_16] : memref<128x128xf32, #tpu.memory_space<vmem>>, vector<128x128xf32>
      tpu.vector_store %arg4[%c0_15, %c0_16], %17 {strides = array<i32>} : memref<128x128xf32, #tpu.memory_space<vmem>>, vector<128x128xf32>,
      %c0_17 = arith.constant 0 : index
      %c0_18 = arith.constant 0 : index
      %19 = vector.load %arg5[%c0_17, %c0_18] : memref<1x128xf32, #tpu.memory_space<vmem>>, vector<1x128xf32>
      %cst_19 = arith.constant dense<0.000000e+00> : vector<128xf32>
      %20 = vector.multi_reduction <add>, %17, %cst_19 [0] : vector<128x128xf32> to vector<128xf32>
      %21 = vector.shape_cast %20 : vector<128xf32> to vector<1x128xf32>
      %22 = arith.addf %19, %21 : vector<1x128xf32>
      %c0_20 = arith.constant 0 : index
      %c0_21 = arith.constant 0 : index
      %23 = vector.load %arg5[%c0_20, %c0_21] : memref<1x128xf32, #tpu.memory_space<vmem>>, vector<1x128xf32>
      tpu.vector_store %arg5[%c0_20, %c0_21], %22 {strides = array<i32>} : memref<1x128xf32, #tpu.memory_space<vmem>>, vector<1x128xf32>,
      %c0_22 = arith.constant 0 : index
      %c0_23 = arith.constant 0 : index
      %24 = vector.load %arg6[%c0_22, %c0_23] : memref<1x128xf32, #tpu.memory_space<vmem>>, vector<1x128xf32>
      %25 = arith.mulf %17, %17 : vector<128x128xf32>
      %cst_24 = arith.constant dense<0.000000e+00> : vector<128xf32>
      %26 = vector.multi_reduction <add>, %25, %cst_24 [0] : vector<128x128xf32> to vector<128xf32>
      %27 = vector.shape_cast %26 : vector<128xf32> to vector<1x128xf32>
      %28 = arith.addf %24, %27 : vector<1x128xf32>
      %c0_25 = arith.constant 0 : index
      %c0_26 = arith.constant 0 : index
      %29 = vector.load %arg6[%c0_25, %c0_26] : memref<1x128xf32, #tpu.memory_space<vmem>>, vector<1x128xf32>
      tpu.vector_store %arg6[%c0_25, %c0_26], %28 {strides = array<i32>} : memref<1x128xf32, #tpu.memory_space<vmem>>, vector<1x128xf32>,
    } else {
    }
    return
  }
  func.func @transform_0(%arg0: i32, %arg1: i32) -> (i32, i32) {
    %c0_i32 = arith.constant 0 : i32
    return %arg0, %arg1 : i32, i32
  }
  func.func @transform_1(%arg0: i32, %arg1: i32) -> (i32, i32) {
    %c0_i32 = arith.constant 0 : i32
    %c0_i32_0 = arith.constant 0 : i32
    return %arg1, %c0_i32 : i32, i32
  }
  func.func @transform_2(%arg0: i32, %arg1: i32) -> (i32, i32) {
    %c0_i32 = arith.constant 0 : i32
    %c0_i32_0 = arith.constant 0 : i32
    return %arg0, %c0_i32 : i32, i32
  }
  func.func @transform_3(%arg0: i32, %arg1: i32) -> (i32, i32) {
    %c0_i32 = arith.constant 0 : i32
    %c0_i32_0 = arith.constant 0 : i32
    %c0_i32_1 = arith.constant 0 : i32
    return %c0_i32, %c0_i32_0 : i32, i32
  }
  func.func @transform_4(%arg0: i32, %arg1: i32) -> (i32, i32) {
    %c0_i32 = arith.constant 0 : i32
    %c0_i32_0 = arith.constant 0 : i32
    %c0_i32_1 = arith.constant 0 : i32
    return %c0_i32, %c0_i32_0 : i32, i32
  }
}

module attributes {stable_mosaic.version = 11 : i64} {
  func.func @_bn_apply_kernel(%arg0: i32, %arg1: memref<128x128xf32, #tpu.memory_space<vmem>>, %arg2: memref<1x128xf32, #tpu.memory_space<vmem>>, %arg3: memref<1x128xf32, #tpu.memory_space<vmem>>, %arg4: memref<128x128xf32, #tpu.memory_space<vmem>>) attributes {dimension_semantics = [#tpu.dimension_semantics<parallel>], iteration_bounds = array<i64: 1>, scalar_prefetch = 0 : i64, scratch_operands = 0 : i64, tpu.core_type = #tpu.core_type<tc>, window_params = [{transform_indices = @transform_0, window_bounds = array<i64: 128, 128>}, {pipeline_mode = #tpu.pipeline_mode<synchronous>, transform_indices = @transform_1, window_bounds = array<i64: 1, 128>}, {pipeline_mode = #tpu.pipeline_mode<synchronous>, transform_indices = @transform_2, window_bounds = array<i64: 1, 128>}, {transform_indices = @transform_3, window_bounds = array<i64: 128, 128>}]} {
    %c0 = arith.constant 0 : index
    %c0_0 = arith.constant 0 : index
    %0 = vector.load %arg1[%c0, %c0_0] : memref<128x128xf32, #tpu.memory_space<vmem>>, vector<128x128xf32>
    %c0_1 = arith.constant 0 : index
    %c0_2 = arith.constant 0 : index
    %1 = vector.load %arg2[%c0_1, %c0_2] : memref<1x128xf32, #tpu.memory_space<vmem>>, vector<1x128xf32>
    %2 = vector.broadcast %1 : vector<1x128xf32> to vector<128x128xf32>
    %3 = arith.mulf %0, %2 : vector<128x128xf32>
    %c0_3 = arith.constant 0 : index
    %c0_4 = arith.constant 0 : index
    %4 = vector.load %arg3[%c0_3, %c0_4] : memref<1x128xf32, #tpu.memory_space<vmem>>, vector<1x128xf32>
    %5 = vector.broadcast %4 : vector<1x128xf32> to vector<128x128xf32>
    %6 = arith.addf %3, %5 : vector<128x128xf32>
    %c0_5 = arith.constant 0 : index
    %c0_6 = arith.constant 0 : index
    %7 = vector.load %arg4[%c0_5, %c0_6] : memref<128x128xf32, #tpu.memory_space<vmem>>, vector<128x128xf32>
    tpu.vector_store %arg4[%c0_5, %c0_6], %6 {strides = array<i32>} : memref<128x128xf32, #tpu.memory_space<vmem>>, vector<128x128xf32>,
    return
  }
  func.func @transform_0(%arg0: i32) -> (i32, i32) {
    %c0_i32 = arith.constant 0 : i32
    %c0_i32_0 = arith.constant 0 : i32
    return %arg0, %c0_i32 : i32, i32
  }
  func.func @transform_1(%arg0: i32) -> (i32, i32) {
    %c0_i32 = arith.constant 0 : i32
    %c0_i32_0 = arith.constant 0 : i32
    %c0_i32_1 = arith.constant 0 : i32
    return %c0_i32, %c0_i32_0 : i32, i32
  }
  func.func @transform_2(%arg0: i32) -> (i32, i32) {
    %c0_i32 = arith.constant 0 : i32
    %c0_i32_0 = arith.constant 0 : i32
    %c0_i32_1 = arith.constant 0 : i32
    return %c0_i32, %c0_i32_0 : i32, i32
  }
  func.func @transform_3(%arg0: i32) -> (i32, i32) {
    %c0_i32 = arith.constant 0 : i32
    %c0_i32_0 = arith.constant 0 : i32
    return %arg0, %c0_i32 : i32, i32
  }
}

</mosaic_0001>

<llo_original>
// kernel: conv_down_block_forward.7
$region0: #{conv_down_block_forward.7}
  #allocation0 [shape = 'u32[]', space=smem, size = 0x4, offset = 0x4, fixed_abs, tag = 'smem constant byte address 0x4 - core index']
  #allocation1 [shape = 'u32[72,128]{1,0:T(1,128)}', space=vmem, size = 0x9000, scoped, tag = 'internal scratch']
  %s0 = inlined_call_operand.vmem [shape: f32[512,128], index: 0, kind: input, shape index: {}]
  %s1 = inlined_call_operand.vmem [shape: f32[1,128], index: 1, kind: input, shape index: {}]
  %s2 = inlined_call_operand.vmem [shape: f32[1,128], index: 2, kind: input, shape index: {}]
  %s3 = inlined_call_operand.vmem [shape: bf16[512,128], index: 3, kind: output, shape index: {}]
  %s4 = sld [smem:[#allocation0]]
  $region22: #{conv_down_block_forward.7} parent=0
    _
  %s6 = ssub.s32 1, %s4
  %s7 = scalar_select 0, %s6, %s4
  // Predicated region
  $region2: #{conv_down_block_forward.7} parent=0 // pred_check
    _
  $region3: #{conv_down_block_forward.7} parent=0 // pred_check_branch
    %9 = sbr.rel (0) target = $region5
  $region4: #{conv_down_block_forward.7} parent=0 // pred_region
    _
  $region5: #{conv_down_block_forward.7} parent=0 // pred_fallthru
    _
  // Predicated region
  $region6: #{conv_down_block_forward.7} parent=0 // pred_check
    _
  $region7: #{conv_down_block_forward.7} parent=0 // pred_check_branch
    %11 = sbr.rel (0) target = $region9
  $region8: #{conv_down_block_forward.7} parent=0 // pred_region
    _
  $region9: #{conv_down_block_forward.7} parent=0 // pred_fallthru
    _
  // Predicated region
  $region10: #{conv_down_block_forward.7} parent=0 // pred_check
    _
  $region11: #{conv_down_block_forward.7} parent=0 // pred_check_branch
    %13 = sbr.rel (0) target = $region13
  $region12: #{conv_down_block_forward.7} parent=0 // pred_region
    _
  $region13: #{conv_down_block_forward.7} parent=0 // pred_fallthru
    _
  %v14 = vld [vmem:[%s0] sm:$0xff]
  %v15 = vld [vmem:[%s0 + $0x8] sm:$0xff]
  %v16 = vld [vmem:[%s0 + $0x10] sm:$0xff]
  %v17 = vld [vmem:[%s0 + $0x18] sm:$0xff]
  %v18 = vld [vmem:[%s0 + $0x20] sm:$0xff]
  %v19 = vld [vmem:[%s0 + $0x28] sm:$0xff]
  %v20 = vld [vmem:[%s0 + $0x30] sm:$0xff]
  %v21 = vld [vmem:[%s0 + $0x38] sm:$0xff]
  %v22 = vld [vmem:[%s0 + $0x40] sm:$0xff]
  %v23 = vld [vmem:[%s0 + $0x48] sm:$0xff]
  %v24 = vld [vmem:[%s0 + $0x50] sm:$0xff]
  %v25 = vld [vmem:[%s0 + $0x58] sm:$0xff]
  %v26 = vld [vmem:[%s0 + $0x60] sm:$0xff]
  %v27 = vld [vmem:[%s0 + $0x68] sm:$0xff]
  %v28 = vld [vmem:[%s0 + $0x70] sm:$0xff]
  %v29 = vld [vmem:[%s0 + $0x78] sm:$0xff]
  %v30 = vld [vmem:[%s0 + $0x80] sm:$0xff]
  %v31 = vld [vmem:[%s0 + $0x88] sm:$0xff]
  %v32 = vld [vmem:[%s0 + $0x90] sm:$0xff]
  %v33 = vld [vmem:[%s0 + $0x98] sm:$0xff]
  %v34 = vld [vmem:[%s0 + $0xa0] sm:$0xff]
  %v35 = vld [vmem:[%s0 + $0xa8] sm:$0xff]
  %v36 = vld [vmem:[%s0 + $0xb0] sm:$0xff]
  %v37 = vld [vmem:[%s0 + $0xb8] sm:$0xff]
  %v38 = vld [vmem:[%s0 + $0xc0] sm:$0xff]
  %v39 = vld [vmem:[%s0 + $0xc8] sm:$0xff]
  %v40 = vld [vmem:[%s0 + $0xd0] sm:$0xff]
  %v41 = vld [vmem:[%s0 + $0xd8] sm:$0xff]
  %v42 = vld [vmem:[%s0 + $0xe0] sm:$0xff]
  %v43 = vld [vmem:[%s0 + $0xe8] sm:$0xff]
  %v44 = vld [vmem:[%s0 + $0xf0] sm:$0xff]
  %v45 = vld [vmem:[%s0 + $0xf8] sm:$0xff]
  %v46 = vld [vmem:[%s0 + $0x100] sm:$0xff]
  %v47 = vld [vmem:[%s0 + $0x108] sm:$0xff]
  %v48 = vld [vmem:[%s0 + $0x110] sm:$0xff]
  %v49 = vld [vmem:[%s0 + $0x118] sm:$0xff]
  %v50 = vld [vmem:[%s0 + $0x120] sm:$0xff]
  %v51 = vld [vmem:[%s0 + $0x128] sm:$0xff]
  %v52 = vld [vmem:[%s0 + $0x130] sm:$0xff]
  %v53 = vld [vmem:[%s0 + $0x138] sm:$0xff]
  %v54 = vld [vmem:[%s0 + $0x140] sm:$0xff]
  %v55 = vld [vmem:[%s0 + $0x148] sm:$0xff]
  %v56 = vld [vmem:[%s0 + $0x150] sm:$0xff]
  %v57 = vld [vmem:[%s0 + $0x158] sm:$0xff]
  %v58 = vld [vmem:[%s0 + $0x160] sm:$0xff]
  %v59 = vld [vmem:[%s0 + $0x168] sm:$0xff]
  %v60 = vld [vmem:[%s0 + $0x170] sm:$0xff]
  %v61 = vld [vmem:[%s0 + $0x178] sm:$0xff]
  %v62 = vld [vmem:[%s0 + $0x180] sm:$0xff]
  %v63 = vld [vmem:[%s0 + $0x188] sm:$0xff]
  %v64 = vld [vmem:[%s0 + $0x190] sm:$0xff]
  %v65 = vld [vmem:[%s0 + $0x198] sm:$0xff]
  %v66 = vld [vmem:[%s0 + $0x1a0] sm:$0xff]
  %v67 = vld [vmem:[%s0 + $0x1a8] sm:$0xff]
  %v68 = vld [vmem:[%s0 + $0x1b0] sm:$0xff]
  %v69 = vld [vmem:[%s0 + $0x1b8] sm:$0xff]
  %v70 = vld [vmem:[%s0 + $0x1c0] sm:$0xff]
  %v71 = vld [vmem:[%s0 + $0x1c8] sm:$0xff]
  %v72 = vld [vmem:[%s0 + $0x1d0] sm:$0xff]
  %v73 = vld [vmem:[%s0 + $0x1d8] sm:$0xff]
  %v74 = vld [vmem:[%s0 + $0x1e0] sm:$0xff]
  %v75 = vld [vmem:[%s0 + $0x1e8] sm:$0xff]
  %v76 = vld [vmem:[%s0 + $0x1f0] sm:$0xff]
  %v77 = vld [vmem:[%s0 + $0x1f8] sm:$0xff]
  %v78 = vld [vmem:[%s1] sm:$0x1]
  %v80 = vperm.slane %v78, 0
  %v82 = vmul.f32 %v14, %v80
  %v83 = vmul.f32 %v15, %v80
  %v84 = vmul.f32 %v16, %v80
  %v85 = vmul.f32 %v17, %v80
  %v86 = vmul.f32 %v18, %v80
  %v87 = vmul.f32 %v19, %v80
  %v88 = vmul.f32 %v20, %v80
  %v89 = vmul.f32 %v21, %v80
  %v90 = vmul.f32 %v22, %v80
  %v91 = vmul.f32 %v23, %v80
  %v92 = vmul.f32 %v24, %v80
  %v93 = vmul.f32 %v25, %v80
  %v94 = vmul.f32 %v26, %v80
  %v95 = vmul.f32 %v27, %v80
  %v96 = vmul.f32 %v28, %v80
  %v97 = vmul.f32 %v29, %v80
  %v98 = vmul.f32 %v30, %v80
  %v99 = vmul.f32 %v31, %v80
  %v100 = vmul.f32 %v32, %v80
  %v101 = vmul.f32 %v33, %v80
  %v102 = vmul.f32 %v34, %v80
  %v103 = vmul.f32 %v35, %v80
  %v104 = vmul.f32 %v36, %v80
  %v105 = vmul.f32 %v37, %v80
  %v106 = vmul.f32 %v38, %v80
  %v107 = vmul.f32 %v39, %v80
  %v108 = vmul.f32 %v40, %v80
  %v109 = vmul.f32 %v41, %v80
  %v110 = vmul.f32 %v42, %v80
  %v111 = vmul.f32 %v43, %v80
  %v112 = vmul.f32 %v44, %v80
  %v113 = vmul.f32 %v45, %v80
  %v114 = vmul.f32 %v46, %v80
  %v115 = vmul.f32 %v47, %v80
  %v116 = vmul.f32 %v48, %v80
  %v117 = vmul.f32 %v49, %v80
  %v118 = vmul.f32 %v50, %v80
  %v119 = vmul.f32 %v51, %v80
  %v120 = vmul.f32 %v52, %v80
  %v121 = vmul.f32 %v53, %v80
  %v122 = vmul.f32 %v54, %v80
  %v123 = vmul.f32 %v55, %v80
  %v124 = vmul.f32 %v56, %v80
  %v125 = vmul.f32 %v57, %v80
  %v126 = vmul.f32 %v58, %v80
  %v127 = vmul.f32 %v59, %v80
  %v128 = vmul.f32 %v60, %v80
  %v129 = vmul.f32 %v61, %v80
  %v130 = vmul.f32 %v62, %v80
  %v131 = vmul.f32 %v63, %v80
  %v132 = vmul.f32 %v64, %v80
  %v133 = vmul.f32 %v65, %v80
  %v134 = vmul.f32 %v66, %v80
  %v135 = vmul.f32 %v67, %v80
  %v136 = vmul.f32 %v68, %v80
  %v137 = vmul.f32 %v69, %v80
  %v138 = vmul.f32 %v70, %v80
  %v139 = vmul.f32 %v71, %v80
  %v140 = vmul.f32 %v72, %v80
  %v141 = vmul.f32 %v73, %v80
  %v142 = vmul.f32 %v74, %v80
  %v143 = vmul.f32 %v75, %v80
  %v144 = vmul.f32 %v76, %v80
  %v145 = vmul.f32 %v77, %v80
  %v146 = vld [vmem:[%s2] sm:$0x1]
  %v148 = vperm.slane %v146, 0
  %v150 = vadd.f32 %v82, %v148
  %v151 = vadd.f32 %v83, %v148
  %v152 = vadd.f32 %v84, %v148
  %v153 = vadd.f32 %v85, %v148
  %v154 = vadd.f32 %v86, %v148
  %v155 = vadd.f32 %v87, %v148
  %v156 = vadd.f32 %v88, %v148
  %v157 = vadd.f32 %v89, %v148
  %v158 = vadd.f32 %v90, %v148
  %v159 = vadd.f32 %v91, %v148
  %v160 = vadd.f32 %v92, %v148
  %v161 = vadd.f32 %v93, %v148
  %v162 = vadd.f32 %v94, %v148
  %v163 = vadd.f32 %v95, %v148
  %v164 = vadd.f32 %v96, %v148
  %v165 = vadd.f32 %v97, %v148
  %v166 = vadd.f32 %v98, %v148
  %v167 = vadd.f32 %v99, %v148
  %v168 = vadd.f32 %v100, %v148
  %v169 = vadd.f32 %v101, %v148
  %v170 = vadd.f32 %v102, %v148
  %v171 = vadd.f32 %v103, %v148
  %v172 = vadd.f32 %v104, %v148
  %v173 = vadd.f32 %v105, %v148
  %v174 = vadd.f32 %v106, %v148
  %v175 = vadd.f32 %v107, %v148
  %v176 = vadd.f32 %v108, %v148
  %v177 = vadd.f32 %v109, %v148
  %v178 = vadd.f32 %v110, %v148
  %v179 = vadd.f32 %v111, %v148
  %v180 = vadd.f32 %v112, %v148
  %v181 = vadd.f32 %v113, %v148
  %v182 = vadd.f32 %v114, %v148
  %v183 = vadd.f32 %v115, %v148
  %v184 = vadd.f32 %v116, %v148
  %v185 = vadd.f32 %v117, %v148
  %v186 = vadd.f32 %v118, %v148
  %v187 = vadd.f32 %v119, %v148
  %v188 = vadd.f32 %v120, %v148
  %v189 = vadd.f32 %v121, %v148
  %v190 = vadd.f32 %v122, %v148
  %v191 = vadd.f32 %v123, %v148
  %v192 = vadd.f32 %v124, %v148
  %v193 = vadd.f32 %v125, %v148
  %v194 = vadd.f32 %v126, %v148
  %v195 = vadd.f32 %v127, %v148
  %v196 = vadd.f32 %v128, %v148
  %v197 = vadd.f32 %v129, %v148
  %v198 = vadd.f32 %v130, %v148
  %v199 = vadd.f32 %v131, %v148
  %v200 = vadd.f32 %v132, %v148
  %v201 = vadd.f32 %v133, %v148
  %v202 = vadd.f32 %v134, %v148
  %v203 = vadd.f32 %v135, %v148
  %v204 = vadd.f32 %v136, %v148
  %v205 = vadd.f32 %v137, %v148
  %v206 = vadd.f32 %v138, %v148
  %v207 = vadd.f32 %v139, %v148
  %v208 = vadd.f32 %v140, %v148
  %v209 = vadd.f32 %v141, %v148
  %v210 = vadd.f32 %v142, %v148
  %v211 = vadd.f32 %v143, %v148
  %v212 = vadd.f32 %v144, %v148
  %v213 = vadd.f32 %v145, %v148
  %vm214 = vcmp.ge.f32.partialorder %v150, 0.0
  %vm215 = vcmp.ge.f32.partialorder %v151, 0.0
  %vm216 = vcmp.ge.f32.partialorder %v152, 0.0
  %vm217 = vcmp.ge.f32.partialorder %v153, 0.0
  %vm218 = vcmp.ge.f32.partialorder %v154, 0.0
  %vm219 = vcmp.ge.f32.partialorder %v155, 0.0
  %vm220 = vcmp.ge.f32.partialorder %v156, 0.0
  %vm221 = vcmp.ge.f32.partialorder %v157, 0.0
  %vm222 = vcmp.ge.f32.partialorder %v158, 0.0
  %vm223 = vcmp.ge.f32.partialorder %v159, 0.0
  %vm224 = vcmp.ge.f32.partialorder %v160, 0.0
  %vm225 = vcmp.ge.f32.partialorder %v161, 0.0
  %vm226 = vcmp.ge.f32.partialorder %v162, 0.0
  %vm227 = vcmp.ge.f32.partialorder %v163, 0.0
  %vm228 = vcmp.ge.f32.partialorder %v164, 0.0
  %vm229 = vcmp.ge.f32.partialorder %v165, 0.0
  %vm230 = vcmp.ge.f32.partialorder %v166, 0.0
  %vm231 = vcmp.ge.f32.partialorder %v167, 0.0
  %vm232 = vcmp.ge.f32.partialorder %v168, 0.0
  %vm233 = vcmp.ge.f32.partialorder %v169, 0.0
  %vm234 = vcmp.ge.f32.partialorder %v170, 0.0
  %vm235 = vcmp.ge.f32.partialorder %v171, 0.0
  %vm236 = vcmp.ge.f32.partialorder %v172, 0.0
  %vm237 = vcmp.ge.f32.partialorder %v173, 0.0
  %vm238 = vcmp.ge.f32.partialorder %v174, 0.0
  %vm239 = vcmp.ge.f32.partialorder %v175, 0.0
  %vm240 = vcmp.ge.f32.partialorder %v176, 0.0
  %vm241 = vcmp.ge.f32.partialorder %v177, 0.0
  %vm242 = vcmp.ge.f32.partialorder %v178, 0.0
  %vm243 = vcmp.ge.f32.partialorder %v179, 0.0
  %vm244 = vcmp.ge.f32.partialorder %v180, 0.0
  %vm245 = vcmp.ge.f32.partialorder %v181, 0.0
  %vm246 = vcmp.ge.f32.partialorder %v182, 0.0
  %vm247 = vcmp.ge.f32.partialorder %v183, 0.0
  %vm248 = vcmp.ge.f32.partialorder %v184, 0.0
  %vm249 = vcmp.ge.f32.partialorder %v185, 0.0
  %vm250 = vcmp.ge.f32.partialorder %v186, 0.0
  %vm251 = vcmp.ge.f32.partialorder %v187, 0.0
  %vm252 = vcmp.ge.f32.partialorder %v188, 0.0
  %vm253 = vcmp.ge.f32.partialorder %v189, 0.0
  %vm254 = vcmp.ge.f32.partialorder %v190, 0.0
  %vm255 = vcmp.ge.f32.partialorder %v191, 0.0
  %vm256 = vcmp.ge.f32.partialorder %v192, 0.0
  %vm257 = vcmp.ge.f32.partialorder %v193, 0.0
  %vm258 = vcmp.ge.f32.partialorder %v194, 0.0
  %vm259 = vcmp.ge.f32.partialorder %v195, 0.0
  %vm260 = vcmp.ge.f32.partialorder %v196, 0.0
  %vm261 = vcmp.ge.f32.partialorder %v197, 0.0
  %vm262 = vcmp.ge.f32.partialorder %v198, 0.0
  %vm263 = vcmp.ge.f32.partialorder %v199, 0.0
  %vm264 = vcmp.ge.f32.partialorder %v200, 0.0
  %vm265 = vcmp.ge.f32.partialorder %v201, 0.0
  %vm266 = vcmp.ge.f32.partialorder %v202, 0.0
  %vm267 = vcmp.ge.f32.partialorder %v203, 0.0
  %vm268 = vcmp.ge.f32.partialorder %v204, 0.0
  %vm269 = vcmp.ge.f32.partialorder %v205, 0.0
  %vm270 = vcmp.ge.f32.partialorder %v206, 0.0
  %vm271 = vcmp.ge.f32.partialorder %v207, 0.0
  %vm272 = vcmp.ge.f32.partialorder %v208, 0.0
  %vm273 = vcmp.ge.f32.partialorder %v209, 0.0
  %vm274 = vcmp.ge.f32.partialorder %v210, 0.0
  %vm275 = vcmp.ge.f32.partialorder %v211, 0.0
  %vm276 = vcmp.ge.f32.partialorder %v212, 0.0
  %vm277 = vcmp.ge.f32.partialorder %v213, 0.0
  %v278 = vmul.f32 %v150, 0.01
  %v279 = vmul.f32 %v151, 0.01
  %v280 = vmul.f32 %v152, 0.01
  %v281 = vmul.f32 %v153, 0.01
  %v282 = vmul.f32 %v154, 0.01
  %v283 = vmul.f32 %v155, 0.01
  %v284 = vmul.f32 %v156, 0.01
  %v285 = vmul.f32 %v157, 0.01
  %v286 = vmul.f32 %v158, 0.01
  %v287 = vmul.f32 %v159, 0.01
  %v288 = vmul.f32 %v160, 0.01
  %v289 = vmul.f32 %v161, 0.01
  %v290 = vmul.f32 %v162, 0.01
  %v291 = vmul.f32 %v163, 0.01
  %v292 = vmul.f32 %v164, 0.01
  %v293 = vmul.f32 %v165, 0.01
  %v294 = vmul.f32 %v166, 0.01
  %v295 = vmul.f32 %v167, 0.01
  %v296 = vmul.f32 %v168, 0.01
  %v297 = vmul.f32 %v169, 0.01
  %v298 = vmul.f32 %v170, 0.01
  %v299 = vmul.f32 %v171, 0.01
  %v300 = vmul.f32 %v172, 0.01
  %v301 = vmul.f32 %v173, 0.01
  %v302 = vmul.f32 %v174, 0.01
  %v303 = vmul.f32 %v175, 0.01
  %v304 = vmul.f32 %v176, 0.01
  %v305 = vmul.f32 %v177, 0.01
  %v306 = vmul.f32 %v178, 0.01
  %v307 = vmul.f32 %v179, 0.01
  %v308 = vmul.f32 %v180, 0.01
  %v309 = vmul.f32 %v181, 0.01
  %v310 = vmul.f32 %v182, 0.01
  %v311 = vmul.f32 %v183, 0.01
  %v312 = vmul.f32 %v184, 0.01
  %v313 = vmul.f32 %v185, 0.01
  %v314 = vmul.f32 %v186, 0.01
  %v315 = vmul.f32 %v187, 0.01
  %v316 = vmul.f32 %v188, 0.01
  %v317 = vmul.f32 %v189, 0.01
  %v318 = vmul.f32 %v190, 0.01
  %v319 = vmul.f32 %v191, 0.01
  %v320 = vmul.f32 %v192, 0.01
  %v321 = vmul.f32 %v193, 0.01
  %v322 = vmul.f32 %v194, 0.01
  %v323 = vmul.f32 %v195, 0.01
  %v324 = vmul.f32 %v196, 0.01
  %v325 = vmul.f32 %v197, 0.01
  %v326 = vmul.f32 %v198, 0.01
  %v327 = vmul.f32 %v199, 0.01
  %v328 = vmul.f32 %v200, 0.01
  %v329 = vmul.f32 %v201, 0.01
  %v330 = vmul.f32 %v202, 0.01
  %v331 = vmul.f32 %v203, 0.01
  %v332 = vmul.f32 %v204, 0.01
  %v333 = vmul.f32 %v205, 0.01
  %v334 = vmul.f32 %v206, 0.01
  %v335 = vmul.f32 %v207, 0.01
  %v336 = vmul.f32 %v208, 0.01
  %v337 = vmul.f32 %v209, 0.01
  %v338 = vmul.f32 %v210, 0.01
  %v339 = vmul.f32 %v211, 0.01
  %v340 = vmul.f32 %v212, 0.01
  %v341 = vmul.f32 %v213, 0.01
  %v342 = vsel %vm214, %v150, %v278
  %v343 = vsel %vm215, %v151, %v279
  %v344 = vsel %vm216, %v152, %v280
  %v345 = vsel %vm217, %v153, %v281
  %v346 = vsel %vm218, %v154, %v282
  %v347 = vsel %vm219, %v155, %v283
  %v348 = vsel %vm220, %v156, %v284
  %v349 = vsel %vm221, %v157, %v285
  %v350 = vsel %vm222, %v158, %v286
  %v351 = vsel %vm223, %v159, %v287
  %v352 = vsel %vm224, %v160, %v288
  %v353 = vsel %vm225, %v161, %v289
  %v354 = vsel %vm226, %v162, %v290
  %v355 = vsel %vm227, %v163, %v291
  %v356 = vsel %vm228, %v164, %v292
  %v357 = vsel %vm229, %v165, %v293
  %v358 = vsel %vm230, %v166, %v294
  %v359 = vsel %vm231, %v167, %v295
  %v360 = vsel %vm232, %v168, %v296
  %v361 = vsel %vm233, %v169, %v297
  %v362 = vsel %vm234, %v170, %v298
  %v363 = vsel %vm235, %v171, %v299
  %v364 = vsel %vm236, %v172, %v300
  %v365 = vsel %vm237, %v173, %v301
  %v366 = vsel %vm238, %v174, %v302
  %v367 = vsel %vm239, %v175, %v303
  %v368 = vsel %vm240, %v176, %v304
  %v369 = vsel %vm241, %v177, %v305
  %v370 = vsel %vm242, %v178, %v306
  %v371 = vsel %vm243, %v179, %v307
  %v372 = vsel %vm244, %v180, %v308
  %v373 = vsel %vm245, %v181, %v309
  %v374 = vsel %vm246, %v182, %v310
  %v375 = vsel %vm247, %v183, %v311
  %v376 = vsel %vm248, %v184, %v312
  %v377 = vsel %vm249, %v185, %v313
  %v378 = vsel %vm250, %v186, %v314
  %v379 = vsel %vm251, %v187, %v315
  %v380 = vsel %vm252, %v188, %v316
  %v381 = vsel %vm253, %v189, %v317
  %v382 = vsel %vm254, %v190, %v318
  %v383 = vsel %vm255, %v191, %v319
  %v384 = vsel %vm256, %v192, %v320
  %v385 = vsel %vm257, %v193, %v321
  %v386 = vsel %vm258, %v194, %v322
  %v387 = vsel %vm259, %v195, %v323
  %v388 = vsel %vm260, %v196, %v324
  %v389 = vsel %vm261, %v197, %v325
  %v390 = vsel %vm262, %v198, %v326
  %v391 = vsel %vm263, %v199, %v327
  %v392 = vsel %vm264, %v200, %v328
  %v393 = vsel %vm265, %v201, %v329
  %v394 = vsel %vm266, %v202, %v330
  %v395 = vsel %vm267, %v203, %v331
  %v396 = vsel %vm268, %v204, %v332
  %v397 = vsel %vm269, %v205, %v333
  %v398 = vsel %vm270, %v206, %v334
  %v399 = vsel %vm271, %v207, %v335
  %v400 = vsel %vm272, %v208, %v336
  %v401 = vsel %vm273, %v209, %v337
  %v402 = vsel %vm274, %v210, %v338
  %v403 = vsel %vm275, %v211, %v339
  %v404 = vsel %vm276, %v212, %v340
  %v405 = vsel %vm277, %v213, %v341
  %v406 = vpack.c.bf16 %v342, %v342
  %v407 = vpack.c.bf16 %v343, %v343
  %v408 = vpack.c.bf16 %v344, %v344
  %v409 = vpack.c.bf16 %v345, %v345
  %v410 = vpack.c.bf16 %v346, %v346
  %v411 = vpack.c.bf16 %v347, %v347
  %v412 = vpack.c.bf16 %v348, %v348
  %v413 = vpack.c.bf16 %v349, %v349
  %v414 = vpack.c.bf16 %v350, %v350
  %v415 = vpack.c.bf16 %v351, %v351
  %v416 = vpack.c.bf16 %v352, %v352
  %v417 = vpack.c.bf16 %v353, %v353
  %v418 = vpack.c.bf16 %v354, %v354
  %v419 = vpack.c.bf16 %v355, %v355
  %v420 = vpack.c.bf16 %v356, %v356
  %v421 = vpack.c.bf16 %v357, %v357
  %v422 = vpack.c.bf16 %v358, %v358
  %v423 = vpack.c.bf16 %v359, %v359
  %v424 = vpack.c.bf16 %v360, %v360
  %v425 = vpack.c.bf16 %v361, %v361
  %v426 = vpack.c.bf16 %v362, %v362
  %v427 = vpack.c.bf16 %v363, %v363
  %v428 = vpack.c.bf16 %v364, %v364
  %v429 = vpack.c.bf16 %v365, %v365
  %v430 = vpack.c.bf16 %v366, %v366
  %v431 = vpack.c.bf16 %v367, %v367
  %v432 = vpack.c.bf16 %v368, %v368
  %v433 = vpack.c.bf16 %v369, %v369
  %v434 = vpack.c.bf16 %v370, %v370
  %v435 = vpack.c.bf16 %v371, %v371
  %v436 = vpack.c.bf16 %v372, %v372
  %v437 = vpack.c.bf16 %v373, %v373
  %v438 = vpack.c.bf16 %v374, %v374
  %v439 = vpack.c.bf16 %v375, %v375
  %v440 = vpack.c.bf16 %v376, %v376
  %v441 = vpack.c.bf16 %v377, %v377
  %v442 = vpack.c.bf16 %v378, %v378
  %v443 = vpack.c.bf16 %v379, %v379
  %v444 = vpack.c.bf16 %v380, %v380
  %v445 = vpack.c.bf16 %v381, %v381
  %v446 = vpack.c.bf16 %v382, %v382
  %v447 = vpack.c.bf16 %v383, %v383
  %v448 = vpack.c.bf16 %v384, %v384
  %v449 = vpack.c.bf16 %v385, %v385
  %v450 = vpack.c.bf16 %v386, %v386
  %v451 = vpack.c.bf16 %v387, %v387
  %v452 = vpack.c.bf16 %v388, %v388
  %v453 = vpack.c.bf16 %v389, %v389
  %v454 = vpack.c.bf16 %v390, %v390
  %v455 = vpack.c.bf16 %v391, %v391
  %v456 = vpack.c.bf16 %v392, %v392
  %v457 = vpack.c.bf16 %v393, %v393
  %v458 = vpack.c.bf16 %v394, %v394
  %v459 = vpack.c.bf16 %v395, %v395
  %v460 = vpack.c.bf16 %v396, %v396
  %v461 = vpack.c.bf16 %v397, %v397
  %v462 = vpack.c.bf16 %v398, %v398
  %v463 = vpack.c.bf16 %v399, %v399
  %v464 = vpack.c.bf16 %v400, %v400
  %v465 = vpack.c.bf16 %v401, %v401
  %v466 = vpack.c.bf16 %v402, %v402
  %v467 = vpack.c.bf16 %v403, %v403
  %v468 = vpack.c.bf16 %v404, %v404
  %v469 = vpack.c.bf16 %v405, %v405
  %470 = vst [vmem:[%s3] sm:$0xf] %v406
  %471 = vst [vmem:[%s3 + $0x4] sm:$0xf] %v407
  %472 = vst [vmem:[%s3 + $0x8] sm:$0xf] %v408
  %473 = vst [vmem:[%s3 + $0xc] sm:$0xf] %v409
  %474 = vst [vmem:[%s3 + $0x10] sm:$0xf] %v410
  %475 = vst [vmem:[%s3 + $0x14] sm:$0xf] %v411
  %476 = vst [vmem:[%s3 + $0x18] sm:$0xf] %v412
  %477 = vst [vmem:[%s3 + $0x1c] sm:$0xf] %v413
  %478 = vst [vmem:[%s3 + $0x20] sm:$0xf] %v414
  %479 = vst [vmem:[%s3 + $0x24] sm:$0xf] %v415
  %480 = vst [vmem:[%s3 + $0x28] sm:$0xf] %v416
  %481 = vst [vmem:[%s3 + $0x2c] sm:$0xf] %v417
  %482 = vst [vmem:[%s3 + $0x30] sm:$0xf] %v418
  %483 = vst [vmem:[%s3 + $0x34] sm:$0xf] %v419
  %484 = vst [vmem:[%s3 + $0x38] sm:$0xf] %v420
  %485 = vst [vmem:[%s3 + $0x3c] sm:$0xf] %v421
  %486 = vst [vmem:[%s3 + $0x40] sm:$0xf] %v422
  %487 = vst [vmem:[%s3 + $0x44] sm:$0xf] %v423
  %488 = vst [vmem:[%s3 + $0x48] sm:$0xf] %v424
  %489 = vst [vmem:[%s3 + $0x4c] sm:$0xf] %v425
  %490 = vst [vmem:[%s3 + $0x50] sm:$0xf] %v426
  %491 = vst [vmem:[%s3 + $0x54] sm:$0xf] %v427
  %492 = vst [vmem:[%s3 + $0x58] sm:$0xf] %v428
  %493 = vst [vmem:[%s3 + $0x5c] sm:$0xf] %v429
  %494 = vst [vmem:[%s3 + $0x60] sm:$0xf] %v430
  %495 = vst [vmem:[%s3 + $0x64] sm:$0xf] %v431
  %496 = vst [vmem:[%s3 + $0x68] sm:$0xf] %v432
  %497 = vst [vmem:[%s3 + $0x6c] sm:$0xf] %v433
  %498 = vst [vmem:[%s3 + $0x70] sm:$0xf] %v434
  %499 = vst [vmem:[%s3 + $0x74] sm:$0xf] %v435
  %500 = vst [vmem:[%s3 + $0x78] sm:$0xf] %v436
  %501 = vst [vmem:[%s3 + $0x7c] sm:$0xf] %v437
  %502 = vst [vmem:[%s3 + $0x80] sm:$0xf] %v438
  %503 = vst [vmem:[%s3 + $0x84] sm:$0xf] %v439
  %504 = vst [vmem:[%s3 + $0x88] sm:$0xf] %v440
  %505 = vst [vmem:[%s3 + $0x8c] sm:$0xf] %v441
  %506 = vst [vmem:[%s3 + $0x90] sm:$0xf] %v442
  %507 = vst [vmem:[%s3 + $0x94] sm:$0xf] %v443
  %508 = vst [vmem:[%s3 + $0x98] sm:$0xf] %v444
  %509 = vst [vmem:[%s3 + $0x9c] sm:$0xf] %v445
  %510 = vst [vmem:[%s3 + $0xa0] sm:$0xf] %v446
  %511 = vst [vmem:[%s3 + $0xa4] sm:$0xf] %v447
  %512 = vst [vmem:[%s3 + $0xa8] sm:$0xf] %v448
  %513 = vst [vmem:[%s3 + $0xac] sm:$0xf] %v449
  %514 = vst [vmem:[%s3 + $0xb0] sm:$0xf] %v450
  %515 = vst [vmem:[%s3 + $0xb4] sm:$0xf] %v451
  %516 = vst [vmem:[%s3 + $0xb8] sm:$0xf] %v452
  %517 = vst [vmem:[%s3 + $0xbc] sm:$0xf] %v453
  %518 = vst [vmem:[%s3 + $0xc0] sm:$0xf] %v454
  %519 = vst [vmem:[%s3 + $0xc4] sm:$0xf] %v455
  %520 = vst [vmem:[%s3 + $0xc8] sm:$0xf] %v456
  %521 = vst [vmem:[%s3 + $0xcc] sm:$0xf] %v457
  %522 = vst [vmem:[%s3 + $0xd0] sm:$0xf] %v458
  %523 = vst [vmem:[%s3 + $0xd4] sm:$0xf] %v459
  %524 = vst [vmem:[%s3 + $0xd8] sm:$0xf] %v460
  %525 = vst [vmem:[%s3 + $0xdc] sm:$0xf] %v461
  %526 = vst [vmem:[%s3 + $0xe0] sm:$0xf] %v462
  %527 = vst [vmem:[%s3 + $0xe4] sm:$0xf] %v463
  %528 = vst [vmem:[%s3 + $0xe8] sm:$0xf] %v464
  %529 = vst [vmem:[%s3 + $0xec] sm:$0xf] %v465
  %530 = vst [vmem:[%s3 + $0xf0] sm:$0xf] %v466
  %531 = vst [vmem:[%s3 + $0xf4] sm:$0xf] %v467
  %532 = vst [vmem:[%s3 + $0xf8] sm:$0xf] %v468
  %533 = vst [vmem:[%s3 + $0xfc] sm:$0xf] %v469
  // Predicated region
  $region14: #{conv_down_block_forward.7} parent=0 // pred_check
    _
  $region15: #{conv_down_block_forward.7} parent=0 // pred_check_branch
    %535 = sbr.rel (0) target = $region17
  $region16: #{conv_down_block_forward.7} parent=0 // pred_region
    _
  $region17: #{conv_down_block_forward.7} parent=0 // pred_fallthru
    _
  // Predicated region
  $region18: #{conv_down_block_forward.7} parent=0 // pred_check
    _
  $region19: #{conv_down_block_forward.7} parent=0 // pred_check_branch
    %537 = sbr.rel (0) target = $region21
  $region20: #{conv_down_block_forward.7} parent=0 // pred_region
    _
  $region21: #{conv_down_block_forward.7} parent=0 // pred_fallthru
    _

// kernel: conv_down_block_forward.6
$region0: #{conv_down_block_forward.6}
  #allocation0 [shape = 'u32[]', space=smem, size = 0x4, offset = 0x4, fixed_abs, tag = 'smem constant byte address 0x4 - core index']
  #allocation1 [shape = 'u32[72,128]{1,0:T(1,128)}', space=vmem, size = 0x9000, scoped, tag = 'internal scratch']
  #allocation2 [shape = 'f32[512,128]{1,0:T(8,128)}', space=vmem, size = 0x40000, scoped, tag = 'scratch operand']
  %s0 = inlined_call_operand.vmem [shape: bf16[512,36], index: 0, kind: input, shape index: {}]
  %s1 = inlined_call_operand.vmem [shape: bf16[36,128], index: 1, kind: input, shape index: {}]
  %s2 = inlined_call_operand.vmem [shape: f32[512,128], index: 2, kind: output, shape index: {0}]
  %s3 = inlined_call_operand.vmem [shape: f32[1,128], index: 3, kind: output, shape index: {1}]
  %s4 = inlined_call_operand.vmem [shape: f32[1,128], index: 4, kind: output, shape index: {2}]
  %5 = xla_tuple %s2, %s3, %s4
  %s6 = sld [smem:[#allocation0]]
  $region46: #{conv_down_block_forward.6} parent=0
    _
  %s8 = ssub.s32 1, %s6
  %s9 = scalar_select 0, %s8, %s6
  // Predicated region
  $region2: #{conv_down_block_forward.6} parent=0 // pred_check
    _
  $region3: #{conv_down_block_forward.6} parent=0 // pred_check_branch
    %11 = sbr.rel (0) target = $region5
  $region4: #{conv_down_block_forward.6} parent=0 // pred_region
    _
  $region5: #{conv_down_block_forward.6} parent=0 // pred_fallthru
    _
  // Predicated region
  $region6: #{conv_down_block_forward.6} parent=0 // pred_check
    _
  $region7: #{conv_down_block_forward.6} parent=0 // pred_check_branch
    %13 = sbr.rel (0) target = $region9
  $region8: #{conv_down_block_forward.6} parent=0 // pred_region
    _
  $region9: #{conv_down_block_forward.6} parent=0 // pred_fallthru
    _
  %p15 = scmp.eq.s32.totalorder 0, 0
  %p16 = scmp.eq.s32.totalorder 0, 0
  %p17 = pnand %p15, %p16
  %p18 = pneg %p17
  // Predicated region
  $region10: #{conv_down_block_forward.6} parent=0 // pred_check
    _
  $region11: #{conv_down_block_forward.6} parent=0 // pred_check_branch
    %20 = sbr.rel (%p17) target = $region13
  $region12: #{conv_down_block_forward.6} parent=0 // pred_region
    %21 = vst [vmem:[%s3] sm:$0x1] 0.0
    %22 = vst [vmem:[%s4] sm:$0x1] 0.0
  $region13: #{conv_down_block_forward.6} parent=0 // pred_fallthru
    _
  // Predicated region
  $region14: #{conv_down_block_forward.6} parent=0 // pred_check
    %p23 = pneg %p16
  $region15: #{conv_down_block_forward.6} parent=0 // pred_check_branch
    %25 = sbr.rel (%p23) target = $region17
  $region16: #{conv_down_block_forward.6} parent=0 // pred_region
    %26 = vst [vmem:[#allocation2] sm:$0xff] 0.0
    %27 = vst [vmem:[#allocation2 + $0x8] sm:$0xff] 0.0
    %28 = vst [vmem:[#allocation2 + $0x10] sm:$0xff] 0.0
    %29 = vst [vmem:[#allocation2 + $0x18] sm:$0xff] 0.0
    %30 = vst [vmem:[#allocation2 + $0x20] sm:$0xff] 0.0
    %31 = vst [vmem:[#allocation2 + $0x28] sm:$0xff] 0.0
    %32 = vst [vmem:[#allocation2 + $0x30] sm:$0xff] 0.0
    %33 = vst [vmem:[#allocation2 + $0x38] sm:$0xff] 0.0
    %34 = vst [vmem:[#allocation2 + $0x40] sm:$0xff] 0.0
    %35 = vst [vmem:[#allocation2 + $0x48] sm:$0xff] 0.0
    %36 = vst [vmem:[#allocation2 + $0x50] sm:$0xff] 0.0
    %37 = vst [vmem:[#allocation2 + $0x58] sm:$0xff] 0.0
    %38 = vst [vmem:[#allocation2 + $0x60] sm:$0xff] 0.0
    %39 = vst [vmem:[#allocation2 + $0x68] sm:$0xff] 0.0
    %40 = vst [vmem:[#allocation2 + $0x70] sm:$0xff] 0.0
    %41 = vst [vmem:[#allocation2 + $0x78] sm:$0xff] 0.0
    %42 = vst [vmem:[#allocation2 + $0x80] sm:$0xff] 0.0
    %43 = vst [vmem:[#allocation2 + $0x88] sm:$0xff] 0.0
    %44 = vst [vmem:[#allocation2 + $0x90] sm:$0xff] 0.0
    %45 = vst [vmem:[#allocation2 + $0x98] sm:$0xff] 0.0
    %46 = vst [vmem:[#allocation2 + $0xa0] sm:$0xff] 0.0
    %47 = vst [vmem:[#allocation2 + $0xa8] sm:$0xff] 0.0
    %48 = vst [vmem:[#allocation2 + $0xb0] sm:$0xff] 0.0
    %49 = vst [vmem:[#allocation2 + $0xb8] sm:$0xff] 0.0
    %50 = vst [vmem:[#allocation2 + $0xc0] sm:$0xff] 0.0
    %51 = vst [vmem:[#allocation2 + $0xc8] sm:$0xff] 0.0
    %52 = vst [vmem:[#allocation2 + $0xd0] sm:$0xff] 0.0
    %53 = vst [vmem:[#allocation2 + $0xd8] sm:$0xff] 0.0
    %54 = vst [vmem:[#allocation2 + $0xe0] sm:$0xff] 0.0
    %55 = vst [vmem:[#allocation2 + $0xe8] sm:$0xff] 0.0
    %56 = vst [vmem:[#allocation2 + $0xf0] sm:$0xff] 0.0
    %57 = vst [vmem:[#allocation2 + $0xf8] sm:$0xff] 0.0
    %58 = vst [vmem:[#allocation2 + $0x100] sm:$0xff] 0.0
    %59 = vst [vmem:[#allocation2 + $0x108] sm:$0xff] 0.0
    %60 = vst [vmem:[#allocation2 + $0x110] sm:$0xff] 0.0
    %61 = vst [vmem:[#allocation2 + $0x118] sm:$0xff] 0.0
    %62 = vst [vmem:[#allocation2 + $0x120] sm:$0xff] 0.0
    %63 = vst [vmem:[#allocation2 + $0x128] sm:$0xff] 0.0
    %64 = vst [vmem:[#allocation2 + $0x130] sm:$0xff] 0.0
    %65 = vst [vmem:[#allocation2 + $0x138] sm:$0xff] 0.0
    %66 = vst [vmem:[#allocation2 + $0x140] sm:$0xff] 0.0
    %67 = vst [vmem:[#allocation2 + $0x148] sm:$0xff] 0.0
    %68 = vst [vmem:[#allocation2 + $0x150] sm:$0xff] 0.0
    %69 = vst [vmem:[#allocation2 + $0x158] sm:$0xff] 0.0
    %70 = vst [vmem:[#allocation2 + $0x160] sm:$0xff] 0.0
    %71 = vst [vmem:[#allocation2 + $0x168] sm:$0xff] 0.0
    %72 = vst [vmem:[#allocation2 + $0x170] sm:$0xff] 0.0
    %73 = vst [vmem:[#allocation2 + $0x178] sm:$0xff] 0.0
    %74 = vst [vmem:[#allocation2 + $0x180] sm:$0xff] 0.0
    %75 = vst [vmem:[#allocation2 + $0x188] sm:$0xff] 0.0
    %76 = vst [vmem:[#allocation2 + $0x190] sm:$0xff] 0.0
    %77 = vst [vmem:[#allocation2 + $0x198] sm:$0xff] 0.0
    %78 = vst [vmem:[#allocation2 + $0x1a0] sm:$0xff] 0.0
    %79 = vst [vmem:[#allocation2 + $0x1a8] sm:$0xff] 0.0
    %80 = vst [vmem:[#allocation2 + $0x1b0] sm:$0xff] 0.0
    %81 = vst [vmem:[#allocation2 + $0x1b8] sm:$0xff] 0.0
    %82 = vst [vmem:[#allocation2 + $0x1c0] sm:$0xff] 0.0
    %83 = vst [vmem:[#allocation2 + $0x1c8] sm:$0xff] 0.0
    %84 = vst [vmem:[#allocation2 + $0x1d0] sm:$0xff] 0.0
    %85 = vst [vmem:[#allocation2 + $0x1d8] sm:$0xff] 0.0
    %86 = vst [vmem:[#allocation2 + $0x1e0] sm:$0xff] 0.0
    %87 = vst [vmem:[#allocation2 + $0x1e8] sm:$0xff] 0.0
    %88 = vst [vmem:[#allocation2 + $0x1f0] sm:$0xff] 0.0
    %89 = vst [vmem:[#allocation2 + $0x1f8] sm:$0xff] 0.0
  $region17: #{conv_down_block_forward.6} parent=0 // pred_fallthru
    _
  %v90 = vld [vmem:[#allocation2] sm:$0xff]
  %v91 = vld [vmem:[#allocation2 + $0x8] sm:$0xff]
  %v92 = vld [vmem:[#allocation2 + $0x10] sm:$0xff]
  %v93 = vld [vmem:[#allocation2 + $0x18] sm:$0xff]
  %v94 = vld [vmem:[#allocation2 + $0x20] sm:$0xff]
  %v95 = vld [vmem:[#allocation2 + $0x28] sm:$0xff]
  %v96 = vld [vmem:[#allocation2 + $0x30] sm:$0xff]
  %v97 = vld [vmem:[#allocation2 + $0x38] sm:$0xff]
  %v98 = vld [vmem:[#allocation2 + $0x40] sm:$0xff]
  %v99 = vld [vmem:[#allocation2 + $0x48] sm:$0xff]
  %v100 = vld [vmem:[#allocation2 + $0x50] sm:$0xff]
  %v101 = vld [vmem:[#allocation2 + $0x58] sm:$0xff]
  %v102 = vld [vmem:[#allocation2 + $0x60] sm:$0xff]
  %v103 = vld [vmem:[#allocation2 + $0x68] sm:$0xff]
  %v104 = vld [vmem:[#allocation2 + $0x70] sm:$0xff]
  %v105 = vld [vmem:[#allocation2 + $0x78] sm:$0xff]
  %v106 = vld [vmem:[#allocation2 + $0x80] sm:$0xff]
  %v107 = vld [vmem:[#allocation2 + $0x88] sm:$0xff]
  %v108 = vld [vmem:[#allocation2 + $0x90] sm:$0xff]
  %v109 = vld [vmem:[#allocation2 + $0x98] sm:$0xff]
  %v110 = vld [vmem:[#allocation2 + $0xa0] sm:$0xff]
  %v111 = vld [vmem:[#allocation2 + $0xa8] sm:$0xff]
  %v112 = vld [vmem:[#allocation2 + $0xb0] sm:$0xff]
  %v113 = vld [vmem:[#allocation2 + $0xb8] sm:$0xff]
  %v114 = vld [vmem:[#allocation2 + $0xc0] sm:$0xff]
  %v115 = vld [vmem:[#allocation2 + $0xc8] sm:$0xff]
  %v116 = vld [vmem:[#allocation2 + $0xd0] sm:$0xff]
  %v117 = vld [vmem:[#allocation2 + $0xd8] sm:$0xff]
  %v118 = vld [vmem:[#allocation2 + $0xe0] sm:$0xff]
  %v119 = vld [vmem:[#allocation2 + $0xe8] sm:$0xff]
  %v120 = vld [vmem:[#allocation2 + $0xf0] sm:$0xff]
  %v121 = vld [vmem:[#allocation2 + $0xf8] sm:$0xff]
  %v122 = vld [vmem:[#allocation2 + $0x100] sm:$0xff]
  %v123 = vld [vmem:[#allocation2 + $0x108] sm:$0xff]
  %v124 = vld [vmem:[#allocation2 + $0x110] sm:$0xff]
  %v125 = vld [vmem:[#allocation2 + $0x118] sm:$0xff]
  %v126 = vld [vmem:[#allocation2 + $0x120] sm:$0xff]
  %v127 = vld [vmem:[#allocation2 + $0x128] sm:$0xff]
  %v128 = vld [vmem:[#allocation2 + $0x130] sm:$0xff]
  %v129 = vld [vmem:[#allocation2 + $0x138] sm:$0xff]
  %v130 = vld [vmem:[#allocation2 + $0x140] sm:$0xff]
  %v131 = vld [vmem:[#allocation2 + $0x148] sm:$0xff]
  %v132 = vld [vmem:[#allocation2 + $0x150] sm:$0xff]
  %v133 = vld [vmem:[#allocation2 + $0x158] sm:$0xff]
  %v134 = vld [vmem:[#allocation2 + $0x160] sm:$0xff]
  %v135 = vld [vmem:[#allocation2 + $0x168] sm:$0xff]
  %v136 = vld [vmem:[#allocation2 + $0x170] sm:$0xff]
  %v137 = vld [vmem:[#allocation2 + $0x178] sm:$0xff]
  %v138 = vld [vmem:[#allocation2 + $0x180] sm:$0xff]
  %v139 = vld [vmem:[#allocation2 + $0x188] sm:$0xff]
  %v140 = vld [vmem:[#allocation2 + $0x190] sm:$0xff]
  %v141 = vld [vmem:[#allocation2 + $0x198] sm:$0xff]
  %v142 = vld [vmem:[#allocation2 + $0x1a0] sm:$0xff]
  %v143 = vld [vmem:[#allocation2 + $0x1a8] sm:$0xff]
  %v144 = vld [vmem:[#allocation2 + $0x1b0] sm:$0xff]
  %v145 = vld [vmem:[#allocation2 + $0x1b8] sm:$0xff]
  %v146 = vld [vmem:[#allocation2 + $0x1c0] sm:$0xff]
  %v147 = vld [vmem:[#allocation2 + $0x1c8] sm:$0xff]
  %v148 = vld [vmem:[#allocation2 + $0x1d0] sm:$0xff]
  %v149 = vld [vmem:[#allocation2 + $0x1d8] sm:$0xff]
  %v150 = vld [vmem:[#allocation2 + $0x1e0] sm:$0xff]
  %v151 = vld [vmem:[#allocation2 + $0x1e8] sm:$0xff]
  %v152 = vld [vmem:[#allocation2 + $0x1f0] sm:$0xff]
  %v153 = vld [vmem:[#allocation2 + $0x1f8] sm:$0xff]
  %v154 = vld [vmem:[%s0] sm:$0xf]
  %v155 = vld [vmem:[%s0 + $0x4] sm:$0xf]
  %v156 = vld [vmem:[%s0 + $0x8] sm:$0xf]
  %v157 = vld [vmem:[%s0 + $0xc] sm:$0xf]
  %v158 = vld [vmem:[%s0 + $0x10] sm:$0xf]
  %v159 = vld [vmem:[%s0 + $0x14] sm:$0xf]
  %v160 = vld [vmem:[%s0 + $0x18] sm:$0xf]
  %v161 = vld [vmem:[%s0 + $0x1c] sm:$0xf]
  %v162 = vld [vmem:[%s0 + $0x20] sm:$0xf]
  %v163 = vld [vmem:[%s0 + $0x24] sm:$0xf]
  %v164 = vld [vmem:[%s0 + $0x28] sm:$0xf]
  %v165 = vld [vmem:[%s0 + $0x2c] sm:$0xf]
  %v166 = vld [vmem:[%s0 + $0x30] sm:$0xf]
  %v167 = vld [vmem:[%s0 + $0x34] sm:$0xf]
  %v168 = vld [vmem:[%s0 + $0x38] sm:$0xf]
  %v169 = vld [vmem:[%s0 + $0x3c] sm:$0xf]
  %v170 = vld [vmem:[%s0 + $0x40] sm:$0xf]
  %v171 = vld [vmem:[%s0 + $0x44] sm:$0xf]
  %v172 = vld [vmem:[%s0 + $0x48] sm:$0xf]
  %v173 = vld [vmem:[%s0 + $0x4c] sm:$0xf]
  %v174 = vld [vmem:[%s0 + $0x50] sm:$0xf]
  %v175 = vld [vmem:[%s0 + $0x54] sm:$0xf]
  %v176 = vld [vmem:[%s0 + $0x58] sm:$0xf]
  %v177 = vld [vmem:[%s0 + $0x5c] sm:$0xf]
  %v178 = vld [vmem:[%s0 + $0x60] sm:$0xf]
  %v179 = vld [vmem:[%s0 + $0x64] sm:$0xf]
  %v180 = vld [vmem:[%s0 + $0x68] sm:$0xf]
  %v181 = vld [vmem:[%s0 + $0x6c] sm:$0xf]
  %v182 = vld [vmem:[%s0 + $0x70] sm:$0xf]
  %v183 = vld [vmem:[%s0 + $0x74] sm:$0xf]
  %v184 = vld [vmem:[%s0 + $0x78] sm:$0xf]
  %v185 = vld [vmem:[%s0 + $0x7c] sm:$0xf]
  %v186 = vld [vmem:[%s0 + $0x80] sm:$0xf]
  %v187 = vld [vmem:[%s0 + $0x84] sm:$0xf]
  %v188 = vld [vmem:[%s0 + $0x88] sm:$0xf]
  %v189 = vld [vmem:[%s0 + $0x8c] sm:$0xf]
  %v190 = vld [vmem:[%s0 + $0x90] sm:$0xf]
  %v191 = vld [vmem:[%s0 + $0x94] sm:$0xf]
  %v192 = vld [vmem:[%s0 + $0x98] sm:$0xf]
  %v193 = vld [vmem:[%s0 + $0x9c] sm:$0xf]
  %v194 = vld [vmem:[%s0 + $0xa0] sm:$0xf]
  %v195 = vld [vmem:[%s0 + $0xa4] sm:$0xf]
  %v196 = vld [vmem:[%s0 + $0xa8] sm:$0xf]
  %v197 = vld [vmem:[%s0 + $0xac] sm:$0xf]
  %v198 = vld [vmem:[%s0 + $0xb0] sm:$0xf]
  %v199 = vld [vmem:[%s0 + $0xb4] sm:$0xf]
  %v200 = vld [vmem:[%s0 + $0xb8] sm:$0xf]
  %v201 = vld [vmem:[%s0 + $0xbc] sm:$0xf]
  %v202 = vld [vmem:[%s0 + $0xc0] sm:$0xf]
  %v203 = vld [vmem:[%s0 + $0xc4] sm:$0xf]
  %v204 = vld [vmem:[%s0 + $0xc8] sm:$0xf]
  %v205 = vld [vmem:[%s0 + $0xcc] sm:$0xf]
  %v206 = vld [vmem:[%s0 + $0xd0] sm:$0xf]
  %v207 = vld [vmem:[%s0 + $0xd4] sm:$0xf]
  %v208 = vld [vmem:[%s0 + $0xd8] sm:$0xf]
  %v209 = vld [vmem:[%s0 + $0xdc] sm:$0xf]
  %v210 = vld [vmem:[%s0 + $0xe0] sm:$0xf]
  %v211 = vld [vmem:[%s0 + $0xe4] sm:$0xf]
  %v212 = vld [vmem:[%s0 + $0xe8] sm:$0xf]
  %v213 = vld [vmem:[%s0 + $0xec] sm:$0xf]
  %v214 = vld [vmem:[%s0 + $0xf0] sm:$0xf]
  %v215 = vld [vmem:[%s0 + $0xf4] sm:$0xf]
  %v216 = vld [vmem:[%s0 + $0xf8] sm:$0xf]
  %v217 = vld [vmem:[%s0 + $0xfc] sm:$0xf]
  %v218 = vld [vmem:[%s1] sm:$0xf]
  %v219 = vld [vmem:[%s1 + $0x4] sm:$0xf]
  %v220 = vld [vmem:[%s1 + $0x8] sm:$0xf]
  %v221 = vld [vmem:[%s1 + $0xc] sm:$0xf]
  %v222 = vld [vmem:[%s1 + $0x10] sm:$0x3]
  %v287 = vunpack.c.l.b16 %v154
  %v288 = vunpack.c.l.b16 %v155
  %v289 = vunpack.c.l.b16 %v156
  %v290 = vunpack.c.l.b16 %v157
  %v291 = vunpack.c.l.b16 %v158
  %v292 = vunpack.c.l.b16 %v159
  %v293 = vunpack.c.l.b16 %v160
  %v294 = vunpack.c.l.b16 %v161
  %v295 = vunpack.c.l.b16 %v162
  %v296 = vunpack.c.l.b16 %v163
  %v297 = vunpack.c.l.b16 %v164
  %v298 = vunpack.c.l.b16 %v165
  %v299 = vunpack.c.l.b16 %v166
  %v300 = vunpack.c.l.b16 %v167
  %v301 = vunpack.c.l.b16 %v168
  %v302 = vunpack.c.l.b16 %v169
  %v303 = vunpack.c.l.b16 %v170
  %v304 = vunpack.c.l.b16 %v171
  %v305 = vunpack.c.l.b16 %v172
  %v306 = vunpack.c.l.b16 %v173
  %v307 = vunpack.c.l.b16 %v174
  %v308 = vunpack.c.l.b16 %v175
  %v309 = vunpack.c.l.b16 %v176
  %v310 = vunpack.c.l.b16 %v177
  %v311 = vunpack.c.l.b16 %v178
  %v312 = vunpack.c.l.b16 %v179
  %v313 = vunpack.c.l.b16 %v180
  %v314 = vunpack.c.l.b16 %v181
  %v315 = vunpack.c.l.b16 %v182
  %v316 = vunpack.c.l.b16 %v183
  %v317 = vunpack.c.l.b16 %v184
  %v318 = vunpack.c.l.b16 %v185
  %v319 = vunpack.c.l.b16 %v186
  %v320 = vunpack.c.l.b16 %v187
  %v321 = vunpack.c.l.b16 %v188
  %v322 = vunpack.c.l.b16 %v189
  %v323 = vunpack.c.l.b16 %v190
  %v324 = vunpack.c.l.b16 %v191
  %v325 = vunpack.c.l.b16 %v192
  %v326 = vunpack.c.l.b16 %v193
  %v327 = vunpack.c.l.b16 %v194
  %v328 = vunpack.c.l.b16 %v195
  %v329 = vunpack.c.l.b16 %v196
  %v330 = vunpack.c.l.b16 %v197
  %v331 = vunpack.c.l.b16 %v198
  %v332 = vunpack.c.l.b16 %v199
  %v333 = vunpack.c.l.b16 %v200
  %v334 = vunpack.c.l.b16 %v201
  %v335 = vunpack.c.l.b16 %v202
  %v336 = vunpack.c.l.b16 %v203
  %v337 = vunpack.c.l.b16 %v204
  %v338 = vunpack.c.l.b16 %v205
  %v339 = vunpack.c.l.b16 %v206
  %v340 = vunpack.c.l.b16 %v207
  %v341 = vunpack.c.l.b16 %v208
  %v342 = vunpack.c.l.b16 %v209
  %v343 = vunpack.c.l.b16 %v210
  %v344 = vunpack.c.l.b16 %v211
  %v345 = vunpack.c.l.b16 %v212
  %v346 = vunpack.c.l.b16 %v213
  %v347 = vunpack.c.l.b16 %v214
  %v348 = vunpack.c.l.b16 %v215
  %v349 = vunpack.c.l.b16 %v216
  %v350 = vunpack.c.l.b16 %v217
  %v351 = vpack.c.b16 %v288, %v287
  %v352 = vpack.c.b16 %v290, %v289
  %v353 = vpack.c.b16 %v292, %v291
  %v354 = vpack.c.b16 %v294, %v293
  %v355 = vpack.c.b16 %v296, %v295
  %v356 = vpack.c.b16 %v298, %v297
  %v357 = vpack.c.b16 %v300, %v299
  %v358 = vpack.c.b16 %v302, %v301
  %v359 = vpack.c.b16 %v304, %v303
  %v360 = vpack.c.b16 %v306, %v305
  %v361 = vpack.c.b16 %v308, %v307
  %v362 = vpack.c.b16 %v310, %v309
  %v363 = vpack.c.b16 %v312, %v311
  %v364 = vpack.c.b16 %v314, %v313
  %v365 = vpack.c.b16 %v316, %v315
  %v366 = vpack.c.b16 %v318, %v317
  %v367 = vpack.c.b16 %v320, %v319
  %v368 = vpack.c.b16 %v322, %v321
  %v369 = vpack.c.b16 %v324, %v323
  %v370 = vpack.c.b16 %v326, %v325
  %v371 = vpack.c.b16 %v328, %v327
  %v372 = vpack.c.b16 %v330, %v329
  %v373 = vpack.c.b16 %v332, %v331
  %v374 = vpack.c.b16 %v334, %v333
  %v375 = vpack.c.b16 %v336, %v335
  %v376 = vpack.c.b16 %v338, %v337
  %v377 = vpack.c.b16 %v340, %v339
  %v378 = vpack.c.b16 %v342, %v341
  %v379 = vpack.c.b16 %v344, %v343
  %v380 = vpack.c.b16 %v346, %v345
  %v381 = vpack.c.b16 %v348, %v347
  %v382 = vpack.c.b16 %v350, %v349
  %v388 = vunpack.c.l.b16 %v218
  %v389 = vunpack.c.l.b16 %v219
  %v390 = vunpack.c.l.b16 %v220
  %v391 = vunpack.c.l.b16 %v221
  %v392 = vunpack.c.l.b16 %v222
  %v393 = vpack.c.b16 %v389, %v388
  %v394 = vpack.c.b16 %v391, %v390
  %v395 = vpack.c.b16 %v392, %v392
  %vm398 = vcmask 293888
  %v400 = vsel %vm398, %v351, 0
  %v403 = vsel %vm398, %v352, 0
  %v406 = vsel %vm398, %v353, 0
  %v409 = vsel %vm398, %v354, 0
  %v412 = vsel %vm398, %v355, 0
  %v415 = vsel %vm398, %v356, 0
  %v418 = vsel %vm398, %v357, 0
  %v421 = vsel %vm398, %v358, 0
  %v424 = vsel %vm398, %v359, 0
  %v427 = vsel %vm398, %v360, 0
  %v430 = vsel %vm398, %v361, 0
  %v433 = vsel %vm398, %v362, 0
  %v436 = vsel %vm398, %v363, 0
  %v439 = vsel %vm398, %v364, 0
  %v442 = vsel %vm398, %v365, 0
  %v445 = vsel %vm398, %v366, 0
  %v448 = vsel %vm398, %v367, 0
  %v451 = vsel %vm398, %v368, 0
  %v454 = vsel %vm398, %v369, 0
  %v457 = vsel %vm398, %v370, 0
  %v460 = vsel %vm398, %v371, 0
  %v463 = vsel %vm398, %v372, 0
  %v466 = vsel %vm398, %v373, 0
  %v469 = vsel %vm398, %v374, 0
  %v472 = vsel %vm398, %v375, 0
  %v475 = vsel %vm398, %v376, 0
  %v478 = vsel %vm398, %v377, 0
  %v481 = vsel %vm398, %v378, 0
  %v484 = vsel %vm398, %v379, 0
  %v487 = vsel %vm398, %v380, 0
  %v490 = vsel %vm398, %v381, 0
  %v493 = vsel %vm398, %v382, 0
  %vm495 = vcmask 1041408
  %v497 = vsel %vm495, %v395, 0
  %499 = vmatpush.bf16.msra.mxu0 0
  %500 = vmatpush.bf16.msra.mxu0 0
  %501 = vmatpush.bf16.msra.mxu0 0
  %502 = vmatpush.bf16.msra.mxu0 0
  %503 = vmatpush.bf16.msra.mxu0 0
  %504 = vmatpush.bf16.msra.mxu0 %v497
  %505 = vmatpush.bf16.msra.mxu0 %v394
  %506 = vmatpush.bf16.msra.mxu0 %v393
  %507 = vmatmul.bf16.gmra.mxu0 %v400
  %v508 = vpop.f32.mrf.mxu0
  %v509 = vadd.f32 0.0, %v508
  %v510 = vpop.f32.mrf.mxu0
  %v511 = vadd.f32 0.0, %v510
  %512 = vmatmul.bf16.gmra.mxu0 %v403
  %v513 = vpop.f32.mrf.mxu0
  %v514 = vadd.f32 0.0, %v513
  %v515 = vpop.f32.mrf.mxu0
  %v516 = vadd.f32 0.0, %v515
  %517 = vmatmul.bf16.gmra.mxu0 %v406
  %v518 = vpop.f32.mrf.mxu0
  %v519 = vadd.f32 0.0, %v518
  %v520 = vpop.f32.mrf.mxu0
  %v521 = vadd.f32 0.0, %v520
  %522 = vmatmul.bf16.gmra.mxu0 %v409
  %v523 = vpop.f32.mrf.mxu0
  %v524 = vadd.f32 0.0, %v523
  %v525 = vpop.f32.mrf.mxu0
  %v526 = vadd.f32 0.0, %v525
  %527 = vmatmul.bf16.gmra.mxu0 %v412
  %v528 = vpop.f32.mrf.mxu0
  %v529 = vadd.f32 0.0, %v528
  %v530 = vpop.f32.mrf.mxu0
  %v531 = vadd.f32 0.0, %v530
  %532 = vmatmul.bf16.gmra.mxu0 %v415
  %v533 = vpop.f32.mrf.mxu0
  %v534 = vadd.f32 0.0, %v533
  %v535 = vpop.f32.mrf.mxu0
  %v536 = vadd.f32 0.0, %v535
  %537 = vmatmul.bf16.gmra.mxu0 %v418
  %v538 = vpop.f32.mrf.mxu0
  %v539 = vadd.f32 0.0, %v538
  %v540 = vpop.f32.mrf.mxu0
  %v541 = vadd.f32 0.0, %v540
  %542 = vmatmul.bf16.gmra.mxu0 %v421
  %v543 = vpop.f32.mrf.mxu0
  %v544 = vadd.f32 0.0, %v543
  %v545 = vpop.f32.mrf.mxu0
  %v546 = vadd.f32 0.0, %v545
  %547 = vmatmul.bf16.gmra.mxu0 %v424
  %v548 = vpop.f32.mrf.mxu0
  %v549 = vadd.f32 0.0, %v548
  %v550 = vpop.f32.mrf.mxu0
  %v551 = vadd.f32 0.0, %v550
  %552 = vmatmul.bf16.gmra.mxu0 %v427
  %v553 = vpop.f32.mrf.mxu0
  %v554 = vadd.f32 0.0, %v553
  %v555 = vpop.f32.mrf.mxu0
  %v556 = vadd.f32 0.0, %v555
  %557 = vmatmul.bf16.gmra.mxu0 %v430
  %v558 = vpop.f32.mrf.mxu0
  %v559 = vadd.f32 0.0, %v558
  %v560 = vpop.f32.mrf.mxu0
  %v561 = vadd.f32 0.0, %v560
  %562 = vmatmul.bf16.gmra.mxu0 %v433
  %v563 = vpop.f32.mrf.mxu0
  %v564 = vadd.f32 0.0, %v563
  %v565 = vpop.f32.mrf.mxu0
  %v566 = vadd.f32 0.0, %v565
  %567 = vmatmul.bf16.gmra.mxu0 %v436
  %v568 = vpop.f32.mrf.mxu0
  %v569 = vadd.f32 0.0, %v568
  %v570 = vpop.f32.mrf.mxu0
  %v571 = vadd.f32 0.0, %v570
  %572 = vmatmul.bf16.gmra.mxu0 %v439
  %v573 = vpop.f32.mrf.mxu0
  %v574 = vadd.f32 0.0, %v573
  %v575 = vpop.f32.mrf.mxu0
  %v576 = vadd.f32 0.0, %v575
  %577 = vmatmul.bf16.gmra.mxu0 %v442
  %v578 = vpop.f32.mrf.mxu0
  %v579 = vadd.f32 0.0, %v578
  %v580 = vpop.f32.mrf.mxu0
  %v581 = vadd.f32 0.0, %v580
  %582 = vmatmul.bf16.gmra.mxu0 %v445
  %v583 = vpop.f32.mrf.mxu0
  %v584 = vadd.f32 0.0, %v583
  %v585 = vpop.f32.mrf.mxu0
  %v586 = vadd.f32 0.0, %v585
  %587 = vmatmul.bf16.gmra.mxu0 %v448
  %v588 = vpop.f32.mrf.mxu0
  %v589 = vadd.f32 0.0, %v588
  %v590 = vpop.f32.mrf.mxu0
  %v591 = vadd.f32 0.0, %v590
  %592 = vmatmul.bf16.gmra.mxu0 %v451
  %v593 = vpop.f32.mrf.mxu0
  %v594 = vadd.f32 0.0, %v593
  %v595 = vpop.f32.mrf.mxu0
  %v596 = vadd.f32 0.0, %v595
  %597 = vmatmul.bf16.gmra.mxu0 %v454
  %v598 = vpop.f32.mrf.mxu0
  %v599 = vadd.f32 0.0, %v598
  %v600 = vpop.f32.mrf.mxu0
  %v601 = vadd.f32 0.0, %v600
  %602 = vmatmul.bf16.gmra.mxu0 %v457
  %v603 = vpop.f32.mrf.mxu0
  %v604 = vadd.f32 0.0, %v603
  %v605 = vpop.f32.mrf.mxu0
  %v606 = vadd.f32 0.0, %v605
  %607 = vmatmul.bf16.gmra.mxu0 %v460
  %v608 = vpop.f32.mrf.mxu0
  %v609 = vadd.f32 0.0, %v608
  %v610 = vpop.f32.mrf.mxu0
  %v611 = vadd.f32 0.0, %v610
  %612 = vmatmul.bf16.gmra.mxu0 %v463
  %v613 = vpop.f32.mrf.mxu0
  %v614 = vadd.f32 0.0, %v613
  %v615 = vpop.f32.mrf.mxu0
  %v616 = vadd.f32 0.0, %v615
  %617 = vmatmul.bf16.gmra.mxu0 %v466
  %v618 = vpop.f32.mrf.mxu0
  %v619 = vadd.f32 0.0, %v618
  %v620 = vpop.f32.mrf.mxu0
  %v621 = vadd.f32 0.0, %v620
  %622 = vmatmul.bf16.gmra.mxu0 %v469
  %v623 = vpop.f32.mrf.mxu0
  %v624 = vadd.f32 0.0, %v623
  %v625 = vpop.f32.mrf.mxu0
  %v626 = vadd.f32 0.0, %v625
  %627 = vmatmul.bf16.gmra.mxu0 %v472
  %v628 = vpop.f32.mrf.mxu0
  %v629 = vadd.f32 0.0, %v628
  %v630 = vpop.f32.mrf.mxu0
  %v631 = vadd.f32 0.0, %v630
  %632 = vmatmul.bf16.gmra.mxu0 %v475
  %v633 = vpop.f32.mrf.mxu0
  %v634 = vadd.f32 0.0, %v633
  %v635 = vpop.f32.mrf.mxu0
  %v636 = vadd.f32 0.0, %v635
  %637 = vmatmul.bf16.gmra.mxu0 %v478
  %v638 = vpop.f32.mrf.mxu0
  %v639 = vadd.f32 0.0, %v638
  %v640 = vpop.f32.mrf.mxu0
  %v641 = vadd.f32 0.0, %v640
  %642 = vmatmul.bf16.gmra.mxu0 %v481
  %v643 = vpop.f32.mrf.mxu0
  %v644 = vadd.f32 0.0, %v643
  %v645 = vpop.f32.mrf.mxu0
  %v646 = vadd.f32 0.0, %v645
  %647 = vmatmul.bf16.gmra.mxu0 %v484
  %v648 = vpop.f32.mrf.mxu0
  %v649 = vadd.f32 0.0, %v648
  %v650 = vpop.f32.mrf.mxu0
  %v651 = vadd.f32 0.0, %v650
  %652 = vmatmul.bf16.gmra.mxu0 %v487
  %v653 = vpop.f32.mrf.mxu0
  %v654 = vadd.f32 0.0, %v653
  %v655 = vpop.f32.mrf.mxu0
  %v656 = vadd.f32 0.0, %v655
  %657 = vmatmul.bf16.gmra.mxu0 %v490
  %v658 = vpop.f32.mrf.mxu0
  %v659 = vadd.f32 0.0, %v658
  %v660 = vpop.f32.mrf.mxu0
  %v661 = vadd.f32 0.0, %v660
  %662 = vmatmul.bf16.gmra.mxu0 %v493
  %v663 = vpop.f32.mrf.mxu0
  %v664 = vadd.f32 0.0, %v663
  %v665 = vpop.f32.mrf.mxu0
  %v666 = vadd.f32 0.0, %v665
  %667 = vdwg.mxu0
  %v668 = vadd.f32 %v90, %v509
  %v669 = vadd.f32 %v91, %v511
  %v670 = vadd.f32 %v92, %v514
  %v671 = vadd.f32 %v93, %v516
  %v672 = vadd.f32 %v94, %v519
  %v673 = vadd.f32 %v95, %v521
  %v674 = vadd.f32 %v96, %v524
  %v675 = vadd.f32 %v97, %v526
  %v676 = vadd.f32 %v98, %v529
  %v677 = vadd.f32 %v99, %v531
  %v678 = vadd.f32 %v100, %v534
  %v679 = vadd.f32 %v101, %v536
  %v680 = vadd.f32 %v102, %v539
  %v681 = vadd.f32 %v103, %v541
  %v682 = vadd.f32 %v104, %v544
  %v683 = vadd.f32 %v105, %v546
  %v684 = vadd.f32 %v106, %v549
  %v685 = vadd.f32 %v107, %v551
  %v686 = vadd.f32 %v108, %v554
  %v687 = vadd.f32 %v109, %v556
  %v688 = vadd.f32 %v110, %v559
  %v689 = vadd.f32 %v111, %v561
  %v690 = vadd.f32 %v112, %v564
  %v691 = vadd.f32 %v113, %v566
  %v692 = vadd.f32 %v114, %v569
  %v693 = vadd.f32 %v115, %v571
  %v694 = vadd.f32 %v116, %v574
  %v695 = vadd.f32 %v117, %v576
  %v696 = vadd.f32 %v118, %v579
  %v697 = vadd.f32 %v119, %v581
  %v698 = vadd.f32 %v120, %v584
  %v699 = vadd.f32 %v121, %v586
  %v700 = vadd.f32 %v122, %v589
  %v701 = vadd.f32 %v123, %v591
  %v702 = vadd.f32 %v124, %v594
  %v703 = vadd.f32 %v125, %v596
  %v704 = vadd.f32 %v126, %v599
  %v705 = vadd.f32 %v127, %v601
  %v706 = vadd.f32 %v128, %v604
  %v707 = vadd.f32 %v129, %v606
  %v708 = vadd.f32 %v130, %v609
  %v709 = vadd.f32 %v131, %v611
  %v710 = vadd.f32 %v132, %v614
  %v711 = vadd.f32 %v133, %v616
  %v712 = vadd.f32 %v134, %v619
  %v713 = vadd.f32 %v135, %v621
  %v714 = vadd.f32 %v136, %v624
  %v715 = vadd.f32 %v137, %v626
  %v716 = vadd.f32 %v138, %v629
  %v717 = vadd.f32 %v139, %v631
  %v718 = vadd.f32 %v140, %v634
  %v719 = vadd.f32 %v141, %v636
  %v720 = vadd.f32 %v142, %v639
  %v721 = vadd.f32 %v143, %v641
  %v722 = vadd.f32 %v144, %v644
  %v723 = vadd.f32 %v145, %v646
  %v724 = vadd.f32 %v146, %v649
  %v725 = vadd.f32 %v147, %v651
  %v726 = vadd.f32 %v148, %v654
  %v727 = vadd.f32 %v149, %v656
  %v728 = vadd.f32 %v150, %v659
  %v729 = vadd.f32 %v151, %v661
  %v730 = vadd.f32 %v152, %v664
  %v731 = vadd.f32 %v153, %v666
  %732 = vst [vmem:[#allocation2] sm:$0xff] %v668
  %733 = vst [vmem:[#allocation2 + $0x8] sm:$0xff] %v669
  %734 = vst [vmem:[#allocation2 + $0x10] sm:$0xff] %v670
  %735 = vst [vmem:[#allocation2 + $0x18] sm:$0xff] %v671
  %736 = vst [vmem:[#allocation2 + $0x20] sm:$0xff] %v672
  %737 = vst [vmem:[#allocation2 + $0x28] sm:$0xff] %v673
  %738 = vst [vmem:[#allocation2 + $0x30] sm:$0xff] %v674
  %739 = vst [vmem:[#allocation2 + $0x38] sm:$0xff] %v675
  %740 = vst [vmem:[#allocation2 + $0x40] sm:$0xff] %v676
  %741 = vst [vmem:[#allocation2 + $0x48] sm:$0xff] %v677
  %742 = vst [vmem:[#allocation2 + $0x50] sm:$0xff] %v678
  %743 = vst [vmem:[#allocation2 + $0x58] sm:$0xff] %v679
  %744 = vst [vmem:[#allocation2 + $0x60] sm:$0xff] %v680
  %745 = vst [vmem:[#allocation2 + $0x68] sm:$0xff] %v681
  %746 = vst [vmem:[#allocation2 + $0x70] sm:$0xff] %v682
  %747 = vst [vmem:[#allocation2 + $0x78] sm:$0xff] %v683
  %748 = vst [vmem:[#allocation2 + $0x80] sm:$0xff] %v684
  %749 = vst [vmem:[#allocation2 + $0x88] sm:$0xff] %v685
  %750 = vst [vmem:[#allocation2 + $0x90] sm:$0xff] %v686
  %751 = vst [vmem:[#allocation2 + $0x98] sm:$0xff] %v687
  %752 = vst [vmem:[#allocation2 + $0xa0] sm:$0xff] %v688
  %753 = vst [vmem:[#allocation2 + $0xa8] sm:$0xff] %v689
  %754 = vst [vmem:[#allocation2 + $0xb0] sm:$0xff] %v690
  %755 = vst [vmem:[#allocation2 + $0xb8] sm:$0xff] %v691
  %756 = vst [vmem:[#allocation2 + $0xc0] sm:$0xff] %v692
  %757 = vst [vmem:[#allocation2 + $0xc8] sm:$0xff] %v693
  %758 = vst [vmem:[#allocation2 + $0xd0] sm:$0xff] %v694
  %759 = vst [vmem:[#allocation2 + $0xd8] sm:$0xff] %v695
  %760 = vst [vmem:[#allocation2 + $0xe0] sm:$0xff] %v696
  %761 = vst [vmem:[#allocation2 + $0xe8] sm:$0xff] %v697
  %762 = vst [vmem:[#allocation2 + $0xf0] sm:$0xff] %v698
  %763 = vst [vmem:[#allocation2 + $0xf8] sm:$0xff] %v699
  %764 = vst [vmem:[#allocation2 + $0x100] sm:$0xff] %v700
  %765 = vst [vmem:[#allocation2 + $0x108] sm:$0xff] %v701
  %766 = vst [vmem:[#allocation2 + $0x110] sm:$0xff] %v702
  %767 = vst [vmem:[#allocation2 + $0x118] sm:$0xff] %v703
  %768 = vst [vmem:[#allocation2 + $0x120] sm:$0xff] %v704
  %769 = vst [vmem:[#allocation2 + $0x128] sm:$0xff] %v705
  %770 = vst [vmem:[#allocation2 + $0x130] sm:$0xff] %v706
  %771 = vst [vmem:[#allocation2 + $0x138] sm:$0xff] %v707
  %772 = vst [vmem:[#allocation2 + $0x140] sm:$0xff] %v708
  %773 = vst [vmem:[#allocation2 + $0x148] sm:$0xff] %v709
  %774 = vst [vmem:[#allocation2 + $0x150] sm:$0xff] %v710
  %775 = vst [vmem:[#allocation2 + $0x158] sm:$0xff] %v711
  %776 = vst [vmem:[#allocation2 + $0x160] sm:$0xff] %v712
  %777 = vst [vmem:[#allocation2 + $0x168] sm:$0xff] %v713
  %778 = vst [vmem:[#allocation2 + $0x170] sm:$0xff] %v714
  %779 = vst [vmem:[#allocation2 + $0x178] sm:$0xff] %v715
  %780 = vst [vmem:[#allocation2 + $0x180] sm:$0xff] %v716
  %781 = vst [vmem:[#allocation2 + $0x188] sm:$0xff] %v717
  %782 = vst [vmem:[#allocation2 + $0x190] sm:$0xff] %v718
  %783 = vst [vmem:[#allocation2 + $0x198] sm:$0xff] %v719
  %784 = vst [vmem:[#allocation2 + $0x1a0] sm:$0xff] %v720
  %785 = vst [vmem:[#allocation2 + $0x1a8] sm:$0xff] %v721
  %786 = vst [vmem:[#allocation2 + $0x1b0] sm:$0xff] %v722
  %787 = vst [vmem:[#allocation2 + $0x1b8] sm:$0xff] %v723
  %788 = vst [vmem:[#allocation2 + $0x1c0] sm:$0xff] %v724
  %789 = vst [vmem:[#allocation2 + $0x1c8] sm:$0xff] %v725
  %790 = vst [vmem:[#allocation2 + $0x1d0] sm:$0xff] %v726
  %791 = vst [vmem:[#allocation2 + $0x1d8] sm:$0xff] %v727
  %792 = vst [vmem:[#allocation2 + $0x1e0] sm:$0xff] %v728
  %793 = vst [vmem:[#allocation2 + $0x1e8] sm:$0xff] %v729
  %794 = vst [vmem:[#allocation2 + $0x1f0] sm:$0xff] %v730
  %795 = vst [vmem:[#allocation2 + $0x1f8] sm:$0xff] %v731
  // Predicated region
  $region18: #{conv_down_block_forward.6} parent=0 // pred_check
    %p796 = pneg %p16
  $region19: #{conv_down_block_forward.6} parent=0 // pred_check_branch
    %798 = sbr.rel (%p796) target = $region21
  $region20: #{conv_down_block_forward.6} parent=0 // pred_region
    %v799 = vld [vmem:[#allocation2] sm:$0xff]
    %v800 = vld [vmem:[#allocation2 + $0x8] sm:$0xff]
    %v801 = vld [vmem:[#allocation2 + $0x10] sm:$0xff]
    %v802 = vld [vmem:[#allocation2 + $0x18] sm:$0xff]
    %v803 = vld [vmem:[#allocation2 + $0x20] sm:$0xff]
    %v804 = vld [vmem:[#allocation2 + $0x28] sm:$0xff]
    %v805 = vld [vmem:[#allocation2 + $0x30] sm:$0xff]
    %v806 = vld [vmem:[#allocation2 + $0x38] sm:$0xff]
    %v807 = vld [vmem:[#allocation2 + $0x40] sm:$0xff]
    %v808 = vld [vmem:[#allocation2 + $0x48] sm:$0xff]
    %v809 = vld [vmem:[#allocation2 + $0x50] sm:$0xff]
    %v810 = vld [vmem:[#allocation2 + $0x58] sm:$0xff]
    %v811 = vld [vmem:[#allocation2 + $0x60] sm:$0xff]
    %v812 = vld [vmem:[#allocation2 + $0x68] sm:$0xff]
    %v813 = vld [vmem:[#allocation2 + $0x70] sm:$0xff]
    %v814 = vld [vmem:[#allocation2 + $0x78] sm:$0xff]
    %v815 = vld [vmem:[#allocation2 + $0x80] sm:$0xff]
    %v816 = vld [vmem:[#allocation2 + $0x88] sm:$0xff]
    %v817 = vld [vmem:[#allocation2 + $0x90] sm:$0xff]
    %v818 = vld [vmem:[#allocation2 + $0x98] sm:$0xff]
    %v819 = vld [vmem:[#allocation2 + $0xa0] sm:$0xff]
    %v820 = vld [vmem:[#allocation2 + $0xa8] sm:$0xff]
    %v821 = vld [vmem:[#allocation2 + $0xb0] sm:$0xff]
    %v822 = vld [vmem:[#allocation2 + $0xb8] sm:$0xff]
    %v823 = vld [vmem:[#allocation2 + $0xc0] sm:$0xff]
    %v824 = vld [vmem:[#allocation2 + $0xc8] sm:$0xff]
    %v825 = vld [vmem:[#allocation2 + $0xd0] sm:$0xff]
    %v826 = vld [vmem:[#allocation2 + $0xd8] sm:$0xff]
    %v827 = vld [vmem:[#allocation2 + $0xe0] sm:$0xff]
    %v828 = vld [vmem:[#allocation2 + $0xe8] sm:$0xff]
    %v829 = vld [vmem:[#allocation2 + $0xf0] sm:$0xff]
    %v830 = vld [vmem:[#allocation2 + $0xf8] sm:$0xff]
    %v831 = vld [vmem:[#allocation2 + $0x100] sm:$0xff]
    %v832 = vld [vmem:[#allocation2 + $0x108] sm:$0xff]
    %v833 = vld [vmem:[#allocation2 + $0x110] sm:$0xff]
    %v834 = vld [vmem:[#allocation2 + $0x118] sm:$0xff]
    %v835 = vld [vmem:[#allocation2 + $0x120] sm:$0xff]
    %v836 = vld [vmem:[#allocation2 + $0x128] sm:$0xff]
    %v837 = vld [vmem:[#allocation2 + $0x130] sm:$0xff]
    %v838 = vld [vmem:[#allocation2 + $0x138] sm:$0xff]
    %v839 = vld [vmem:[#allocation2 + $0x140] sm:$0xff]
    %v840 = vld [vmem:[#allocation2 + $0x148] sm:$0xff]
    %v841 = vld [vmem:[#allocation2 + $0x150] sm:$0xff]
    %v842 = vld [vmem:[#allocation2 + $0x158] sm:$0xff]
    %v843 = vld [vmem:[#allocation2 + $0x160] sm:$0xff]
    %v844 = vld [vmem:[#allocation2 + $0x168] sm:$0xff]
    %v845 = vld [vmem:[#allocation2 + $0x170] sm:$0xff]
    %v846 = vld [vmem:[#allocation2 + $0x178] sm:$0xff]
    %v847 = vld [vmem:[#allocation2 + $0x180] sm:$0xff]
    %v848 = vld [vmem:[#allocation2 + $0x188] sm:$0xff]
    %v849 = vld [vmem:[#allocation2 + $0x190] sm:$0xff]
    %v850 = vld [vmem:[#allocation2 + $0x198] sm:$0xff]
    %v851 = vld [vmem:[#allocation2 + $0x1a0] sm:$0xff]
    %v852 = vld [vmem:[#allocation2 + $0x1a8] sm:$0xff]
    %v853 = vld [vmem:[#allocation2 + $0x1b0] sm:$0xff]
    %v854 = vld [vmem:[#allocation2 + $0x1b8] sm:$0xff]
    %v855 = vld [vmem:[#allocation2 + $0x1c0] sm:$0xff]
    %v856 = vld [vmem:[#allocation2 + $0x1c8] sm:$0xff]
    %v857 = vld [vmem:[#allocation2 + $0x1d0] sm:$0xff]
    %v858 = vld [vmem:[#allocation2 + $0x1d8] sm:$0xff]
    %v859 = vld [vmem:[#allocation2 + $0x1e0] sm:$0xff]
    %v860 = vld [vmem:[#allocation2 + $0x1e8] sm:$0xff]
    %v861 = vld [vmem:[#allocation2 + $0x1f0] sm:$0xff]
    %v862 = vld [vmem:[#allocation2 + $0x1f8] sm:$0xff]
    %863 = vst [vmem:[%s2] sm:$0xff] %v799
    %864 = vst [vmem:[%s2 + $0x8] sm:$0xff] %v800
    %865 = vst [vmem:[%s2 + $0x10] sm:$0xff] %v801
    %866 = vst [vmem:[%s2 + $0x18] sm:$0xff] %v802
    %867 = vst [vmem:[%s2 + $0x20] sm:$0xff] %v803
    %868 = vst [vmem:[%s2 + $0x28] sm:$0xff] %v804
    %869 = vst [vmem:[%s2 + $0x30] sm:$0xff] %v805
    %870 = vst [vmem:[%s2 + $0x38] sm:$0xff] %v806
    %871 = vst [vmem:[%s2 + $0x40] sm:$0xff] %v807
    %872 = vst [vmem:[%s2 + $0x48] sm:$0xff] %v808
    %873 = vst [vmem:[%s2 + $0x50] sm:$0xff] %v809
    %874 = vst [vmem:[%s2 + $0x58] sm:$0xff] %v810
    %875 = vst [vmem:[%s2 + $0x60] sm:$0xff] %v811
    %876 = vst [vmem:[%s2 + $0x68] sm:$0xff] %v812
    %877 = vst [vmem:[%s2 + $0x70] sm:$0xff] %v813
    %878 = vst [vmem:[%s2 + $0x78] sm:$0xff] %v814
    %879 = vst [vmem:[%s2 + $0x80] sm:$0xff] %v815
    %880 = vst [vmem:[%s2 + $0x88] sm:$0xff] %v816
    %881 = vst [vmem:[%s2 + $0x90] sm:$0xff] %v817
    %882 = vst [vmem:[%s2 + $0x98] sm:$0xff] %v818
    %883 = vst [vmem:[%s2 + $0xa0] sm:$0xff] %v819
    %884 = vst [vmem:[%s2 + $0xa8] sm:$0xff] %v820
    %885 = vst [vmem:[%s2 + $0xb0] sm:$0xff] %v821
    %886 = vst [vmem:[%s2 + $0xb8] sm:$0xff] %v822
    %887 = vst [vmem:[%s2 + $0xc0] sm:$0xff] %v823
    %888 = vst [vmem:[%s2 + $0xc8] sm:$0xff] %v824
    %889 = vst [vmem:[%s2 + $0xd0] sm:$0xff] %v825
    %890 = vst [vmem:[%s2 + $0xd8] sm:$0xff] %v826
    %891 = vst [vmem:[%s2 + $0xe0] sm:$0xff] %v827
    %892 = vst [vmem:[%s2 + $0xe8] sm:$0xff] %v828
    %893 = vst [vmem:[%s2 + $0xf0] sm:$0xff] %v829
    %894 = vst [vmem:[%s2 + $0xf8] sm:$0xff] %v830
    %895 = vst [vmem:[%s2 + $0x100] sm:$0xff] %v831
    %896 = vst [vmem:[%s2 + $0x108] sm:$0xff] %v832
    %897 = vst [vmem:[%s2 + $0x110] sm:$0xff] %v833
    %898 = vst [vmem:[%s2 + $0x118] sm:$0xff] %v834
    %899 = vst [vmem:[%s2 + $0x120] sm:$0xff] %v835
    %900 = vst [vmem:[%s2 + $0x128] sm:$0xff] %v836
    %901 = vst [vmem:[%s2 + $0x130] sm:$0xff] %v837
    %902 = vst [vmem:[%s2 + $0x138] sm:$0xff] %v838
    %903 = vst [vmem:[%s2 + $0x140] sm:$0xff] %v839
    %904 = vst [vmem:[%s2 + $0x148] sm:$0xff] %v840
    %905 = vst [vmem:[%s2 + $0x150] sm:$0xff] %v841
    %906 = vst [vmem:[%s2 + $0x158] sm:$0xff] %v842
    %907 = vst [vmem:[%s2 + $0x160] sm:$0xff] %v843
    %908 = vst [vmem:[%s2 + $0x168] sm:$0xff] %v844
    %909 = vst [vmem:[%s2 + $0x170] sm:$0xff] %v845
    %910 = vst [vmem:[%s2 + $0x178] sm:$0xff] %v846
    %911 = vst [vmem:[%s2 + $0x180] sm:$0xff] %v847
    %912 = vst [vmem:[%s2 + $0x188] sm:$0xff] %v848
    %913 = vst [vmem:[%s2 + $0x190] sm:$0xff] %v849
    %914 = vst [vmem:[%s2 + $0x198] sm:$0xff] %v850
    %915 = vst [vmem:[%s2 + $0x1a0] sm:$0xff] %v851
    %916 = vst [vmem:[%s2 + $0x1a8] sm:$0xff] %v852
    %917 = vst [vmem:[%s2 + $0x1b0] sm:$0xff] %v853
    %918 = vst [vmem:[%s2 + $0x1b8] sm:$0xff] %v854
    %919 = vst [vmem:[%s2 + $0x1c0] sm:$0xff] %v855
    %920 = vst [vmem:[%s2 + $0x1c8] sm:$0xff] %v856
    %921 = vst [vmem:[%s2 + $0x1d0] sm:$0xff] %v857
    %922 = vst [vmem:[%s2 + $0x1d8] sm:$0xff] %v858
    %923 = vst [vmem:[%s2 + $0x1e0] sm:$0xff] %v859
    %924 = vst [vmem:[%s2 + $0x1e8] sm:$0xff] %v860
    %925 = vst [vmem:[%s2 + $0x1f0] sm:$0xff] %v861
    %926 = vst [vmem:[%s2 + $0x1f8] sm:$0xff] %v862
    %v927 = vld [vmem:[%s3] sm:$0x1]
    %v928 = vadd.f32 %v799, %v800
    %v929 = vadd.f32 %v928, %v801
    %v930 = vadd.f32 %v929, %v802
    %v931 = vadd.f32 %v930, %v803
    %v932 = vadd.f32 %v931, %v804
    %v933 = vadd.f32 %v932, %v805
    %v934 = vadd.f32 %v933, %v806
    %v935 = vadd.f32 %v934, %v807
    %v936 = vadd.f32 %v935, %v808
    %v937 = vadd.f32 %v936, %v809
    %v938 = vadd.f32 %v937, %v810
    %v939 = vadd.f32 %v938, %v811
    %v940 = vadd.f32 %v939, %v812
    %v941 = vadd.f32 %v940, %v813
    %v942 = vadd.f32 %v941, %v814
    %v943 = vadd.f32 %v942, %v815
    %v944 = vadd.f32 %v943, %v816
    %v945 = vadd.f32 %v944, %v817
    %v946 = vadd.f32 %v945, %v818
    %v947 = vadd.f32 %v946, %v819
    %v948 = vadd.f32 %v947, %v820
    %v949 = vadd.f32 %v948, %v821
    %v950 = vadd.f32 %v949, %v822
    %v951 = vadd.f32 %v950, %v823
    %v952 = vadd.f32 %v951, %v824
    %v953 = vadd.f32 %v952, %v825
    %v954 = vadd.f32 %v953, %v826
    %v955 = vadd.f32 %v954, %v827
    %v956 = vadd.f32 %v955, %v828
    %v957 = vadd.f32 %v956, %v829
    %v958 = vadd.f32 %v957, %v830
    %v959 = vadd.f32 %v958, %v831
    %v960 = vadd.f32 %v959, %v832
    %v961 = vadd.f32 %v960, %v833
    %v962 = vadd.f32 %v961, %v834
    %v963 = vadd.f32 %v962, %v835
    %v964 = vadd.f32 %v963, %v836
    %v965 = vadd.f32 %v964, %v837
    %v966 = vadd.f32 %v965, %v838
    %v967 = vadd.f32 %v966, %v839
    %v968 = vadd.f32 %v967, %v840
    %v969 = vadd.f32 %v968, %v841
    %v970 = vadd.f32 %v969, %v842
    %v971 = vadd.f32 %v970, %v843
    %v972 = vadd.f32 %v971, %v844
    %v973 = vadd.f32 %v972, %v845
    %v974 = vadd.f32 %v973, %v846
    %v975 = vadd.f32 %v974, %v847
    %v976 = vadd.f32 %v975, %v848
    %v977 = vadd.f32 %v976, %v849
    %v978 = vadd.f32 %v977, %v850
    %v979 = vadd.f32 %v978, %v851
    %v980 = vadd.f32 %v979, %v852
    %v981 = vadd.f32 %v980, %v853
    %v982 = vadd.f32 %v981, %v854
    %v983 = vadd.f32 %v982, %v855
    %v984 = vadd.f32 %v983, %v856
    %v985 = vadd.f32 %v984, %v857
    %v986 = vadd.f32 %v985, %v858
    %v987 = vadd.f32 %v986, %v859
    %v988 = vadd.f32 %v987, %v860
    %v989 = vadd.f32 %v988, %v861
    %v990 = vadd.f32 %v989, %v862
    %v991 = vrot.slane %v990, 4
    %v992 = vadd.f32 %v990, %v991
    %v993 = vrot.slane %v992, 2
    %v994 = vadd.f32 %v992, %v993
    %v995 = vrot.slane %v994, 1
    %v996 = vadd.f32 %v994, %v995
    %v997 = vadd.f32 %v927, %v996
    %998 = vst [vmem:[%s3] sm:$0x1] %v997
    %v999 = vld [vmem:[%s4] sm:$0x1]
    %v1000 = vmul.f32 %v799, %v799
    %v1001 = vmul.f32 %v800, %v800
    %v1002 = vmul.f32 %v801, %v801
    %v1003 = vmul.f32 %v802, %v802
    %v1004 = vmul.f32 %v803, %v803
    %v1005 = vmul.f32 %v804, %v804
    %v1006 = vmul.f32 %v805, %v805
    %v1007 = vmul.f32 %v806, %v806
    %v1008 = vmul.f32 %v807, %v807
    %v1009 = vmul.f32 %v808, %v808
    %v1010 = vmul.f32 %v809, %v809
    %v1011 = vmul.f32 %v810, %v810
    %v1012 = vmul.f32 %v811, %v811
    %v1013 = vmul.f32 %v812, %v812
    %v1014 = vmul.f32 %v813, %v813
    %v1015 = vmul.f32 %v814, %v814
    %v1016 = vmul.f32 %v815, %v815
    %v1017 = vmul.f32 %v816, %v816
    %v1018 = vmul.f32 %v817, %v817
    %v1019 = vmul.f32 %v818, %v818
    %v1020 = vmul.f32 %v819, %v819
    %v1021 = vmul.f32 %v820, %v820
    %v1022 = vmul.f32 %v821, %v821
    %v1023 = vmul.f32 %v822, %v822
    %v1024 = vmul.f32 %v823, %v823
    %v1025 = vmul.f32 %v824, %v824
    %v1026 = vmul.f32 %v825, %v825
    %v1027 = vmul.f32 %v826, %v826
    %v1028 = vmul.f32 %v827, %v827
    %v1029 = vmul.f32 %v828, %v828
    %v1030 = vmul.f32 %v829, %v829
    %v1031 = vmul.f32 %v830, %v830
    %v1032 = vmul.f32 %v831, %v831
    %v1033 = vmul.f32 %v832, %v832
    %v1034 = vmul.f32 %v833, %v833
    %v1035 = vmul.f32 %v834, %v834
    %v1036 = vmul.f32 %v835, %v835
    %v1037 = vmul.f32 %v836, %v836
    %v1038 = vmul.f32 %v837, %v837
    %v1039 = vmul.f32 %v838, %v838
    %v1040 = vmul.f32 %v839, %v839
    %v1041 = vmul.f32 %v840, %v840
    %v1042 = vmul.f32 %v841, %v841
    %v1043 = vmul.f32 %v842, %v842
    %v1044 = vmul.f32 %v843, %v843
    %v1045 = vmul.f32 %v844, %v844
    %v1046 = vmul.f32 %v845, %v845
    %v1047 = vmul.f32 %v846, %v846
    %v1048 = vmul.f32 %v847, %v847
    %v1049 = vmul.f32 %v848, %v848
    %v1050 = vmul.f32 %v849, %v849
    %v1051 = vmul.f32 %v850, %v850
    %v1052 = vmul.f32 %v851, %v851
    %v1053 = vmul.f32 %v852, %v852
    %v1054 = vmul.f32 %v853, %v853
    %v1055 = vmul.f32 %v854, %v854
    %v1056 = vmul.f32 %v855, %v855
    %v1057 = vmul.f32 %v856, %v856
    %v1058 = vmul.f32 %v857, %v857
    %v1059 = vmul.f32 %v858, %v858
    %v1060 = vmul.f32 %v859, %v859
    %v1061 = vmul.f32 %v860, %v860
    %v1062 = vmul.f32 %v861, %v861
    %v1063 = vmul.f32 %v862, %v862
    %v1064 = vadd.f32 %v1000, %v1001
    %v1065 = vadd.f32 %v1064, %v1002
    %v1066 = vadd.f32 %v1065, %v1003
    %v1067 = vadd.f32 %v1066, %v1004
    %v1068 = vadd.f32 %v1067, %v1005
    %v1069 = vadd.f32 %v1068, %v1006
    %v1070 = vadd.f32 %v1069, %v1007
    %v1071 = vadd.f32 %v1070, %v1008
    %v1072 = vadd.f32 %v1071, %v1009
    %v1073 = vadd.f32 %v1072, %v1010
    %v1074 = vadd.f32 %v1073, %v1011
    %v1075 = vadd.f32 %v1074, %v1012
    %v1076 = vadd.f32 %v1075, %v1013
    %v1077 = vadd.f32 %v1076, %v1014
    %v1078 = vadd.f32 %v1077, %v1015
    %v1079 = vadd.f32 %v1078, %v1016
    %v1080 = vadd.f32 %v1079, %v1017
    %v1081 = vadd.f32 %v1080, %v1018
    %v1082 = vadd.f32 %v1081, %v1019
    %v1083 = vadd.f32 %v1082, %v1020
    %v1084 = vadd.f32 %v1083, %v1021
    %v1085 = vadd.f32 %v1084, %v1022
    %v1086 = vadd.f32 %v1085, %v1023
    %v1087 = vadd.f32 %v1086, %v1024
    %v1088 = vadd.f32 %v1087, %v1025
    %v1089 = vadd.f32 %v1088, %v1026
    %v1090 = vadd.f32 %v1089, %v1027
    %v1091 = vadd.f32 %v1090, %v1028
    %v1092 = vadd.f32 %v1091, %v1029
    %v1093 = vadd.f32 %v1092, %v1030
    %v1094 = vadd.f32 %v1093, %v1031
    %v1095 = vadd.f32 %v1094, %v1032
    %v1096 = vadd.f32 %v1095, %v1033
    %v1097 = vadd.f32 %v1096, %v1034
    %v1098 = vadd.f32 %v1097, %v1035
    %v1099 = vadd.f32 %v1098, %v1036
    %v1100 = vadd.f32 %v1099, %v1037
    %v1101 = vadd.f32 %v1100, %v1038
    %v1102 = vadd.f32 %v1101, %v1039
    %v1103 = vadd.f32 %v1102, %v1040
    %v1104 = vadd.f32 %v1103, %v1041
    %v1105 = vadd.f32 %v1104, %v1042
    %v1106 = vadd.f32 %v1105, %v1043
    %v1107 = vadd.f32 %v1106, %v1044
    %v1108 = vadd.f32 %v1107, %v1045
    %v1109 = vadd.f32 %v1108, %v1046
    %v1110 = vadd.f32 %v1109, %v1047
    %v1111 = vadd.f32 %v1110, %v1048
    %v1112 = vadd.f32 %v1111, %v1049
    %v1113 = vadd.f32 %v1112, %v1050
    %v1114 = vadd.f32 %v1113, %v1051
    %v1115 = vadd.f32 %v1114, %v1052
    %v1116 = vadd.f32 %v1115, %v1053
    %v1117 = vadd.f32 %v1116, %v1054
    %v1118 = vadd.f32 %v1117, %v1055
    %v1119 = vadd.f32 %v1118, %v1056
    %v1120 = vadd.f32 %v1119, %v1057
    %v1121 = vadd.f32 %v1120, %v1058
    %v1122 = vadd.f32 %v1121, %v1059
    %v1123 = vadd.f32 %v1122, %v1060
    %v1124 = vadd.f32 %v1123, %v1061
    %v1125 = vadd.f32 %v1124, %v1062
    %v1126 = vadd.f32 %v1125, %v1063
    %v1127 = vrot.slane %v1126, 4
    %v1128 = vadd.f32 %v1126, %v1127
    %v1129 = vrot.slane %v1128, 2
    %v1130 = vadd.f32 %v1128, %v1129
    %v1131 = vrot.slane %v1130, 1
    %v1132 = vadd.f32 %v1130, %v1131
    %v1133 = vadd.f32 %v999, %v1132
    %1134 = vst [vmem:[%s4] sm:$0x1] %v1133
  $region21: #{conv_down_block_forward.6} parent=0 // pred_fallthru
    _
  // Predicated region
  $region22: #{conv_down_block_forward.6} parent=0 // pred_check
    _
  $region23: #{conv_down_block_forward.6} parent=0 // pred_check_branch
    %1136 = sbr.rel (0) target = $region25
  $region24: #{conv_down_block_forward.6} parent=0 // pred_region
    _
  $region25: #{conv_down_block_forward.6} parent=0 // pred_fallthru
    _
  // Predicated region
  $region26: #{conv_down_block_forward.6} parent=0 // pred_check
    _
  $region27: #{conv_down_block_forward.6} parent=0 // pred_check_branch
    %1138 = sbr.rel (0) target = $region29
  $region28: #{conv_down_block_forward.6} parent=0 // pred_region
    _
  $region29: #{conv_down_block_forward.6} parent=0 // pred_fallthru
    _
  // Predicated region
  $region30: #{conv_down_block_forward.6} parent=0 // pred_check
    _
  $region31: #{conv_down_block_forward.6} parent=0 // pred_check_branch
    %1140 = sbr.rel (0) target = $region33
  $region32: #{conv_down_block_forward.6} parent=0 // pred_region
    _
  $region33: #{conv_down_block_forward.6} parent=0 // pred_fallthru
    _
  // Predicated region
  $region34: #{conv_down_block_forward.6} parent=0 // pred_check
    _
  $region35: #{conv_down_block_forward.6} parent=0 // pred_check_branch
    %1142 = sbr.rel (0) target = $region37
  $region36: #{conv_down_block_forward.6} parent=0 // pred_region
    _
  $region37: #{conv_down_block_forward.6} parent=0 // pred_fallthru
    _
  // Predicated region
  $region38: #{conv_down_block_forward.6} parent=0 // pred_check
    _
  $region39: #{conv_down_block_forward.6} parent=0 // pred_check_branch
    %1144 = sbr.rel (0) target = $region41
  $region40: #{conv_down_block_forward.6} parent=0 // pred_region
    _
  $region41: #{conv_down_block_forward.6} parent=0 // pred_fallthru
    _
  // Predicated region
  $region42: #{conv_down_block_forward.6} parent=0 // pred_check
    _
  $region43: #{conv_down_block_forward.6} parent=0 // pred_check_branch
    %1146 = sbr.rel (0) target = $region45
  $region44: #{conv_down_block_forward.6} parent=0 // pred_region
    _
  $region45: #{conv_down_block_forward.6} parent=0 // pred_fallthru
    _

// kernel: conv_down_block_forward.8
$region0: #{conv_down_block_forward.8}
  #allocation0 [shape = 'u32[]', space=smem, size = 0x4, offset = 0x4, fixed_abs, tag = 'smem constant byte address 0x4 - core index']
  #allocation1 [shape = 'u32[72,128]{1,0:T(1,128)}', space=vmem, size = 0x9000, scoped, tag = 'internal scratch']
  #allocation2 [shape = 'f32[512,128]{1,0:T(8,128)}', space=vmem, size = 0x40000, scoped, tag = 'scratch operand']
  %s0 = inlined_call_operand.vmem [shape: bf16[512,1152], index: 0, kind: input, shape index: {}]
  %s1 = inlined_call_operand.vmem [shape: bf16[1152,128], index: 1, kind: input, shape index: {}]
  %s2 = inlined_call_operand.vmem [shape: f32[512,128], index: 2, kind: output, shape index: {0}]
  %s3 = inlined_call_operand.vmem [shape: f32[1,128], index: 3, kind: output, shape index: {1}]
  %s4 = inlined_call_operand.vmem [shape: f32[1,128], index: 4, kind: output, shape index: {2}]
  %5 = xla_tuple %s2, %s3, %s4
  %s6 = sld [smem:[#allocation0]]
  $region46: #{conv_down_block_forward.8} parent=0
    _
  %s8 = ssub.s32 1, %s6
  %s9 = scalar_select 0, %s8, %s6
  // Predicated region
  $region2: #{conv_down_block_forward.8} parent=0 // pred_check
    _
  $region3: #{conv_down_block_forward.8} parent=0 // pred_check_branch
    %11 = sbr.rel (0) target = $region5
  $region4: #{conv_down_block_forward.8} parent=0 // pred_region
    _
  $region5: #{conv_down_block_forward.8} parent=0 // pred_fallthru
    _
  // Predicated region
  $region6: #{conv_down_block_forward.8} parent=0 // pred_check
    _
  $region7: #{conv_down_block_forward.8} parent=0 // pred_check_branch
    %13 = sbr.rel (0) target = $region9
  $region8: #{conv_down_block_forward.8} parent=0 // pred_region
    _
  $region9: #{conv_down_block_forward.8} parent=0 // pred_fallthru
    _
  %p14 = scmp.eq.s32.totalorder 0, 0
  %p15 = scmp.eq.s32.totalorder 0, 0
  %p16 = pnand %p14, %p15
  %p17 = pneg %p16
  // Predicated region
  $region10: #{conv_down_block_forward.8} parent=0 // pred_check
    _
  $region11: #{conv_down_block_forward.8} parent=0 // pred_check_branch
    %19 = sbr.rel (%p16) target = $region13
  $region12: #{conv_down_block_forward.8} parent=0 // pred_region
    %20 = vst [vmem:[%s3] sm:$0x1] 0.0
    %21 = vst [vmem:[%s4] sm:$0x1] 0.0
  $region13: #{conv_down_block_forward.8} parent=0 // pred_fallthru
    _
  // Predicated region
  $region14: #{conv_down_block_forward.8} parent=0 // pred_check
    %p22 = pneg %p15
  $region15: #{conv_down_block_forward.8} parent=0 // pred_check_branch
    %24 = sbr.rel (%p22) target = $region17
  $region16: #{conv_down_block_forward.8} parent=0 // pred_region
    %25 = vst [vmem:[#allocation2] sm:$0xff] 0.0
    %26 = vst [vmem:[#allocation2 + $0x8] sm:$0xff] 0.0
    %27 = vst [vmem:[#allocation2 + $0x10] sm:$0xff] 0.0
    %28 = vst [vmem:[#allocation2 + $0x18] sm:$0xff] 0.0
    %29 = vst [vmem:[#allocation2 + $0x20] sm:$0xff] 0.0
    %30 = vst [vmem:[#allocation2 + $0x28] sm:$0xff] 0.0
    %31 = vst [vmem:[#allocation2 + $0x30] sm:$0xff] 0.0
    %32 = vst [vmem:[#allocation2 + $0x38] sm:$0xff] 0.0
    %33 = vst [vmem:[#allocation2 + $0x40] sm:$0xff] 0.0
    %34 = vst [vmem:[#allocation2 + $0x48] sm:$0xff] 0.0
    %35 = vst [vmem:[#allocation2 + $0x50] sm:$0xff] 0.0
    %36 = vst [vmem:[#allocation2 + $0x58] sm:$0xff] 0.0
    %37 = vst [vmem:[#allocation2 + $0x60] sm:$0xff] 0.0
    %38 = vst [vmem:[#allocation2 + $0x68] sm:$0xff] 0.0
    %39 = vst [vmem:[#allocation2 + $0x70] sm:$0xff] 0.0
    %40 = vst [vmem:[#allocation2 + $0x78] sm:$0xff] 0.0
    %41 = vst [vmem:[#allocation2 + $0x80] sm:$0xff] 0.0
    %42 = vst [vmem:[#allocation2 + $0x88] sm:$0xff] 0.0
    %43 = vst [vmem:[#allocation2 + $0x90] sm:$0xff] 0.0
    %44 = vst [vmem:[#allocation2 + $0x98] sm:$0xff] 0.0
    %45 = vst [vmem:[#allocation2 + $0xa0] sm:$0xff] 0.0
    %46 = vst [vmem:[#allocation2 + $0xa8] sm:$0xff] 0.0
    %47 = vst [vmem:[#allocation2 + $0xb0] sm:$0xff] 0.0
    %48 = vst [vmem:[#allocation2 + $0xb8] sm:$0xff] 0.0
    %49 = vst [vmem:[#allocation2 + $0xc0] sm:$0xff] 0.0
    %50 = vst [vmem:[#allocation2 + $0xc8] sm:$0xff] 0.0
    %51 = vst [vmem:[#allocation2 + $0xd0] sm:$0xff] 0.0
    %52 = vst [vmem:[#allocation2 + $0xd8] sm:$0xff] 0.0
    %53 = vst [vmem:[#allocation2 + $0xe0] sm:$0xff] 0.0
    %54 = vst [vmem:[#allocation2 + $0xe8] sm:$0xff] 0.0
    %55 = vst [vmem:[#allocation2 + $0xf0] sm:$0xff] 0.0
    %56 = vst [vmem:[#allocation2 + $0xf8] sm:$0xff] 0.0
    %57 = vst [vmem:[#allocation2 + $0x100] sm:$0xff] 0.0
    %58 = vst [vmem:[#allocation2 + $0x108] sm:$0xff] 0.0
    %59 = vst [vmem:[#allocation2 + $0x110] sm:$0xff] 0.0
    %60 = vst [vmem:[#allocation2 + $0x118] sm:$0xff] 0.0
    %61 = vst [vmem:[#allocation2 + $0x120] sm:$0xff] 0.0
    %62 = vst [vmem:[#allocation2 + $0x128] sm:$0xff] 0.0
    %63 = vst [vmem:[#allocation2 + $0x130] sm:$0xff] 0.0
    %64 = vst [vmem:[#allocation2 + $0x138] sm:$0xff] 0.0
    %65 = vst [vmem:[#allocation2 + $0x140] sm:$0xff] 0.0
    %66 = vst [vmem:[#allocation2 + $0x148] sm:$0xff] 0.0
    %67 = vst [vmem:[#allocation2 + $0x150] sm:$0xff] 0.0
    %68 = vst [vmem:[#allocation2 + $0x158] sm:$0xff] 0.0
    %69 = vst [vmem:[#allocation2 + $0x160] sm:$0xff] 0.0
    %70 = vst [vmem:[#allocation2 + $0x168] sm:$0xff] 0.0
    %71 = vst [vmem:[#allocation2 + $0x170] sm:$0xff] 0.0
    %72 = vst [vmem:[#allocation2 + $0x178] sm:$0xff] 0.0
    %73 = vst [vmem:[#allocation2 + $0x180] sm:$0xff] 0.0
    %74 = vst [vmem:[#allocation2 + $0x188] sm:$0xff] 0.0
    %75 = vst [vmem:[#allocation2 + $0x190] sm:$0xff] 0.0
    %76 = vst [vmem:[#allocation2 + $0x198] sm:$0xff] 0.0
    %77 = vst [vmem:[#allocation2 + $0x1a0] sm:$0xff] 0.0
    %78 = vst [vmem:[#allocation2 + $0x1a8] sm:$0xff] 0.0
    %79 = vst [vmem:[#allocation2 + $0x1b0] sm:$0xff] 0.0
    %80 = vst [vmem:[#allocation2 + $0x1b8] sm:$0xff] 0.0
    %81 = vst [vmem:[#allocation2 + $0x1c0] sm:$0xff] 0.0
    %82 = vst [vmem:[#allocation2 + $0x1c8] sm:$0xff] 0.0
    %83 = vst [vmem:[#allocation2 + $0x1d0] sm:$0xff] 0.0
    %84 = vst [vmem:[#allocation2 + $0x1d8] sm:$0xff] 0.0
    %85 = vst [vmem:[#allocation2 + $0x1e0] sm:$0xff] 0.0
    %86 = vst [vmem:[#allocation2 + $0x1e8] sm:$0xff] 0.0
    %87 = vst [vmem:[#allocation2 + $0x1f0] sm:$0xff] 0.0
    %88 = vst [vmem:[#allocation2 + $0x1f8] sm:$0xff] 0.0
  $region17: #{conv_down_block_forward.8} parent=0 // pred_fallthru
    _
  %v89 = vld [vmem:[#allocation2] sm:$0xff]
  %v90 = vld [vmem:[#allocation2 + $0x8] sm:$0xff]
  %v91 = vld [vmem:[#allocation2 + $0x10] sm:$0xff]
  %v92 = vld [vmem:[#allocation2 + $0x18] sm:$0xff]
  %v93 = vld [vmem:[#allocation2 + $0x20] sm:$0xff]
  %v94 = vld [vmem:[#allocation2 + $0x28] sm:$0xff]
  %v95 = vld [vmem:[#allocation2 + $0x30] sm:$0xff]
  %v96 = vld [vmem:[#allocation2 + $0x38] sm:$0xff]
  %v97 = vld [vmem:[#allocation2 + $0x40] sm:$0xff]
  %v98 = vld [vmem:[#allocation2 + $0x48] sm:$0xff]
  %v99 = vld [vmem:[#allocation2 + $0x50] sm:$0xff]
  %v100 = vld [vmem:[#allocation2 + $0x58] sm:$0xff]
  %v101 = vld [vmem:[#allocation2 + $0x60] sm:$0xff]
  %v102 = vld [vmem:[#allocation2 + $0x68] sm:$0xff]
  %v103 = vld [vmem:[#allocation2 + $0x70] sm:$0xff]
  %v104 = vld [vmem:[#allocation2 + $0x78] sm:$0xff]
  %v105 = vld [vmem:[#allocation2 + $0x80] sm:$0xff]
  %v106 = vld [vmem:[#allocation2 + $0x88] sm:$0xff]
  %v107 = vld [vmem:[#allocation2 + $0x90] sm:$0xff]
  %v108 = vld [vmem:[#allocation2 + $0x98] sm:$0xff]
  %v109 = vld [vmem:[#allocation2 + $0xa0] sm:$0xff]
  %v110 = vld [vmem:[#allocation2 + $0xa8] sm:$0xff]
  %v111 = vld [vmem:[#allocation2 + $0xb0] sm:$0xff]
  %v112 = vld [vmem:[#allocation2 + $0xb8] sm:$0xff]
  %v113 = vld [vmem:[#allocation2 + $0xc0] sm:$0xff]
  %v114 = vld [vmem:[#allocation2 + $0xc8] sm:$0xff]
  %v115 = vld [vmem:[#allocation2 + $0xd0] sm:$0xff]
  %v116 = vld [vmem:[#allocation2 + $0xd8] sm:$0xff]
  %v117 = vld [vmem:[#allocation2 + $0xe0] sm:$0xff]
  %v118 = vld [vmem:[#allocation2 + $0xe8] sm:$0xff]
  %v119 = vld [vmem:[#allocation2 + $0xf0] sm:$0xff]
  %v120 = vld [vmem:[#allocation2 + $0xf8] sm:$0xff]
  %v121 = vld [vmem:[#allocation2 + $0x100] sm:$0xff]
  %v122 = vld [vmem:[#allocation2 + $0x108] sm:$0xff]
  %v123 = vld [vmem:[#allocation2 + $0x110] sm:$0xff]
  %v124 = vld [vmem:[#allocation2 + $0x118] sm:$0xff]
  %v125 = vld [vmem:[#allocation2 + $0x120] sm:$0xff]
  %v126 = vld [vmem:[#allocation2 + $0x128] sm:$0xff]
  %v127 = vld [vmem:[#allocation2 + $0x130] sm:$0xff]
  %v128 = vld [vmem:[#allocation2 + $0x138] sm:$0xff]
  %v129 = vld [vmem:[#allocation2 + $0x140] sm:$0xff]
  %v130 = vld [vmem:[#allocation2 + $0x148] sm:$0xff]
  %v131 = vld [vmem:[#allocation2 + $0x150] sm:$0xff]
  %v132 = vld [vmem:[#allocation2 + $0x158] sm:$0xff]
  %v133 = vld [vmem:[#allocation2 + $0x160] sm:$0xff]
  %v134 = vld [vmem:[#allocation2 + $0x168] sm:$0xff]
  %v135 = vld [vmem:[#allocation2 + $0x170] sm:$0xff]
  %v136 = vld [vmem:[#allocation2 + $0x178] sm:$0xff]
  %v137 = vld [vmem:[#allocation2 + $0x180] sm:$0xff]
  %v138 = vld [vmem:[#allocation2 + $0x188] sm:$0xff]
  %v139 = vld [vmem:[#allocation2 + $0x190] sm:$0xff]
  %v140 = vld [vmem:[#allocation2 + $0x198] sm:$0xff]
  %v141 = vld [vmem:[#allocation2 + $0x1a0] sm:$0xff]
  %v142 = vld [vmem:[#allocation2 + $0x1a8] sm:$0xff]
  %v143 = vld [vmem:[#allocation2 + $0x1b0] sm:$0xff]
  %v144 = vld [vmem:[#allocation2 + $0x1b8] sm:$0xff]
  %v145 = vld [vmem:[#allocation2 + $0x1c0] sm:$0xff]
  %v146 = vld [vmem:[#allocation2 + $0x1c8] sm:$0xff]
  %v147 = vld [vmem:[#allocation2 + $0x1d0] sm:$0xff]
  %v148 = vld [vmem:[#allocation2 + $0x1d8] sm:$0xff]
  %v149 = vld [vmem:[#allocation2 + $0x1e0] sm:$0xff]
  %v150 = vld [vmem:[#allocation2 + $0x1e8] sm:$0xff]
  %v151 = vld [vmem:[#allocation2 + $0x1f0] sm:$0xff]
  %v152 = vld [vmem:[#allocation2 + $0x1f8] sm:$0xff]
  %v153 = vld [vmem:[%s0] sm:$0xff]
  %v154 = vld [vmem:[%s0 + $0x8] sm:$0xff]
  %v155 = vld [vmem:[%s0 + $0x10] sm:$0xff]
  %v156 = vld [vmem:[%s0 + $0x18] sm:$0xff]
  %v157 = vld [vmem:[%s0 + $0x20] sm:$0xf]
  %v158 = vld [vmem:[%s0 + $0x24] sm:$0xff]
  %v159 = vld [vmem:[%s0 + $0x2c] sm:$0xff]
  %v160 = vld [vmem:[%s0 + $0x34] sm:$0xff]
  %v161 = vld [vmem:[%s0 + $0x3c] sm:$0xff]
  %v162 = vld [vmem:[%s0 + $0x44] sm:$0xf]
  %v163 = vld [vmem:[%s0 + $0x48] sm:$0xff]
  %v164 = vld [vmem:[%s0 + $0x50] sm:$0xff]
  %v165 = vld [vmem:[%s0 + $0x58] sm:$0xff]
  %v166 = vld [vmem:[%s0 + $0x60] sm:$0xff]
  %v167 = vld [vmem:[%s0 + $0x68] sm:$0xf]
  %v168 = vld [vmem:[%s0 + $0x6c] sm:$0xff]
  %v169 = vld [vmem:[%s0 + $0x74] sm:$0xff]
  %v170 = vld [vmem:[%s0 + $0x7c] sm:$0xff]
  %v171 = vld [vmem:[%s0 + $0x84] sm:$0xff]
  %v172 = vld [vmem:[%s0 + $0x8c] sm:$0xf]
  %v173 = vld [vmem:[%s0 + $0x90] sm:$0xff]
  %v174 = vld [vmem:[%s0 + $0x98] sm:$0xff]
  %v175 = vld [vmem:[%s0 + $0xa0] sm:$0xff]
  %v176 = vld [vmem:[%s0 + $0xa8] sm:$0xff]
  %v177 = vld [vmem:[%s0 + $0xb0] sm:$0xf]
  %v178 = vld [vmem:[%s0 + $0xb4] sm:$0xff]
  %v179 = vld [vmem:[%s0 + $0xbc] sm:$0xff]
  %v180 = vld [vmem:[%s0 + $0xc4] sm:$0xff]
  %v181 = vld [vmem:[%s0 + $0xcc] sm:$0xff]
  %v182 = vld [vmem:[%s0 + $0xd4] sm:$0xf]
  %v183 = vld [vmem:[%s0 + $0xd8] sm:$0xff]
  %v184 = vld [vmem:[%s0 + $0xe0] sm:$0xff]
  %v185 = vld [vmem:[%s0 + $0xe8] sm:$0xff]
  %v186 = vld [vmem:[%s0 + $0xf0] sm:$0xff]
  %v187 = vld [vmem:[%s0 + $0xf8] sm:$0xf]
  %v188 = vld [vmem:[%s0 + $0xfc] sm:$0xff]
  %v189 = vld [vmem:[%s0 + $0x104] sm:$0xff]
  %v190 = vld [vmem:[%s0 + $0x10c] sm:$0xff]
  %v191 = vld [vmem:[%s0 + $0x114] sm:$0xff]
  %v192 = vld [vmem:[%s0 + $0x11c] sm:$0xf]
  %v193 = vld [vmem:[%s0 + $0x120] sm:$0xff]
  %v194 = vld [vmem:[%s0 + $0x128] sm:$0xff]
  %v195 = vld [vmem:[%s0 + $0x130] sm:$0xff]
  %v196 = vld [vmem:[%s0 + $0x138] sm:$0xff]
  %v197 = vld [vmem:[%s0 + $0x140] sm:$0xf]
  %v198 = vld [vmem:[%s0 + $0x144] sm:$0xff]
  %v199 = vld [vmem:[%s0 + $0x14c] sm:$0xff]
  %v200 = vld [vmem:[%s0 + $0x154] sm:$0xff]
  %v201 = vld [vmem:[%s0 + $0x15c] sm:$0xff]
  %v202 = vld [vmem:[%s0 + $0x164] sm:$0xf]
  %v203 = vld [vmem:[%s0 + $0x168] sm:$0xff]
  %v204 = vld [vmem:[%s0 + $0x170] sm:$0xff]
  %v205 = vld [vmem:[%s0 + $0x178] sm:$0xff]
  %v206 = vld [vmem:[%s0 + $0x180] sm:$0xff]
  %v207 = vld [vmem:[%s0 + $0x188] sm:$0xf]
  %v208 = vld [vmem:[%s0 + $0x18c] sm:$0xff]
  %v209 = vld [vmem:[%s0 + $0x194] sm:$0xff]
  %v210 = vld [vmem:[%s0 + $0x19c] sm:$0xff]
  %v211 = vld [vmem:[%s0 + $0x1a4] sm:$0xff]
  %v212 = vld [vmem:[%s0 + $0x1ac] sm:$0xf]
  %v213 = vld [vmem:[%s0 + $0x1b0] sm:$0xff]
  %v214 = vld [vmem:[%s0 + $0x1b8] sm:$0xff]
  %v215 = vld [vmem:[%s0 + $0x1c0] sm:$0xff]
  %v216 = vld [vmem:[%s0 + $0x1c8] sm:$0xff]
  %v217 = vld [vmem:[%s0 + $0x1d0] sm:$0xf]
  %v218 = vld [vmem:[%s0 + $0x1d4] sm:$0xff]
  %v219 = vld [vmem:[%s0 + $0x1dc] sm:$0xff]
  %v220 = vld [vmem:[%s0 + $0x1e4] sm:$0xff]
  %v221 = vld [vmem:[%s0 + $0x1ec] sm:$0xff]
  %v222 = vld [vmem:[%s0 + $0x1f4] sm:$0xf]
  %v223 = vld [vmem:[%s0 + $0x1f8] sm:$0xff]
  %v224 = vld [vmem:[%s0 + $0x200] sm:$0xff]
  %v225 = vld [vmem:[%s0 + $0x208] sm:$0xff]
  %v226 = vld [vmem:[%s0 + $0x210] sm:$0xff]
  %v227 = vld [vmem:[%s0 + $0x218] sm:$0xf]
  %v228 = vld [vmem:[%s0 + $0x21c] sm:$0xff]
  %v229 = vld [vmem:[%s0 + $0x224] sm:$0xff]
  %v230 = vld [vmem:[%s0 + $0x22c] sm:$0xff]
  %v231 = vld [vmem:[%s0 + $0x234] sm:$0xff]
  %v232 = vld [vmem:[%s0 + $0x23c] sm:$0xf]
  %v233 = vld [vmem:[%s0 + $0x240] sm:$0xff]
  %v234 = vld [vmem:[%s0 + $0x248] sm:$0xff]
  %v235 = vld [vmem:[%s0 + $0x250] sm:$0xff]
  %v236 = vld [vmem:[%s0 + $0x258] sm:$0xff]
  %v237 = vld [vmem:[%s0 + $0x260] sm:$0xf]
  %v238 = vld [vmem:[%s0 + $0x264] sm:$0xff]
  %v239 = vld [vmem:[%s0 + $0x26c] sm:$0xff]
  %v240 = vld [vmem:[%s0 + $0x274] sm:$0xff]
  %v241 = vld [vmem:[%s0 + $0x27c] sm:$0xff]
  %v242 = vld [vmem:[%s0 + $0x284] sm:$0xf]
  %v243 = vld [vmem:[%s0 + $0x288] sm:$0xff]
  %v244 = vld [vmem:[%s0 + $0x290] sm:$0xff]
  %v245 = vld [vmem:[%s0 + $0x298] sm:$0xff]
  %v246 = vld [vmem:[%s0 + $0x2a0] sm:$0xff]
  %v247 = vld [vmem:[%s0 + $0x2a8] sm:$0xf]
  %v248 = vld [vmem:[%s0 + $0x2ac] sm:$0xff]
  %v249 = vld [vmem:[%s0 + $0x2b4] sm:$0xff]
  %v250 = vld [vmem:[%s0 + $0x2bc] sm:$0xff]
  %v251 = vld [vmem:[%s0 + $0x2c4] sm:$0xff]
  %v252 = vld [vmem:[%s0 + $0x2cc] sm:$0xf]
  %v253 = vld [vmem:[%s0 + $0x2d0] sm:$0xff]
  %v254 = vld [vmem:[%s0 + $0x2d8] sm:$0xff]
  %v255 = vld [vmem:[%s0 + $0x2e0] sm:$0xff]
  %v256 = vld [vmem:[%s0 + $0x2e8] sm:$0xff]
  %v257 = vld [vmem:[%s0 + $0x2f0] sm:$0xf]
  %v258 = vld [vmem:[%s0 + $0x2f4] sm:$0xff]
  %v259 = vld [vmem:[%s0 + $0x2fc] sm:$0xff]
  %v260 = vld [vmem:[%s0 + $0x304] sm:$0xff]
  %v261 = vld [vmem:[%s0 + $0x30c] sm:$0xff]
  %v262 = vld [vmem:[%s0 + $0x314] sm:$0xf]
  %v263 = vld [vmem:[%s0 + $0x318] sm:$0xff]
  %v264 = vld [vmem:[%s0 + $0x320] sm:$0xff]
  %v265 = vld [vmem:[%s0 + $0x328] sm:$0xff]
  %v266 = vld [vmem:[%s0 + $0x330] sm:$0xff]
  %v267 = vld [vmem:[%s0 + $0x338] sm:$0xf]
  %v268 = vld [vmem:[%s0 + $0x33c] sm:$0xff]
  %v269 = vld [vmem:[%s0 + $0x344] sm:$0xff]
  %v270 = vld [vmem:[%s0 + $0x34c] sm:$0xff]
  %v271 = vld [vmem:[%s0 + $0x354] sm:$0xff]
  %v272 = vld [vmem:[%s0 + $0x35c] sm:$0xf]
  %v273 = vld [vmem:[%s0 + $0x360] sm:$0xff]
  %v274 = vld [vmem:[%s0 + $0x368] sm:$0xff]
  %v275 = vld [vmem:[%s0 + $0x370] sm:$0xff]
  %v276 = vld [vmem:[%s0 + $0x378] sm:$0xff]
  %v277 = vld [vmem:[%s0 + $0x380] sm:$0xf]
  %v278 = vld [vmem:[%s0 + $0x384] sm:$0xff]
  %v279 = vld [vmem:[%s0 + $0x38c] sm:$0xff]
  %v280 = vld [vmem:[%s0 + $0x394] sm:$0xff]
  %v281 = vld [vmem:[%s0 + $0x39c] sm:$0xff]
  %v282 = vld [vmem:[%s0 + $0x3a4] sm:$0xf]
  %v283 = vld [vmem:[%s0 + $0x3a8] sm:$0xff]
  %v284 = vld [vmem:[%s0 + $0x3b0] sm:$0xff]
  %v285 = vld [vmem:[%s0 + $0x3b8] sm:$0xff]
  %v286 = vld [vmem:[%s0 + $0x3c0] sm:$0xff]
  %v287 = vld [vmem:[%s0 + $0x3c8] sm:$0xf]
  %v288 = vld [vmem:[%s0 + $0x3cc] sm:$0xff]
  %v289 = vld [vmem:[%s0 + $0x3d4] sm:$0xff]
  %v290 = vld [vmem:[%s0 + $0x3dc] sm:$0xff]
  %v291 = vld [vmem:[%s0 + $0x3e4] sm:$0xff]
  %v292 = vld [vmem:[%s0 + $0x3ec] sm:$0xf]
  %v293 = vld [vmem:[%s0 + $0x3f0] sm:$0xff]
  %v294 = vld [vmem:[%s0 + $0x3f8] sm:$0xff]
  %v295 = vld [vmem:[%s0 + $0x400] sm:$0xff]
  %v296 = vld [vmem:[%s0 + $0x408] sm:$0xff]
  %v297 = vld [vmem:[%s0 + $0x410] sm:$0xf]
  %v298 = vld [vmem:[%s0 + $0x414] sm:$0xff]
  %v299 = vld [vmem:[%s0 + $0x41c] sm:$0xff]
  %v300 = vld [vmem:[%s0 + $0x424] sm:$0xff]
  %v301 = vld [vmem:[%s0 + $0x42c] sm:$0xff]
  %v302 = vld [vmem:[%s0 + $0x434] sm:$0xf]
  %v303 = vld [vmem:[%s0 + $0x438] sm:$0xff]
  %v304 = vld [vmem:[%s0 + $0x440] sm:$0xff]
  %v305 = vld [vmem:[%s0 + $0x448] sm:$0xff]
  %v306 = vld [vmem:[%s0 + $0x450] sm:$0xff]
  %v307 = vld [vmem:[%s0 + $0x458] sm:$0xf]
  %v308 = vld [vmem:[%s0 + $0x45c] sm:$0xff]
  %v309 = vld [vmem:[%s0 + $0x464] sm:$0xff]
  %v310 = vld [vmem:[%s0 + $0x46c] sm:$0xff]
  %v311 = vld [vmem:[%s0 + $0x474] sm:$0xff]
  %v312 = vld [vmem:[%s0 + $0x47c] sm:$0xf]
  %v313 = vld [vmem:[%s0 + $0x480] sm:$0xff]
  %v314 = vld [vmem:[%s0 + $0x488] sm:$0xff]
  %v315 = vld [vmem:[%s0 + $0x490] sm:$0xff]
  %v316 = vld [vmem:[%s0 + $0x498] sm:$0xff]
  %v317 = vld [vmem:[%s0 + $0x4a0] sm:$0xf]
  %v318 = vld [vmem:[%s0 + $0x4a4] sm:$0xff]
  %v319 = vld [vmem:[%s0 + $0x4ac] sm:$0xff]
  %v320 = vld [vmem:[%s0 + $0x4b4] sm:$0xff]
  %v321 = vld [vmem:[%s0 + $0x4bc] sm:$0xff]
  %v322 = vld [vmem:[%s0 + $0x4c4] sm:$0xf]
  %v323 = vld [vmem:[%s0 + $0x4c8] sm:$0xff]
  %v324 = vld [vmem:[%s0 + $0x4d0] sm:$0xff]
  %v325 = vld [vmem:[%s0 + $0x4d8] sm:$0xff]
  %v326 = vld [vmem:[%s0 + $0x4e0] sm:$0xff]
  %v327 = vld [vmem:[%s0 + $0x4e8] sm:$0xf]
  %v328 = vld [vmem:[%s0 + $0x4ec] sm:$0xff]
  %v329 = vld [vmem:[%s0 + $0x4f4] sm:$0xff]
  %v330 = vld [vmem:[%s0 + $0x4fc] sm:$0xff]
  %v331 = vld [vmem:[%s0 + $0x504] sm:$0xff]
  %v332 = vld [vmem:[%s0 + $0x50c] sm:$0xf]
  %v333 = vld [vmem:[%s0 + $0x510] sm:$0xff]
  %v334 = vld [vmem:[%s0 + $0x518] sm:$0xff]
  %v335 = vld [vmem:[%s0 + $0x520] sm:$0xff]
  %v336 = vld [vmem:[%s0 + $0x528] sm:$0xff]
  %v337 = vld [vmem:[%s0 + $0x530] sm:$0xf]
  %v338 = vld [vmem:[%s0 + $0x534] sm:$0xff]
  %v339 = vld [vmem:[%s0 + $0x53c] sm:$0xff]
  %v340 = vld [vmem:[%s0 + $0x544] sm:$0xff]
  %v341 = vld [vmem:[%s0 + $0x54c] sm:$0xff]
  %v342 = vld [vmem:[%s0 + $0x554] sm:$0xf]
  %v343 = vld [vmem:[%s0 + $0x558] sm:$0xff]
  %v344 = vld [vmem:[%s0 + $0x560] sm:$0xff]
  %v345 = vld [vmem:[%s0 + $0x568] sm:$0xff]
  %v346 = vld [vmem:[%s0 + $0x570] sm:$0xff]
  %v347 = vld [vmem:[%s0 + $0x578] sm:$0xf]
  %v348 = vld [vmem:[%s0 + $0x57c] sm:$0xff]
  %v349 = vld [vmem:[%s0 + $0x584] sm:$0xff]
  %v350 = vld [vmem:[%s0 + $0x58c] sm:$0xff]
  %v351 = vld [vmem:[%s0 + $0x594] sm:$0xff]
  %v352 = vld [vmem:[%s0 + $0x59c] sm:$0xf]
  %v353 = vld [vmem:[%s0 + $0x5a0] sm:$0xff]
  %v354 = vld [vmem:[%s0 + $0x5a8] sm:$0xff]
  %v355 = vld [vmem:[%s0 + $0x5b0] sm:$0xff]
  %v356 = vld [vmem:[%s0 + $0x5b8] sm:$0xff]
  %v357 = vld [vmem:[%s0 + $0x5c0] sm:$0xf]
  %v358 = vld [vmem:[%s0 + $0x5c4] sm:$0xff]
  %v359 = vld [vmem:[%s0 + $0x5cc] sm:$0xff]
  %v360 = vld [vmem:[%s0 + $0x5d4] sm:$0xff]
  %v361 = vld [vmem:[%s0 + $0x5dc] sm:$0xff]
  %v362 = vld [vmem:[%s0 + $0x5e4] sm:$0xf]
  %v363 = vld [vmem:[%s0 + $0x5e8] sm:$0xff]
  %v364 = vld [vmem:[%s0 + $0x5f0] sm:$0xff]
  %v365 = vld [vmem:[%s0 + $0x5f8] sm:$0xff]
  %v366 = vld [vmem:[%s0 + $0x600] sm:$0xff]
  %v367 = vld [vmem:[%s0 + $0x608] sm:$0xf]
  %v368 = vld [vmem:[%s0 + $0x60c] sm:$0xff]
  %v369 = vld [vmem:[%s0 + $0x614] sm:$0xff]
  %v370 = vld [vmem:[%s0 + $0x61c] sm:$0xff]
  %v371 = vld [vmem:[%s0 + $0x624] sm:$0xff]
  %v372 = vld [vmem:[%s0 + $0x62c] sm:$0xf]
  %v373 = vld [vmem:[%s0 + $0x630] sm:$0xff]
  %v374 = vld [vmem:[%s0 + $0x638] sm:$0xff]
  %v375 = vld [vmem:[%s0 + $0x640] sm:$0xff]
  %v376 = vld [vmem:[%s0 + $0x648] sm:$0xff]
  %v377 = vld [vmem:[%s0 + $0x650] sm:$0xf]
  %v378 = vld [vmem:[%s0 + $0x654] sm:$0xff]
  %v379 = vld [vmem:[%s0 + $0x65c] sm:$0xff]
  %v380 = vld [vmem:[%s0 + $0x664] sm:$0xff]
  %v381 = vld [vmem:[%s0 + $0x66c] sm:$0xff]
  %v382 = vld [vmem:[%s0 + $0x674] sm:$0xf]
  %v383 = vld [vmem:[%s0 + $0x678] sm:$0xff]
  %v384 = vld [vmem:[%s0 + $0x680] sm:$0xff]
  %v385 = vld [vmem:[%s0 + $0x688] sm:$0xff]
  %v386 = vld [vmem:[%s0 + $0x690] sm:$0xff]
  %v387 = vld [vmem:[%s0 + $0x698] sm:$0xf]
  %v388 = vld [vmem:[%s0 + $0x69c] sm:$0xff]
  %v389 = vld [vmem:[%s0 + $0x6a4] sm:$0xff]
  %v390 = vld [vmem:[%s0 + $0x6ac] sm:$0xff]
  %v391 = vld [vmem:[%s0 + $0x6b4] sm:$0xff]
  %v392 = vld [vmem:[%s0 + $0x6bc] sm:$0xf]
  %v393 = vld [vmem:[%s0 + $0x6c0] sm:$0xff]
  %v394 = vld [vmem:[%s0 + $0x6c8] sm:$0xff]
  %v395 = vld [vmem:[%s0 + $0x6d0] sm:$0xff]
  %v396 = vld [vmem:[%s0 + $0x6d8] sm:$0xff]
  %v397 = vld [vmem:[%s0 + $0x6e0] sm:$0xf]
  %v398 = vld [vmem:[%s0 + $0x6e4] sm:$0xff]
  %v399 = vld [vmem:[%s0 + $0x6ec] sm:$0xff]
  %v400 = vld [vmem:[%s0 + $0x6f4] sm:$0xff]
  %v401 = vld [vmem:[%s0 + $0x6fc] sm:$0xff]
  %v402 = vld [vmem:[%s0 + $0x704] sm:$0xf]
  %v403 = vld [vmem:[%s0 + $0x708] sm:$0xff]
  %v404 = vld [vmem:[%s0 + $0x710] sm:$0xff]
  %v405 = vld [vmem:[%s0 + $0x718] sm:$0xff]
  %v406 = vld [vmem:[%s0 + $0x720] sm:$0xff]
  %v407 = vld [vmem:[%s0 + $0x728] sm:$0xf]
  %v408 = vld [vmem:[%s0 + $0x72c] sm:$0xff]
  %v409 = vld [vmem:[%s0 + $0x734] sm:$0xff]
  %v410 = vld [vmem:[%s0 + $0x73c] sm:$0xff]
  %v411 = vld [vmem:[%s0 + $0x744] sm:$0xff]
  %v412 = vld [vmem:[%s0 + $0x74c] sm:$0xf]
  %v413 = vld [vmem:[%s0 + $0x750] sm:$0xff]
  %v414 = vld [vmem:[%s0 + $0x758] sm:$0xff]
  %v415 = vld [vmem:[%s0 + $0x760] sm:$0xff]
  %v416 = vld [vmem:[%s0 + $0x768] sm:$0xff]
  %v417 = vld [vmem:[%s0 + $0x770] sm:$0xf]
  %v418 = vld [vmem:[%s0 + $0x774] sm:$0xff]
  %v419 = vld [vmem:[%s0 + $0x77c] sm:$0xff]
  %v420 = vld [vmem:[%s0 + $0x784] sm:$0xff]
  %v421 = vld [vmem:[%s0 + $0x78c] sm:$0xff]
  %v422 = vld [vmem:[%s0 + $0x794] sm:$0xf]
  %v423 = vld [vmem:[%s0 + $0x798] sm:$0xff]
  %v424 = vld [vmem:[%s0 + $0x7a0] sm:$0xff]
  %v425 = vld [vmem:[%s0 + $0x7a8] sm:$0xff]
  %v426 = vld [vmem:[%s0 + $0x7b0] sm:$0xff]
  %v427 = vld [vmem:[%s0 + $0x7b8] sm:$0xf]
  %v428 = vld [vmem:[%s0 + $0x7bc] sm:$0xff]
  %v429 = vld [vmem:[%s0 + $0x7c4] sm:$0xff]
  %v430 = vld [vmem:[%s0 + $0x7cc] sm:$0xff]
  %v431 = vld [vmem:[%s0 + $0x7d4] sm:$0xff]
  %v432 = vld [vmem:[%s0 + $0x7dc] sm:$0xf]
  %v433 = vld [vmem:[%s0 + $0x7e0] sm:$0xff]
  %v434 = vld [vmem:[%s0 + $0x7e8] sm:$0xff]
  %v435 = vld [vmem:[%s0 + $0x7f0] sm:$0xff]
  %v436 = vld [vmem:[%s0 + $0x7f8] sm:$0xff]
  %v437 = vld [vmem:[%s0 + $0x800] sm:$0xf]
  %v438 = vld [vmem:[%s0 + $0x804] sm:$0xff]
  %v439 = vld [vmem:[%s0 + $0x80c] sm:$0xff]
  %v440 = vld [vmem:[%s0 + $0x814] sm:$0xff]
  %v441 = vld [vmem:[%s0 + $0x81c] sm:$0xff]
  %v442 = vld [vmem:[%s0 + $0x824] sm:$0xf]
  %v443 = vld [vmem:[%s0 + $0x828] sm:$0xff]
  %v444 = vld [vmem:[%s0 + $0x830] sm:$0xff]
  %v445 = vld [vmem:[%s0 + $0x838] sm:$0xff]
  %v446 = vld [vmem:[%s0 + $0x840] sm:$0xff]
  %v447 = vld [vmem:[%s0 + $0x848] sm:$0xf]
  %v448 = vld [vmem:[%s0 + $0x84c] sm:$0xff]
  %v449 = vld [vmem:[%s0 + $0x854] sm:$0xff]
  %v450 = vld [vmem:[%s0 + $0x85c] sm:$0xff]
  %v451 = vld [vmem:[%s0 + $0x864] sm:$0xff]
  %v452 = vld [vmem:[%s0 + $0x86c] sm:$0xf]
  %v453 = vld [vmem:[%s0 + $0x870] sm:$0xff]
  %v454 = vld [vmem:[%s0 + $0x878] sm:$0xff]
  %v455 = vld [vmem:[%s0 + $0x880] sm:$0xff]
  %v456 = vld [vmem:[%s0 + $0x888] sm:$0xff]
  %v457 = vld [vmem:[%s0 + $0x890] sm:$0xf]
  %v458 = vld [vmem:[%s0 + $0x894] sm:$0xff]
  %v459 = vld [vmem:[%s0 + $0x89c] sm:$0xff]
  %v460 = vld [vmem:[%s0 + $0x8a4] sm:$0xff]
  %v461 = vld [vmem:[%s0 + $0x8ac] sm:$0xff]
  %v462 = vld [vmem:[%s0 + $0x8b4] sm:$0xf]
  %v463 = vld [vmem:[%s0 + $0x8b8] sm:$0xff]
  %v464 = vld [vmem:[%s0 + $0x8c0] sm:$0xff]
  %v465 = vld [vmem:[%s0 + $0x8c8] sm:$0xff]
  %v466 = vld [vmem:[%s0 + $0x8d0] sm:$0xff]
  %v467 = vld [vmem:[%s0 + $0x8d8] sm:$0xf]
  %v468 = vld [vmem:[%s0 + $0x8dc] sm:$0xff]
  %v469 = vld [vmem:[%s0 + $0x8e4] sm:$0xff]
  %v470 = vld [vmem:[%s0 + $0x8ec] sm:$0xff]
  %v471 = vld [vmem:[%s0 + $0x8f4] sm:$0xff]
  %v472 = vld [vmem:[%s0 + $0x8fc] sm:$0xf]
  %v473 = vld [vmem:[%s1] sm:$0xf]
  %v474 = vld [vmem:[%s1 + $0x4] sm:$0xf]
  %v475 = vld [vmem:[%s1 + $0x8] sm:$0xf]
  %v476 = vld [vmem:[%s1 + $0xc] sm:$0xf]
  %v477 = vld [vmem:[%s1 + $0x10] sm:$0xf]
  %v478 = vld [vmem:[%s1 + $0x14] sm:$0xf]
  %v479 = vld [vmem:[%s1 + $0x18] sm:$0xf]
  %v480 = vld [vmem:[%s1 + $0x1c] sm:$0xf]
  %v481 = vld [vmem:[%s1 + $0x20] sm:$0xf]
  %v482 = vld [vmem:[%s1 + $0x24] sm:$0xf]
  %v483 = vld [vmem:[%s1 + $0x28] sm:$0xf]
  %v484 = vld [vmem:[%s1 + $0x2c] sm:$0xf]
  %v485 = vld [vmem:[%s1 + $0x30] sm:$0xf]
  %v486 = vld [vmem:[%s1 + $0x34] sm:$0xf]
  %v487 = vld [vmem:[%s1 + $0x38] sm:$0xf]
  %v488 = vld [vmem:[%s1 + $0x3c] sm:$0xf]
  %v489 = vld [vmem:[%s1 + $0x40] sm:$0xf]
  %v490 = vld [vmem:[%s1 + $0x44] sm:$0xf]
  %v491 = vld [vmem:[%s1 + $0x48] sm:$0xf]
  %v492 = vld [vmem:[%s1 + $0x4c] sm:$0xf]
  %v493 = vld [vmem:[%s1 + $0x50] sm:$0xf]
  %v494 = vld [vmem:[%s1 + $0x54] sm:$0xf]
  %v495 = vld [vmem:[%s1 + $0x58] sm:$0xf]
  %v496 = vld [vmem:[%s1 + $0x5c] sm:$0xf]
  %v497 = vld [vmem:[%s1 + $0x60] sm:$0xf]
  %v498 = vld [vmem:[%s1 + $0x64] sm:$0xf]
  %v499 = vld [vmem:[%s1 + $0x68] sm:$0xf]
  %v500 = vld [vmem:[%s1 + $0x6c] sm:$0xf]
  %v501 = vld [vmem:[%s1 + $0x70] sm:$0xf]
  %v502 = vld [vmem:[%s1 + $0x74] sm:$0xf]
  %v503 = vld [vmem:[%s1 + $0x78] sm:$0xf]
  %v504 = vld [vmem:[%s1 + $0x7c] sm:$0xf]
  %v505 = vld [vmem:[%s1 + $0x80] sm:$0xf]
  %v506 = vld [vmem:[%s1 + $0x84] sm:$0xf]
  %v507 = vld [vmem:[%s1 + $0x88] sm:$0xf]
  %v508 = vld [vmem:[%s1 + $0x8c] sm:$0xf]
  %v509 = vld [vmem:[%s1 + $0x90] sm:$0xf]
  %v510 = vld [vmem:[%s1 + $0x94] sm:$0xf]
  %v511 = vld [vmem:[%s1 + $0x98] sm:$0xf]
  %v512 = vld [vmem:[%s1 + $0x9c] sm:$0xf]
  %v513 = vld [vmem:[%s1 + $0xa0] sm:$0xf]
  %v514 = vld [vmem:[%s1 + $0xa4] sm:$0xf]
  %v515 = vld [vmem:[%s1 + $0xa8] sm:$0xf]
  %v516 = vld [vmem:[%s1 + $0xac] sm:$0xf]
  %v517 = vld [vmem:[%s1 + $0xb0] sm:$0xf]
  %v518 = vld [vmem:[%s1 + $0xb4] sm:$0xf]
  %v519 = vld [vmem:[%s1 + $0xb8] sm:$0xf]
  %v520 = vld [vmem:[%s1 + $0xbc] sm:$0xf]
  %v521 = vld [vmem:[%s1 + $0xc0] sm:$0xf]
  %v522 = vld [vmem:[%s1 + $0xc4] sm:$0xf]
  %v523 = vld [vmem:[%s1 + $0xc8] sm:$0xf]
  %v524 = vld [vmem:[%s1 + $0xcc] sm:$0xf]
  %v525 = vld [vmem:[%s1 + $0xd0] sm:$0xf]
  %v526 = vld [vmem:[%s1 + $0xd4] sm:$0xf]
  %v527 = vld [vmem:[%s1 + $0xd8] sm:$0xf]
  %v528 = vld [vmem:[%s1 + $0xdc] sm:$0xf]
  %v529 = vld [vmem:[%s1 + $0xe0] sm:$0xf]
  %v530 = vld [vmem:[%s1 + $0xe4] sm:$0xf]
  %v531 = vld [vmem:[%s1 + $0xe8] sm:$0xf]
  %v532 = vld [vmem:[%s1 + $0xec] sm:$0xf]
  %v533 = vld [vmem:[%s1 + $0xf0] sm:$0xf]
  %v534 = vld [vmem:[%s1 + $0xf4] sm:$0xf]
  %v535 = vld [vmem:[%s1 + $0xf8] sm:$0xf]
  %v536 = vld [vmem:[%s1 + $0xfc] sm:$0xf]
  %v537 = vld [vmem:[%s1 + $0x100] sm:$0xf]
  %v538 = vld [vmem:[%s1 + $0x104] sm:$0xf]
  %v539 = vld [vmem:[%s1 + $0x108] sm:$0xf]
  %v540 = vld [vmem:[%s1 + $0x10c] sm:$0xf]
  %v541 = vld [vmem:[%s1 + $0x110] sm:$0xf]
  %v542 = vld [vmem:[%s1 + $0x114] sm:$0xf]
  %v543 = vld [vmem:[%s1 + $0x118] sm:$0xf]
  %v544 = vld [vmem:[%s1 + $0x11c] sm:$0xf]
  %v545 = vld [vmem:[%s1 + $0x120] sm:$0xf]
  %v546 = vld [vmem:[%s1 + $0x124] sm:$0xf]
  %v547 = vld [vmem:[%s1 + $0x128] sm:$0xf]
  %v548 = vld [vmem:[%s1 + $0x12c] sm:$0xf]
  %v549 = vld [vmem:[%s1 + $0x130] sm:$0xf]
  %v550 = vld [vmem:[%s1 + $0x134] sm:$0xf]
  %v551 = vld [vmem:[%s1 + $0x138] sm:$0xf]
  %v552 = vld [vmem:[%s1 + $0x13c] sm:$0xf]
  %v553 = vld [vmem:[%s1 + $0x140] sm:$0xf]
  %v554 = vld [vmem:[%s1 + $0x144] sm:$0xf]
  %v555 = vld [vmem:[%s1 + $0x148] sm:$0xf]
  %v556 = vld [vmem:[%s1 + $0x14c] sm:$0xf]
  %v557 = vld [vmem:[%s1 + $0x150] sm:$0xf]
  %v558 = vld [vmem:[%s1 + $0x154] sm:$0xf]
  %v559 = vld [vmem:[%s1 + $0x158] sm:$0xf]
  %v560 = vld [vmem:[%s1 + $0x15c] sm:$0xf]
  %v561 = vld [vmem:[%s1 + $0x160] sm:$0xf]
  %v562 = vld [vmem:[%s1 + $0x164] sm:$0xf]
  %v563 = vld [vmem:[%s1 + $0x168] sm:$0xf]
  %v564 = vld [vmem:[%s1 + $0x16c] sm:$0xf]
  %v565 = vld [vmem:[%s1 + $0x170] sm:$0xf]
  %v566 = vld [vmem:[%s1 + $0x174] sm:$0xf]
  %v567 = vld [vmem:[%s1 + $0x178] sm:$0xf]
  %v568 = vld [vmem:[%s1 + $0x17c] sm:$0xf]
  %v569 = vld [vmem:[%s1 + $0x180] sm:$0xf]
  %v570 = vld [vmem:[%s1 + $0x184] sm:$0xf]
  %v571 = vld [vmem:[%s1 + $0x188] sm:$0xf]
  %v572 = vld [vmem:[%s1 + $0x18c] sm:$0xf]
  %v573 = vld [vmem:[%s1 + $0x190] sm:$0xf]
  %v574 = vld [vmem:[%s1 + $0x194] sm:$0xf]
  %v575 = vld [vmem:[%s1 + $0x198] sm:$0xf]
  %v576 = vld [vmem:[%s1 + $0x19c] sm:$0xf]
  %v577 = vld [vmem:[%s1 + $0x1a0] sm:$0xf]
  %v578 = vld [vmem:[%s1 + $0x1a4] sm:$0xf]
  %v579 = vld [vmem:[%s1 + $0x1a8] sm:$0xf]
  %v580 = vld [vmem:[%s1 + $0x1ac] sm:$0xf]
  %v581 = vld [vmem:[%s1 + $0x1b0] sm:$0xf]
  %v582 = vld [vmem:[%s1 + $0x1b4] sm:$0xf]
  %v583 = vld [vmem:[%s1 + $0x1b8] sm:$0xf]
  %v584 = vld [vmem:[%s1 + $0x1bc] sm:$0xf]
  %v585 = vld [vmem:[%s1 + $0x1c0] sm:$0xf]
  %v586 = vld [vmem:[%s1 + $0x1c4] sm:$0xf]
  %v587 = vld [vmem:[%s1 + $0x1c8] sm:$0xf]
  %v588 = vld [vmem:[%s1 + $0x1cc] sm:$0xf]
  %v589 = vld [vmem:[%s1 + $0x1d0] sm:$0xf]
  %v590 = vld [vmem:[%s1 + $0x1d4] sm:$0xf]
  %v591 = vld [vmem:[%s1 + $0x1d8] sm:$0xf]
  %v592 = vld [vmem:[%s1 + $0x1dc] sm:$0xf]
  %v593 = vld [vmem:[%s1 + $0x1e0] sm:$0xf]
  %v594 = vld [vmem:[%s1 + $0x1e4] sm:$0xf]
  %v595 = vld [vmem:[%s1 + $0x1e8] sm:$0xf]
  %v596 = vld [vmem:[%s1 + $0x1ec] sm:$0xf]
  %v597 = vld [vmem:[%s1 + $0x1f0] sm:$0xf]
  %v598 = vld [vmem:[%s1 + $0x1f4] sm:$0xf]
  %v599 = vld [vmem:[%s1 + $0x1f8] sm:$0xf]
  %v600 = vld [vmem:[%s1 + $0x1fc] sm:$0xf]
  %v601 = vld [vmem:[%s1 + $0x200] sm:$0xf]
  %v602 = vld [vmem:[%s1 + $0x204] sm:$0xf]
  %v603 = vld [vmem:[%s1 + $0x208] sm:$0xf]
  %v604 = vld [vmem:[%s1 + $0x20c] sm:$0xf]
  %v605 = vld [vmem:[%s1 + $0x210] sm:$0xf]
  %v606 = vld [vmem:[%s1 + $0x214] sm:$0xf]
  %v607 = vld [vmem:[%s1 + $0x218] sm:$0xf]
  %v608 = vld [vmem:[%s1 + $0x21c] sm:$0xf]
  %v609 = vld [vmem:[%s1 + $0x220] sm:$0xf]
  %v610 = vld [vmem:[%s1 + $0x224] sm:$0xf]
  %v611 = vld [vmem:[%s1 + $0x228] sm:$0xf]
  %v612 = vld [vmem:[%s1 + $0x22c] sm:$0xf]
  %v613 = vld [vmem:[%s1 + $0x230] sm:$0xf]
  %v614 = vld [vmem:[%s1 + $0x234] sm:$0xf]
  %v615 = vld [vmem:[%s1 + $0x238] sm:$0xf]
  %v616 = vld [vmem:[%s1 + $0x23c] sm:$0xf]
  %v937 = vunpack.c.l.b16 %v153
  %v938 = vunpack.c.h.b16 %v153
  %v939 = vunpack.c.l.b16 %v154
  %v940 = vunpack.c.h.b16 %v154
  %v941 = vunpack.c.l.b16 %v155
  %v942 = vunpack.c.h.b16 %v155
  %v943 = vunpack.c.l.b16 %v156
  %v944 = vunpack.c.h.b16 %v156
  %v945 = vunpack.c.l.b16 %v157
  %v946 = vunpack.c.l.b16 %v158
  %v947 = vunpack.c.h.b16 %v158
  %v948 = vunpack.c.l.b16 %v159
  %v949 = vunpack.c.h.b16 %v159
  %v950 = vunpack.c.l.b16 %v160
  %v951 = vunpack.c.h.b16 %v160
  %v952 = vunpack.c.l.b16 %v161
  %v953 = vunpack.c.h.b16 %v161
  %v954 = vunpack.c.l.b16 %v162
  %v955 = vunpack.c.l.b16 %v163
  %v956 = vunpack.c.h.b16 %v163
  %v957 = vunpack.c.l.b16 %v164
  %v958 = vunpack.c.h.b16 %v164
  %v959 = vunpack.c.l.b16 %v165
  %v960 = vunpack.c.h.b16 %v165
  %v961 = vunpack.c.l.b16 %v166
  %v962 = vunpack.c.h.b16 %v166
  %v963 = vunpack.c.l.b16 %v167
  %v964 = vunpack.c.l.b16 %v168
  %v965 = vunpack.c.h.b16 %v168
  %v966 = vunpack.c.l.b16 %v169
  %v967 = vunpack.c.h.b16 %v169
  %v968 = vunpack.c.l.b16 %v170
  %v969 = vunpack.c.h.b16 %v170
  %v970 = vunpack.c.l.b16 %v171
  %v971 = vunpack.c.h.b16 %v171
  %v972 = vunpack.c.l.b16 %v172
  %v973 = vunpack.c.l.b16 %v173
  %v974 = vunpack.c.h.b16 %v173
  %v975 = vunpack.c.l.b16 %v174
  %v976 = vunpack.c.h.b16 %v174
  %v977 = vunpack.c.l.b16 %v175
  %v978 = vunpack.c.h.b16 %v175
  %v979 = vunpack.c.l.b16 %v176
  %v980 = vunpack.c.h.b16 %v176
  %v981 = vunpack.c.l.b16 %v177
  %v982 = vunpack.c.l.b16 %v178
  %v983 = vunpack.c.h.b16 %v178
  %v984 = vunpack.c.l.b16 %v179
  %v985 = vunpack.c.h.b16 %v179
  %v986 = vunpack.c.l.b16 %v180
  %v987 = vunpack.c.h.b16 %v180
  %v988 = vunpack.c.l.b16 %v181
  %v989 = vunpack.c.h.b16 %v181
  %v990 = vunpack.c.l.b16 %v182
  %v991 = vunpack.c.l.b16 %v183
  %v992 = vunpack.c.h.b16 %v183
  %v993 = vunpack.c.l.b16 %v184
  %v994 = vunpack.c.h.b16 %v184
  %v995 = vunpack.c.l.b16 %v185
  %v996 = vunpack.c.h.b16 %v185
  %v997 = vunpack.c.l.b16 %v186
  %v998 = vunpack.c.h.b16 %v186
  %v999 = vunpack.c.l.b16 %v187
  %v1000 = vunpack.c.l.b16 %v188
  %v1001 = vunpack.c.h.b16 %v188
  %v1002 = vunpack.c.l.b16 %v189
  %v1003 = vunpack.c.h.b16 %v189
  %v1004 = vunpack.c.l.b16 %v190
  %v1005 = vunpack.c.h.b16 %v190
  %v1006 = vunpack.c.l.b16 %v191
  %v1007 = vunpack.c.h.b16 %v191
  %v1008 = vunpack.c.l.b16 %v192
  %v1009 = vunpack.c.l.b16 %v193
  %v1010 = vunpack.c.h.b16 %v193
  %v1011 = vunpack.c.l.b16 %v194
  %v1012 = vunpack.c.h.b16 %v194
  %v1013 = vunpack.c.l.b16 %v195
  %v1014 = vunpack.c.h.b16 %v195
  %v1015 = vunpack.c.l.b16 %v196
  %v1016 = vunpack.c.h.b16 %v196
  %v1017 = vunpack.c.l.b16 %v197
  %v1018 = vunpack.c.l.b16 %v198
  %v1019 = vunpack.c.h.b16 %v198
  %v1020 = vunpack.c.l.b16 %v199
  %v1021 = vunpack.c.h.b16 %v199
  %v1022 = vunpack.c.l.b16 %v200
  %v1023 = vunpack.c.h.b16 %v200
  %v1024 = vunpack.c.l.b16 %v201
  %v1025 = vunpack.c.h.b16 %v201
  %v1026 = vunpack.c.l.b16 %v202
  %v1027 = vunpack.c.l.b16 %v203
  %v1028 = vunpack.c.h.b16 %v203
  %v1029 = vunpack.c.l.b16 %v204
  %v1030 = vunpack.c.h.b16 %v204
  %v1031 = vunpack.c.l.b16 %v205
  %v1032 = vunpack.c.h.b16 %v205
  %v1033 = vunpack.c.l.b16 %v206
  %v1034 = vunpack.c.h.b16 %v206
  %v1035 = vunpack.c.l.b16 %v207
  %v1036 = vunpack.c.l.b16 %v208
  %v1037 = vunpack.c.h.b16 %v208
  %v1038 = vunpack.c.l.b16 %v209
  %v1039 = vunpack.c.h.b16 %v209
  %v1040 = vunpack.c.l.b16 %v210
  %v1041 = vunpack.c.h.b16 %v210
  %v1042 = vunpack.c.l.b16 %v211
  %v1043 = vunpack.c.h.b16 %v211
  %v1044 = vunpack.c.l.b16 %v212
  %v1045 = vunpack.c.l.b16 %v213
  %v1046 = vunpack.c.h.b16 %v213
  %v1047 = vunpack.c.l.b16 %v214
  %v1048 = vunpack.c.h.b16 %v214
  %v1049 = vunpack.c.l.b16 %v215
  %v1050 = vunpack.c.h.b16 %v215
  %v1051 = vunpack.c.l.b16 %v216
  %v1052 = vunpack.c.h.b16 %v216
  %v1053 = vunpack.c.l.b16 %v217
  %v1054 = vunpack.c.l.b16 %v218
  %v1055 = vunpack.c.h.b16 %v218
  %v1056 = vunpack.c.l.b16 %v219
  %v1057 = vunpack.c.h.b16 %v219
  %v1058 = vunpack.c.l.b16 %v220
  %v1059 = vunpack.c.h.b16 %v220
  %v1060 = vunpack.c.l.b16 %v221
  %v1061 = vunpack.c.h.b16 %v221
  %v1062 = vunpack.c.l.b16 %v222
  %v1063 = vunpack.c.l.b16 %v223
  %v1064 = vunpack.c.h.b16 %v223
  %v1065 = vunpack.c.l.b16 %v224
  %v1066 = vunpack.c.h.b16 %v224
  %v1067 = vunpack.c.l.b16 %v225
  %v1068 = vunpack.c.h.b16 %v225
  %v1069 = vunpack.c.l.b16 %v226
  %v1070 = vunpack.c.h.b16 %v226
  %v1071 = vunpack.c.l.b16 %v227
  %v1072 = vunpack.c.l.b16 %v228
  %v1073 = vunpack.c.h.b16 %v228
  %v1074 = vunpack.c.l.b16 %v229
  %v1075 = vunpack.c.h.b16 %v229
  %v1076 = vunpack.c.l.b16 %v230
  %v1077 = vunpack.c.h.b16 %v230
  %v1078 = vunpack.c.l.b16 %v231
  %v1079 = vunpack.c.h.b16 %v231
  %v1080 = vunpack.c.l.b16 %v232
  %v1081 = vunpack.c.l.b16 %v233
  %v1082 = vunpack.c.h.b16 %v233
  %v1083 = vunpack.c.l.b16 %v234
  %v1084 = vunpack.c.h.b16 %v234
  %v1085 = vunpack.c.l.b16 %v235
  %v1086 = vunpack.c.h.b16 %v235
  %v1087 = vunpack.c.l.b16 %v236
  %v1088 = vunpack.c.h.b16 %v236
  %v1089 = vunpack.c.l.b16 %v237
  %v1090 = vunpack.c.l.b16 %v238
  %v1091 = vunpack.c.h.b16 %v238
  %v1092 = vunpack.c.l.b16 %v239
  %v1093 = vunpack.c.h.b16 %v239
  %v1094 = vunpack.c.l.b16 %v240
  %v1095 = vunpack.c.h.b16 %v240
  %v1096 = vunpack.c.l.b16 %v241
  %v1097 = vunpack.c.h.b16 %v241
  %v1098 = vunpack.c.l.b16 %v242
  %v1099 = vunpack.c.l.b16 %v243
  %v1100 = vunpack.c.h.b16 %v243
  %v1101 = vunpack.c.l.b16 %v244
  %v1102 = vunpack.c.h.b16 %v244
  %v1103 = vunpack.c.l.b16 %v245
  %v1104 = vunpack.c.h.b16 %v245
  %v1105 = vunpack.c.l.b16 %v246
  %v1106 = vunpack.c.h.b16 %v246
  %v1107 = vunpack.c.l.b16 %v247
  %v1108 = vunpack.c.l.b16 %v248
  %v1109 = vunpack.c.h.b16 %v248
  %v1110 = vunpack.c.l.b16 %v249
  %v1111 = vunpack.c.h.b16 %v249
  %v1112 = vunpack.c.l.b16 %v250
  %v1113 = vunpack.c.h.b16 %v250
  %v1114 = vunpack.c.l.b16 %v251
  %v1115 = vunpack.c.h.b16 %v251
  %v1116 = vunpack.c.l.b16 %v252
  %v1117 = vunpack.c.l.b16 %v253
  %v1118 = vunpack.c.h.b16 %v253
  %v1119 = vunpack.c.l.b16 %v254
  %v1120 = vunpack.c.h.b16 %v254
  %v1121 = vunpack.c.l.b16 %v255
  %v1122 = vunpack.c.h.b16 %v255
  %v1123 = vunpack.c.l.b16 %v256
  %v1124 = vunpack.c.h.b16 %v256
  %v1125 = vunpack.c.l.b16 %v257
  %v1126 = vunpack.c.l.b16 %v258
  %v1127 = vunpack.c.h.b16 %v258
  %v1128 = vunpack.c.l.b16 %v259
  %v1129 = vunpack.c.h.b16 %v259
  %v1130 = vunpack.c.l.b16 %v260
  %v1131 = vunpack.c.h.b16 %v260
  %v1132 = vunpack.c.l.b16 %v261
  %v1133 = vunpack.c.h.b16 %v261
  %v1134 = vunpack.c.l.b16 %v262
  %v1135 = vunpack.c.l.b16 %v263
  %v1136 = vunpack.c.h.b16 %v263
  %v1137 = vunpack.c.l.b16 %v264
  %v1138 = vunpack.c.h.b16 %v264
  %v1139 = vunpack.c.l.b16 %v265
  %v1140 = vunpack.c.h.b16 %v265
  %v1141 = vunpack.c.l.b16 %v266
  %v1142 = vunpack.c.h.b16 %v266
  %v1143 = vunpack.c.l.b16 %v267
  %v1144 = vunpack.c.l.b16 %v268
  %v1145 = vunpack.c.h.b16 %v268
  %v1146 = vunpack.c.l.b16 %v269
  %v1147 = vunpack.c.h.b16 %v269
  %v1148 = vunpack.c.l.b16 %v270
  %v1149 = vunpack.c.h.b16 %v270
  %v1150 = vunpack.c.l.b16 %v271
  %v1151 = vunpack.c.h.b16 %v271
  %v1152 = vunpack.c.l.b16 %v272
  %v1153 = vunpack.c.l.b16 %v273
  %v1154 = vunpack.c.h.b16 %v273
  %v1155 = vunpack.c.l.b16 %v274
  %v1156 = vunpack.c.h.b16 %v274
  %v1157 = vunpack.c.l.b16 %v275
  %v1158 = vunpack.c.h.b16 %v275
  %v1159 = vunpack.c.l.b16 %v276
  %v1160 = vunpack.c.h.b16 %v276
  %v1161 = vunpack.c.l.b16 %v277
  %v1162 = vunpack.c.l.b16 %v278
  %v1163 = vunpack.c.h.b16 %v278
  %v1164 = vunpack.c.l.b16 %v279
  %v1165 = vunpack.c.h.b16 %v279
  %v1166 = vunpack.c.l.b16 %v280
  %v1167 = vunpack.c.h.b16 %v280
  %v1168 = vunpack.c.l.b16 %v281
  %v1169 = vunpack.c.h.b16 %v281
  %v1170 = vunpack.c.l.b16 %v282
  %v1171 = vunpack.c.l.b16 %v283
  %v1172 = vunpack.c.h.b16 %v283
  %v1173 = vunpack.c.l.b16 %v284
  %v1174 = vunpack.c.h.b16 %v284
  %v1175 = vunpack.c.l.b16 %v285
  %v1176 = vunpack.c.h.b16 %v285
  %v1177 = vunpack.c.l.b16 %v286
  %v1178 = vunpack.c.h.b16 %v286
  %v1179 = vunpack.c.l.b16 %v287
  %v1180 = vunpack.c.l.b16 %v288
  %v1181 = vunpack.c.h.b16 %v288
  %v1182 = vunpack.c.l.b16 %v289
  %v1183 = vunpack.c.h.b16 %v289
  %v1184 = vunpack.c.l.b16 %v290
  %v1185 = vunpack.c.h.b16 %v290
  %v1186 = vunpack.c.l.b16 %v291
  %v1187 = vunpack.c.h.b16 %v291
  %v1188 = vunpack.c.l.b16 %v292
  %v1189 = vunpack.c.l.b16 %v293
  %v1190 = vunpack.c.h.b16 %v293
  %v1191 = vunpack.c.l.b16 %v294
  %v1192 = vunpack.c.h.b16 %v294
  %v1193 = vunpack.c.l.b16 %v295
  %v1194 = vunpack.c.h.b16 %v295
  %v1195 = vunpack.c.l.b16 %v296
  %v1196 = vunpack.c.h.b16 %v296
  %v1197 = vunpack.c.l.b16 %v297
  %v1198 = vunpack.c.l.b16 %v298
  %v1199 = vunpack.c.h.b16 %v298
  %v1200 = vunpack.c.l.b16 %v299
  %v1201 = vunpack.c.h.b16 %v299
  %v1202 = vunpack.c.l.b16 %v300
  %v1203 = vunpack.c.h.b16 %v300
  %v1204 = vunpack.c.l.b16 %v301
  %v1205 = vunpack.c.h.b16 %v301
  %v1206 = vunpack.c.l.b16 %v302
  %v1207 = vunpack.c.l.b16 %v303
  %v1208 = vunpack.c.h.b16 %v303
  %v1209 = vunpack.c.l.b16 %v304
  %v1210 = vunpack.c.h.b16 %v304
  %v1211 = vunpack.c.l.b16 %v305
  %v1212 = vunpack.c.h.b16 %v305
  %v1213 = vunpack.c.l.b16 %v306
  %v1214 = vunpack.c.h.b16 %v306
  %v1215 = vunpack.c.l.b16 %v307
  %v1216 = vunpack.c.l.b16 %v308
  %v1217 = vunpack.c.h.b16 %v308
  %v1218 = vunpack.c.l.b16 %v309
  %v1219 = vunpack.c.h.b16 %v309
  %v1220 = vunpack.c.l.b16 %v310
  %v1221 = vunpack.c.h.b16 %v310
  %v1222 = vunpack.c.l.b16 %v311
  %v1223 = vunpack.c.h.b16 %v311
  %v1224 = vunpack.c.l.b16 %v312
  %v1225 = vunpack.c.l.b16 %v313
  %v1226 = vunpack.c.h.b16 %v313
  %v1227 = vunpack.c.l.b16 %v314
  %v1228 = vunpack.c.h.b16 %v314
  %v1229 = vunpack.c.l.b16 %v315
  %v1230 = vunpack.c.h.b16 %v315
  %v1231 = vunpack.c.l.b16 %v316
  %v1232 = vunpack.c.h.b16 %v316
  %v1233 = vunpack.c.l.b16 %v317
  %v1234 = vunpack.c.l.b16 %v318
  %v1235 = vunpack.c.h.b16 %v318
  %v1236 = vunpack.c.l.b16 %v319
  %v1237 = vunpack.c.h.b16 %v319
  %v1238 = vunpack.c.l.b16 %v320
  %v1239 = vunpack.c.h.b16 %v320
  %v1240 = vunpack.c.l.b16 %v321
  %v1241 = vunpack.c.h.b16 %v321
  %v1242 = vunpack.c.l.b16 %v322
  %v1243 = vunpack.c.l.b16 %v323
  %v1244 = vunpack.c.h.b16 %v323
  %v1245 = vunpack.c.l.b16 %v324
  %v1246 = vunpack.c.h.b16 %v324
  %v1247 = vunpack.c.l.b16 %v325
  %v1248 = vunpack.c.h.b16 %v325
  %v1249 = vunpack.c.l.b16 %v326
  %v1250 = vunpack.c.h.b16 %v326
  %v1251 = vunpack.c.l.b16 %v327
  %v1252 = vunpack.c.l.b16 %v328
  %v1253 = vunpack.c.h.b16 %v328
  %v1254 = vunpack.c.l.b16 %v329
  %v1255 = vunpack.c.h.b16 %v329
  %v1256 = vunpack.c.l.b16 %v330
  %v1257 = vunpack.c.h.b16 %v330
  %v1258 = vunpack.c.l.b16 %v331
  %v1259 = vunpack.c.h.b16 %v331
  %v1260 = vunpack.c.l.b16 %v332
  %v1261 = vunpack.c.l.b16 %v333
  %v1262 = vunpack.c.h.b16 %v333
  %v1263 = vunpack.c.l.b16 %v334
  %v1264 = vunpack.c.h.b16 %v334
  %v1265 = vunpack.c.l.b16 %v335
  %v1266 = vunpack.c.h.b16 %v335
  %v1267 = vunpack.c.l.b16 %v336
  %v1268 = vunpack.c.h.b16 %v336
  %v1269 = vunpack.c.l.b16 %v337
  %v1270 = vunpack.c.l.b16 %v338
  %v1271 = vunpack.c.h.b16 %v338
  %v1272 = vunpack.c.l.b16 %v339
  %v1273 = vunpack.c.h.b16 %v339
  %v1274 = vunpack.c.l.b16 %v340
  %v1275 = vunpack.c.h.b16 %v340
  %v1276 = vunpack.c.l.b16 %v341
  %v1277 = vunpack.c.h.b16 %v341
  %v1278 = vunpack.c.l.b16 %v342
  %v1279 = vunpack.c.l.b16 %v343
  %v1280 = vunpack.c.h.b16 %v343
  %v1281 = vunpack.c.l.b16 %v344
  %v1282 = vunpack.c.h.b16 %v344
  %v1283 = vunpack.c.l.b16 %v345
  %v1284 = vunpack.c.h.b16 %v345
  %v1285 = vunpack.c.l.b16 %v346
  %v1286 = vunpack.c.h.b16 %v346
  %v1287 = vunpack.c.l.b16 %v347
  %v1288 = vunpack.c.l.b16 %v348
  %v1289 = vunpack.c.h.b16 %v348
  %v1290 = vunpack.c.l.b16 %v349
  %v1291 = vunpack.c.h.b16 %v349
  %v1292 = vunpack.c.l.b16 %v350
  %v1293 = vunpack.c.h.b16 %v350
  %v1294 = vunpack.c.l.b16 %v351
  %v1295 = vunpack.c.h.b16 %v351
  %v1296 = vunpack.c.l.b16 %v352
  %v1297 = vunpack.c.l.b16 %v353
  %v1298 = vunpack.c.h.b16 %v353
  %v1299 = vunpack.c.l.b16 %v354
  %v1300 = vunpack.c.h.b16 %v354
  %v1301 = vunpack.c.l.b16 %v355
  %v1302 = vunpack.c.h.b16 %v355
  %v1303 = vunpack.c.l.b16 %v356
  %v1304 = vunpack.c.h.b16 %v356
  %v1305 = vunpack.c.l.b16 %v357
  %v1306 = vunpack.c.l.b16 %v358
  %v1307 = vunpack.c.h.b16 %v358
  %v1308 = vunpack.c.l.b16 %v359
  %v1309 = vunpack.c.h.b16 %v359
  %v1310 = vunpack.c.l.b16 %v360
  %v1311 = vunpack.c.h.b16 %v360
  %v1312 = vunpack.c.l.b16 %v361
  %v1313 = vunpack.c.h.b16 %v361
  %v1314 = vunpack.c.l.b16 %v362
  %v1315 = vunpack.c.l.b16 %v363
  %v1316 = vunpack.c.h.b16 %v363
  %v1317 = vunpack.c.l.b16 %v364
  %v1318 = vunpack.c.h.b16 %v364
  %v1319 = vunpack.c.l.b16 %v365
  %v1320 = vunpack.c.h.b16 %v365
  %v1321 = vunpack.c.l.b16 %v366
  %v1322 = vunpack.c.h.b16 %v366
  %v1323 = vunpack.c.l.b16 %v367
  %v1324 = vunpack.c.l.b16 %v368
  %v1325 = vunpack.c.h.b16 %v368
  %v1326 = vunpack.c.l.b16 %v369
  %v1327 = vunpack.c.h.b16 %v369
  %v1328 = vunpack.c.l.b16 %v370
  %v1329 = vunpack.c.h.b16 %v370
  %v1330 = vunpack.c.l.b16 %v371
  %v1331 = vunpack.c.h.b16 %v371
  %v1332 = vunpack.c.l.b16 %v372
  %v1333 = vunpack.c.l.b16 %v373
  %v1334 = vunpack.c.h.b16 %v373
  %v1335 = vunpack.c.l.b16 %v374
  %v1336 = vunpack.c.h.b16 %v374
  %v1337 = vunpack.c.l.b16 %v375
  %v1338 = vunpack.c.h.b16 %v375
  %v1339 = vunpack.c.l.b16 %v376
  %v1340 = vunpack.c.h.b16 %v376
  %v1341 = vunpack.c.l.b16 %v377
  %v1342 = vunpack.c.l.b16 %v378
  %v1343 = vunpack.c.h.b16 %v378
  %v1344 = vunpack.c.l.b16 %v379
  %v1345 = vunpack.c.h.b16 %v379
  %v1346 = vunpack.c.l.b16 %v380
  %v1347 = vunpack.c.h.b16 %v380
  %v1348 = vunpack.c.l.b16 %v381
  %v1349 = vunpack.c.h.b16 %v381
  %v1350 = vunpack.c.l.b16 %v382
  %v1351 = vunpack.c.l.b16 %v383
  %v1352 = vunpack.c.h.b16 %v383
  %v1353 = vunpack.c.l.b16 %v384
  %v1354 = vunpack.c.h.b16 %v384
  %v1355 = vunpack.c.l.b16 %v385
  %v1356 = vunpack.c.h.b16 %v385
  %v1357 = vunpack.c.l.b16 %v386
  %v1358 = vunpack.c.h.b16 %v386
  %v1359 = vunpack.c.l.b16 %v387
  %v1360 = vunpack.c.l.b16 %v388
  %v1361 = vunpack.c.h.b16 %v388
  %v1362 = vunpack.c.l.b16 %v389
  %v1363 = vunpack.c.h.b16 %v389
  %v1364 = vunpack.c.l.b16 %v390
  %v1365 = vunpack.c.h.b16 %v390
  %v1366 = vunpack.c.l.b16 %v391
  %v1367 = vunpack.c.h.b16 %v391
  %v1368 = vunpack.c.l.b16 %v392
  %v1369 = vunpack.c.l.b16 %v393
  %v1370 = vunpack.c.h.b16 %v393
  %v1371 = vunpack.c.l.b16 %v394
  %v1372 = vunpack.c.h.b16 %v394
  %v1373 = vunpack.c.l.b16 %v395
  %v1374 = vunpack.c.h.b16 %v395
  %v1375 = vunpack.c.l.b16 %v396
  %v1376 = vunpack.c.h.b16 %v396
  %v1377 = vunpack.c.l.b16 %v397
  %v1378 = vunpack.c.l.b16 %v398
  %v1379 = vunpack.c.h.b16 %v398
  %v1380 = vunpack.c.l.b16 %v399
  %v1381 = vunpack.c.h.b16 %v399
  %v1382 = vunpack.c.l.b16 %v400
  %v1383 = vunpack.c.h.b16 %v400
  %v1384 = vunpack.c.l.b16 %v401
  %v1385 = vunpack.c.h.b16 %v401
  %v1386 = vunpack.c.l.b16 %v402
  %v1387 = vunpack.c.l.b16 %v403
  %v1388 = vunpack.c.h.b16 %v403
  %v1389 = vunpack.c.l.b16 %v404
  %v1390 = vunpack.c.h.b16 %v404
  %v1391 = vunpack.c.l.b16 %v405
  %v1392 = vunpack.c.h.b16 %v405
  %v1393 = vunpack.c.l.b16 %v406
  %v1394 = vunpack.c.h.b16 %v406
  %v1395 = vunpack.c.l.b16 %v407
  %v1396 = vunpack.c.l.b16 %v408
  %v1397 = vunpack.c.h.b16 %v408
  %v1398 = vunpack.c.l.b16 %v409
  %v1399 = vunpack.c.h.b16 %v409
  %v1400 = vunpack.c.l.b16 %v410
  %v1401 = vunpack.c.h.b16 %v410
  %v1402 = vunpack.c.l.b16 %v411
  %v1403 = vunpack.c.h.b16 %v411
  %v1404 = vunpack.c.l.b16 %v412
  %v1405 = vunpack.c.l.b16 %v413
  %v1406 = vunpack.c.h.b16 %v413
  %v1407 = vunpack.c.l.b16 %v414
  %v1408 = vunpack.c.h.b16 %v414
  %v1409 = vunpack.c.l.b16 %v415
  %v1410 = vunpack.c.h.b16 %v415
  %v1411 = vunpack.c.l.b16 %v416
  %v1412 = vunpack.c.h.b16 %v416
  %v1413 = vunpack.c.l.b16 %v417
  %v1414 = vunpack.c.l.b16 %v418
  %v1415 = vunpack.c.h.b16 %v418
  %v1416 = vunpack.c.l.b16 %v419
  %v1417 = vunpack.c.h.b16 %v419
  %v1418 = vunpack.c.l.b16 %v420
  %v1419 = vunpack.c.h.b16 %v420
  %v1420 = vunpack.c.l.b16 %v421
  %v1421 = vunpack.c.h.b16 %v421
  %v1422 = vunpack.c.l.b16 %v422
  %v1423 = vunpack.c.l.b16 %v423
  %v1424 = vunpack.c.h.b16 %v423
  %v1425 = vunpack.c.l.b16 %v424
  %v1426 = vunpack.c.h.b16 %v424
  %v1427 = vunpack.c.l.b16 %v425
  %v1428 = vunpack.c.h.b16 %v425
  %v1429 = vunpack.c.l.b16 %v426
  %v1430 = vunpack.c.h.b16 %v426
  %v1431 = vunpack.c.l.b16 %v427
  %v1432 = vunpack.c.l.b16 %v428
  %v1433 = vunpack.c.h.b16 %v428
  %v1434 = vunpack.c.l.b16 %v429
  %v1435 = vunpack.c.h.b16 %v429
  %v1436 = vunpack.c.l.b16 %v430
  %v1437 = vunpack.c.h.b16 %v430
  %v1438 = vunpack.c.l.b16 %v431
  %v1439 = vunpack.c.h.b16 %v431
  %v1440 = vunpack.c.l.b16 %v432
  %v1441 = vunpack.c.l.b16 %v433
  %v1442 = vunpack.c.h.b16 %v433
  %v1443 = vunpack.c.l.b16 %v434
  %v1444 = vunpack.c.h.b16 %v434
  %v1445 = vunpack.c.l.b16 %v435
  %v1446 = vunpack.c.h.b16 %v435
  %v1447 = vunpack.c.l.b16 %v436
  %v1448 = vunpack.c.h.b16 %v436
  %v1449 = vunpack.c.l.b16 %v437
  %v1450 = vunpack.c.l.b16 %v438
  %v1451 = vunpack.c.h.b16 %v438
  %v1452 = vunpack.c.l.b16 %v439
  %v1453 = vunpack.c.h.b16 %v439
  %v1454 = vunpack.c.l.b16 %v440
  %v1455 = vunpack.c.h.b16 %v440
  %v1456 = vunpack.c.l.b16 %v441
  %v1457 = vunpack.c.h.b16 %v441
  %v1458 = vunpack.c.l.b16 %v442
  %v1459 = vunpack.c.l.b16 %v443
  %v1460 = vunpack.c.h.b16 %v443
  %v1461 = vunpack.c.l.b16 %v444
  %v1462 = vunpack.c.h.b16 %v444
  %v1463 = vunpack.c.l.b16 %v445
  %v1464 = vunpack.c.h.b16 %v445
  %v1465 = vunpack.c.l.b16 %v446
  %v1466 = vunpack.c.h.b16 %v446
  %v1467 = vunpack.c.l.b16 %v447
  %v1468 = vunpack.c.l.b16 %v448
  %v1469 = vunpack.c.h.b16 %v448
  %v1470 = vunpack.c.l.b16 %v449
  %v1471 = vunpack.c.h.b16 %v449
  %v1472 = vunpack.c.l.b16 %v450
  %v1473 = vunpack.c.h.b16 %v450
  %v1474 = vunpack.c.l.b16 %v451
  %v1475 = vunpack.c.h.b16 %v451
  %v1476 = vunpack.c.l.b16 %v452
  %v1477 = vunpack.c.l.b16 %v453
  %v1478 = vunpack.c.h.b16 %v453
  %v1479 = vunpack.c.l.b16 %v454
  %v1480 = vunpack.c.h.b16 %v454
  %v1481 = vunpack.c.l.b16 %v455
  %v1482 = vunpack.c.h.b16 %v455
  %v1483 = vunpack.c.l.b16 %v456
  %v1484 = vunpack.c.h.b16 %v456
  %v1485 = vunpack.c.l.b16 %v457
  %v1486 = vunpack.c.l.b16 %v458
  %v1487 = vunpack.c.h.b16 %v458
  %v1488 = vunpack.c.l.b16 %v459
  %v1489 = vunpack.c.h.b16 %v459
  %v1490 = vunpack.c.l.b16 %v460
  %v1491 = vunpack.c.h.b16 %v460
  %v1492 = vunpack.c.l.b16 %v461
  %v1493 = vunpack.c.h.b16 %v461
  %v1494 = vunpack.c.l.b16 %v462
  %v1495 = vunpack.c.l.b16 %v463
  %v1496 = vunpack.c.h.b16 %v463
  %v1497 = vunpack.c.l.b16 %v464
  %v1498 = vunpack.c.h.b16 %v464
  %v1499 = vunpack.c.l.b16 %v465
  %v1500 = vunpack.c.h.b16 %v465
  %v1501 = vunpack.c.l.b16 %v466
  %v1502 = vunpack.c.h.b16 %v466
  %v1503 = vunpack.c.l.b16 %v467
  %v1504 = vunpack.c.l.b16 %v468
  %v1505 = vunpack.c.h.b16 %v468
  %v1506 = vunpack.c.l.b16 %v469
  %v1507 = vunpack.c.h.b16 %v469
  %v1508 = vunpack.c.l.b16 %v470
  %v1509 = vunpack.c.h.b16 %v470
  %v1510 = vunpack.c.l.b16 %v471
  %v1511 = vunpack.c.h.b16 %v471
  %v1512 = vunpack.c.l.b16 %v472
  %v1513 = vpack.c.b16 %v946, %v937
  %v1514 = vpack.c.b16 %v947, %v938
  %v1515 = vpack.c.b16 %v948, %v939
  %v1516 = vpack.c.b16 %v949, %v940
  %v1517 = vpack.c.b16 %v950, %v941
  %v1518 = vpack.c.b16 %v951, %v942
  %v1519 = vpack.c.b16 %v952, %v943
  %v1520 = vpack.c.b16 %v953, %v944
  %v1521 = vpack.c.b16 %v954, %v945
  %v1522 = vpack.c.b16 %v964, %v955
  %v1523 = vpack.c.b16 %v965, %v956
  %v1524 = vpack.c.b16 %v966, %v957
  %v1525 = vpack.c.b16 %v967, %v958
  %v1526 = vpack.c.b16 %v968, %v959
  %v1527 = vpack.c.b16 %v969, %v960
  %v1528 = vpack.c.b16 %v970, %v961
  %v1529 = vpack.c.b16 %v971, %v962
  %v1530 = vpack.c.b16 %v972, %v963
  %v1531 = vpack.c.b16 %v982, %v973
  %v1532 = vpack.c.b16 %v983, %v974
  %v1533 = vpack.c.b16 %v984, %v975
  %v1534 = vpack.c.b16 %v985, %v976
  %v1535 = vpack.c.b16 %v986, %v977
  %v1536 = vpack.c.b16 %v987, %v978
  %v1537 = vpack.c.b16 %v988, %v979
  %v1538 = vpack.c.b16 %v989, %v980
  %v1539 = vpack.c.b16 %v990, %v981
  %v1540 = vpack.c.b16 %v1000, %v991
  %v1541 = vpack.c.b16 %v1001, %v992
  %v1542 = vpack.c.b16 %v1002, %v993
  %v1543 = vpack.c.b16 %v1003, %v994
  %v1544 = vpack.c.b16 %v1004, %v995
  %v1545 = vpack.c.b16 %v1005, %v996
  %v1546 = vpack.c.b16 %v1006, %v997
  %v1547 = vpack.c.b16 %v1007, %v998
  %v1548 = vpack.c.b16 %v1008, %v999
  %v1549 = vpack.c.b16 %v1018, %v1009
  %v1550 = vpack.c.b16 %v1019, %v1010
  %v1551 = vpack.c.b16 %v1020, %v1011
  %v1552 = vpack.c.b16 %v1021, %v1012
  %v1553 = vpack.c.b16 %v1022, %v1013
  %v1554 = vpack.c.b16 %v1023, %v1014
  %v1555 = vpack.c.b16 %v1024, %v1015
  %v1556 = vpack.c.b16 %v1025, %v1016
  %v1557 = vpack.c.b16 %v1026, %v1017
  %v1558 = vpack.c.b16 %v1036, %v1027
  %v1559 = vpack.c.b16 %v1037, %v1028
  %v1560 = vpack.c.b16 %v1038, %v1029
  %v1561 = vpack.c.b16 %v1039, %v1030
  %v1562 = vpack.c.b16 %v1040, %v1031
  %v1563 = vpack.c.b16 %v1041, %v1032
  %v1564 = vpack.c.b16 %v1042, %v1033
  %v1565 = vpack.c.b16 %v1043, %v1034
  %v1566 = vpack.c.b16 %v1044, %v1035
  %v1567 = vpack.c.b16 %v1054, %v1045
  %v1568 = vpack.c.b16 %v1055, %v1046
  %v1569 = vpack.c.b16 %v1056, %v1047
  %v1570 = vpack.c.b16 %v1057, %v1048
  %v1571 = vpack.c.b16 %v1058, %v1049
  %v1572 = vpack.c.b16 %v1059, %v1050
  %v1573 = vpack.c.b16 %v1060, %v1051
  %v1574 = vpack.c.b16 %v1061, %v1052
  %v1575 = vpack.c.b16 %v1062, %v1053
  %v1576 = vpack.c.b16 %v1072, %v1063
  %v1577 = vpack.c.b16 %v1073, %v1064
  %v1578 = vpack.c.b16 %v1074, %v1065
  %v1579 = vpack.c.b16 %v1075, %v1066
  %v1580 = vpack.c.b16 %v1076, %v1067
  %v1581 = vpack.c.b16 %v1077, %v1068
  %v1582 = vpack.c.b16 %v1078, %v1069
  %v1583 = vpack.c.b16 %v1079, %v1070
  %v1584 = vpack.c.b16 %v1080, %v1071
  %v1585 = vpack.c.b16 %v1090, %v1081
  %v1586 = vpack.c.b16 %v1091, %v1082
  %v1587 = vpack.c.b16 %v1092, %v1083
  %v1588 = vpack.c.b16 %v1093, %v1084
  %v1589 = vpack.c.b16 %v1094, %v1085
  %v1590 = vpack.c.b16 %v1095, %v1086
  %v1591 = vpack.c.b16 %v1096, %v1087
  %v1592 = vpack.c.b16 %v1097, %v1088
  %v1593 = vpack.c.b16 %v1098, %v1089
  %v1594 = vpack.c.b16 %v1108, %v1099
  %v1595 = vpack.c.b16 %v1109, %v1100
  %v1596 = vpack.c.b16 %v1110, %v1101
  %v1597 = vpack.c.b16 %v1111, %v1102
  %v1598 = vpack.c.b16 %v1112, %v1103
  %v1599 = vpack.c.b16 %v1113, %v1104
  %v1600 = vpack.c.b16 %v1114, %v1105
  %v1601 = vpack.c.b16 %v1115, %v1106
  %v1602 = vpack.c.b16 %v1116, %v1107
  %v1603 = vpack.c.b16 %v1126, %v1117
  %v1604 = vpack.c.b16 %v1127, %v1118
  %v1605 = vpack.c.b16 %v1128, %v1119
  %v1606 = vpack.c.b16 %v1129, %v1120
  %v1607 = vpack.c.b16 %v1130, %v1121
  %v1608 = vpack.c.b16 %v1131, %v1122
  %v1609 = vpack.c.b16 %v1132, %v1123
  %v1610 = vpack.c.b16 %v1133, %v1124
  %v1611 = vpack.c.b16 %v1134, %v1125
  %v1612 = vpack.c.b16 %v1144, %v1135
  %v1613 = vpack.c.b16 %v1145, %v1136
  %v1614 = vpack.c.b16 %v1146, %v1137
  %v1615 = vpack.c.b16 %v1147, %v1138
  %v1616 = vpack.c.b16 %v1148, %v1139
  %v1617 = vpack.c.b16 %v1149, %v1140
  %v1618 = vpack.c.b16 %v1150, %v1141
  %v1619 = vpack.c.b16 %v1151, %v1142
  %v1620 = vpack.c.b16 %v1152, %v1143
  %v1621 = vpack.c.b16 %v1162, %v1153
  %v1622 = vpack.c.b16 %v1163, %v1154
  %v1623 = vpack.c.b16 %v1164, %v1155
  %v1624 = vpack.c.b16 %v1165, %v1156
  %v1625 = vpack.c.b16 %v1166, %v1157
  %v1626 = vpack.c.b16 %v1167, %v1158
  %v1627 = vpack.c.b16 %v1168, %v1159
  %v1628 = vpack.c.b16 %v1169, %v1160
  %v1629 = vpack.c.b16 %v1170, %v1161
  %v1630 = vpack.c.b16 %v1180, %v1171
  %v1631 = vpack.c.b16 %v1181, %v1172
  %v1632 = vpack.c.b16 %v1182, %v1173
  %v1633 = vpack.c.b16 %v1183, %v1174
  %v1634 = vpack.c.b16 %v1184, %v1175
  %v1635 = vpack.c.b16 %v1185, %v1176
  %v1636 = vpack.c.b16 %v1186, %v1177
  %v1637 = vpack.c.b16 %v1187, %v1178
  %v1638 = vpack.c.b16 %v1188, %v1179
  %v1639 = vpack.c.b16 %v1198, %v1189
  %v1640 = vpack.c.b16 %v1199, %v1190
  %v1641 = vpack.c.b16 %v1200, %v1191
  %v1642 = vpack.c.b16 %v1201, %v1192
  %v1643 = vpack.c.b16 %v1202, %v1193
  %v1644 = vpack.c.b16 %v1203, %v1194
  %v1645 = vpack.c.b16 %v1204, %v1195
  %v1646 = vpack.c.b16 %v1205, %v1196
  %v1647 = vpack.c.b16 %v1206, %v1197
  %v1648 = vpack.c.b16 %v1216, %v1207
  %v1649 = vpack.c.b16 %v1217, %v1208
  %v1650 = vpack.c.b16 %v1218, %v1209
  %v1651 = vpack.c.b16 %v1219, %v1210
  %v1652 = vpack.c.b16 %v1220, %v1211
  %v1653 = vpack.c.b16 %v1221, %v1212
  %v1654 = vpack.c.b16 %v1222, %v1213
  %v1655 = vpack.c.b16 %v1223, %v1214
  %v1656 = vpack.c.b16 %v1224, %v1215
  %v1657 = vpack.c.b16 %v1234, %v1225
  %v1658 = vpack.c.b16 %v1235, %v1226
  %v1659 = vpack.c.b16 %v1236, %v1227
  %v1660 = vpack.c.b16 %v1237, %v1228
  %v1661 = vpack.c.b16 %v1238, %v1229
  %v1662 = vpack.c.b16 %v1239, %v1230
  %v1663 = vpack.c.b16 %v1240, %v1231
  %v1664 = vpack.c.b16 %v1241, %v1232
  %v1665 = vpack.c.b16 %v1242, %v1233
  %v1666 = vpack.c.b16 %v1252, %v1243
  %v1667 = vpack.c.b16 %v1253, %v1244
  %v1668 = vpack.c.b16 %v1254, %v1245
  %v1669 = vpack.c.b16 %v1255, %v1246
  %v1670 = vpack.c.b16 %v1256, %v1247
  %v1671 = vpack.c.b16 %v1257, %v1248
  %v1672 = vpack.c.b16 %v1258, %v1249
  %v1673 = vpack.c.b16 %v1259, %v1250
  %v1674 = vpack.c.b16 %v1260, %v1251
  %v1675 = vpack.c.b16 %v1270, %v1261
  %v1676 = vpack.c.b16 %v1271, %v1262
  %v1677 = vpack.c.b16 %v1272, %v1263
  %v1678 = vpack.c.b16 %v1273, %v1264
  %v1679 = vpack.c.b16 %v1274, %v1265
  %v1680 = vpack.c.b16 %v1275, %v1266
  %v1681 = vpack.c.b16 %v1276, %v1267
  %v1682 = vpack.c.b16 %v1277, %v1268
  %v1683 = vpack.c.b16 %v1278, %v1269
  %v1684 = vpack.c.b16 %v1288, %v1279
  %v1685 = vpack.c.b16 %v1289, %v1280
  %v1686 = vpack.c.b16 %v1290, %v1281
  %v1687 = vpack.c.b16 %v1291, %v1282
  %v1688 = vpack.c.b16 %v1292, %v1283
  %v1689 = vpack.c.b16 %v1293, %v1284
  %v1690 = vpack.c.b16 %v1294, %v1285
  %v1691 = vpack.c.b16 %v1295, %v1286
  %v1692 = vpack.c.b16 %v1296, %v1287
  %v1693 = vpack.c.b16 %v1306, %v1297
  %v1694 = vpack.c.b16 %v1307, %v1298
  %v1695 = vpack.c.b16 %v1308, %v1299
  %v1696 = vpack.c.b16 %v1309, %v1300
  %v1697 = vpack.c.b16 %v1310, %v1301
  %v1698 = vpack.c.b16 %v1311, %v1302
  %v1699 = vpack.c.b16 %v1312, %v1303
  %v1700 = vpack.c.b16 %v1313, %v1304
  %v1701 = vpack.c.b16 %v1314, %v1305
  %v1702 = vpack.c.b16 %v1324, %v1315
  %v1703 = vpack.c.b16 %v1325, %v1316
  %v1704 = vpack.c.b16 %v1326, %v1317
  %v1705 = vpack.c.b16 %v1327, %v1318
  %v1706 = vpack.c.b16 %v1328, %v1319
  %v1707 = vpack.c.b16 %v1329, %v1320
  %v1708 = vpack.c.b16 %v1330, %v1321
  %v1709 = vpack.c.b16 %v1331, %v1322
  %v1710 = vpack.c.b16 %v1332, %v1323
  %v1711 = vpack.c.b16 %v1342, %v1333
  %v1712 = vpack.c.b16 %v1343, %v1334
  %v1713 = vpack.c.b16 %v1344, %v1335
  %v1714 = vpack.c.b16 %v1345, %v1336
  %v1715 = vpack.c.b16 %v1346, %v1337
  %v1716 = vpack.c.b16 %v1347, %v1338
  %v1717 = vpack.c.b16 %v1348, %v1339
  %v1718 = vpack.c.b16 %v1349, %v1340
  %v1719 = vpack.c.b16 %v1350, %v1341
  %v1720 = vpack.c.b16 %v1360, %v1351
  %v1721 = vpack.c.b16 %v1361, %v1352
  %v1722 = vpack.c.b16 %v1362, %v1353
  %v1723 = vpack.c.b16 %v1363, %v1354
  %v1724 = vpack.c.b16 %v1364, %v1355
  %v1725 = vpack.c.b16 %v1365, %v1356
  %v1726 = vpack.c.b16 %v1366, %v1357
  %v1727 = vpack.c.b16 %v1367, %v1358
  %v1728 = vpack.c.b16 %v1368, %v1359
  %v1729 = vpack.c.b16 %v1378, %v1369
  %v1730 = vpack.c.b16 %v1379, %v1370
  %v1731 = vpack.c.b16 %v1380, %v1371
  %v1732 = vpack.c.b16 %v1381, %v1372
  %v1733 = vpack.c.b16 %v1382, %v1373
  %v1734 = vpack.c.b16 %v1383, %v1374
  %v1735 = vpack.c.b16 %v1384, %v1375
  %v1736 = vpack.c.b16 %v1385, %v1376
  %v1737 = vpack.c.b16 %v1386, %v1377
  %v1738 = vpack.c.b16 %v1396, %v1387
  %v1739 = vpack.c.b16 %v1397, %v1388
  %v1740 = vpack.c.b16 %v1398, %v1389
  %v1741 = vpack.c.b16 %v1399, %v1390
  %v1742 = vpack.c.b16 %v1400, %v1391
  %v1743 = vpack.c.b16 %v1401, %v1392
  %v1744 = vpack.c.b16 %v1402, %v1393
  %v1745 = vpack.c.b16 %v1403, %v1394
  %v1746 = vpack.c.b16 %v1404, %v1395
  %v1747 = vpack.c.b16 %v1414, %v1405
  %v1748 = vpack.c.b16 %v1415, %v1406
  %v1749 = vpack.c.b16 %v1416, %v1407
  %v1750 = vpack.c.b16 %v1417, %v1408
  %v1751 = vpack.c.b16 %v1418, %v1409
  %v1752 = vpack.c.b16 %v1419, %v1410
  %v1753 = vpack.c.b16 %v1420, %v1411
  %v1754 = vpack.c.b16 %v1421, %v1412
  %v1755 = vpack.c.b16 %v1422, %v1413
  %v1756 = vpack.c.b16 %v1432, %v1423
  %v1757 = vpack.c.b16 %v1433, %v1424
  %v1758 = vpack.c.b16 %v1434, %v1425
  %v1759 = vpack.c.b16 %v1435, %v1426
  %v1760 = vpack.c.b16 %v1436, %v1427
  %v1761 = vpack.c.b16 %v1437, %v1428
  %v1762 = vpack.c.b16 %v1438, %v1429
  %v1763 = vpack.c.b16 %v1439, %v1430
  %v1764 = vpack.c.b16 %v1440, %v1431
  %v1765 = vpack.c.b16 %v1450, %v1441
  %v1766 = vpack.c.b16 %v1451, %v1442
  %v1767 = vpack.c.b16 %v1452, %v1443
  %v1768 = vpack.c.b16 %v1453, %v1444
  %v1769 = vpack.c.b16 %v1454, %v1445
  %v1770 = vpack.c.b16 %v1455, %v1446
  %v1771 = vpack.c.b16 %v1456, %v1447
  %v1772 = vpack.c.b16 %v1457, %v1448
  %v1773 = vpack.c.b16 %v1458, %v1449
  %v1774 = vpack.c.b16 %v1468, %v1459
  %v1775 = vpack.c.b16 %v1469, %v1460
  %v1776 = vpack.c.b16 %v1470, %v1461
  %v1777 = vpack.c.b16 %v1471, %v1462
  %v1778 = vpack.c.b16 %v1472, %v1463
  %v1779 = vpack.c.b16 %v1473, %v1464
  %v1780 = vpack.c.b16 %v1474, %v1465
  %v1781 = vpack.c.b16 %v1475, %v1466
  %v1782 = vpack.c.b16 %v1476, %v1467
  %v1783 = vpack.c.b16 %v1486, %v1477
  %v1784 = vpack.c.b16 %v1487, %v1478
  %v1785 = vpack.c.b16 %v1488, %v1479
  %v1786 = vpack.c.b16 %v1489, %v1480
  %v1787 = vpack.c.b16 %v1490, %v1481
  %v1788 = vpack.c.b16 %v1491, %v1482
  %v1789 = vpack.c.b16 %v1492, %v1483
  %v1790 = vpack.c.b16 %v1493, %v1484
  %v1791 = vpack.c.b16 %v1494, %v1485
  %v1792 = vpack.c.b16 %v1504, %v1495
  %v1793 = vpack.c.b16 %v1505, %v1496
  %v1794 = vpack.c.b16 %v1506, %v1497
  %v1795 = vpack.c.b16 %v1507, %v1498
  %v1796 = vpack.c.b16 %v1508, %v1499
  %v1797 = vpack.c.b16 %v1509, %v1500
  %v1798 = vpack.c.b16 %v1510, %v1501
  %v1799 = vpack.c.b16 %v1511, %v1502
  %v1800 = vpack.c.b16 %v1512, %v1503
  %v2233 = vunpack.c.l.b16 %v473
  %v2234 = vunpack.c.l.b16 %v474
  %v2235 = vunpack.c.l.b16 %v475
  %v2236 = vunpack.c.l.b16 %v476
  %v2237 = vunpack.c.l.b16 %v477
  %v2238 = vunpack.c.l.b16 %v478
  %v2239 = vunpack.c.l.b16 %v479
  %v2240 = vunpack.c.l.b16 %v480
  %v2241 = vunpack.c.l.b16 %v481
  %v2242 = vunpack.c.l.b16 %v482
  %v2243 = vunpack.c.l.b16 %v483
  %v2244 = vunpack.c.l.b16 %v484
  %v2245 = vunpack.c.l.b16 %v485
  %v2246 = vunpack.c.l.b16 %v486
  %v2247 = vunpack.c.l.b16 %v487
  %v2248 = vunpack.c.l.b16 %v488
  %v2249 = vunpack.c.l.b16 %v489
  %v2250 = vunpack.c.l.b16 %v490
  %v2251 = vunpack.c.l.b16 %v491
  %v2252 = vunpack.c.l.b16 %v492
  %v2253 = vunpack.c.l.b16 %v493
  %v2254 = vunpack.c.l.b16 %v494
  %v2255 = vunpack.c.l.b16 %v495
  %v2256 = vunpack.c.l.b16 %v496
  %v2257 = vunpack.c.l.b16 %v497
  %v2258 = vunpack.c.l.b16 %v498
  %v2259 = vunpack.c.l.b16 %v499
  %v2260 = vunpack.c.l.b16 %v500
  %v2261 = vunpack.c.l.b16 %v501
  %v2262 = vunpack.c.l.b16 %v502
  %v2263 = vunpack.c.l.b16 %v503
  %v2264 = vunpack.c.l.b16 %v504
  %v2265 = vunpack.c.l.b16 %v505
  %v2266 = vunpack.c.l.b16 %v506
  %v2267 = vunpack.c.l.b16 %v507
  %v2268 = vunpack.c.l.b16 %v508
  %v2269 = vunpack.c.l.b16 %v509
  %v2270 = vunpack.c.l.b16 %v510
  %v2271 = vunpack.c.l.b16 %v511
  %v2272 = vunpack.c.l.b16 %v512
  %v2273 = vunpack.c.l.b16 %v513
  %v2274 = vunpack.c.l.b16 %v514
  %v2275 = vunpack.c.l.b16 %v515
  %v2276 = vunpack.c.l.b16 %v516
  %v2277 = vunpack.c.l.b16 %v517
  %v2278 = vunpack.c.l.b16 %v518
  %v2279 = vunpack.c.l.b16 %v519
  %v2280 = vunpack.c.l.b16 %v520
  %v2281 = vunpack.c.l.b16 %v521
  %v2282 = vunpack.c.l.b16 %v522
  %v2283 = vunpack.c.l.b16 %v523
  %v2284 = vunpack.c.l.b16 %v524
  %v2285 = vunpack.c.l.b16 %v525
  %v2286 = vunpack.c.l.b16 %v526
  %v2287 = vunpack.c.l.b16 %v527
  %v2288 = vunpack.c.l.b16 %v528
  %v2289 = vunpack.c.l.b16 %v529
  %v2290 = vunpack.c.l.b16 %v530
  %v2291 = vunpack.c.l.b16 %v531
  %v2292 = vunpack.c.l.b16 %v532
  %v2293 = vunpack.c.l.b16 %v533
  %v2294 = vunpack.c.l.b16 %v534
  %v2295 = vunpack.c.l.b16 %v535
  %v2296 = vunpack.c.l.b16 %v536
  %v2297 = vunpack.c.l.b16 %v537
  %v2298 = vunpack.c.l.b16 %v538
  %v2299 = vunpack.c.l.b16 %v539
  %v2300 = vunpack.c.l.b16 %v540
  %v2301 = vunpack.c.l.b16 %v541
  %v2302 = vunpack.c.l.b16 %v542
  %v2303 = vunpack.c.l.b16 %v543
  %v2304 = vunpack.c.l.b16 %v544
  %v2305 = vunpack.c.l.b16 %v545
  %v2306 = vunpack.c.l.b16 %v546
  %v2307 = vunpack.c.l.b16 %v547
  %v2308 = vunpack.c.l.b16 %v548
  %v2309 = vunpack.c.l.b16 %v549
  %v2310 = vunpack.c.l.b16 %v550
  %v2311 = vunpack.c.l.b16 %v551
  %v2312 = vunpack.c.l.b16 %v552
  %v2313 = vunpack.c.l.b16 %v553
  %v2314 = vunpack.c.l.b16 %v554
  %v2315 = vunpack.c.l.b16 %v555
  %v2316 = vunpack.c.l.b16 %v556
  %v2317 = vunpack.c.l.b16 %v557
  %v2318 = vunpack.c.l.b16 %v558
  %v2319 = vunpack.c.l.b16 %v559
  %v2320 = vunpack.c.l.b16 %v560
  %v2321 = vunpack.c.l.b16 %v561
  %v2322 = vunpack.c.l.b16 %v562
  %v2323 = vunpack.c.l.b16 %v563
  %v2324 = vunpack.c.l.b16 %v564
  %v2325 = vunpack.c.l.b16 %v565
  %v2326 = vunpack.c.l.b16 %v566
  %v2327 = vunpack.c.l.b16 %v567
  %v2328 = vunpack.c.l.b16 %v568
  %v2329 = vunpack.c.l.b16 %v569
  %v2330 = vunpack.c.l.b16 %v570
  %v2331 = vunpack.c.l.b16 %v571
  %v2332 = vunpack.c.l.b16 %v572
  %v2333 = vunpack.c.l.b16 %v573
  %v2334 = vunpack.c.l.b16 %v574
  %v2335 = vunpack.c.l.b16 %v575
  %v2336 = vunpack.c.l.b16 %v576
  %v2337 = vunpack.c.l.b16 %v577
  %v2338 = vunpack.c.l.b16 %v578
  %v2339 = vunpack.c.l.b16 %v579
  %v2340 = vunpack.c.l.b16 %v580
  %v2341 = vunpack.c.l.b16 %v581
  %v2342 = vunpack.c.l.b16 %v582
  %v2343 = vunpack.c.l.b16 %v583
  %v2344 = vunpack.c.l.b16 %v584
  %v2345 = vunpack.c.l.b16 %v585
  %v2346 = vunpack.c.l.b16 %v586
  %v2347 = vunpack.c.l.b16 %v587
  %v2348 = vunpack.c.l.b16 %v588
  %v2349 = vunpack.c.l.b16 %v589
  %v2350 = vunpack.c.l.b16 %v590
  %v2351 = vunpack.c.l.b16 %v591
  %v2352 = vunpack.c.l.b16 %v592
  %v2353 = vunpack.c.l.b16 %v593
  %v2354 = vunpack.c.l.b16 %v594
  %v2355 = vunpack.c.l.b16 %v595
  %v2356 = vunpack.c.l.b16 %v596
  %v2357 = vunpack.c.l.b16 %v597
  %v2358 = vunpack.c.l.b16 %v598
  %v2359 = vunpack.c.l.b16 %v599
  %v2360 = vunpack.c.l.b16 %v600
  %v2361 = vunpack.c.l.b16 %v601
  %v2362 = vunpack.c.l.b16 %v602
  %v2363 = vunpack.c.l.b16 %v603
  %v2364 = vunpack.c.l.b16 %v604
  %v2365 = vunpack.c.l.b16 %v605
  %v2366 = vunpack.c.l.b16 %v606
  %v2367 = vunpack.c.l.b16 %v607
  %v2368 = vunpack.c.l.b16 %v608
  %v2369 = vunpack.c.l.b16 %v609
  %v2370 = vunpack.c.l.b16 %v610
  %v2371 = vunpack.c.l.b16 %v611
  %v2372 = vunpack.c.l.b16 %v612
  %v2373 = vunpack.c.l.b16 %v613
  %v2374 = vunpack.c.l.b16 %v614
  %v2375 = vunpack.c.l.b16 %v615
  %v2376 = vunpack.c.l.b16 %v616
  %v2377 = vpack.c.b16 %v2234, %v2233
  %v2378 = vpack.c.b16 %v2236, %v2235
  %v2379 = vpack.c.b16 %v2238, %v2237
  %v2380 = vpack.c.b16 %v2240, %v2239
  %v2381 = vpack.c.b16 %v2242, %v2241
  %v2382 = vpack.c.b16 %v2244, %v2243
  %v2383 = vpack.c.b16 %v2246, %v2245
  %v2384 = vpack.c.b16 %v2248, %v2247
  %v2385 = vpack.c.b16 %v2250, %v2249
  %v2386 = vpack.c.b16 %v2252, %v2251
  %v2387 = vpack.c.b16 %v2254, %v2253
  %v2388 = vpack.c.b16 %v2256, %v2255
  %v2389 = vpack.c.b16 %v2258, %v2257
  %v2390 = vpack.c.b16 %v2260, %v2259
  %v2391 = vpack.c.b16 %v2262, %v2261
  %v2392 = vpack.c.b16 %v2264, %v2263
  %v2393 = vpack.c.b16 %v2266, %v2265
  %v2394 = vpack.c.b16 %v2268, %v2267
  %v2395 = vpack.c.b16 %v2270, %v2269
  %v2396 = vpack.c.b16 %v2272, %v2271
  %v2397 = vpack.c.b16 %v2274, %v2273
  %v2398 = vpack.c.b16 %v2276, %v2275
  %v2399 = vpack.c.b16 %v2278, %v2277
  %v2400 = vpack.c.b16 %v2280, %v2279
  %v2401 = vpack.c.b16 %v2282, %v2281
  %v2402 = vpack.c.b16 %v2284, %v2283
  %v2403 = vpack.c.b16 %v2286, %v2285
  %v2404 = vpack.c.b16 %v2288, %v2287
  %v2405 = vpack.c.b16 %v2290, %v2289
  %v2406 = vpack.c.b16 %v2292, %v2291
  %v2407 = vpack.c.b16 %v2294, %v2293
  %v2408 = vpack.c.b16 %v2296, %v2295
  %v2409 = vpack.c.b16 %v2298, %v2297
  %v2410 = vpack.c.b16 %v2300, %v2299
  %v2411 = vpack.c.b16 %v2302, %v2301
  %v2412 = vpack.c.b16 %v2304, %v2303
  %v2413 = vpack.c.b16 %v2306, %v2305
  %v2414 = vpack.c.b16 %v2308, %v2307
  %v2415 = vpack.c.b16 %v2310, %v2309
  %v2416 = vpack.c.b16 %v2312, %v2311
  %v2417 = vpack.c.b16 %v2314, %v2313
  %v2418 = vpack.c.b16 %v2316, %v2315
  %v2419 = vpack.c.b16 %v2318, %v2317
  %v2420 = vpack.c.b16 %v2320, %v2319
  %v2421 = vpack.c.b16 %v2322, %v2321
  %v2422 = vpack.c.b16 %v2324, %v2323
  %v2423 = vpack.c.b16 %v2326, %v2325
  %v2424 = vpack.c.b16 %v2328, %v2327
  %v2425 = vpack.c.b16 %v2330, %v2329
  %v2426 = vpack.c.b16 %v2332, %v2331
  %v2427 = vpack.c.b16 %v2334, %v2333
  %v2428 = vpack.c.b16 %v2336, %v2335
  %v2429 = vpack.c.b16 %v2338, %v2337
  %v2430 = vpack.c.b16 %v2340, %v2339
  %v2431 = vpack.c.b16 %v2342, %v2341
  %v2432 = vpack.c.b16 %v2344, %v2343
  %v2433 = vpack.c.b16 %v2346, %v2345
  %v2434 = vpack.c.b16 %v2348, %v2347
  %v2435 = vpack.c.b16 %v2350, %v2349
  %v2436 = vpack.c.b16 %v2352, %v2351
  %v2437 = vpack.c.b16 %v2354, %v2353
  %v2438 = vpack.c.b16 %v2356, %v2355
  %v2439 = vpack.c.b16 %v2358, %v2357
  %v2440 = vpack.c.b16 %v2360, %v2359
  %v2441 = vpack.c.b16 %v2362, %v2361
  %v2442 = vpack.c.b16 %v2364, %v2363
  %v2443 = vpack.c.b16 %v2366, %v2365
  %v2444 = vpack.c.b16 %v2368, %v2367
  %v2445 = vpack.c.b16 %v2370, %v2369
  %v2446 = vpack.c.b16 %v2372, %v2371
  %v2447 = vpack.c.b16 %v2374, %v2373
  %v2448 = vpack.c.b16 %v2376, %v2375
  %2521 = vmatpush.bf16.msra.mxu0 %v2384
  %2522 = vmatpush.bf16.msra.mxu0 %v2383
  %2523 = vmatpush.bf16.msra.mxu0 %v2382
  %2524 = vmatpush.bf16.msra.mxu0 %v2381
  %2525 = vmatpush.bf16.msra.mxu0 %v2380
  %2526 = vmatpush.bf16.msra.mxu0 %v2379
  %2527 = vmatpush.bf16.msra.mxu0 %v2378
  %2528 = vmatpush.bf16.msra.mxu0 %v2377
  %2529 = vmatmul.bf16.gmra.mxu0 %v1513
  %v2530 = vpop.f32.mrf.mxu0
  %v2531 = vadd.f32 0.0, %v2530
  %v2532 = vpop.f32.mrf.mxu0
  %v2533 = vadd.f32 0.0, %v2532
  %2534 = vmatmul.bf16.gmra.mxu0 %v1522
  %v2535 = vpop.f32.mrf.mxu0
  %v2536 = vadd.f32 0.0, %v2535
  %v2537 = vpop.f32.mrf.mxu0
  %v2538 = vadd.f32 0.0, %v2537
  %2539 = vmatmul.bf16.gmra.mxu0 %v1531
  %v2540 = vpop.f32.mrf.mxu0
  %v2541 = vadd.f32 0.0, %v2540
  %v2542 = vpop.f32.mrf.mxu0
  %v2543 = vadd.f32 0.0, %v2542
  %2544 = vmatmul.bf16.gmra.mxu0 %v1540
  %v2545 = vpop.f32.mrf.mxu0
  %v2546 = vadd.f32 0.0, %v2545
  %v2547 = vpop.f32.mrf.mxu0
  %v2548 = vadd.f32 0.0, %v2547
  %2549 = vmatmul.bf16.gmra.mxu0 %v1549
  %v2550 = vpop.f32.mrf.mxu0
  %v2551 = vadd.f32 0.0, %v2550
  %v2552 = vpop.f32.mrf.mxu0
  %v2553 = vadd.f32 0.0, %v2552
  %2554 = vmatmul.bf16.gmra.mxu0 %v1558
  %v2555 = vpop.f32.mrf.mxu0
  %v2556 = vadd.f32 0.0, %v2555
  %v2557 = vpop.f32.mrf.mxu0
  %v2558 = vadd.f32 0.0, %v2557
  %2559 = vmatmul.bf16.gmra.mxu0 %v1567
  %v2560 = vpop.f32.mrf.mxu0
  %v2561 = vadd.f32 0.0, %v2560
  %v2562 = vpop.f32.mrf.mxu0
  %v2563 = vadd.f32 0.0, %v2562
  %2564 = vmatmul.bf16.gmra.mxu0 %v1576
  %v2565 = vpop.f32.mrf.mxu0
  %v2566 = vadd.f32 0.0, %v2565
  %v2567 = vpop.f32.mrf.mxu0
  %v2568 = vadd.f32 0.0, %v2567
  %2569 = vmatmul.bf16.gmra.mxu0 %v1585
  %v2570 = vpop.f32.mrf.mxu0
  %v2571 = vadd.f32 0.0, %v2570
  %v2572 = vpop.f32.mrf.mxu0
  %v2573 = vadd.f32 0.0, %v2572
  %2574 = vmatmul.bf16.gmra.mxu0 %v1594
  %v2575 = vpop.f32.mrf.mxu0
  %v2576 = vadd.f32 0.0, %v2575
  %v2577 = vpop.f32.mrf.mxu0
  %v2578 = vadd.f32 0.0, %v2577
  %2579 = vmatmul.bf16.gmra.mxu0 %v1603
  %v2580 = vpop.f32.mrf.mxu0
  %v2581 = vadd.f32 0.0, %v2580
  %v2582 = vpop.f32.mrf.mxu0
  %v2583 = vadd.f32 0.0, %v2582
  %2584 = vmatmul.bf16.gmra.mxu0 %v1612
  %v2585 = vpop.f32.mrf.mxu0
  %v2586 = vadd.f32 0.0, %v2585
  %v2587 = vpop.f32.mrf.mxu0
  %v2588 = vadd.f32 0.0, %v2587
  %2589 = vmatmul.bf16.gmra.mxu0 %v1621
  %v2590 = vpop.f32.mrf.mxu0
  %v2591 = vadd.f32 0.0, %v2590
  %v2592 = vpop.f32.mrf.mxu0
  %v2593 = vadd.f32 0.0, %v2592
  %2594 = vmatmul.bf16.gmra.mxu0 %v1630
  %v2595 = vpop.f32.mrf.mxu0
  %v2596 = vadd.f32 0.0, %v2595
  %v2597 = vpop.f32.mrf.mxu0
  %v2598 = vadd.f32 0.0, %v2597
  %2599 = vmatmul.bf16.gmra.mxu0 %v1639
  %v2600 = vpop.f32.mrf.mxu0
  %v2601 = vadd.f32 0.0, %v2600
  %v2602 = vpop.f32.mrf.mxu0
  %v2603 = vadd.f32 0.0, %v2602
  %2604 = vmatmul.bf16.gmra.mxu0 %v1648
  %v2605 = vpop.f32.mrf.mxu0
  %v2606 = vadd.f32 0.0, %v2605
  %v2607 = vpop.f32.mrf.mxu0
  %v2608 = vadd.f32 0.0, %v2607
  %2609 = vmatmul.bf16.gmra.mxu0 %v1657
  %v2610 = vpop.f32.mrf.mxu0
  %v2611 = vadd.f32 0.0, %v2610
  %v2612 = vpop.f32.mrf.mxu0
  %v2613 = vadd.f32 0.0, %v2612
  %2614 = vmatmul.bf16.gmra.mxu0 %v1666
  %v2615 = vpop.f32.mrf.mxu0
  %v2616 = vadd.f32 0.0, %v2615
  %v2617 = vpop.f32.mrf.mxu0
  %v2618 = vadd.f32 0.0, %v2617
  %2619 = vmatmul.bf16.gmra.mxu0 %v1675
  %v2620 = vpop.f32.mrf.mxu0
  %v2621 = vadd.f32 0.0, %v2620
  %v2622 = vpop.f32.mrf.mxu0
  %v2623 = vadd.f32 0.0, %v2622
  %2624 = vmatmul.bf16.gmra.mxu0 %v1684
  %v2625 = vpop.f32.mrf.mxu0
  %v2626 = vadd.f32 0.0, %v2625
  %v2627 = vpop.f32.mrf.mxu0
  %v2628 = vadd.f32 0.0, %v2627
  %2629 = vmatmul.bf16.gmra.mxu0 %v1693
  %v2630 = vpop.f32.mrf.mxu0
  %v2631 = vadd.f32 0.0, %v2630
  %v2632 = vpop.f32.mrf.mxu0
  %v2633 = vadd.f32 0.0, %v2632
  %2634 = vmatmul.bf16.gmra.mxu0 %v1702
  %v2635 = vpop.f32.mrf.mxu0
  %v2636 = vadd.f32 0.0, %v2635
  %v2637 = vpop.f32.mrf.mxu0
  %v2638 = vadd.f32 0.0, %v2637
  %2639 = vmatmul.bf16.gmra.mxu0 %v1711
  %v2640 = vpop.f32.mrf.mxu0
  %v2641 = vadd.f32 0.0, %v2640
  %v2642 = vpop.f32.mrf.mxu0
  %v2643 = vadd.f32 0.0, %v2642
  %2644 = vmatmul.bf16.gmra.mxu0 %v1720
  %v2645 = vpop.f32.mrf.mxu0
  %v2646 = vadd.f32 0.0, %v2645
  %v2647 = vpop.f32.mrf.mxu0
  %v2648 = vadd.f32 0.0, %v2647
  %2649 = vmatmul.bf16.gmra.mxu0 %v1729
  %v2650 = vpop.f32.mrf.mxu0
  %v2651 = vadd.f32 0.0, %v2650
  %v2652 = vpop.f32.mrf.mxu0
  %v2653 = vadd.f32 0.0, %v2652
  %2654 = vmatmul.bf16.gmra.mxu0 %v1738
  %v2655 = vpop.f32.mrf.mxu0
  %v2656 = vadd.f32 0.0, %v2655
  %v2657 = vpop.f32.mrf.mxu0
  %v2658 = vadd.f32 0.0, %v2657
  %2659 = vmatmul.bf16.gmra.mxu0 %v1747
  %v2660 = vpop.f32.mrf.mxu0
  %v2661 = vadd.f32 0.0, %v2660
  %v2662 = vpop.f32.mrf.mxu0
  %v2663 = vadd.f32 0.0, %v2662
  %2664 = vmatmul.bf16.gmra.mxu0 %v1756
  %v2665 = vpop.f32.mrf.mxu0
  %v2666 = vadd.f32 0.0, %v2665
  %v2667 = vpop.f32.mrf.mxu0
  %v2668 = vadd.f32 0.0, %v2667
  %2669 = vmatmul.bf16.gmra.mxu0 %v1765
  %v2670 = vpop.f32.mrf.mxu0
  %v2671 = vadd.f32 0.0, %v2670
  %v2672 = vpop.f32.mrf.mxu0
  %v2673 = vadd.f32 0.0, %v2672
  %2674 = vmatmul.bf16.gmra.mxu0 %v1774
  %v2675 = vpop.f32.mrf.mxu0
  %v2676 = vadd.f32 0.0, %v2675
  %v2677 = vpop.f32.mrf.mxu0
  %v2678 = vadd.f32 0.0, %v2677
  %2679 = vmatmul.bf16.gmra.mxu0 %v1783
  %v2680 = vpop.f32.mrf.mxu0
  %v2681 = vadd.f32 0.0, %v2680
  %v2682 = vpop.f32.mrf.mxu0
  %v2683 = vadd.f32 0.0, %v2682
  %2684 = vmatmul.bf16.gmra.mxu0 %v1792
  %v2685 = vpop.f32.mrf.mxu0
  %v2686 = vadd.f32 0.0, %v2685
  %v2687 = vpop.f32.mrf.mxu0
  %v2688 = vadd.f32 0.0, %v2687
  %2689 = vdwg.mxu0
  %2690 = vmatpush.bf16.msra.mxu0 %v2392
  %2691 = vmatpush.bf16.msra.mxu0 %v2391
  %2692 = vmatpush.bf16.msra.mxu0 %v2390
  %2693 = vmatpush.bf16.msra.mxu0 %v2389
  %2694 = vmatpush.bf16.msra.mxu0 %v2388
  %2695 = vmatpush.bf16.msra.mxu0 %v2387
  %2696 = vmatpush.bf16.msra.mxu0 %v2386
  %2697 = vmatpush.bf16.msra.mxu0 %v2385
  %2698 = vmatmul.bf16.gmra.mxu0 %v1514
  %v2699 = vpop.f32.mrf.mxu0
  %v2700 = vadd.f32 %v2531, %v2699
  %v2701 = vpop.f32.mrf.mxu0
  %v2702 = vadd.f32 %v2533, %v2701
  %2703 = vmatmul.bf16.gmra.mxu0 %v1523
  %v2704 = vpop.f32.mrf.mxu0
  %v2705 = vadd.f32 %v2536, %v2704
  %v2706 = vpop.f32.mrf.mxu0
  %v2707 = vadd.f32 %v2538, %v2706
  %2708 = vmatmul.bf16.gmra.mxu0 %v1532
  %v2709 = vpop.f32.mrf.mxu0
  %v2710 = vadd.f32 %v2541, %v2709
  %v2711 = vpop.f32.mrf.mxu0
  %v2712 = vadd.f32 %v2543, %v2711
  %2713 = vmatmul.bf16.gmra.mxu0 %v1541
  %v2714 = vpop.f32.mrf.mxu0
  %v2715 = vadd.f32 %v2546, %v2714
  %v2716 = vpop.f32.mrf.mxu0
  %v2717 = vadd.f32 %v2548, %v2716
  %2718 = vmatmul.bf16.gmra.mxu0 %v1550
  %v2719 = vpop.f32.mrf.mxu0
  %v2720 = vadd.f32 %v2551, %v2719
  %v2721 = vpop.f32.mrf.mxu0
  %v2722 = vadd.f32 %v2553, %v2721
  %2723 = vmatmul.bf16.gmra.mxu0 %v1559
  %v2724 = vpop.f32.mrf.mxu0
  %v2725 = vadd.f32 %v2556, %v2724
  %v2726 = vpop.f32.mrf.mxu0
  %v2727 = vadd.f32 %v2558, %v2726
  %2728 = vmatmul.bf16.gmra.mxu0 %v1568
  %v2729 = vpop.f32.mrf.mxu0
  %v2730 = vadd.f32 %v2561, %v2729
  %v2731 = vpop.f32.mrf.mxu0
  %v2732 = vadd.f32 %v2563, %v2731
  %2733 = vmatmul.bf16.gmra.mxu0 %v1577
  %v2734 = vpop.f32.mrf.mxu0
  %v2735 = vadd.f32 %v2566, %v2734
  %v2736 = vpop.f32.mrf.mxu0
  %v2737 = vadd.f32 %v2568, %v2736
  %2738 = vmatmul.bf16.gmra.mxu0 %v1586
  %v2739 = vpop.f32.mrf.mxu0
  %v2740 = vadd.f32 %v2571, %v2739
  %v2741 = vpop.f32.mrf.mxu0
  %v2742 = vadd.f32 %v2573, %v2741
  %2743 = vmatmul.bf16.gmra.mxu0 %v1595
  %v2744 = vpop.f32.mrf.mxu0
  %v2745 = vadd.f32 %v2576, %v2744
  %v2746 = vpop.f32.mrf.mxu0
  %v2747 = vadd.f32 %v2578, %v2746
  %2748 = vmatmul.bf16.gmra.mxu0 %v1604
  %v2749 = vpop.f32.mrf.mxu0
  %v2750 = vadd.f32 %v2581, %v2749
  %v2751 = vpop.f32.mrf.mxu0
  %v2752 = vadd.f32 %v2583, %v2751
  %2753 = vmatmul.bf16.gmra.mxu0 %v1613
  %v2754 = vpop.f32.mrf.mxu0
  %v2755 = vadd.f32 %v2586, %v2754
  %v2756 = vpop.f32.mrf.mxu0
  %v2757 = vadd.f32 %v2588, %v2756
  %2758 = vmatmul.bf16.gmra.mxu0 %v1622
  %v2759 = vpop.f32.mrf.mxu0
  %v2760 = vadd.f32 %v2591, %v2759
  %v2761 = vpop.f32.mrf.mxu0
  %v2762 = vadd.f32 %v2593, %v2761
  %2763 = vmatmul.bf16.gmra.mxu0 %v1631
  %v2764 = vpop.f32.mrf.mxu0
  %v2765 = vadd.f32 %v2596, %v2764
  %v2766 = vpop.f32.mrf.mxu0
  %v2767 = vadd.f32 %v2598, %v2766
  %2768 = vmatmul.bf16.gmra.mxu0 %v1640
  %v2769 = vpop.f32.mrf.mxu0
  %v2770 = vadd.f32 %v2601, %v2769
  %v2771 = vpop.f32.mrf.mxu0
  %v2772 = vadd.f32 %v2603, %v2771
  %2773 = vmatmul.bf16.gmra.mxu0 %v1649
  %v2774 = vpop.f32.mrf.mxu0
  %v2775 = vadd.f32 %v2606, %v2774
  %v2776 = vpop.f32.mrf.mxu0
  %v2777 = vadd.f32 %v2608, %v2776
  %2778 = vmatmul.bf16.gmra.mxu0 %v1658
  %v2779 = vpop.f32.mrf.mxu0
  %v2780 = vadd.f32 %v2611, %v2779
  %v2781 = vpop.f32.mrf.mxu0
  %v2782 = vadd.f32 %v2613, %v2781
  %2783 = vmatmul.bf16.gmra.mxu0 %v1667
  %v2784 = vpop.f32.mrf.mxu0
  %v2785 = vadd.f32 %v2616, %v2784
  %v2786 = vpop.f32.mrf.mxu0
  %v2787 = vadd.f32 %v2618, %v2786
  %2788 = vmatmul.bf16.gmra.mxu0 %v1676
  %v2789 = vpop.f32.mrf.mxu0
  %v2790 = vadd.f32 %v2621, %v2789
  %v2791 = vpop.f32.mrf.mxu0
  %v2792 = vadd.f32 %v2623, %v2791
  %2793 = vmatmul.bf16.gmra.mxu0 %v1685
  %v2794 = vpop.f32.mrf.mxu0
  %v2795 = vadd.f32 %v2626, %v2794
  %v2796 = vpop.f32.mrf.mxu0
  %v2797 = vadd.f32 %v2628, %v2796
  %2798 = vmatmul.bf16.gmra.mxu0 %v1694
  %v2799 = vpop.f32.mrf.mxu0
  %v2800 = vadd.f32 %v2631, %v2799
  %v2801 = vpop.f32.mrf.mxu0
  %v2802 = vadd.f32 %v2633, %v2801
  %2803 = vmatmul.bf16.gmra.mxu0 %v1703
  %v2804 = vpop.f32.mrf.mxu0
  %v2805 = vadd.f32 %v2636, %v2804
  %v2806 = vpop.f32.mrf.mxu0
  %v2807 = vadd.f32 %v2638, %v2806
  %2808 = vmatmul.bf16.gmra.mxu0 %v1712
  %v2809 = vpop.f32.mrf.mxu0
  %v2810 = vadd.f32 %v2641, %v2809
  %v2811 = vpop.f32.mrf.mxu0
  %v2812 = vadd.f32 %v2643, %v2811
  %2813 = vmatmul.bf16.gmra.mxu0 %v1721
  %v2814 = vpop.f32.mrf.mxu0
  %v2815 = vadd.f32 %v2646, %v2814
  %v2816 = vpop.f32.mrf.mxu0
  %v2817 = vadd.f32 %v2648, %v2816
  %2818 = vmatmul.bf16.gmra.mxu0 %v1730
  %v2819 = vpop.f32.mrf.mxu0
  %v2820 = vadd.f32 %v2651, %v2819
  %v2821 = vpop.f32.mrf.mxu0
  %v2822 = vadd.f32 %v2653, %v2821
  %2823 = vmatmul.bf16.gmra.mxu0 %v1739
  %v2824 = vpop.f32.mrf.mxu0
  %v2825 = vadd.f32 %v2656, %v2824
  %v2826 = vpop.f32.mrf.mxu0
  %v2827 = vadd.f32 %v2658, %v2826
  %2828 = vmatmul.bf16.gmra.mxu0 %v1748
  %v2829 = vpop.f32.mrf.mxu0
  %v2830 = vadd.f32 %v2661, %v2829
  %v2831 = vpop.f32.mrf.mxu0
  %v2832 = vadd.f32 %v2663, %v2831
  %2833 = vmatmul.bf16.gmra.mxu0 %v1757
  %v2834 = vpop.f32.mrf.mxu0
  %v2835 = vadd.f32 %v2666, %v2834
  %v2836 = vpop.f32.mrf.mxu0
  %v2837 = vadd.f32 %v2668, %v2836
  %2838 = vmatmul.bf16.gmra.mxu0 %v1766
  %v2839 = vpop.f32.mrf.mxu0
  %v2840 = vadd.f32 %v2671, %v2839
  %v2841 = vpop.f32.mrf.mxu0
  %v2842 = vadd.f32 %v2673, %v2841
  %2843 = vmatmul.bf16.gmra.mxu0 %v1775
  %v2844 = vpop.f32.mrf.mxu0
  %v2845 = vadd.f32 %v2676, %v2844
  %v2846 = vpop.f32.mrf.mxu0
  %v2847 = vadd.f32 %v2678, %v2846
  %2848 = vmatmul.bf16.gmra.mxu0 %v1784
  %v2849 = vpop.f32.mrf.mxu0
  %v2850 = vadd.f32 %v2681, %v2849
  %v2851 = vpop.f32.mrf.mxu0
  %v2852 = vadd.f32 %v2683, %v2851
  %2853 = vmatmul.bf16.gmra.mxu0 %v1793
  %v2854 = vpop.f32.mrf.mxu0
  %v2855 = vadd.f32 %v2686, %v2854
  %v2856 = vpop.f32.mrf.mxu0
  %v2857 = vadd.f32 %v2688, %v2856
  %2858 = vdwg.mxu0
  %2859 = vmatpush.bf16.msra.mxu0 %v2400
  %2860 = vmatpush.bf16.msra.mxu0 %v2399
  %2861 = vmatpush.bf16.msra.mxu0 %v2398
  %2862 = vmatpush.bf16.msra.mxu0 %v2397
  %2863 = vmatpush.bf16.msra.mxu0 %v2396
  %2864 = vmatpush.bf16.msra.mxu0 %v2395
  %2865 = vmatpush.bf16.msra.mxu0 %v2394
  %2866 = vmatpush.bf16.msra.mxu0 %v2393
  %2867 = vmatmul.bf16.gmra.mxu0 %v1515
  %v2868 = vpop.f32.mrf.mxu0
  %v2869 = vadd.f32 %v2700, %v2868
  %v2870 = vpop.f32.mrf.mxu0
  %v2871 = vadd.f32 %v2702, %v2870
  %2872 = vmatmul.bf16.gmra.mxu0 %v1524
  %v2873 = vpop.f32.mrf.mxu0
  %v2874 = vadd.f32 %v2705, %v2873
  %v2875 = vpop.f32.mrf.mxu0
  %v2876 = vadd.f32 %v2707, %v2875
  %2877 = vmatmul.bf16.gmra.mxu0 %v1533
  %v2878 = vpop.f32.mrf.mxu0
  %v2879 = vadd.f32 %v2710, %v2878
  %v2880 = vpop.f32.mrf.mxu0
  %v2881 = vadd.f32 %v2712, %v2880
  %2882 = vmatmul.bf16.gmra.mxu0 %v1542
  %v2883 = vpop.f32.mrf.mxu0
  %v2884 = vadd.f32 %v2715, %v2883
  %v2885 = vpop.f32.mrf.mxu0
  %v2886 = vadd.f32 %v2717, %v2885
  %2887 = vmatmul.bf16.gmra.mxu0 %v1551
  %v2888 = vpop.f32.mrf.mxu0
  %v2889 = vadd.f32 %v2720, %v2888
  %v2890 = vpop.f32.mrf.mxu0
  %v2891 = vadd.f32 %v2722, %v2890
  %2892 = vmatmul.bf16.gmra.mxu0 %v1560
  %v2893 = vpop.f32.mrf.mxu0
  %v2894 = vadd.f32 %v2725, %v2893
  %v2895 = vpop.f32.mrf.mxu0
  %v2896 = vadd.f32 %v2727, %v2895
  %2897 = vmatmul.bf16.gmra.mxu0 %v1569
  %v2898 = vpop.f32.mrf.mxu0
  %v2899 = vadd.f32 %v2730, %v2898
  %v2900 = vpop.f32.mrf.mxu0
  %v2901 = vadd.f32 %v2732, %v2900
  %2902 = vmatmul.bf16.gmra.mxu0 %v1578
  %v2903 = vpop.f32.mrf.mxu0
  %v2904 = vadd.f32 %v2735, %v2903
  %v2905 = vpop.f32.mrf.mxu0
  %v2906 = vadd.f32 %v2737, %v2905
  %2907 = vmatmul.bf16.gmra.mxu0 %v1587
  %v2908 = vpop.f32.mrf.mxu0
  %v2909 = vadd.f32 %v2740, %v2908
  %v2910 = vpop.f32.mrf.mxu0
  %v2911 = vadd.f32 %v2742, %v2910
  %2912 = vmatmul.bf16.gmra.mxu0 %v1596
  %v2913 = vpop.f32.mrf.mxu0
  %v2914 = vadd.f32 %v2745, %v2913
  %v2915 = vpop.f32.mrf.mxu0
  %v2916 = vadd.f32 %v2747, %v2915
  %2917 = vmatmul.bf16.gmra.mxu0 %v1605
  %v2918 = vpop.f32.mrf.mxu0
  %v2919 = vadd.f32 %v2750, %v2918
  %v2920 = vpop.f32.mrf.mxu0
  %v2921 = vadd.f32 %v2752, %v2920
  %2922 = vmatmul.bf16.gmra.mxu0 %v1614
  %v2923 = vpop.f32.mrf.mxu0
  %v2924 = vadd.f32 %v2755, %v2923
  %v2925 = vpop.f32.mrf.mxu0
  %v2926 = vadd.f32 %v2757, %v2925
  %2927 = vmatmul.bf16.gmra.mxu0 %v1623
  %v2928 = vpop.f32.mrf.mxu0
  %v2929 = vadd.f32 %v2760, %v2928
  %v2930 = vpop.f32.mrf.mxu0
  %v2931 = vadd.f32 %v2762, %v2930
  %2932 = vmatmul.bf16.gmra.mxu0 %v1632
  %v2933 = vpop.f32.mrf.mxu0
  %v2934 = vadd.f32 %v2765, %v2933
  %v2935 = vpop.f32.mrf.mxu0
  %v2936 = vadd.f32 %v2767, %v2935
  %2937 = vmatmul.bf16.gmra.mxu0 %v1641
  %v2938 = vpop.f32.mrf.mxu0
  %v2939 = vadd.f32 %v2770, %v2938
  %v2940 = vpop.f32.mrf.mxu0
  %v2941 = vadd.f32 %v2772, %v2940
  %2942 = vmatmul.bf16.gmra.mxu0 %v1650
  %v2943 = vpop.f32.mrf.mxu0
  %v2944 = vadd.f32 %v2775, %v2943
  %v2945 = vpop.f32.mrf.mxu0
  %v2946 = vadd.f32 %v2777, %v2945
  %2947 = vmatmul.bf16.gmra.mxu0 %v1659
  %v2948 = vpop.f32.mrf.mxu0
  %v2949 = vadd.f32 %v2780, %v2948
  %v2950 = vpop.f32.mrf.mxu0
  %v2951 = vadd.f32 %v2782, %v2950
  %2952 = vmatmul.bf16.gmra.mxu0 %v1668
  %v2953 = vpop.f32.mrf.mxu0
  %v2954 = vadd.f32 %v2785, %v2953
  %v2955 = vpop.f32.mrf.mxu0
  %v2956 = vadd.f32 %v2787, %v2955
  %2957 = vmatmul.bf16.gmra.mxu0 %v1677
  %v2958 = vpop.f32.mrf.mxu0
  %v2959 = vadd.f32 %v2790, %v2958
  %v2960 = vpop.f32.mrf.mxu0
  %v2961 = vadd.f32 %v2792, %v2960
  %2962 = vmatmul.bf16.gmra.mxu0 %v1686
  %v2963 = vpop.f32.mrf.mxu0
  %v2964 = vadd.f32 %v2795, %v2963
  %v2965 = vpop.f32.mrf.mxu0
  %v2966 = vadd.f32 %v2797, %v2965
  %2967 = vmatmul.bf16.gmra.mxu0 %v1695
  %v2968 = vpop.f32.mrf.mxu0
  %v2969 = vadd.f32 %v2800, %v2968
  %v2970 = vpop.f32.mrf.mxu0
  %v2971 = vadd.f32 %v2802, %v2970
  %2972 = vmatmul.bf16.gmra.mxu0 %v1704
  %v2973 = vpop.f32.mrf.mxu0
  %v2974 = vadd.f32 %v2805, %v2973
  %v2975 = vpop.f32.mrf.mxu0
  %v2976 = vadd.f32 %v2807, %v2975
  %2977 = vmatmul.bf16.gmra.mxu0 %v1713
  %v2978 = vpop.f32.mrf.mxu0
  %v2979 = vadd.f32 %v2810, %v2978
  %v2980 = vpop.f32.mrf.mxu0
  %v2981 = vadd.f32 %v2812, %v2980
  %2982 = vmatmul.bf16.gmra.mxu0 %v1722
  %v2983 = vpop.f32.mrf.mxu0
  %v2984 = vadd.f32 %v2815, %v2983
  %v2985 = vpop.f32.mrf.mxu0
  %v2986 = vadd.f32 %v2817, %v2985
  %2987 = vmatmul.bf16.gmra.mxu0 %v1731
  %v2988 = vpop.f32.mrf.mxu0
  %v2989 = vadd.f32 %v2820, %v2988
  %v2990 = vpop.f32.mrf.mxu0
  %v2991 = vadd.f32 %v2822, %v2990
  %2992 = vmatmul.bf16.gmra.mxu0 %v1740
  %v2993 = vpop.f32.mrf.mxu0
  %v2994 = vadd.f32 %v2825, %v2993
  %v2995 = vpop.f32.mrf.mxu0
  %v2996 = vadd.f32 %v2827, %v2995
  %2997 = vmatmul.bf16.gmra.mxu0 %v1749
  %v2998 = vpop.f32.mrf.mxu0
  %v2999 = vadd.f32 %v2830, %v2998
  %v3000 = vpop.f32.mrf.mxu0
  %v3001 = vadd.f32 %v2832, %v3000
  %3002 = vmatmul.bf16.gmra.mxu0 %v1758
  %v3003 = vpop.f32.mrf.mxu0
  %v3004 = vadd.f32 %v2835, %v3003
  %v3005 = vpop.f32.mrf.mxu0
  %v3006 = vadd.f32 %v2837, %v3005
  %3007 = vmatmul.bf16.gmra.mxu0 %v1767
  %v3008 = vpop.f32.mrf.mxu0
  %v3009 = vadd.f32 %v2840, %v3008
  %v3010 = vpop.f32.mrf.mxu0
  %v3011 = vadd.f32 %v2842, %v3010
  %3012 = vmatmul.bf16.gmra.mxu0 %v1776
  %v3013 = vpop.f32.mrf.mxu0
  %v3014 = vadd.f32 %v2845, %v3013
  %v3015 = vpop.f32.mrf.mxu0
  %v3016 = vadd.f32 %v2847, %v3015
  %3017 = vmatmul.bf16.gmra.mxu0 %v1785
  %v3018 = vpop.f32.mrf.mxu0
  %v3019 = vadd.f32 %v2850, %v3018
  %v3020 = vpop.f32.mrf.mxu0
  %v3021 = vadd.f32 %v2852, %v3020
  %3022 = vmatmul.bf16.gmra.mxu0 %v1794
  %v3023 = vpop.f32.mrf.mxu0
  %v3024 = vadd.f32 %v2855, %v3023
  %v3025 = vpop.f32.mrf.mxu0
  %v3026 = vadd.f32 %v2857, %v3025
  %3027 = vdwg.mxu0
  %3028 = vmatpush.bf16.msra.mxu0 %v2408
  %3029 = vmatpush.bf16.msra.mxu0 %v2407
  %3030 = vmatpush.bf16.msra.mxu0 %v2406
  %3031 = vmatpush.bf16.msra.mxu0 %v2405
  %3032 = vmatpush.bf16.msra.mxu0 %v2404
  %3033 = vmatpush.bf16.msra.mxu0 %v2403
  %3034 = vmatpush.bf16.msra.mxu0 %v2402
  %3035 = vmatpush.bf16.msra.mxu0 %v2401
  %3036 = vmatmul.bf16.gmra.mxu0 %v1516
  %v3037 = vpop.f32.mrf.mxu0
  %v3038 = vadd.f32 %v2869, %v3037
  %v3039 = vpop.f32.mrf.mxu0
  %v3040 = vadd.f32 %v2871, %v3039
  %3041 = vmatmul.bf16.gmra.mxu0 %v1525
  %v3042 = vpop.f32.mrf.mxu0
  %v3043 = vadd.f32 %v2874, %v3042
  %v3044 = vpop.f32.mrf.mxu0
  %v3045 = vadd.f32 %v2876, %v3044
  %3046 = vmatmul.bf16.gmra.mxu0 %v1534
  %v3047 = vpop.f32.mrf.mxu0
  %v3048 = vadd.f32 %v2879, %v3047
  %v3049 = vpop.f32.mrf.mxu0
  %v3050 = vadd.f32 %v2881, %v3049
  %3051 = vmatmul.bf16.gmra.mxu0 %v1543
  %v3052 = vpop.f32.mrf.mxu0
  %v3053 = vadd.f32 %v2884, %v3052
  %v3054 = vpop.f32.mrf.mxu0
  %v3055 = vadd.f32 %v2886, %v3054
  %3056 = vmatmul.bf16.gmra.mxu0 %v1552
  %v3057 = vpop.f32.mrf.mxu0
  %v3058 = vadd.f32 %v2889, %v3057
  %v3059 = vpop.f32.mrf.mxu0
  %v3060 = vadd.f32 %v2891, %v3059
  %3061 = vmatmul.bf16.gmra.mxu0 %v1561
  %v3062 = vpop.f32.mrf.mxu0
  %v3063 = vadd.f32 %v2894, %v3062
  %v3064 = vpop.f32.mrf.mxu0
  %v3065 = vadd.f32 %v2896, %v3064
  %3066 = vmatmul.bf16.gmra.mxu0 %v1570
  %v3067 = vpop.f32.mrf.mxu0
  %v3068 = vadd.f32 %v2899, %v3067
  %v3069 = vpop.f32.mrf.mxu0
  %v3070 = vadd.f32 %v2901, %v3069
  %3071 = vmatmul.bf16.gmra.mxu0 %v1579
  %v3072 = vpop.f32.mrf.mxu0
  %v3073 = vadd.f32 %v2904, %v3072
  %v3074 = vpop.f32.mrf.mxu0
  %v3075 = vadd.f32 %v2906, %v3074
  %3076 = vmatmul.bf16.gmra.mxu0 %v1588
  %v3077 = vpop.f32.mrf.mxu0
  %v3078 = vadd.f32 %v2909, %v3077
  %v3079 = vpop.f32.mrf.mxu0
  %v3080 = vadd.f32 %v2911, %v3079
  %3081 = vmatmul.bf16.gmra.mxu0 %v1597
  %v3082 = vpop.f32.mrf.mxu0
  %v3083 = vadd.f32 %v2914, %v3082
  %v3084 = vpop.f32.mrf.mxu0
  %v3085 = vadd.f32 %v2916, %v3084
  %3086 = vmatmul.bf16.gmra.mxu0 %v1606
  %v3087 = vpop.f32.mrf.mxu0
  %v3088 = vadd.f32 %v2919, %v3087
  %v3089 = vpop.f32.mrf.mxu0
  %v3090 = vadd.f32 %v2921, %v3089
  %3091 = vmatmul.bf16.gmra.mxu0 %v1615
  %v3092 = vpop.f32.mrf.mxu0
  %v3093 = vadd.f32 %v2924, %v3092
  %v3094 = vpop.f32.mrf.mxu0
  %v3095 = vadd.f32 %v2926, %v3094
  %3096 = vmatmul.bf16.gmra.mxu0 %v1624
  %v3097 = vpop.f32.mrf.mxu0
  %v3098 = vadd.f32 %v2929, %v3097
  %v3099 = vpop.f32.mrf.mxu0
  %v3100 = vadd.f32 %v2931, %v3099
  %3101 = vmatmul.bf16.gmra.mxu0 %v1633
  %v3102 = vpop.f32.mrf.mxu0
  %v3103 = vadd.f32 %v2934, %v3102
  %v3104 = vpop.f32.mrf.mxu0
  %v3105 = vadd.f32 %v2936, %v3104
  %3106 = vmatmul.bf16.gmra.mxu0 %v1642
  %v3107 = vpop.f32.mrf.mxu0
  %v3108 = vadd.f32 %v2939, %v3107
  %v3109 = vpop.f32.mrf.mxu0
  %v3110 = vadd.f32 %v2941, %v3109
  %3111 = vmatmul.bf16.gmra.mxu0 %v1651
  %v3112 = vpop.f32.mrf.mxu0
  %v3113 = vadd.f32 %v2944, %v3112
  %v3114 = vpop.f32.mrf.mxu0
  %v3115 = vadd.f32 %v2946, %v3114
  %3116 = vmatmul.bf16.gmra.mxu0 %v1660
  %v3117 = vpop.f32.mrf.mxu0
  %v3118 = vadd.f32 %v2949, %v3117
  %v3119 = vpop.f32.mrf.mxu0
  %v3120 = vadd.f32 %v2951, %v3119
  %3121 = vmatmul.bf16.gmra.mxu0 %v1669
  %v3122 = vpop.f32.mrf.mxu0
  %v3123 = vadd.f32 %v2954, %v3122
  %v3124 = vpop.f32.mrf.mxu0
  %v3125 = vadd.f32 %v2956, %v3124
  %3126 = vmatmul.bf16.gmra.mxu0 %v1678
  %v3127 = vpop.f32.mrf.mxu0
  %v3128 = vadd.f32 %v2959, %v3127
  %v3129 = vpop.f32.mrf.mxu0
  %v3130 = vadd.f32 %v2961, %v3129
  %3131 = vmatmul.bf16.gmra.mxu0 %v1687
  %v3132 = vpop.f32.mrf.mxu0
  %v3133 = vadd.f32 %v2964, %v3132
  %v3134 = vpop.f32.mrf.mxu0
  %v3135 = vadd.f32 %v2966, %v3134
  %3136 = vmatmul.bf16.gmra.mxu0 %v1696
  %v3137 = vpop.f32.mrf.mxu0
  %v3138 = vadd.f32 %v2969, %v3137
  %v3139 = vpop.f32.mrf.mxu0
  %v3140 = vadd.f32 %v2971, %v3139
  %3141 = vmatmul.bf16.gmra.mxu0 %v1705
  %v3142 = vpop.f32.mrf.mxu0
  %v3143 = vadd.f32 %v2974, %v3142
  %v3144 = vpop.f32.mrf.mxu0
  %v3145 = vadd.f32 %v2976, %v3144
  %3146 = vmatmul.bf16.gmra.mxu0 %v1714
  %v3147 = vpop.f32.mrf.mxu0
  %v3148 = vadd.f32 %v2979, %v3147
  %v3149 = vpop.f32.mrf.mxu0
  %v3150 = vadd.f32 %v2981, %v3149
  %3151 = vmatmul.bf16.gmra.mxu0 %v1723
  %v3152 = vpop.f32.mrf.mxu0
  %v3153 = vadd.f32 %v2984, %v3152
  %v3154 = vpop.f32.mrf.mxu0
  %v3155 = vadd.f32 %v2986, %v3154
  %3156 = vmatmul.bf16.gmra.mxu0 %v1732
  %v3157 = vpop.f32.mrf.mxu0
  %v3158 = vadd.f32 %v2989, %v3157
  %v3159 = vpop.f32.mrf.mxu0
  %v3160 = vadd.f32 %v2991, %v3159
  %3161 = vmatmul.bf16.gmra.mxu0 %v1741
  %v3162 = vpop.f32.mrf.mxu0
  %v3163 = vadd.f32 %v2994, %v3162
  %v3164 = vpop.f32.mrf.mxu0
  %v3165 = vadd.f32 %v2996, %v3164
  %3166 = vmatmul.bf16.gmra.mxu0 %v1750
  %v3167 = vpop.f32.mrf.mxu0
  %v3168 = vadd.f32 %v2999, %v3167
  %v3169 = vpop.f32.mrf.mxu0
  %v3170 = vadd.f32 %v3001, %v3169
  %3171 = vmatmul.bf16.gmra.mxu0 %v1759
  %v3172 = vpop.f32.mrf.mxu0
  %v3173 = vadd.f32 %v3004, %v3172
  %v3174 = vpop.f32.mrf.mxu0
  %v3175 = vadd.f32 %v3006, %v3174
  %3176 = vmatmul.bf16.gmra.mxu0 %v1768
  %v3177 = vpop.f32.mrf.mxu0
  %v3178 = vadd.f32 %v3009, %v3177
  %v3179 = vpop.f32.mrf.mxu0
  %v3180 = vadd.f32 %v3011, %v3179
  %3181 = vmatmul.bf16.gmra.mxu0 %v1777
  %v3182 = vpop.f32.mrf.mxu0
  %v3183 = vadd.f32 %v3014, %v3182
  %v3184 = vpop.f32.mrf.mxu0
  %v3185 = vadd.f32 %v3016, %v3184
  %3186 = vmatmul.bf16.gmra.mxu0 %v1786
  %v3187 = vpop.f32.mrf.mxu0
  %v3188 = vadd.f32 %v3019, %v3187
  %v3189 = vpop.f32.mrf.mxu0
  %v3190 = vadd.f32 %v3021, %v3189
  %3191 = vmatmul.bf16.gmra.mxu0 %v1795
  %v3192 = vpop.f32.mrf.mxu0
  %v3193 = vadd.f32 %v3024, %v3192
  %v3194 = vpop.f32.mrf.mxu0
  %v3195 = vadd.f32 %v3026, %v3194
  %3196 = vdwg.mxu0
  %3197 = vmatpush.bf16.msra.mxu0 %v2416
  %3198 = vmatpush.bf16.msra.mxu0 %v2415
  %3199 = vmatpush.bf16.msra.mxu0 %v2414
  %3200 = vmatpush.bf16.msra.mxu0 %v2413
  %3201 = vmatpush.bf16.msra.mxu0 %v2412
  %3202 = vmatpush.bf16.msra.mxu0 %v2411
  %3203 = vmatpush.bf16.msra.mxu0 %v2410
  %3204 = vmatpush.bf16.msra.mxu0 %v2409
  %3205 = vmatmul.bf16.gmra.mxu0 %v1517
  %v3206 = vpop.f32.mrf.mxu0
  %v3207 = vadd.f32 %v3038, %v3206
  %v3208 = vpop.f32.mrf.mxu0
  %v3209 = vadd.f32 %v3040, %v3208
  %3210 = vmatmul.bf16.gmra.mxu0 %v1526
  %v3211 = vpop.f32.mrf.mxu0
  %v3212 = vadd.f32 %v3043, %v3211
  %v3213 = vpop.f32.mrf.mxu0
  %v3214 = vadd.f32 %v3045, %v3213
  %3215 = vmatmul.bf16.gmra.mxu0 %v1535
  %v3216 = vpop.f32.mrf.mxu0
  %v3217 = vadd.f32 %v3048, %v3216
  %v3218 = vpop.f32.mrf.mxu0
  %v3219 = vadd.f32 %v3050, %v3218
  %3220 = vmatmul.bf16.gmra.mxu0 %v1544
  %v3221 = vpop.f32.mrf.mxu0
  %v3222 = vadd.f32 %v3053, %v3221
  %v3223 = vpop.f32.mrf.mxu0
  %v3224 = vadd.f32 %v3055, %v3223
  %3225 = vmatmul.bf16.gmra.mxu0 %v1553
  %v3226 = vpop.f32.mrf.mxu0
  %v3227 = vadd.f32 %v3058, %v3226
  %v3228 = vpop.f32.mrf.mxu0
  %v3229 = vadd.f32 %v3060, %v3228
  %3230 = vmatmul.bf16.gmra.mxu0 %v1562
  %v3231 = vpop.f32.mrf.mxu0
  %v3232 = vadd.f32 %v3063, %v3231
  %v3233 = vpop.f32.mrf.mxu0
  %v3234 = vadd.f32 %v3065, %v3233
  %3235 = vmatmul.bf16.gmra.mxu0 %v1571
  %v3236 = vpop.f32.mrf.mxu0
  %v3237 = vadd.f32 %v3068, %v3236
  %v3238 = vpop.f32.mrf.mxu0
  %v3239 = vadd.f32 %v3070, %v3238
  %3240 = vmatmul.bf16.gmra.mxu0 %v1580
  %v3241 = vpop.f32.mrf.mxu0
  %v3242 = vadd.f32 %v3073, %v3241
  %v3243 = vpop.f32.mrf.mxu0
  %v3244 = vadd.f32 %v3075, %v3243
  %3245 = vmatmul.bf16.gmra.mxu0 %v1589
  %v3246 = vpop.f32.mrf.mxu0
  %v3247 = vadd.f32 %v3078, %v3246
  %v3248 = vpop.f32.mrf.mxu0
  %v3249 = vadd.f32 %v3080, %v3248
  %3250 = vmatmul.bf16.gmra.mxu0 %v1598
  %v3251 = vpop.f32.mrf.mxu0
  %v3252 = vadd.f32 %v3083, %v3251
  %v3253 = vpop.f32.mrf.mxu0
  %v3254 = vadd.f32 %v3085, %v3253
  %3255 = vmatmul.bf16.gmra.mxu0 %v1607
  %v3256 = vpop.f32.mrf.mxu0
  %v3257 = vadd.f32 %v3088, %v3256
  %v3258 = vpop.f32.mrf.mxu0
  %v3259 = vadd.f32 %v3090, %v3258
  %3260 = vmatmul.bf16.gmra.mxu0 %v1616
  %v3261 = vpop.f32.mrf.mxu0
  %v3262 = vadd.f32 %v3093, %v3261
  %v3263 = vpop.f32.mrf.mxu0
  %v3264 = vadd.f32 %v3095, %v3263
  %3265 = vmatmul.bf16.gmra.mxu0 %v1625
  %v3266 = vpop.f32.mrf.mxu0
  %v3267 = vadd.f32 %v3098, %v3266
  %v3268 = vpop.f32.mrf.mxu0
  %v3269 = vadd.f32 %v3100, %v3268
  %3270 = vmatmul.bf16.gmra.mxu0 %v1634
  %v3271 = vpop.f32.mrf.mxu0
  %v3272 = vadd.f32 %v3103, %v3271
  %v3273 = vpop.f32.mrf.mxu0
  %v3274 = vadd.f32 %v3105, %v3273
  %3275 = vmatmul.bf16.gmra.mxu0 %v1643
  %v3276 = vpop.f32.mrf.mxu0
  %v3277 = vadd.f32 %v3108, %v3276
  %v3278 = vpop.f32.mrf.mxu0
  %v3279 = vadd.f32 %v3110, %v3278
  %3280 = vmatmul.bf16.gmra.mxu0 %v1652
  %v3281 = vpop.f32.mrf.mxu0
  %v3282 = vadd.f32 %v3113, %v3281
  %v3283 = vpop.f32.mrf.mxu0
  %v3284 = vadd.f32 %v3115, %v3283
  %3285 = vmatmul.bf16.gmra.mxu0 %v1661
  %v3286 = vpop.f32.mrf.mxu0
  %v3287 = vadd.f32 %v3118, %v3286
  %v3288 = vpop.f32.mrf.mxu0
  %v3289 = vadd.f32 %v3120, %v3288
  %3290 = vmatmul.bf16.gmra.mxu0 %v1670
  %v3291 = vpop.f32.mrf.mxu0
  %v3292 = vadd.f32 %v3123, %v3291
  %v3293 = vpop.f32.mrf.mxu0
  %v3294 = vadd.f32 %v3125, %v3293
  %3295 = vmatmul.bf16.gmra.mxu0 %v1679
  %v3296 = vpop.f32.mrf.mxu0
  %v3297 = vadd.f32 %v3128, %v3296
  %v3298 = vpop.f32.mrf.mxu0
  %v3299 = vadd.f32 %v3130, %v3298
  %3300 = vmatmul.bf16.gmra.mxu0 %v1688
  %v3301 = vpop.f32.mrf.mxu0
  %v3302 = vadd.f32 %v3133, %v3301
  %v3303 = vpop.f32.mrf.mxu0
  %v3304 = vadd.f32 %v3135, %v3303
  %3305 = vmatmul.bf16.gmra.mxu0 %v1697
  %v3306 = vpop.f32.mrf.mxu0
  %v3307 = vadd.f32 %v3138, %v3306
  %v3308 = vpop.f32.mrf.mxu0
  %v3309 = vadd.f32 %v3140, %v3308
  %3310 = vmatmul.bf16.gmra.mxu0 %v1706
  %v3311 = vpop.f32.mrf.mxu0
  %v3312 = vadd.f32 %v3143, %v3311
  %v3313 = vpop.f32.mrf.mxu0
  %v3314 = vadd.f32 %v3145, %v3313
  %3315 = vmatmul.bf16.gmra.mxu0 %v1715
  %v3316 = vpop.f32.mrf.mxu0
  %v3317 = vadd.f32 %v3148, %v3316
  %v3318 = vpop.f32.mrf.mxu0
  %v3319 = vadd.f32 %v3150, %v3318
  %3320 = vmatmul.bf16.gmra.mxu0 %v1724
  %v3321 = vpop.f32.mrf.mxu0
  %v3322 = vadd.f32 %v3153, %v3321
  %v3323 = vpop.f32.mrf.mxu0
  %v3324 = vadd.f32 %v3155, %v3323
  %3325 = vmatmul.bf16.gmra.mxu0 %v1733
  %v3326 = vpop.f32.mrf.mxu0
  %v3327 = vadd.f32 %v3158, %v3326
  %v3328 = vpop.f32.mrf.mxu0
  %v3329 = vadd.f32 %v3160, %v3328
  %3330 = vmatmul.bf16.gmra.mxu0 %v1742
  %v3331 = vpop.f32.mrf.mxu0
  %v3332 = vadd.f32 %v3163, %v3331
  %v3333 = vpop.f32.mrf.mxu0
  %v3334 = vadd.f32 %v3165, %v3333
  %3335 = vmatmul.bf16.gmra.mxu0 %v1751
  %v3336 = vpop.f32.mrf.mxu0
  %v3337 = vadd.f32 %v3168, %v3336
  %v3338 = vpop.f32.mrf.mxu0
  %v3339 = vadd.f32 %v3170, %v3338
  %3340 = vmatmul.bf16.gmra.mxu0 %v1760
  %v3341 = vpop.f32.mrf.mxu0
  %v3342 = vadd.f32 %v3173, %v3341
  %v3343 = vpop.f32.mrf.mxu0
  %v3344 = vadd.f32 %v3175, %v3343
  %3345 = vmatmul.bf16.gmra.mxu0 %v1769
  %v3346 = vpop.f32.mrf.mxu0
  %v3347 = vadd.f32 %v3178, %v3346
  %v3348 = vpop.f32.mrf.mxu0
  %v3349 = vadd.f32 %v3180, %v3348
  %3350 = vmatmul.bf16.gmra.mxu0 %v1778
  %v3351 = vpop.f32.mrf.mxu0
  %v3352 = vadd.f32 %v3183, %v3351
  %v3353 = vpop.f32.mrf.mxu0
  %v3354 = vadd.f32 %v3185, %v3353
  %3355 = vmatmul.bf16.gmra.mxu0 %v1787
  %v3356 = vpop.f32.mrf.mxu0
  %v3357 = vadd.f32 %v3188, %v3356
  %v3358 = vpop.f32.mrf.mxu0
  %v3359 = vadd.f32 %v3190, %v3358
  %3360 = vmatmul.bf16.gmra.mxu0 %v1796
  %v3361 = vpop.f32.mrf.mxu0
  %v3362 = vadd.f32 %v3193, %v3361
  %v3363 = vpop.f32.mrf.mxu0
  %v3364 = vadd.f32 %v3195, %v3363
  %3365 = vdwg.mxu0
  %3366 = vmatpush.bf16.msra.mxu0 %v2424
  %3367 = vmatpush.bf16.msra.mxu0 %v2423
  %3368 = vmatpush.bf16.msra.mxu0 %v2422
  %3369 = vmatpush.bf16.msra.mxu0 %v2421
  %3370 = vmatpush.bf16.msra.mxu0 %v2420
  %3371 = vmatpush.bf16.msra.mxu0 %v2419
  %3372 = vmatpush.bf16.msra.mxu0 %v2418
  %3373 = vmatpush.bf16.msra.mxu0 %v2417
  %3374 = vmatmul.bf16.gmra.mxu0 %v1518
  %v3375 = vpop.f32.mrf.mxu0
  %v3376 = vadd.f32 %v3207, %v3375
  %v3377 = vpop.f32.mrf.mxu0
  %v3378 = vadd.f32 %v3209, %v3377
  %3379 = vmatmul.bf16.gmra.mxu0 %v1527
  %v3380 = vpop.f32.mrf.mxu0
  %v3381 = vadd.f32 %v3212, %v3380
  %v3382 = vpop.f32.mrf.mxu0
  %v3383 = vadd.f32 %v3214, %v3382
  %3384 = vmatmul.bf16.gmra.mxu0 %v1536
  %v3385 = vpop.f32.mrf.mxu0
  %v3386 = vadd.f32 %v3217, %v3385
  %v3387 = vpop.f32.mrf.mxu0
  %v3388 = vadd.f32 %v3219, %v3387
  %3389 = vmatmul.bf16.gmra.mxu0 %v1545
  %v3390 = vpop.f32.mrf.mxu0
  %v3391 = vadd.f32 %v3222, %v3390
  %v3392 = vpop.f32.mrf.mxu0
  %v3393 = vadd.f32 %v3224, %v3392
  %3394 = vmatmul.bf16.gmra.mxu0 %v1554
  %v3395 = vpop.f32.mrf.mxu0
  %v3396 = vadd.f32 %v3227, %v3395
  %v3397 = vpop.f32.mrf.mxu0
  %v3398 = vadd.f32 %v3229, %v3397
  %3399 = vmatmul.bf16.gmra.mxu0 %v1563
  %v3400 = vpop.f32.mrf.mxu0
  %v3401 = vadd.f32 %v3232, %v3400
  %v3402 = vpop.f32.mrf.mxu0
  %v3403 = vadd.f32 %v3234, %v3402
  %3404 = vmatmul.bf16.gmra.mxu0 %v1572
  %v3405 = vpop.f32.mrf.mxu0
  %v3406 = vadd.f32 %v3237, %v3405
  %v3407 = vpop.f32.mrf.mxu0
  %v3408 = vadd.f32 %v3239, %v3407
  %3409 = vmatmul.bf16.gmra.mxu0 %v1581
  %v3410 = vpop.f32.mrf.mxu0
  %v3411 = vadd.f32 %v3242, %v3410
  %v3412 = vpop.f32.mrf.mxu0
  %v3413 = vadd.f32 %v3244, %v3412
  %3414 = vmatmul.bf16.gmra.mxu0 %v1590
  %v3415 = vpop.f32.mrf.mxu0
  %v3416 = vadd.f32 %v3247, %v3415
  %v3417 = vpop.f32.mrf.mxu0
  %v3418 = vadd.f32 %v3249, %v3417
  %3419 = vmatmul.bf16.gmra.mxu0 %v1599
  %v3420 = vpop.f32.mrf.mxu0
  %v3421 = vadd.f32 %v3252, %v3420
  %v3422 = vpop.f32.mrf.mxu0
  %v3423 = vadd.f32 %v3254, %v3422
  %3424 = vmatmul.bf16.gmra.mxu0 %v1608
  %v3425 = vpop.f32.mrf.mxu0
  %v3426 = vadd.f32 %v3257, %v3425
  %v3427 = vpop.f32.mrf.mxu0
  %v3428 = vadd.f32 %v3259, %v3427
  %3429 = vmatmul.bf16.gmra.mxu0 %v1617
  %v3430 = vpop.f32.mrf.mxu0
  %v3431 = vadd.f32 %v3262, %v3430
  %v3432 = vpop.f32.mrf.mxu0
  %v3433 = vadd.f32 %v3264, %v3432
  %3434 = vmatmul.bf16.gmra.mxu0 %v1626
  %v3435 = vpop.f32.mrf.mxu0
  %v3436 = vadd.f32 %v3267, %v3435
  %v3437 = vpop.f32.mrf.mxu0
  %v3438 = vadd.f32 %v3269, %v3437
  %3439 = vmatmul.bf16.gmra.mxu0 %v1635
  %v3440 = vpop.f32.mrf.mxu0
  %v3441 = vadd.f32 %v3272, %v3440
  %v3442 = vpop.f32.mrf.mxu0
  %v3443 = vadd.f32 %v3274, %v3442
  %3444 = vmatmul.bf16.gmra.mxu0 %v1644
  %v3445 = vpop.f32.mrf.mxu0
  %v3446 = vadd.f32 %v3277, %v3445
  %v3447 = vpop.f32.mrf.mxu0
  %v3448 = vadd.f32 %v3279, %v3447
  %3449 = vmatmul.bf16.gmra.mxu0 %v1653
  %v3450 = vpop.f32.mrf.mxu0
  %v3451 = vadd.f32 %v3282, %v3450
  %v3452 = vpop.f32.mrf.mxu0
  %v3453 = vadd.f32 %v3284, %v3452
  %3454 = vmatmul.bf16.gmra.mxu0 %v1662
  %v3455 = vpop.f32.mrf.mxu0
  %v3456 = vadd.f32 %v3287, %v3455
  %v3457 = vpop.f32.mrf.mxu0
  %v3458 = vadd.f32 %v3289, %v3457
  %3459 = vmatmul.bf16.gmra.mxu0 %v1671
  %v3460 = vpop.f32.mrf.mxu0
  %v3461 = vadd.f32 %v3292, %v3460
  %v3462 = vpop.f32.mrf.mxu0
  %v3463 = vadd.f32 %v3294, %v3462
  %3464 = vmatmul.bf16.gmra.mxu0 %v1680
  %v3465 = vpop.f32.mrf.mxu0
  %v3466 = vadd.f32 %v3297, %v3465
  %v3467 = vpop.f32.mrf.mxu0
  %v3468 = vadd.f32 %v3299, %v3467
  %3469 = vmatmul.bf16.gmra.mxu0 %v1689
  %v3470 = vpop.f32.mrf.mxu0
  %v3471 = vadd.f32 %v3302, %v3470
  %v3472 = vpop.f32.mrf.mxu0
  %v3473 = vadd.f32 %v3304, %v3472
  %3474 = vmatmul.bf16.gmra.mxu0 %v1698
  %v3475 = vpop.f32.mrf.mxu0
  %v3476 = vadd.f32 %v3307, %v3475
  %v3477 = vpop.f32.mrf.mxu0
  %v3478 = vadd.f32 %v3309, %v3477
  %3479 = vmatmul.bf16.gmra.mxu0 %v1707
  %v3480 = vpop.f32.mrf.mxu0
  %v3481 = vadd.f32 %v3312, %v3480
  %v3482 = vpop.f32.mrf.mxu0
  %v3483 = vadd.f32 %v3314, %v3482
  %3484 = vmatmul.bf16.gmra.mxu0 %v1716
  %v3485 = vpop.f32.mrf.mxu0
  %v3486 = vadd.f32 %v3317, %v3485
  %v3487 = vpop.f32.mrf.mxu0
  %v3488 = vadd.f32 %v3319, %v3487
  %3489 = vmatmul.bf16.gmra.mxu0 %v1725
  %v3490 = vpop.f32.mrf.mxu0
  %v3491 = vadd.f32 %v3322, %v3490
  %v3492 = vpop.f32.mrf.mxu0
  %v3493 = vadd.f32 %v3324, %v3492
  %3494 = vmatmul.bf16.gmra.mxu0 %v1734
  %v3495 = vpop.f32.mrf.mxu0
  %v3496 = vadd.f32 %v3327, %v3495
  %v3497 = vpop.f32.mrf.mxu0
  %v3498 = vadd.f32 %v3329, %v3497
  %3499 = vmatmul.bf16.gmra.mxu0 %v1743
  %v3500 = vpop.f32.mrf.mxu0
  %v3501 = vadd.f32 %v3332, %v3500
  %v3502 = vpop.f32.mrf.mxu0
  %v3503 = vadd.f32 %v3334, %v3502
  %3504 = vmatmul.bf16.gmra.mxu0 %v1752
  %v3505 = vpop.f32.mrf.mxu0
  %v3506 = vadd.f32 %v3337, %v3505
  %v3507 = vpop.f32.mrf.mxu0
  %v3508 = vadd.f32 %v3339, %v3507
  %3509 = vmatmul.bf16.gmra.mxu0 %v1761
  %v3510 = vpop.f32.mrf.mxu0
  %v3511 = vadd.f32 %v3342, %v3510
  %v3512 = vpop.f32.mrf.mxu0
  %v3513 = vadd.f32 %v3344, %v3512
  %3514 = vmatmul.bf16.gmra.mxu0 %v1770
  %v3515 = vpop.f32.mrf.mxu0
  %v3516 = vadd.f32 %v3347, %v3515
  %v3517 = vpop.f32.mrf.mxu0
  %v3518 = vadd.f32 %v3349, %v3517
  %3519 = vmatmul.bf16.gmra.mxu0 %v1779
  %v3520 = vpop.f32.mrf.mxu0
  %v3521 = vadd.f32 %v3352, %v3520
  %v3522 = vpop.f32.mrf.mxu0
  %v3523 = vadd.f32 %v3354, %v3522
  %3524 = vmatmul.bf16.gmra.mxu0 %v1788
  %v3525 = vpop.f32.mrf.mxu0
  %v3526 = vadd.f32 %v3357, %v3525
  %v3527 = vpop.f32.mrf.mxu0
  %v3528 = vadd.f32 %v3359, %v3527
  %3529 = vmatmul.bf16.gmra.mxu0 %v1797
  %v3530 = vpop.f32.mrf.mxu0
  %v3531 = vadd.f32 %v3362, %v3530
  %v3532 = vpop.f32.mrf.mxu0
  %v3533 = vadd.f32 %v3364, %v3532
  %3534 = vdwg.mxu0
  %3535 = vmatpush.bf16.msra.mxu0 %v2432
  %3536 = vmatpush.bf16.msra.mxu0 %v2431
  %3537 = vmatpush.bf16.msra.mxu0 %v2430
  %3538 = vmatpush.bf16.msra.mxu0 %v2429
  %3539 = vmatpush.bf16.msra.mxu0 %v2428
  %3540 = vmatpush.bf16.msra.mxu0 %v2427
  %3541 = vmatpush.bf16.msra.mxu0 %v2426
  %3542 = vmatpush.bf16.msra.mxu0 %v2425
  %3543 = vmatmul.bf16.gmra.mxu0 %v1519
  %v3544 = vpop.f32.mrf.mxu0
  %v3545 = vadd.f32 %v3376, %v3544
  %v3546 = vpop.f32.mrf.mxu0
  %v3547 = vadd.f32 %v3378, %v3546
  %3548 = vmatmul.bf16.gmra.mxu0 %v1528
  %v3549 = vpop.f32.mrf.mxu0
  %v3550 = vadd.f32 %v3381, %v3549
  %v3551 = vpop.f32.mrf.mxu0
  %v3552 = vadd.f32 %v3383, %v3551
  %3553 = vmatmul.bf16.gmra.mxu0 %v1537
  %v3554 = vpop.f32.mrf.mxu0
  %v3555 = vadd.f32 %v3386, %v3554
  %v3556 = vpop.f32.mrf.mxu0
  %v3557 = vadd.f32 %v3388, %v3556
  %3558 = vmatmul.bf16.gmra.mxu0 %v1546
  %v3559 = vpop.f32.mrf.mxu0
  %v3560 = vadd.f32 %v3391, %v3559
  %v3561 = vpop.f32.mrf.mxu0
  %v3562 = vadd.f32 %v3393, %v3561
  %3563 = vmatmul.bf16.gmra.mxu0 %v1555
  %v3564 = vpop.f32.mrf.mxu0
  %v3565 = vadd.f32 %v3396, %v3564
  %v3566 = vpop.f32.mrf.mxu0
  %v3567 = vadd.f32 %v3398, %v3566
  %3568 = vmatmul.bf16.gmra.mxu0 %v1564
  %v3569 = vpop.f32.mrf.mxu0
  %v3570 = vadd.f32 %v3401, %v3569
  %v3571 = vpop.f32.mrf.mxu0
  %v3572 = vadd.f32 %v3403, %v3571
  %3573 = vmatmul.bf16.gmra.mxu0 %v1573
  %v3574 = vpop.f32.mrf.mxu0
  %v3575 = vadd.f32 %v3406, %v3574
  %v3576 = vpop.f32.mrf.mxu0
  %v3577 = vadd.f32 %v3408, %v3576
  %3578 = vmatmul.bf16.gmra.mxu0 %v1582
  %v3579 = vpop.f32.mrf.mxu0
  %v3580 = vadd.f32 %v3411, %v3579
  %v3581 = vpop.f32.mrf.mxu0
  %v3582 = vadd.f32 %v3413, %v3581
  %3583 = vmatmul.bf16.gmra.mxu0 %v1591
  %v3584 = vpop.f32.mrf.mxu0
  %v3585 = vadd.f32 %v3416, %v3584
  %v3586 = vpop.f32.mrf.mxu0
  %v3587 = vadd.f32 %v3418, %v3586
  %3588 = vmatmul.bf16.gmra.mxu0 %v1600
  %v3589 = vpop.f32.mrf.mxu0
  %v3590 = vadd.f32 %v3421, %v3589
  %v3591 = vpop.f32.mrf.mxu0
  %v3592 = vadd.f32 %v3423, %v3591
  %3593 = vmatmul.bf16.gmra.mxu0 %v1609
  %v3594 = vpop.f32.mrf.mxu0
  %v3595 = vadd.f32 %v3426, %v3594
  %v3596 = vpop.f32.mrf.mxu0
  %v3597 = vadd.f32 %v3428, %v3596
  %3598 = vmatmul.bf16.gmra.mxu0 %v1618
  %v3599 = vpop.f32.mrf.mxu0
  %v3600 = vadd.f32 %v3431, %v3599
  %v3601 = vpop.f32.mrf.mxu0
  %v3602 = vadd.f32 %v3433, %v3601
  %3603 = vmatmul.bf16.gmra.mxu0 %v1627
  %v3604 = vpop.f32.mrf.mxu0
  %v3605 = vadd.f32 %v3436, %v3604
  %v3606 = vpop.f32.mrf.mxu0
  %v3607 = vadd.f32 %v3438, %v3606
  %3608 = vmatmul.bf16.gmra.mxu0 %v1636
  %v3609 = vpop.f32.mrf.mxu0
  %v3610 = vadd.f32 %v3441, %v3609
  %v3611 = vpop.f32.mrf.mxu0
  %v3612 = vadd.f32 %v3443, %v3611
  %3613 = vmatmul.bf16.gmra.mxu0 %v1645
  %v3614 = vpop.f32.mrf.mxu0
  %v3615 = vadd.f32 %v3446, %v3614
  %v3616 = vpop.f32.mrf.mxu0
  %v3617 = vadd.f32 %v3448, %v3616
  %3618 = vmatmul.bf16.gmra.mxu0 %v1654
  %v3619 = vpop.f32.mrf.mxu0
  %v3620 = vadd.f32 %v3451, %v3619
  %v3621 = vpop.f32.mrf.mxu0
  %v3622 = vadd.f32 %v3453, %v3621
  %3623 = vmatmul.bf16.gmra.mxu0 %v1663
  %v3624 = vpop.f32.mrf.mxu0
  %v3625 = vadd.f32 %v3456, %v3624
  %v3626 = vpop.f32.mrf.mxu0
  %v3627 = vadd.f32 %v3458, %v3626
  %3628 = vmatmul.bf16.gmra.mxu0 %v1672
  %v3629 = vpop.f32.mrf.mxu0
  %v3630 = vadd.f32 %v3461, %v3629
  %v3631 = vpop.f32.mrf.mxu0
  %v3632 = vadd.f32 %v3463, %v3631
  %3633 = vmatmul.bf16.gmra.mxu0 %v1681
  %v3634 = vpop.f32.mrf.mxu0
  %v3635 = vadd.f32 %v3466, %v3634
  %v3636 = vpop.f32.mrf.mxu0
  %v3637 = vadd.f32 %v3468, %v3636
  %3638 = vmatmul.bf16.gmra.mxu0 %v1690
  %v3639 = vpop.f32.mrf.mxu0
  %v3640 = vadd.f32 %v3471, %v3639
  %v3641 = vpop.f32.mrf.mxu0
  %v3642 = vadd.f32 %v3473, %v3641
  %3643 = vmatmul.bf16.gmra.mxu0 %v1699
  %v3644 = vpop.f32.mrf.mxu0
  %v3645 = vadd.f32 %v3476, %v3644
  %v3646 = vpop.f32.mrf.mxu0
  %v3647 = vadd.f32 %v3478, %v3646
  %3648 = vmatmul.bf16.gmra.mxu0 %v1708
  %v3649 = vpop.f32.mrf.mxu0
  %v3650 = vadd.f32 %v3481, %v3649
  %v3651 = vpop.f32.mrf.mxu0
  %v3652 = vadd.f32 %v3483, %v3651
  %3653 = vmatmul.bf16.gmra.mxu0 %v1717
  %v3654 = vpop.f32.mrf.mxu0
  %v3655 = vadd.f32 %v3486, %v3654
  %v3656 = vpop.f32.mrf.mxu0
  %v3657 = vadd.f32 %v3488, %v3656
  %3658 = vmatmul.bf16.gmra.mxu0 %v1726
  %v3659 = vpop.f32.mrf.mxu0
  %v3660 = vadd.f32 %v3491, %v3659
  %v3661 = vpop.f32.mrf.mxu0
  %v3662 = vadd.f32 %v3493, %v3661
  %3663 = vmatmul.bf16.gmra.mxu0 %v1735
  %v3664 = vpop.f32.mrf.mxu0
  %v3665 = vadd.f32 %v3496, %v3664
  %v3666 = vpop.f32.mrf.mxu0
  %v3667 = vadd.f32 %v3498, %v3666
  %3668 = vmatmul.bf16.gmra.mxu0 %v1744
  %v3669 = vpop.f32.mrf.mxu0
  %v3670 = vadd.f32 %v3501, %v3669
  %v3671 = vpop.f32.mrf.mxu0
  %v3672 = vadd.f32 %v3503, %v3671
  %3673 = vmatmul.bf16.gmra.mxu0 %v1753
  %v3674 = vpop.f32.mrf.mxu0
  %v3675 = vadd.f32 %v3506, %v3674
  %v3676 = vpop.f32.mrf.mxu0
  %v3677 = vadd.f32 %v3508, %v3676
  %3678 = vmatmul.bf16.gmra.mxu0 %v1762
  %v3679 = vpop.f32.mrf.mxu0
  %v3680 = vadd.f32 %v3511, %v3679
  %v3681 = vpop.f32.mrf.mxu0
  %v3682 = vadd.f32 %v3513, %v3681
  %3683 = vmatmul.bf16.gmra.mxu0 %v1771
  %v3684 = vpop.f32.mrf.mxu0
  %v3685 = vadd.f32 %v3516, %v3684
  %v3686 = vpop.f32.mrf.mxu0
  %v3687 = vadd.f32 %v3518, %v3686
  %3688 = vmatmul.bf16.gmra.mxu0 %v1780
  %v3689 = vpop.f32.mrf.mxu0
  %v3690 = vadd.f32 %v3521, %v3689
  %v3691 = vpop.f32.mrf.mxu0
  %v3692 = vadd.f32 %v3523, %v3691
  %3693 = vmatmul.bf16.gmra.mxu0 %v1789
  %v3694 = vpop.f32.mrf.mxu0
  %v3695 = vadd.f32 %v3526, %v3694
  %v3696 = vpop.f32.mrf.mxu0
  %v3697 = vadd.f32 %v3528, %v3696
  %3698 = vmatmul.bf16.gmra.mxu0 %v1798
  %v3699 = vpop.f32.mrf.mxu0
  %v3700 = vadd.f32 %v3531, %v3699
  %v3701 = vpop.f32.mrf.mxu0
  %v3702 = vadd.f32 %v3533, %v3701
  %3703 = vdwg.mxu0
  %3704 = vmatpush.bf16.msra.mxu0 %v2440
  %3705 = vmatpush.bf16.msra.mxu0 %v2439
  %3706 = vmatpush.bf16.msra.mxu0 %v2438
  %3707 = vmatpush.bf16.msra.mxu0 %v2437
  %3708 = vmatpush.bf16.msra.mxu0 %v2436
  %3709 = vmatpush.bf16.msra.mxu0 %v2435
  %3710 = vmatpush.bf16.msra.mxu0 %v2434
  %3711 = vmatpush.bf16.msra.mxu0 %v2433
  %3712 = vmatmul.bf16.gmra.mxu0 %v1520
  %v3713 = vpop.f32.mrf.mxu0
  %v3714 = vadd.f32 %v3545, %v3713
  %v3715 = vpop.f32.mrf.mxu0
  %v3716 = vadd.f32 %v3547, %v3715
  %3717 = vmatmul.bf16.gmra.mxu0 %v1529
  %v3718 = vpop.f32.mrf.mxu0
  %v3719 = vadd.f32 %v3550, %v3718
  %v3720 = vpop.f32.mrf.mxu0
  %v3721 = vadd.f32 %v3552, %v3720
  %3722 = vmatmul.bf16.gmra.mxu0 %v1538
  %v3723 = vpop.f32.mrf.mxu0
  %v3724 = vadd.f32 %v3555, %v3723
  %v3725 = vpop.f32.mrf.mxu0
  %v3726 = vadd.f32 %v3557, %v3725
  %3727 = vmatmul.bf16.gmra.mxu0 %v1547
  %v3728 = vpop.f32.mrf.mxu0
  %v3729 = vadd.f32 %v3560, %v3728
  %v3730 = vpop.f32.mrf.mxu0
  %v3731 = vadd.f32 %v3562, %v3730
  %3732 = vmatmul.bf16.gmra.mxu0 %v1556
  %v3733 = vpop.f32.mrf.mxu0
  %v3734 = vadd.f32 %v3565, %v3733
  %v3735 = vpop.f32.mrf.mxu0
  %v3736 = vadd.f32 %v3567, %v3735
  %3737 = vmatmul.bf16.gmra.mxu0 %v1565
  %v3738 = vpop.f32.mrf.mxu0
  %v3739 = vadd.f32 %v3570, %v3738
  %v3740 = vpop.f32.mrf.mxu0
  %v3741 = vadd.f32 %v3572, %v3740
  %3742 = vmatmul.bf16.gmra.mxu0 %v1574
  %v3743 = vpop.f32.mrf.mxu0
  %v3744 = vadd.f32 %v3575, %v3743
  %v3745 = vpop.f32.mrf.mxu0
  %v3746 = vadd.f32 %v3577, %v3745
  %3747 = vmatmul.bf16.gmra.mxu0 %v1583
  %v3748 = vpop.f32.mrf.mxu0
  %v3749 = vadd.f32 %v3580, %v3748
  %v3750 = vpop.f32.mrf.mxu0
  %v3751 = vadd.f32 %v3582, %v3750
  %3752 = vmatmul.bf16.gmra.mxu0 %v1592
  %v3753 = vpop.f32.mrf.mxu0
  %v3754 = vadd.f32 %v3585, %v3753
  %v3755 = vpop.f32.mrf.mxu0
  %v3756 = vadd.f32 %v3587, %v3755
  %3757 = vmatmul.bf16.gmra.mxu0 %v1601
  %v3758 = vpop.f32.mrf.mxu0
  %v3759 = vadd.f32 %v3590, %v3758
  %v3760 = vpop.f32.mrf.mxu0
  %v3761 = vadd.f32 %v3592, %v3760
  %3762 = vmatmul.bf16.gmra.mxu0 %v1610
  %v3763 = vpop.f32.mrf.mxu0
  %v3764 = vadd.f32 %v3595, %v3763
  %v3765 = vpop.f32.mrf.mxu0
  %v3766 = vadd.f32 %v3597, %v3765
  %3767 = vmatmul.bf16.gmra.mxu0 %v1619
  %v3768 = vpop.f32.mrf.mxu0
  %v3769 = vadd.f32 %v3600, %v3768
  %v3770 = vpop.f32.mrf.mxu0
  %v3771 = vadd.f32 %v3602, %v3770
  %3772 = vmatmul.bf16.gmra.mxu0 %v1628
  %v3773 = vpop.f32.mrf.mxu0
  %v3774 = vadd.f32 %v3605, %v3773
  %v3775 = vpop.f32.mrf.mxu0
  %v3776 = vadd.f32 %v3607, %v3775
  %3777 = vmatmul.bf16.gmra.mxu0 %v1637
  %v3778 = vpop.f32.mrf.mxu0
  %v3779 = vadd.f32 %v3610, %v3778
  %v3780 = vpop.f32.mrf.mxu0
  %v3781 = vadd.f32 %v3612, %v3780
  %3782 = vmatmul.bf16.gmra.mxu0 %v1646
  %v3783 = vpop.f32.mrf.mxu0
  %v3784 = vadd.f32 %v3615, %v3783
  %v3785 = vpop.f32.mrf.mxu0
  %v3786 = vadd.f32 %v3617, %v3785
  %3787 = vmatmul.bf16.gmra.mxu0 %v1655
  %v3788 = vpop.f32.mrf.mxu0
  %v3789 = vadd.f32 %v3620, %v3788
  %v3790 = vpop.f32.mrf.mxu0
  %v3791 = vadd.f32 %v3622, %v3790
  %3792 = vmatmul.bf16.gmra.mxu0 %v1664
  %v3793 = vpop.f32.mrf.mxu0
  %v3794 = vadd.f32 %v3625, %v3793
  %v3795 = vpop.f32.mrf.mxu0
  %v3796 = vadd.f32 %v3627, %v3795
  %3797 = vmatmul.bf16.gmra.mxu0 %v1673
  %v3798 = vpop.f32.mrf.mxu0
  %v3799 = vadd.f32 %v3630, %v3798
  %v3800 = vpop.f32.mrf.mxu0
  %v3801 = vadd.f32 %v3632, %v3800
  %3802 = vmatmul.bf16.gmra.mxu0 %v1682
  %v3803 = vpop.f32.mrf.mxu0
  %v3804 = vadd.f32 %v3635, %v3803
  %v3805 = vpop.f32.mrf.mxu0
  %v3806 = vadd.f32 %v3637, %v3805
  %3807 = vmatmul.bf16.gmra.mxu0 %v1691
  %v3808 = vpop.f32.mrf.mxu0
  %v3809 = vadd.f32 %v3640, %v3808
  %v3810 = vpop.f32.mrf.mxu0
  %v3811 = vadd.f32 %v3642, %v3810
  %3812 = vmatmul.bf16.gmra.mxu0 %v1700
  %v3813 = vpop.f32.mrf.mxu0
  %v3814 = vadd.f32 %v3645, %v3813
  %v3815 = vpop.f32.mrf.mxu0
  %v3816 = vadd.f32 %v3647, %v3815
  %3817 = vmatmul.bf16.gmra.mxu0 %v1709
  %v3818 = vpop.f32.mrf.mxu0
  %v3819 = vadd.f32 %v3650, %v3818
  %v3820 = vpop.f32.mrf.mxu0
  %v3821 = vadd.f32 %v3652, %v3820
  %3822 = vmatmul.bf16.gmra.mxu0 %v1718
  %v3823 = vpop.f32.mrf.mxu0
  %v3824 = vadd.f32 %v3655, %v3823
  %v3825 = vpop.f32.mrf.mxu0
  %v3826 = vadd.f32 %v3657, %v3825
  %3827 = vmatmul.bf16.gmra.mxu0 %v1727
  %v3828 = vpop.f32.mrf.mxu0
  %v3829 = vadd.f32 %v3660, %v3828
  %v3830 = vpop.f32.mrf.mxu0
  %v3831 = vadd.f32 %v3662, %v3830
  %3832 = vmatmul.bf16.gmra.mxu0 %v1736
  %v3833 = vpop.f32.mrf.mxu0
  %v3834 = vadd.f32 %v3665, %v3833
  %v3835 = vpop.f32.mrf.mxu0
  %v3836 = vadd.f32 %v3667, %v3835
  %3837 = vmatmul.bf16.gmra.mxu0 %v1745
  %v3838 = vpop.f32.mrf.mxu0
  %v3839 = vadd.f32 %v3670, %v3838
  %v3840 = vpop.f32.mrf.mxu0
  %v3841 = vadd.f32 %v3672, %v3840
  %3842 = vmatmul.bf16.gmra.mxu0 %v1754
  %v3843 = vpop.f32.mrf.mxu0
  %v3844 = vadd.f32 %v3675, %v3843
  %v3845 = vpop.f32.mrf.mxu0
  %v3846 = vadd.f32 %v3677, %v3845
  %3847 = vmatmul.bf16.gmra.mxu0 %v1763
  %v3848 = vpop.f32.mrf.mxu0
  %v3849 = vadd.f32 %v3680, %v3848
  %v3850 = vpop.f32.mrf.mxu0
  %v3851 = vadd.f32 %v3682, %v3850
  %3852 = vmatmul.bf16.gmra.mxu0 %v1772
  %v3853 = vpop.f32.mrf.mxu0
  %v3854 = vadd.f32 %v3685, %v3853
  %v3855 = vpop.f32.mrf.mxu0
  %v3856 = vadd.f32 %v3687, %v3855
  %3857 = vmatmul.bf16.gmra.mxu0 %v1781
  %v3858 = vpop.f32.mrf.mxu0
  %v3859 = vadd.f32 %v3690, %v3858
  %v3860 = vpop.f32.mrf.mxu0
  %v3861 = vadd.f32 %v3692, %v3860
  %3862 = vmatmul.bf16.gmra.mxu0 %v1790
  %v3863 = vpop.f32.mrf.mxu0
  %v3864 = vadd.f32 %v3695, %v3863
  %v3865 = vpop.f32.mrf.mxu0
  %v3866 = vadd.f32 %v3697, %v3865
  %3867 = vmatmul.bf16.gmra.mxu0 %v1799
  %v3868 = vpop.f32.mrf.mxu0
  %v3869 = vadd.f32 %v3700, %v3868
  %v3870 = vpop.f32.mrf.mxu0
  %v3871 = vadd.f32 %v3702, %v3870
  %3872 = vdwg.mxu0
  %3873 = vmatpush.bf16.msra.mxu0 %v2448
  %3874 = vmatpush.bf16.msra.mxu0 %v2447
  %3875 = vmatpush.bf16.msra.mxu0 %v2446
  %3876 = vmatpush.bf16.msra.mxu0 %v2445
  %3877 = vmatpush.bf16.msra.mxu0 %v2444
  %3878 = vmatpush.bf16.msra.mxu0 %v2443
  %3879 = vmatpush.bf16.msra.mxu0 %v2442
  %3880 = vmatpush.bf16.msra.mxu0 %v2441
  %3881 = vmatmul.bf16.gmra.mxu0 %v1521
  %v3882 = vpop.f32.mrf.mxu0
  %v3883 = vadd.f32 %v3714, %v3882
  %v3884 = vpop.f32.mrf.mxu0
  %v3885 = vadd.f32 %v3716, %v3884
  %3886 = vmatmul.bf16.gmra.mxu0 %v1530
  %v3887 = vpop.f32.mrf.mxu0
  %v3888 = vadd.f32 %v3719, %v3887
  %v3889 = vpop.f32.mrf.mxu0
  %v3890 = vadd.f32 %v3721, %v3889
  %3891 = vmatmul.bf16.gmra.mxu0 %v1539
  %v3892 = vpop.f32.mrf.mxu0
  %v3893 = vadd.f32 %v3724, %v3892
  %v3894 = vpop.f32.mrf.mxu0
  %v3895 = vadd.f32 %v3726, %v3894
  %3896 = vmatmul.bf16.gmra.mxu0 %v1548
  %v3897 = vpop.f32.mrf.mxu0
  %v3898 = vadd.f32 %v3729, %v3897
  %v3899 = vpop.f32.mrf.mxu0
  %v3900 = vadd.f32 %v3731, %v3899
  %3901 = vmatmul.bf16.gmra.mxu0 %v1557
  %v3902 = vpop.f32.mrf.mxu0
  %v3903 = vadd.f32 %v3734, %v3902
  %v3904 = vpop.f32.mrf.mxu0
  %v3905 = vadd.f32 %v3736, %v3904
  %3906 = vmatmul.bf16.gmra.mxu0 %v1566
  %v3907 = vpop.f32.mrf.mxu0
  %v3908 = vadd.f32 %v3739, %v3907
  %v3909 = vpop.f32.mrf.mxu0
  %v3910 = vadd.f32 %v3741, %v3909
  %3911 = vmatmul.bf16.gmra.mxu0 %v1575
  %v3912 = vpop.f32.mrf.mxu0
  %v3913 = vadd.f32 %v3744, %v3912
  %v3914 = vpop.f32.mrf.mxu0
  %v3915 = vadd.f32 %v3746, %v3914
  %3916 = vmatmul.bf16.gmra.mxu0 %v1584
  %v3917 = vpop.f32.mrf.mxu0
  %v3918 = vadd.f32 %v3749, %v3917
  %v3919 = vpop.f32.mrf.mxu0
  %v3920 = vadd.f32 %v3751, %v3919
  %3921 = vmatmul.bf16.gmra.mxu0 %v1593
  %v3922 = vpop.f32.mrf.mxu0
  %v3923 = vadd.f32 %v3754, %v3922
  %v3924 = vpop.f32.mrf.mxu0
  %v3925 = vadd.f32 %v3756, %v3924
  %3926 = vmatmul.bf16.gmra.mxu0 %v1602
  %v3927 = vpop.f32.mrf.mxu0
  %v3928 = vadd.f32 %v3759, %v3927
  %v3929 = vpop.f32.mrf.mxu0
  %v3930 = vadd.f32 %v3761, %v3929
  %3931 = vmatmul.bf16.gmra.mxu0 %v1611
  %v3932 = vpop.f32.mrf.mxu0
  %v3933 = vadd.f32 %v3764, %v3932
  %v3934 = vpop.f32.mrf.mxu0
  %v3935 = vadd.f32 %v3766, %v3934
  %3936 = vmatmul.bf16.gmra.mxu0 %v1620
  %v3937 = vpop.f32.mrf.mxu0
  %v3938 = vadd.f32 %v3769, %v3937
  %v3939 = vpop.f32.mrf.mxu0
  %v3940 = vadd.f32 %v3771, %v3939
  %3941 = vmatmul.bf16.gmra.mxu0 %v1629
  %v3942 = vpop.f32.mrf.mxu0
  %v3943 = vadd.f32 %v3774, %v3942
  %v3944 = vpop.f32.mrf.mxu0
  %v3945 = vadd.f32 %v3776, %v3944
  %3946 = vmatmul.bf16.gmra.mxu0 %v1638
  %v3947 = vpop.f32.mrf.mxu0
  %v3948 = vadd.f32 %v3779, %v3947
  %v3949 = vpop.f32.mrf.mxu0
  %v3950 = vadd.f32 %v3781, %v3949
  %3951 = vmatmul.bf16.gmra.mxu0 %v1647
  %v3952 = vpop.f32.mrf.mxu0
  %v3953 = vadd.f32 %v3784, %v3952
  %v3954 = vpop.f32.mrf.mxu0
  %v3955 = vadd.f32 %v3786, %v3954
  %3956 = vmatmul.bf16.gmra.mxu0 %v1656
  %v3957 = vpop.f32.mrf.mxu0
  %v3958 = vadd.f32 %v3789, %v3957
  %v3959 = vpop.f32.mrf.mxu0
  %v3960 = vadd.f32 %v3791, %v3959
  %3961 = vmatmul.bf16.gmra.mxu0 %v1665
  %v3962 = vpop.f32.mrf.mxu0
  %v3963 = vadd.f32 %v3794, %v3962
  %v3964 = vpop.f32.mrf.mxu0
  %v3965 = vadd.f32 %v3796, %v3964
  %3966 = vmatmul.bf16.gmra.mxu0 %v1674
  %v3967 = vpop.f32.mrf.mxu0
  %v3968 = vadd.f32 %v3799, %v3967
  %v3969 = vpop.f32.mrf.mxu0
  %v3970 = vadd.f32 %v3801, %v3969
  %3971 = vmatmul.bf16.gmra.mxu0 %v1683
  %v3972 = vpop.f32.mrf.mxu0
  %v3973 = vadd.f32 %v3804, %v3972
  %v3974 = vpop.f32.mrf.mxu0
  %v3975 = vadd.f32 %v3806, %v3974
  %3976 = vmatmul.bf16.gmra.mxu0 %v1692
  %v3977 = vpop.f32.mrf.mxu0
  %v3978 = vadd.f32 %v3809, %v3977
  %v3979 = vpop.f32.mrf.mxu0
  %v3980 = vadd.f32 %v3811, %v3979
  %3981 = vmatmul.bf16.gmra.mxu0 %v1701
  %v3982 = vpop.f32.mrf.mxu0
  %v3983 = vadd.f32 %v3814, %v3982
  %v3984 = vpop.f32.mrf.mxu0
  %v3985 = vadd.f32 %v3816, %v3984
  %3986 = vmatmul.bf16.gmra.mxu0 %v1710
  %v3987 = vpop.f32.mrf.mxu0
  %v3988 = vadd.f32 %v3819, %v3987
  %v3989 = vpop.f32.mrf.mxu0
  %v3990 = vadd.f32 %v3821, %v3989
  %3991 = vmatmul.bf16.gmra.mxu0 %v1719
  %v3992 = vpop.f32.mrf.mxu0
  %v3993 = vadd.f32 %v3824, %v3992
  %v3994 = vpop.f32.mrf.mxu0
  %v3995 = vadd.f32 %v3826, %v3994
  %3996 = vmatmul.bf16.gmra.mxu0 %v1728
  %v3997 = vpop.f32.mrf.mxu0
  %v3998 = vadd.f32 %v3829, %v3997
  %v3999 = vpop.f32.mrf.mxu0
  %v4000 = vadd.f32 %v3831, %v3999
  %4001 = vmatmul.bf16.gmra.mxu0 %v1737
  %v4002 = vpop.f32.mrf.mxu0
  %v4003 = vadd.f32 %v3834, %v4002
  %v4004 = vpop.f32.mrf.mxu0
  %v4005 = vadd.f32 %v3836, %v4004
  %4006 = vmatmul.bf16.gmra.mxu0 %v1746
  %v4007 = vpop.f32.mrf.mxu0
  %v4008 = vadd.f32 %v3839, %v4007
  %v4009 = vpop.f32.mrf.mxu0
  %v4010 = vadd.f32 %v3841, %v4009
  %4011 = vmatmul.bf16.gmra.mxu0 %v1755
  %v4012 = vpop.f32.mrf.mxu0
  %v4013 = vadd.f32 %v3844, %v4012
  %v4014 = vpop.f32.mrf.mxu0
  %v4015 = vadd.f32 %v3846, %v4014
  %4016 = vmatmul.bf16.gmra.mxu0 %v1764
  %v4017 = vpop.f32.mrf.mxu0
  %v4018 = vadd.f32 %v3849, %v4017
  %v4019 = vpop.f32.mrf.mxu0
  %v4020 = vadd.f32 %v3851, %v4019
  %4021 = vmatmul.bf16.gmra.mxu0 %v1773
  %v4022 = vpop.f32.mrf.mxu0
  %v4023 = vadd.f32 %v3854, %v4022
  %v4024 = vpop.f32.mrf.mxu0
  %v4025 = vadd.f32 %v3856, %v4024
  %4026 = vmatmul.bf16.gmra.mxu0 %v1782
  %v4027 = vpop.f32.mrf.mxu0
  %v4028 = vadd.f32 %v3859, %v4027
  %v4029 = vpop.f32.mrf.mxu0
  %v4030 = vadd.f32 %v3861, %v4029
  %4031 = vmatmul.bf16.gmra.mxu0 %v1791
  %v4032 = vpop.f32.mrf.mxu0
  %v4033 = vadd.f32 %v3864, %v4032
  %v4034 = vpop.f32.mrf.mxu0
  %v4035 = vadd.f32 %v3866, %v4034
  %4036 = vmatmul.bf16.gmra.mxu0 %v1800
  %v4037 = vpop.f32.mrf.mxu0
  %v4038 = vadd.f32 %v3869, %v4037
  %v4039 = vpop.f32.mrf.mxu0
  %v4040 = vadd.f32 %v3871, %v4039
  %4041 = vdwg.mxu0
  %v4042 = vadd.f32 %v89, %v3883
  %v4043 = vadd.f32 %v90, %v3885
  %v4044 = vadd.f32 %v91, %v3888
  %v4045 = vadd.f32 %v92, %v3890
  %v4046 = vadd.f32 %v93, %v3893
  %v4047 = vadd.f32 %v94, %v3895
  %v4048 = vadd.f32 %v95, %v3898
  %v4049 = vadd.f32 %v96, %v3900
  %v4050 = vadd.f32 %v97, %v3903
  %v4051 = vadd.f32 %v98, %v3905
  %v4052 = vadd.f32 %v99, %v3908
  %v4053 = vadd.f32 %v100, %v3910
  %v4054 = vadd.f32 %v101, %v3913
  %v4055 = vadd.f32 %v102, %v3915
  %v4056 = vadd.f32 %v103, %v3918
  %v4057 = vadd.f32 %v104, %v3920
  %v4058 = vadd.f32 %v105, %v3923
  %v4059 = vadd.f32 %v106, %v3925
  %v4060 = vadd.f32 %v107, %v3928
  %v4061 = vadd.f32 %v108, %v3930
  %v4062 = vadd.f32 %v109, %v3933
  %v4063 = vadd.f32 %v110, %v3935
  %v4064 = vadd.f32 %v111, %v3938
  %v4065 = vadd.f32 %v112, %v3940
  %v4066 = vadd.f32 %v113, %v3943
  %v4067 = vadd.f32 %v114, %v3945
  %v4068 = vadd.f32 %v115, %v3948
  %v4069 = vadd.f32 %v116, %v3950
  %v4070 = vadd.f32 %v117, %v3953
  %v4071 = vadd.f32 %v118, %v3955
  %v4072 = vadd.f32 %v119, %v3958
  %v4073 = vadd.f32 %v120, %v3960
  %v4074 = vadd.f32 %v121, %v3963
  %v4075 = vadd.f32 %v122, %v3965
  %v4076 = vadd.f32 %v123, %v3968
  %v4077 = vadd.f32 %v124, %v3970
  %v4078 = vadd.f32 %v125, %v3973
  %v4079 = vadd.f32 %v126, %v3975
  %v4080 = vadd.f32 %v127, %v3978
  %v4081 = vadd.f32 %v128, %v3980
  %v4082 = vadd.f32 %v129, %v3983
  %v4083 = vadd.f32 %v130, %v3985
  %v4084 = vadd.f32 %v131, %v3988
  %v4085 = vadd.f32 %v132, %v3990
  %v4086 = vadd.f32 %v133, %v3993
  %v4087 = vadd.f32 %v134, %v3995
  %v4088 = vadd.f32 %v135, %v3998
  %v4089 = vadd.f32 %v136, %v4000
  %v4090 = vadd.f32 %v137, %v4003
  %v4091 = vadd.f32 %v138, %v4005
  %v4092 = vadd.f32 %v139, %v4008
  %v4093 = vadd.f32 %v140, %v4010
  %v4094 = vadd.f32 %v141, %v4013
  %v4095 = vadd.f32 %v142, %v4015
  %v4096 = vadd.f32 %v143, %v4018
  %v4097 = vadd.f32 %v144, %v4020
  %v4098 = vadd.f32 %v145, %v4023
  %v4099 = vadd.f32 %v146, %v4025
  %v4100 = vadd.f32 %v147, %v4028
  %v4101 = vadd.f32 %v148, %v4030
  %v4102 = vadd.f32 %v149, %v4033
  %v4103 = vadd.f32 %v150, %v4035
  %v4104 = vadd.f32 %v151, %v4038
  %v4105 = vadd.f32 %v152, %v4040
  %4106 = vst [vmem:[#allocation2] sm:$0xff] %v4042
  %4107 = vst [vmem:[#allocation2 + $0x8] sm:$0xff] %v4043
  %4108 = vst [vmem:[#allocation2 + $0x10] sm:$0xff] %v4044
  %4109 = vst [vmem:[#allocation2 + $0x18] sm:$0xff] %v4045
  %4110 = vst [vmem:[#allocation2 + $0x20] sm:$0xff] %v4046
  %4111 = vst [vmem:[#allocation2 + $0x28] sm:$0xff] %v4047
  %4112 = vst [vmem:[#allocation2 + $0x30] sm:$0xff] %v4048
  %4113 = vst [vmem:[#allocation2 + $0x38] sm:$0xff] %v4049
  %4114 = vst [vmem:[#allocation2 + $0x40] sm:$0xff] %v4050
  %4115 = vst [vmem:[#allocation2 + $0x48] sm:$0xff] %v4051
  %4116 = vst [vmem:[#allocation2 + $0x50] sm:$0xff] %v4052
  %4117 = vst [vmem:[#allocation2 + $0x58] sm:$0xff] %v4053
  %4118 = vst [vmem:[#allocation2 + $0x60] sm:$0xff] %v4054
  %4119 = vst [vmem:[#allocation2 + $0x68] sm:$0xff] %v4055
  %4120 = vst [vmem:[#allocation2 + $0x70] sm:$0xff] %v4056
  %4121 = vst [vmem:[#allocation2 + $0x78] sm:$0xff] %v4057
  %4122 = vst [vmem:[#allocation2 + $0x80] sm:$0xff] %v4058
  %4123 = vst [vmem:[#allocation2 + $0x88] sm:$0xff] %v4059
  %4124 = vst [vmem:[#allocation2 + $0x90] sm:$0xff] %v4060
  %4125 = vst [vmem:[#allocation2 + $0x98] sm:$0xff] %v4061
  %4126 = vst [vmem:[#allocation2 + $0xa0] sm:$0xff] %v4062
  %4127 = vst [vmem:[#allocation2 + $0xa8] sm:$0xff] %v4063
  %4128 = vst [vmem:[#allocation2 + $0xb0] sm:$0xff] %v4064
  %4129 = vst [vmem:[#allocation2 + $0xb8] sm:$0xff] %v4065
  %4130 = vst [vmem:[#allocation2 + $0xc0] sm:$0xff] %v4066
  %4131 = vst [vmem:[#allocation2 + $0xc8] sm:$0xff] %v4067
  %4132 = vst [vmem:[#allocation2 + $0xd0] sm:$0xff] %v4068
  %4133 = vst [vmem:[#allocation2 + $0xd8] sm:$0xff] %v4069
  %4134 = vst [vmem:[#allocation2 + $0xe0] sm:$0xff] %v4070
  %4135 = vst [vmem:[#allocation2 + $0xe8] sm:$0xff] %v4071
  %4136 = vst [vmem:[#allocation2 + $0xf0] sm:$0xff] %v4072
  %4137 = vst [vmem:[#allocation2 + $0xf8] sm:$0xff] %v4073
  %4138 = vst [vmem:[#allocation2 + $0x100] sm:$0xff] %v4074
  %4139 = vst [vmem:[#allocation2 + $0x108] sm:$0xff] %v4075
  %4140 = vst [vmem:[#allocation2 + $0x110] sm:$0xff] %v4076
  %4141 = vst [vmem:[#allocation2 + $0x118] sm:$0xff] %v4077
  %4142 = vst [vmem:[#allocation2 + $0x120] sm:$0xff] %v4078
  %4143 = vst [vmem:[#allocation2 + $0x128] sm:$0xff] %v4079
  %4144 = vst [vmem:[#allocation2 + $0x130] sm:$0xff] %v4080
  %4145 = vst [vmem:[#allocation2 + $0x138] sm:$0xff] %v4081
  %4146 = vst [vmem:[#allocation2 + $0x140] sm:$0xff] %v4082
  %4147 = vst [vmem:[#allocation2 + $0x148] sm:$0xff] %v4083
  %4148 = vst [vmem:[#allocation2 + $0x150] sm:$0xff] %v4084
  %4149 = vst [vmem:[#allocation2 + $0x158] sm:$0xff] %v4085
  %4150 = vst [vmem:[#allocation2 + $0x160] sm:$0xff] %v4086
  %4151 = vst [vmem:[#allocation2 + $0x168] sm:$0xff] %v4087
  %4152 = vst [vmem:[#allocation2 + $0x170] sm:$0xff] %v4088
  %4153 = vst [vmem:[#allocation2 + $0x178] sm:$0xff] %v4089
  %4154 = vst [vmem:[#allocation2 + $0x180] sm:$0xff] %v4090
  %4155 = vst [vmem:[#allocation2 + $0x188] sm:$0xff] %v4091
  %4156 = vst [vmem:[#allocation2 + $0x190] sm:$0xff] %v4092
  %4157 = vst [vmem:[#allocation2 + $0x198] sm:$0xff] %v4093
  %4158 = vst [vmem:[#allocation2 + $0x1a0] sm:$0xff] %v4094
  %4159 = vst [vmem:[#allocation2 + $0x1a8] sm:$0xff] %v4095
  %4160 = vst [vmem:[#allocation2 + $0x1b0] sm:$0xff] %v4096
  %4161 = vst [vmem:[#allocation2 + $0x1b8] sm:$0xff] %v4097
  %4162 = vst [vmem:[#allocation2 + $0x1c0] sm:$0xff] %v4098
  %4163 = vst [vmem:[#allocation2 + $0x1c8] sm:$0xff] %v4099
  %4164 = vst [vmem:[#allocation2 + $0x1d0] sm:$0xff] %v4100
  %4165 = vst [vmem:[#allocation2 + $0x1d8] sm:$0xff] %v4101
  %4166 = vst [vmem:[#allocation2 + $0x1e0] sm:$0xff] %v4102
  %4167 = vst [vmem:[#allocation2 + $0x1e8] sm:$0xff] %v4103
  %4168 = vst [vmem:[#allocation2 + $0x1f0] sm:$0xff] %v4104
  %4169 = vst [vmem:[#allocation2 + $0x1f8] sm:$0xff] %v4105
  // Predicated region
  $region18: #{conv_down_block_forward.8} parent=0 // pred_check
    %p4170 = pneg %p15
  $region19: #{conv_down_block_forward.8} parent=0 // pred_check_branch
    %4172 = sbr.rel (%p4170) target = $region21
  $region20: #{conv_down_block_forward.8} parent=0 // pred_region
    %v4173 = vld [vmem:[#allocation2] sm:$0xff]
    %v4174 = vld [vmem:[#allocation2 + $0x8] sm:$0xff]
    %v4175 = vld [vmem:[#allocation2 + $0x10] sm:$0xff]
    %v4176 = vld [vmem:[#allocation2 + $0x18] sm:$0xff]
    %v4177 = vld [vmem:[#allocation2 + $0x20] sm:$0xff]
    %v4178 = vld [vmem:[#allocation2 + $0x28] sm:$0xff]
    %v4179 = vld [vmem:[#allocation2 + $0x30] sm:$0xff]
    %v4180 = vld [vmem:[#allocation2 + $0x38] sm:$0xff]
    %v4181 = vld [vmem:[#allocation2 + $0x40] sm:$0xff]
    %v4182 = vld [vmem:[#allocation2 + $0x48] sm:$0xff]
    %v4183 = vld [vmem:[#allocation2 + $0x50] sm:$0xff]
    %v4184 = vld [vmem:[#allocation2 + $0x58] sm:$0xff]
    %v4185 = vld [vmem:[#allocation2 + $0x60] sm:$0xff]
    %v4186 = vld [vmem:[#allocation2 + $0x68] sm:$0xff]
    %v4187 = vld [vmem:[#allocation2 + $0x70] sm:$0xff]
    %v4188 = vld [vmem:[#allocation2 + $0x78] sm:$0xff]
    %v4189 = vld [vmem:[#allocation2 + $0x80] sm:$0xff]
    %v4190 = vld [vmem:[#allocation2 + $0x88] sm:$0xff]
    %v4191 = vld [vmem:[#allocation2 + $0x90] sm:$0xff]
    %v4192 = vld [vmem:[#allocation2 + $0x98] sm:$0xff]
    %v4193 = vld [vmem:[#allocation2 + $0xa0] sm:$0xff]
    %v4194 = vld [vmem:[#allocation2 + $0xa8] sm:$0xff]
    %v4195 = vld [vmem:[#allocation2 + $0xb0] sm:$0xff]
    %v4196 = vld [vmem:[#allocation2 + $0xb8] sm:$0xff]
    %v4197 = vld [vmem:[#allocation2 + $0xc0] sm:$0xff]
    %v4198 = vld [vmem:[#allocation2 + $0xc8] sm:$0xff]
    %v4199 = vld [vmem:[#allocation2 + $0xd0] sm:$0xff]
    %v4200 = vld [vmem:[#allocation2 + $0xd8] sm:$0xff]
    %v4201 = vld [vmem:[#allocation2 + $0xe0] sm:$0xff]
    %v4202 = vld [vmem:[#allocation2 + $0xe8] sm:$0xff]
    %v4203 = vld [vmem:[#allocation2 + $0xf0] sm:$0xff]
    %v4204 = vld [vmem:[#allocation2 + $0xf8] sm:$0xff]
    %v4205 = vld [vmem:[#allocation2 + $0x100] sm:$0xff]
    %v4206 = vld [vmem:[#allocation2 + $0x108] sm:$0xff]
    %v4207 = vld [vmem:[#allocation2 + $0x110] sm:$0xff]
    %v4208 = vld [vmem:[#allocation2 + $0x118] sm:$0xff]
    %v4209 = vld [vmem:[#allocation2 + $0x120] sm:$0xff]
    %v4210 = vld [vmem:[#allocation2 + $0x128] sm:$0xff]
    %v4211 = vld [vmem:[#allocation2 + $0x130] sm:$0xff]
    %v4212 = vld [vmem:[#allocation2 + $0x138] sm:$0xff]
    %v4213 = vld [vmem:[#allocation2 + $0x140] sm:$0xff]
    %v4214 = vld [vmem:[#allocation2 + $0x148] sm:$0xff]
    %v4215 = vld [vmem:[#allocation2 + $0x150] sm:$0xff]
    %v4216 = vld [vmem:[#allocation2 + $0x158] sm:$0xff]
    %v4217 = vld [vmem:[#allocation2 + $0x160] sm:$0xff]
    %v4218 = vld [vmem:[#allocation2 + $0x168] sm:$0xff]
    %v4219 = vld [vmem:[#allocation2 + $0x170] sm:$0xff]
    %v4220 = vld [vmem:[#allocation2 + $0x178] sm:$0xff]
    %v4221 = vld [vmem:[#allocation2 + $0x180] sm:$0xff]
    %v4222 = vld [vmem:[#allocation2 + $0x188] sm:$0xff]
    %v4223 = vld [vmem:[#allocation2 + $0x190] sm:$0xff]
    %v4224 = vld [vmem:[#allocation2 + $0x198] sm:$0xff]
    %v4225 = vld [vmem:[#allocation2 + $0x1a0] sm:$0xff]
    %v4226 = vld [vmem:[#allocation2 + $0x1a8] sm:$0xff]
    %v4227 = vld [vmem:[#allocation2 + $0x1b0] sm:$0xff]
    %v4228 = vld [vmem:[#allocation2 + $0x1b8] sm:$0xff]
    %v4229 = vld [vmem:[#allocation2 + $0x1c0] sm:$0xff]
    %v4230 = vld [vmem:[#allocation2 + $0x1c8] sm:$0xff]
    %v4231 = vld [vmem:[#allocation2 + $0x1d0] sm:$0xff]
    %v4232 = vld [vmem:[#allocation2 + $0x1d8] sm:$0xff]
    %v4233 = vld [vmem:[#allocation2 + $0x1e0] sm:$0xff]
    %v4234 = vld [vmem:[#allocation2 + $0x1e8] sm:$0xff]
    %v4235 = vld [vmem:[#allocation2 + $0x1f0] sm:$0xff]
    %v4236 = vld [vmem:[#allocation2 + $0x1f8] sm:$0xff]
    %4237 = vst [vmem:[%s2] sm:$0xff] %v4173
    %4238 = vst [vmem:[%s2 + $0x8] sm:$0xff] %v4174
    %4239 = vst [vmem:[%s2 + $0x10] sm:$0xff] %v4175
    %4240 = vst [vmem:[%s2 + $0x18] sm:$0xff] %v4176
    %4241 = vst [vmem:[%s2 + $0x20] sm:$0xff] %v4177
    %4242 = vst [vmem:[%s2 + $0x28] sm:$0xff] %v4178
    %4243 = vst [vmem:[%s2 + $0x30] sm:$0xff] %v4179
    %4244 = vst [vmem:[%s2 + $0x38] sm:$0xff] %v4180
    %4245 = vst [vmem:[%s2 + $0x40] sm:$0xff] %v4181
    %4246 = vst [vmem:[%s2 + $0x48] sm:$0xff] %v4182
    %4247 = vst [vmem:[%s2 + $0x50] sm:$0xff] %v4183
    %4248 = vst [vmem:[%s2 + $0x58] sm:$0xff] %v4184
    %4249 = vst [vmem:[%s2 + $0x60] sm:$0xff] %v4185
    %4250 = vst [vmem:[%s2 + $0x68] sm:$0xff] %v4186
    %4251 = vst [vmem:[%s2 + $0x70] sm:$0xff] %v4187
    %4252 = vst [vmem:[%s2 + $0x78] sm:$0xff] %v4188
    %4253 = vst [vmem:[%s2 + $0x80] sm:$0xff] %v4189
    %4254 = vst [vmem:[%s2 + $0x88] sm:$0xff] %v4190
    %4255 = vst [vmem:[%s2 + $0x90] sm:$0xff] %v4191
    %4256 = vst [vmem:[%s2 + $0x98] sm:$0xff] %v4192
    %4257 = vst [vmem:[%s2 + $0xa0] sm:$0xff] %v4193
    %4258 = vst [vmem:[%s2 + $0xa8] sm:$0xff] %v4194
    %4259 = vst [vmem:[%s2 + $0xb0] sm:$0xff] %v4195
    %4260 = vst [vmem:[%s2 + $0xb8] sm:$0xff] %v4196
    %4261 = vst [vmem:[%s2 + $0xc0] sm:$0xff] %v4197
    %4262 = vst [vmem:[%s2 + $0xc8] sm:$0xff] %v4198
    %4263 = vst [vmem:[%s2 + $0xd0] sm:$0xff] %v4199
    %4264 = vst [vmem:[%s2 + $0xd8] sm:$0xff] %v4200
    %4265 = vst [vmem:[%s2 + $0xe0] sm:$0xff] %v4201
    %4266 = vst [vmem:[%s2 + $0xe8] sm:$0xff] %v4202
    %4267 = vst [vmem:[%s2 + $0xf0] sm:$0xff] %v4203
    %4268 = vst [vmem:[%s2 + $0xf8] sm:$0xff] %v4204
    %4269 = vst [vmem:[%s2 + $0x100] sm:$0xff] %v4205
    %4270 = vst [vmem:[%s2 + $0x108] sm:$0xff] %v4206
    %4271 = vst [vmem:[%s2 + $0x110] sm:$0xff] %v4207
    %4272 = vst [vmem:[%s2 + $0x118] sm:$0xff] %v4208
    %4273 = vst [vmem:[%s2 + $0x120] sm:$0xff] %v4209
    %4274 = vst [vmem:[%s2 + $0x128] sm:$0xff] %v4210
    %4275 = vst [vmem:[%s2 + $0x130] sm:$0xff] %v4211
    %4276 = vst [vmem:[%s2 + $0x138] sm:$0xff] %v4212
    %4277 = vst [vmem:[%s2 + $0x140] sm:$0xff] %v4213
    %4278 = vst [vmem:[%s2 + $0x148] sm:$0xff] %v4214
    %4279 = vst [vmem:[%s2 + $0x150] sm:$0xff] %v4215
    %4280 = vst [vmem:[%s2 + $0x158] sm:$0xff] %v4216
    %4281 = vst [vmem:[%s2 + $0x160] sm:$0xff] %v4217
    %4282 = vst [vmem:[%s2 + $0x168] sm:$0xff] %v4218
    %4283 = vst [vmem:[%s2 + $0x170] sm:$0xff] %v4219
    %4284 = vst [vmem:[%s2 + $0x178] sm:$0xff] %v4220
    %4285 = vst [vmem:[%s2 + $0x180] sm:$0xff] %v4221
    %4286 = vst [vmem:[%s2 + $0x188] sm:$0xff] %v4222
    %4287 = vst [vmem:[%s2 + $0x190] sm:$0xff] %v4223
    %4288 = vst [vmem:[%s2 + $0x198] sm:$0xff] %v4224
    %4289 = vst [vmem:[%s2 + $0x1a0] sm:$0xff] %v4225
    %4290 = vst [vmem:[%s2 + $0x1a8] sm:$0xff] %v4226
    %4291 = vst [vmem:[%s2 + $0x1b0] sm:$0xff] %v4227
    %4292 = vst [vmem:[%s2 + $0x1b8] sm:$0xff] %v4228
    %4293 = vst [vmem:[%s2 + $0x1c0] sm:$0xff] %v4229
    %4294 = vst [vmem:[%s2 + $0x1c8] sm:$0xff] %v4230
    %4295 = vst [vmem:[%s2 + $0x1d0] sm:$0xff] %v4231
    %4296 = vst [vmem:[%s2 + $0x1d8] sm:$0xff] %v4232
    %4297 = vst [vmem:[%s2 + $0x1e0] sm:$0xff] %v4233
    %4298 = vst [vmem:[%s2 + $0x1e8] sm:$0xff] %v4234
    %4299 = vst [vmem:[%s2 + $0x1f0] sm:$0xff] %v4235
    %4300 = vst [vmem:[%s2 + $0x1f8] sm:$0xff] %v4236
    %v4301 = vld [vmem:[%s3] sm:$0x1]
    %v4302 = vadd.f32 %v4173, %v4174
    %v4303 = vadd.f32 %v4302, %v4175
    %v4304 = vadd.f32 %v4303, %v4176
    %v4305 = vadd.f32 %v4304, %v4177
    %v4306 = vadd.f32 %v4305, %v4178
    %v4307 = vadd.f32 %v4306, %v4179
    %v4308 = vadd.f32 %v4307, %v4180
    %v4309 = vadd.f32 %v4308, %v4181
    %v4310 = vadd.f32 %v4309, %v4182
    %v4311 = vadd.f32 %v4310, %v4183
    %v4312 = vadd.f32 %v4311, %v4184
    %v4313 = vadd.f32 %v4312, %v4185
    %v4314 = vadd.f32 %v4313, %v4186
    %v4315 = vadd.f32 %v4314, %v4187
    %v4316 = vadd.f32 %v4315, %v4188
    %v4317 = vadd.f32 %v4316, %v4189
    %v4318 = vadd.f32 %v4317, %v4190
    %v4319 = vadd.f32 %v4318, %v4191
    %v4320 = vadd.f32 %v4319, %v4192
    %v4321 = vadd.f32 %v4320, %v4193
    %v4322 = vadd.f32 %v4321, %v4194
    %v4323 = vadd.f32 %v4322, %v4195
    %v4324 = vadd.f32 %v4323, %v4196
    %v4325 = vadd.f32 %v4324, %v4197
    %v4326 = vadd.f32 %v4325, %v4198
    %v4327 = vadd.f32 %v4326, %v4199
    %v4328 = vadd.f32 %v4327, %v4200
    %v4329 = vadd.f32 %v4328, %v4201
    %v4330 = vadd.f32 %v4329, %v4202
    %v4331 = vadd.f32 %v4330, %v4203
    %v4332 = vadd.f32 %v4331, %v4204
    %v4333 = vadd.f32 %v4332, %v4205
    %v4334 = vadd.f32 %v4333, %v4206
    %v4335 = vadd.f32 %v4334, %v4207
    %v4336 = vadd.f32 %v4335, %v4208
    %v4337 = vadd.f32 %v4336, %v4209
    %v4338 = vadd.f32 %v4337, %v4210
    %v4339 = vadd.f32 %v4338, %v4211
    %v4340 = vadd.f32 %v4339, %v4212
    %v4341 = vadd.f32 %v4340, %v4213
    %v4342 = vadd.f32 %v4341, %v4214
    %v4343 = vadd.f32 %v4342, %v4215
    %v4344 = vadd.f32 %v4343, %v4216
    %v4345 = vadd.f32 %v4344, %v4217
    %v4346 = vadd.f32 %v4345, %v4218
    %v4347 = vadd.f32 %v4346, %v4219
    %v4348 = vadd.f32 %v4347, %v4220
    %v4349 = vadd.f32 %v4348, %v4221
    %v4350 = vadd.f32 %v4349, %v4222
    %v4351 = vadd.f32 %v4350, %v4223
    %v4352 = vadd.f32 %v4351, %v4224
    %v4353 = vadd.f32 %v4352, %v4225
    %v4354 = vadd.f32 %v4353, %v4226
    %v4355 = vadd.f32 %v4354, %v4227
    %v4356 = vadd.f32 %v4355, %v4228
    %v4357 = vadd.f32 %v4356, %v4229
    %v4358 = vadd.f32 %v4357, %v4230
    %v4359 = vadd.f32 %v4358, %v4231
    %v4360 = vadd.f32 %v4359, %v4232
    %v4361 = vadd.f32 %v4360, %v4233
    %v4362 = vadd.f32 %v4361, %v4234
    %v4363 = vadd.f32 %v4362, %v4235
    %v4364 = vadd.f32 %v4363, %v4236
    %v4365 = vrot.slane %v4364, 4
    %v4366 = vadd.f32 %v4364, %v4365
    %v4367 = vrot.slane %v4366, 2
    %v4368 = vadd.f32 %v4366, %v4367
    %v4369 = vrot.slane %v4368, 1
    %v4370 = vadd.f32 %v4368, %v4369
    %v4371 = vadd.f32 %v4301, %v4370
    %4372 = vst [vmem:[%s3] sm:$0x1] %v4371
    %v4373 = vld [vmem:[%s4] sm:$0x1]
    %v4374 = vmul.f32 %v4173, %v4173
    %v4375 = vmul.f32 %v4174, %v4174
    %v4376 = vmul.f32 %v4175, %v4175
    %v4377 = vmul.f32 %v4176, %v4176
    %v4378 = vmul.f32 %v4177, %v4177
    %v4379 = vmul.f32 %v4178, %v4178
    %v4380 = vmul.f32 %v4179, %v4179
    %v4381 = vmul.f32 %v4180, %v4180
    %v4382 = vmul.f32 %v4181, %v4181
    %v4383 = vmul.f32 %v4182, %v4182
    %v4384 = vmul.f32 %v4183, %v4183
    %v4385 = vmul.f32 %v4184, %v4184
    %v4386 = vmul.f32 %v4185, %v4185
    %v4387 = vmul.f32 %v4186, %v4186
    %v4388 = vmul.f32 %v4187, %v4187
    %v4389 = vmul.f32 %v4188, %v4188
    %v4390 = vmul.f32 %v4189, %v4189
    %v4391 = vmul.f32 %v4190, %v4190
    %v4392 = vmul.f32 %v4191, %v4191
    %v4393 = vmul.f32 %v4192, %v4192
    %v4394 = vmul.f32 %v4193, %v4193
    %v4395 = vmul.f32 %v4194, %v4194
    %v4396 = vmul.f32 %v4195, %v4195
    %v4397 = vmul.f32 %v4196, %v4196
    %v4398 = vmul.f32 %v4197, %v4197
    %v4399 = vmul.f32 %v4198, %v4198
    %v4400 = vmul.f32 %v4199, %v4199
    %v4401 = vmul.f32 %v4200, %v4200
    %v4402 = vmul.f32 %v4201, %v4201
    %v4403 = vmul.f32 %v4202, %v4202
    %v4404 = vmul.f32 %v4203, %v4203
    %v4405 = vmul.f32 %v4204, %v4204
    %v4406 = vmul.f32 %v4205, %v4205
    %v4407 = vmul.f32 %v4206, %v4206
    %v4408 = vmul.f32 %v4207, %v4207
    %v4409 = vmul.f32 %v4208, %v4208
    %v4410 = vmul.f32 %v4209, %v4209
    %v4411 = vmul.f32 %v4210, %v4210
    %v4412 = vmul.f32 %v4211, %v4211
    %v4413 = vmul.f32 %v4212, %v4212
    %v4414 = vmul.f32 %v4213, %v4213
    %v4415 = vmul.f32 %v4214, %v4214
    %v4416 = vmul.f32 %v4215, %v4215
    %v4417 = vmul.f32 %v4216, %v4216
    %v4418 = vmul.f32 %v4217, %v4217
    %v4419 = vmul.f32 %v4218, %v4218
    %v4420 = vmul.f32 %v4219, %v4219
    %v4421 = vmul.f32 %v4220, %v4220
    %v4422 = vmul.f32 %v4221, %v4221
    %v4423 = vmul.f32 %v4222, %v4222
    %v4424 = vmul.f32 %v4223, %v4223
    %v4425 = vmul.f32 %v4224, %v4224
    %v4426 = vmul.f32 %v4225, %v4225
    %v4427 = vmul.f32 %v4226, %v4226
    %v4428 = vmul.f32 %v4227, %v4227
    %v4429 = vmul.f32 %v4228, %v4228
    %v4430 = vmul.f32 %v4229, %v4229
    %v4431 = vmul.f32 %v4230, %v4230
    %v4432 = vmul.f32 %v4231, %v4231
    %v4433 = vmul.f32 %v4232, %v4232
    %v4434 = vmul.f32 %v4233, %v4233
    %v4435 = vmul.f32 %v4234, %v4234
    %v4436 = vmul.f32 %v4235, %v4235
    %v4437 = vmul.f32 %v4236, %v4236
    %v4438 = vadd.f32 %v4374, %v4375
    %v4439 = vadd.f32 %v4438, %v4376
    %v4440 = vadd.f32 %v4439, %v4377
    %v4441 = vadd.f32 %v4440, %v4378
    %v4442 = vadd.f32 %v4441, %v4379
    %v4443 = vadd.f32 %v4442, %v4380
    %v4444 = vadd.f32 %v4443, %v4381
    %v4445 = vadd.f32 %v4444, %v4382
    %v4446 = vadd.f32 %v4445, %v4383
    %v4447 = vadd.f32 %v4446, %v4384
    %v4448 = vadd.f32 %v4447, %v4385
    %v4449 = vadd.f32 %v4448, %v4386
    %v4450 = vadd.f32 %v4449, %v4387
    %v4451 = vadd.f32 %v4450, %v4388
    %v4452 = vadd.f32 %v4451, %v4389
    %v4453 = vadd.f32 %v4452, %v4390
    %v4454 = vadd.f32 %v4453, %v4391
    %v4455 = vadd.f32 %v4454, %v4392
    %v4456 = vadd.f32 %v4455, %v4393
    %v4457 = vadd.f32 %v4456, %v4394
    %v4458 = vadd.f32 %v4457, %v4395
    %v4459 = vadd.f32 %v4458, %v4396
    %v4460 = vadd.f32 %v4459, %v4397
    %v4461 = vadd.f32 %v4460, %v4398
    %v4462 = vadd.f32 %v4461, %v4399
    %v4463 = vadd.f32 %v4462, %v4400
    %v4464 = vadd.f32 %v4463, %v4401
    %v4465 = vadd.f32 %v4464, %v4402
    %v4466 = vadd.f32 %v4465, %v4403
    %v4467 = vadd.f32 %v4466, %v4404
    %v4468 = vadd.f32 %v4467, %v4405
    %v4469 = vadd.f32 %v4468, %v4406
    %v4470 = vadd.f32 %v4469, %v4407
    %v4471 = vadd.f32 %v4470, %v4408
    %v4472 = vadd.f32 %v4471, %v4409
    %v4473 = vadd.f32 %v4472, %v4410
    %v4474 = vadd.f32 %v4473, %v4411
    %v4475 = vadd.f32 %v4474, %v4412
    %v4476 = vadd.f32 %v4475, %v4413
    %v4477 = vadd.f32 %v4476, %v4414
    %v4478 = vadd.f32 %v4477, %v4415
    %v4479 = vadd.f32 %v4478, %v4416
    %v4480 = vadd.f32 %v4479, %v4417
    %v4481 = vadd.f32 %v4480, %v4418
    %v4482 = vadd.f32 %v4481, %v4419
    %v4483 = vadd.f32 %v4482, %v4420
    %v4484 = vadd.f32 %v4483, %v4421
    %v4485 = vadd.f32 %v4484, %v4422
    %v4486 = vadd.f32 %v4485, %v4423
    %v4487 = vadd.f32 %v4486, %v4424
    %v4488 = vadd.f32 %v4487, %v4425
    %v4489 = vadd.f32 %v4488, %v4426
    %v4490 = vadd.f32 %v4489, %v4427
    %v4491 = vadd.f32 %v4490, %v4428
    %v4492 = vadd.f32 %v4491, %v4429
    %v4493 = vadd.f32 %v4492, %v4430
    %v4494 = vadd.f32 %v4493, %v4431
    %v4495 = vadd.f32 %v4494, %v4432
    %v4496 = vadd.f32 %v4495, %v4433
    %v4497 = vadd.f32 %v4496, %v4434
    %v4498 = vadd.f32 %v4497, %v4435
    %v4499 = vadd.f32 %v4498, %v4436
    %v4500 = vadd.f32 %v4499, %v4437
    %v4501 = vrot.slane %v4500, 4
    %v4502 = vadd.f32 %v4500, %v4501
    %v4503 = vrot.slane %v4502, 2
    %v4504 = vadd.f32 %v4502, %v4503
    %v4505 = vrot.slane %v4504, 1
    %v4506 = vadd.f32 %v4504, %v4505
    %v4507 = vadd.f32 %v4373, %v4506
    %4508 = vst [vmem:[%s4] sm:$0x1] %v4507
  $region21: #{conv_down_block_forward.8} parent=0 // pred_fallthru
    _
  // Predicated region
  $region22: #{conv_down_block_forward.8} parent=0 // pred_check
    _
  $region23: #{conv_down_block_forward.8} parent=0 // pred_check_branch
    %4510 = sbr.rel (0) target = $region25
  $region24: #{conv_down_block_forward.8} parent=0 // pred_region
    _
  $region25: #{conv_down_block_forward.8} parent=0 // pred_fallthru
    _
  // Predicated region
  $region26: #{conv_down_block_forward.8} parent=0 // pred_check
    _
  $region27: #{conv_down_block_forward.8} parent=0 // pred_check_branch
    %4512 = sbr.rel (0) target = $region29
  $region28: #{conv_down_block_forward.8} parent=0 // pred_region
    _
  $region29: #{conv_down_block_forward.8} parent=0 // pred_fallthru
    _
  // Predicated region
  $region30: #{conv_down_block_forward.8} parent=0 // pred_check
    _
  $region31: #{conv_down_block_forward.8} parent=0 // pred_check_branch
    %4514 = sbr.rel (0) target = $region33
  $region32: #{conv_down_block_forward.8} parent=0 // pred_region
    _
  $region33: #{conv_down_block_forward.8} parent=0 // pred_fallthru
    _
  // Predicated region
  $region34: #{conv_down_block_forward.8} parent=0 // pred_check
    _
  $region35: #{conv_down_block_forward.8} parent=0 // pred_check_branch
    %4516 = sbr.rel (0) target = $region37
  $region36: #{conv_down_block_forward.8} parent=0 // pred_region
    _
  $region37: #{conv_down_block_forward.8} parent=0 // pred_fallthru
    _
  // Predicated region
  $region38: #{conv_down_block_forward.8} parent=0 // pred_check
    _
  $region39: #{conv_down_block_forward.8} parent=0 // pred_check_branch
    %4518 = sbr.rel (0) target = $region41
  $region40: #{conv_down_block_forward.8} parent=0 // pred_region
    _
  $region41: #{conv_down_block_forward.8} parent=0 // pred_fallthru
    _
  // Predicated region
  $region42: #{conv_down_block_forward.8} parent=0 // pred_check
    _
  $region43: #{conv_down_block_forward.8} parent=0 // pred_check_branch
    %4520 = sbr.rel (0) target = $region45
  $region44: #{conv_down_block_forward.8} parent=0 // pred_region
    _
  $region45: #{conv_down_block_forward.8} parent=0 // pred_fallthru
    _

// kernel: conv_down_block_forward.11
$region0: #{conv_down_block_forward.11}
  #allocation0 [shape = 'u32[]', space=smem, size = 0x4, offset = 0x4, fixed_abs, tag = 'smem constant byte address 0x4 - core index']
  #allocation1 [shape = 'u32[72,128]{1,0:T(1,128)}', space=vmem, size = 0x9000, scoped, tag = 'internal scratch']
  %s0 = inlined_call_operand.vmem [shape: f32[128,128], index: 0, kind: input, shape index: {}]
  %s1 = inlined_call_operand.vmem [shape: f32[1,128], index: 1, kind: input, shape index: {}]
  %s2 = inlined_call_operand.vmem [shape: f32[1,128], index: 2, kind: input, shape index: {}]
  %s3 = inlined_call_operand.vmem [shape: f32[128,128], index: 3, kind: output, shape index: {}]
  %s4 = sld [smem:[#allocation0]]
  $region22: #{conv_down_block_forward.11} parent=0
    _
  %s6 = ssub.s32 1, %s4
  %s7 = scalar_select 0, %s6, %s4
  // Predicated region
  $region2: #{conv_down_block_forward.11} parent=0 // pred_check
    _
  $region3: #{conv_down_block_forward.11} parent=0 // pred_check_branch
    %9 = sbr.rel (0) target = $region5
  $region4: #{conv_down_block_forward.11} parent=0 // pred_region
    _
  $region5: #{conv_down_block_forward.11} parent=0 // pred_fallthru
    _
  // Predicated region
  $region6: #{conv_down_block_forward.11} parent=0 // pred_check
    _
  $region7: #{conv_down_block_forward.11} parent=0 // pred_check_branch
    %11 = sbr.rel (0) target = $region9
  $region8: #{conv_down_block_forward.11} parent=0 // pred_region
    _
  $region9: #{conv_down_block_forward.11} parent=0 // pred_fallthru
    _
  // Predicated region
  $region10: #{conv_down_block_forward.11} parent=0 // pred_check
    _
  $region11: #{conv_down_block_forward.11} parent=0 // pred_check_branch
    %13 = sbr.rel (0) target = $region13
  $region12: #{conv_down_block_forward.11} parent=0 // pred_region
    _
  $region13: #{conv_down_block_forward.11} parent=0 // pred_fallthru
    _
  %v14 = vld [vmem:[%s0] sm:$0xff]
  %v15 = vld [vmem:[%s0 + $0x8] sm:$0xff]
  %v16 = vld [vmem:[%s0 + $0x10] sm:$0xff]
  %v17 = vld [vmem:[%s0 + $0x18] sm:$0xff]
  %v18 = vld [vmem:[%s0 + $0x20] sm:$0xff]
  %v19 = vld [vmem:[%s0 + $0x28] sm:$0xff]
  %v20 = vld [vmem:[%s0 + $0x30] sm:$0xff]
  %v21 = vld [vmem:[%s0 + $0x38] sm:$0xff]
  %v22 = vld [vmem:[%s0 + $0x40] sm:$0xff]
  %v23 = vld [vmem:[%s0 + $0x48] sm:$0xff]
  %v24 = vld [vmem:[%s0 + $0x50] sm:$0xff]
  %v25 = vld [vmem:[%s0 + $0x58] sm:$0xff]
  %v26 = vld [vmem:[%s0 + $0x60] sm:$0xff]
  %v27 = vld [vmem:[%s0 + $0x68] sm:$0xff]
  %v28 = vld [vmem:[%s0 + $0x70] sm:$0xff]
  %v29 = vld [vmem:[%s0 + $0x78] sm:$0xff]
  %v30 = vld [vmem:[%s1] sm:$0x1]
  %v32 = vperm.slane %v30, 0
  %v34 = vmul.f32 %v14, %v32
  %v35 = vmul.f32 %v15, %v32
  %v36 = vmul.f32 %v16, %v32
  %v37 = vmul.f32 %v17, %v32
  %v38 = vmul.f32 %v18, %v32
  %v39 = vmul.f32 %v19, %v32
  %v40 = vmul.f32 %v20, %v32
  %v41 = vmul.f32 %v21, %v32
  %v42 = vmul.f32 %v22, %v32
  %v43 = vmul.f32 %v23, %v32
  %v44 = vmul.f32 %v24, %v32
  %v45 = vmul.f32 %v25, %v32
  %v46 = vmul.f32 %v26, %v32
  %v47 = vmul.f32 %v27, %v32
  %v48 = vmul.f32 %v28, %v32
  %v49 = vmul.f32 %v29, %v32
  %v50 = vld [vmem:[%s2] sm:$0x1]
  %v52 = vperm.slane %v50, 0
  %v54 = vadd.f32 %v34, %v52
  %v55 = vadd.f32 %v35, %v52
  %v56 = vadd.f32 %v36, %v52
  %v57 = vadd.f32 %v37, %v52
  %v58 = vadd.f32 %v38, %v52
  %v59 = vadd.f32 %v39, %v52
  %v60 = vadd.f32 %v40, %v52
  %v61 = vadd.f32 %v41, %v52
  %v62 = vadd.f32 %v42, %v52
  %v63 = vadd.f32 %v43, %v52
  %v64 = vadd.f32 %v44, %v52
  %v65 = vadd.f32 %v45, %v52
  %v66 = vadd.f32 %v46, %v52
  %v67 = vadd.f32 %v47, %v52
  %v68 = vadd.f32 %v48, %v52
  %v69 = vadd.f32 %v49, %v52
  %70 = vst [vmem:[%s3] sm:$0xff] %v54
  %71 = vst [vmem:[%s3 + $0x8] sm:$0xff] %v55
  %72 = vst [vmem:[%s3 + $0x10] sm:$0xff] %v56
  %73 = vst [vmem:[%s3 + $0x18] sm:$0xff] %v57
  %74 = vst [vmem:[%s3 + $0x20] sm:$0xff] %v58
  %75 = vst [vmem:[%s3 + $0x28] sm:$0xff] %v59
  %76 = vst [vmem:[%s3 + $0x30] sm:$0xff] %v60
  %77 = vst [vmem:[%s3 + $0x38] sm:$0xff] %v61
  %78 = vst [vmem:[%s3 + $0x40] sm:$0xff] %v62
  %79 = vst [vmem:[%s3 + $0x48] sm:$0xff] %v63
  %80 = vst [vmem:[%s3 + $0x50] sm:$0xff] %v64
  %81 = vst [vmem:[%s3 + $0x58] sm:$0xff] %v65
  %82 = vst [vmem:[%s3 + $0x60] sm:$0xff] %v66
  %83 = vst [vmem:[%s3 + $0x68] sm:$0xff] %v67
  %84 = vst [vmem:[%s3 + $0x70] sm:$0xff] %v68
  %85 = vst [vmem:[%s3 + $0x78] sm:$0xff] %v69
  // Predicated region
  $region14: #{conv_down_block_forward.11} parent=0 // pred_check
    _
  $region15: #{conv_down_block_forward.11} parent=0 // pred_check_branch
    %87 = sbr.rel (0) target = $region17
  $region16: #{conv_down_block_forward.11} parent=0 // pred_region
    _
  $region17: #{conv_down_block_forward.11} parent=0 // pred_fallthru
    _
  // Predicated region
  $region18: #{conv_down_block_forward.11} parent=0 // pred_check
    _
  $region19: #{conv_down_block_forward.11} parent=0 // pred_check_branch
    %89 = sbr.rel (0) target = $region21
  $region20: #{conv_down_block_forward.11} parent=0 // pred_region
    _
  $region21: #{conv_down_block_forward.11} parent=0 // pred_fallthru
    _

// kernel: conv_down_block_forward.10
$region0: #{conv_down_block_forward.10}
  #allocation0 [shape = 'u32[]', space=smem, size = 0x4, offset = 0x4, fixed_abs, tag = 'smem constant byte address 0x4 - core index']
  #allocation1 [shape = 'u32[72,128]{1,0:T(1,128)}', space=vmem, size = 0x9000, scoped, tag = 'internal scratch']
  #allocation2 [shape = 'f32[128,128]{1,0:T(8,128)}', space=vmem, size = 0x10000, scoped, tag = 'scratch operand']
  %s0 = inlined_call_operand.vmem [shape: bf16[128,2048], index: 0, kind: input, shape index: {}]
  %s1 = inlined_call_operand.vmem [shape: bf16[2048,128], index: 1, kind: input, shape index: {}]
  %s2 = inlined_call_operand.vmem [shape: f32[128,128], index: 2, kind: output, shape index: {0}]
  %s3 = inlined_call_operand.vmem [shape: f32[1,128], index: 3, kind: output, shape index: {1}]
  %s4 = inlined_call_operand.vmem [shape: f32[1,128], index: 4, kind: output, shape index: {2}]
  %5 = xla_tuple %s2, %s3, %s4
  %s6 = sld [smem:[#allocation0]]
  $region46: #{conv_down_block_forward.10} parent=0
    _
  %s8 = ssub.s32 1, %s6
  %s9 = scalar_select 0, %s8, %s6
  // Predicated region
  $region2: #{conv_down_block_forward.10} parent=0 // pred_check
    _
  $region3: #{conv_down_block_forward.10} parent=0 // pred_check_branch
    %11 = sbr.rel (0) target = $region5
  $region4: #{conv_down_block_forward.10} parent=0 // pred_region
    _
  $region5: #{conv_down_block_forward.10} parent=0 // pred_fallthru
    _
  // Predicated region
  $region6: #{conv_down_block_forward.10} parent=0 // pred_check
    _
  $region7: #{conv_down_block_forward.10} parent=0 // pred_check_branch
    %13 = sbr.rel (0) target = $region9
  $region8: #{conv_down_block_forward.10} parent=0 // pred_region
    _
  $region9: #{conv_down_block_forward.10} parent=0 // pred_fallthru
    _
  %p14 = scmp.eq.s32.totalorder 0, 0
  %p15 = scmp.eq.s32.totalorder 0, 0
  %p16 = pnand %p14, %p15
  %p17 = pneg %p16
  // Predicated region
  $region10: #{conv_down_block_forward.10} parent=0 // pred_check
    _
  $region11: #{conv_down_block_forward.10} parent=0 // pred_check_branch
    %19 = sbr.rel (%p16) target = $region13
  $region12: #{conv_down_block_forward.10} parent=0 // pred_region
    %20 = vst [vmem:[%s3] sm:$0x1] 0.0
    %21 = vst [vmem:[%s4] sm:$0x1] 0.0
  $region13: #{conv_down_block_forward.10} parent=0 // pred_fallthru
    _
  // Predicated region
  $region14: #{conv_down_block_forward.10} parent=0 // pred_check
    %p22 = pneg %p15
  $region15: #{conv_down_block_forward.10} parent=0 // pred_check_branch
    %24 = sbr.rel (%p22) target = $region17
  $region16: #{conv_down_block_forward.10} parent=0 // pred_region
    %25 = vst [vmem:[#allocation2] sm:$0xff] 0.0
    %26 = vst [vmem:[#allocation2 + $0x8] sm:$0xff] 0.0
    %27 = vst [vmem:[#allocation2 + $0x10] sm:$0xff] 0.0
    %28 = vst [vmem:[#allocation2 + $0x18] sm:$0xff] 0.0
    %29 = vst [vmem:[#allocation2 + $0x20] sm:$0xff] 0.0
    %30 = vst [vmem:[#allocation2 + $0x28] sm:$0xff] 0.0
    %31 = vst [vmem:[#allocation2 + $0x30] sm:$0xff] 0.0
    %32 = vst [vmem:[#allocation2 + $0x38] sm:$0xff] 0.0
    %33 = vst [vmem:[#allocation2 + $0x40] sm:$0xff] 0.0
    %34 = vst [vmem:[#allocation2 + $0x48] sm:$0xff] 0.0
    %35 = vst [vmem:[#allocation2 + $0x50] sm:$0xff] 0.0
    %36 = vst [vmem:[#allocation2 + $0x58] sm:$0xff] 0.0
    %37 = vst [vmem:[#allocation2 + $0x60] sm:$0xff] 0.0
    %38 = vst [vmem:[#allocation2 + $0x68] sm:$0xff] 0.0
    %39 = vst [vmem:[#allocation2 + $0x70] sm:$0xff] 0.0
    %40 = vst [vmem:[#allocation2 + $0x78] sm:$0xff] 0.0
  $region17: #{conv_down_block_forward.10} parent=0 // pred_fallthru
    _
  %v41 = vld [vmem:[#allocation2] sm:$0xff]
  %v42 = vld [vmem:[#allocation2 + $0x8] sm:$0xff]
  %v43 = vld [vmem:[#allocation2 + $0x10] sm:$0xff]
  %v44 = vld [vmem:[#allocation2 + $0x18] sm:$0xff]
  %v45 = vld [vmem:[#allocation2 + $0x20] sm:$0xff]
  %v46 = vld [vmem:[#allocation2 + $0x28] sm:$0xff]
  %v47 = vld [vmem:[#allocation2 + $0x30] sm:$0xff]
  %v48 = vld [vmem:[#allocation2 + $0x38] sm:$0xff]
  %v49 = vld [vmem:[#allocation2 + $0x40] sm:$0xff]
  %v50 = vld [vmem:[#allocation2 + $0x48] sm:$0xff]
  %v51 = vld [vmem:[#allocation2 + $0x50] sm:$0xff]
  %v52 = vld [vmem:[#allocation2 + $0x58] sm:$0xff]
  %v53 = vld [vmem:[#allocation2 + $0x60] sm:$0xff]
  %v54 = vld [vmem:[#allocation2 + $0x68] sm:$0xff]
  %v55 = vld [vmem:[#allocation2 + $0x70] sm:$0xff]
  %v56 = vld [vmem:[#allocation2 + $0x78] sm:$0xff]
  %v57 = vld [vmem:[%s0] sm:$0xff]
  %v58 = vld [vmem:[%s0 + $0x8] sm:$0xff]
  %v59 = vld [vmem:[%s0 + $0x10] sm:$0xff]
  %v60 = vld [vmem:[%s0 + $0x18] sm:$0xff]
  %v61 = vld [vmem:[%s0 + $0x20] sm:$0xff]
  %v62 = vld [vmem:[%s0 + $0x28] sm:$0xff]
  %v63 = vld [vmem:[%s0 + $0x30] sm:$0xff]
  %v64 = vld [vmem:[%s0 + $0x38] sm:$0xff]
  %v65 = vld [vmem:[%s0 + $0x40] sm:$0xff]
  %v66 = vld [vmem:[%s0 + $0x48] sm:$0xff]
  %v67 = vld [vmem:[%s0 + $0x50] sm:$0xff]
  %v68 = vld [vmem:[%s0 + $0x58] sm:$0xff]
  %v69 = vld [vmem:[%s0 + $0x60] sm:$0xff]
  %v70 = vld [vmem:[%s0 + $0x68] sm:$0xff]
  %v71 = vld [vmem:[%s0 + $0x70] sm:$0xff]
  %v72 = vld [vmem:[%s0 + $0x78] sm:$0xff]
  %v73 = vld [vmem:[%s0 + $0x80] sm:$0xff]
  %v74 = vld [vmem:[%s0 + $0x88] sm:$0xff]
  %v75 = vld [vmem:[%s0 + $0x90] sm:$0xff]
  %v76 = vld [vmem:[%s0 + $0x98] sm:$0xff]
  %v77 = vld [vmem:[%s0 + $0xa0] sm:$0xff]
  %v78 = vld [vmem:[%s0 + $0xa8] sm:$0xff]
  %v79 = vld [vmem:[%s0 + $0xb0] sm:$0xff]
  %v80 = vld [vmem:[%s0 + $0xb8] sm:$0xff]
  %v81 = vld [vmem:[%s0 + $0xc0] sm:$0xff]
  %v82 = vld [vmem:[%s0 + $0xc8] sm:$0xff]
  %v83 = vld [vmem:[%s0 + $0xd0] sm:$0xff]
  %v84 = vld [vmem:[%s0 + $0xd8] sm:$0xff]
  %v85 = vld [vmem:[%s0 + $0xe0] sm:$0xff]
  %v86 = vld [vmem:[%s0 + $0xe8] sm:$0xff]
  %v87 = vld [vmem:[%s0 + $0xf0] sm:$0xff]
  %v88 = vld [vmem:[%s0 + $0xf8] sm:$0xff]
  %v89 = vld [vmem:[%s0 + $0x100] sm:$0xff]
  %v90 = vld [vmem:[%s0 + $0x108] sm:$0xff]
  %v91 = vld [vmem:[%s0 + $0x110] sm:$0xff]
  %v92 = vld [vmem:[%s0 + $0x118] sm:$0xff]
  %v93 = vld [vmem:[%s0 + $0x120] sm:$0xff]
  %v94 = vld [vmem:[%s0 + $0x128] sm:$0xff]
  %v95 = vld [vmem:[%s0 + $0x130] sm:$0xff]
  %v96 = vld [vmem:[%s0 + $0x138] sm:$0xff]
  %v97 = vld [vmem:[%s0 + $0x140] sm:$0xff]
  %v98 = vld [vmem:[%s0 + $0x148] sm:$0xff]
  %v99 = vld [vmem:[%s0 + $0x150] sm:$0xff]
  %v100 = vld [vmem:[%s0 + $0x158] sm:$0xff]
  %v101 = vld [vmem:[%s0 + $0x160] sm:$0xff]
  %v102 = vld [vmem:[%s0 + $0x168] sm:$0xff]
  %v103 = vld [vmem:[%s0 + $0x170] sm:$0xff]
  %v104 = vld [vmem:[%s0 + $0x178] sm:$0xff]
  %v105 = vld [vmem:[%s0 + $0x180] sm:$0xff]
  %v106 = vld [vmem:[%s0 + $0x188] sm:$0xff]
  %v107 = vld [vmem:[%s0 + $0x190] sm:$0xff]
  %v108 = vld [vmem:[%s0 + $0x198] sm:$0xff]
  %v109 = vld [vmem:[%s0 + $0x1a0] sm:$0xff]
  %v110 = vld [vmem:[%s0 + $0x1a8] sm:$0xff]
  %v111 = vld [vmem:[%s0 + $0x1b0] sm:$0xff]
  %v112 = vld [vmem:[%s0 + $0x1b8] sm:$0xff]
  %v113 = vld [vmem:[%s0 + $0x1c0] sm:$0xff]
  %v114 = vld [vmem:[%s0 + $0x1c8] sm:$0xff]
  %v115 = vld [vmem:[%s0 + $0x1d0] sm:$0xff]
  %v116 = vld [vmem:[%s0 + $0x1d8] sm:$0xff]
  %v117 = vld [vmem:[%s0 + $0x1e0] sm:$0xff]
  %v118 = vld [vmem:[%s0 + $0x1e8] sm:$0xff]
  %v119 = vld [vmem:[%s0 + $0x1f0] sm:$0xff]
  %v120 = vld [vmem:[%s0 + $0x1f8] sm:$0xff]
  %v121 = vld [vmem:[%s0 + $0x200] sm:$0xff]
  %v122 = vld [vmem:[%s0 + $0x208] sm:$0xff]
  %v123 = vld [vmem:[%s0 + $0x210] sm:$0xff]
  %v124 = vld [vmem:[%s0 + $0x218] sm:$0xff]
  %v125 = vld [vmem:[%s0 + $0x220] sm:$0xff]
  %v126 = vld [vmem:[%s0 + $0x228] sm:$0xff]
  %v127 = vld [vmem:[%s0 + $0x230] sm:$0xff]
  %v128 = vld [vmem:[%s0 + $0x238] sm:$0xff]
  %v129 = vld [vmem:[%s0 + $0x240] sm:$0xff]
  %v130 = vld [vmem:[%s0 + $0x248] sm:$0xff]
  %v131 = vld [vmem:[%s0 + $0x250] sm:$0xff]
  %v132 = vld [vmem:[%s0 + $0x258] sm:$0xff]
  %v133 = vld [vmem:[%s0 + $0x260] sm:$0xff]
  %v134 = vld [vmem:[%s0 + $0x268] sm:$0xff]
  %v135 = vld [vmem:[%s0 + $0x270] sm:$0xff]
  %v136 = vld [vmem:[%s0 + $0x278] sm:$0xff]
  %v137 = vld [vmem:[%s0 + $0x280] sm:$0xff]
  %v138 = vld [vmem:[%s0 + $0x288] sm:$0xff]
  %v139 = vld [vmem:[%s0 + $0x290] sm:$0xff]
  %v140 = vld [vmem:[%s0 + $0x298] sm:$0xff]
  %v141 = vld [vmem:[%s0 + $0x2a0] sm:$0xff]
  %v142 = vld [vmem:[%s0 + $0x2a8] sm:$0xff]
  %v143 = vld [vmem:[%s0 + $0x2b0] sm:$0xff]
  %v144 = vld [vmem:[%s0 + $0x2b8] sm:$0xff]
  %v145 = vld [vmem:[%s0 + $0x2c0] sm:$0xff]
  %v146 = vld [vmem:[%s0 + $0x2c8] sm:$0xff]
  %v147 = vld [vmem:[%s0 + $0x2d0] sm:$0xff]
  %v148 = vld [vmem:[%s0 + $0x2d8] sm:$0xff]
  %v149 = vld [vmem:[%s0 + $0x2e0] sm:$0xff]
  %v150 = vld [vmem:[%s0 + $0x2e8] sm:$0xff]
  %v151 = vld [vmem:[%s0 + $0x2f0] sm:$0xff]
  %v152 = vld [vmem:[%s0 + $0x2f8] sm:$0xff]
  %v153 = vld [vmem:[%s0 + $0x300] sm:$0xff]
  %v154 = vld [vmem:[%s0 + $0x308] sm:$0xff]
  %v155 = vld [vmem:[%s0 + $0x310] sm:$0xff]
  %v156 = vld [vmem:[%s0 + $0x318] sm:$0xff]
  %v157 = vld [vmem:[%s0 + $0x320] sm:$0xff]
  %v158 = vld [vmem:[%s0 + $0x328] sm:$0xff]
  %v159 = vld [vmem:[%s0 + $0x330] sm:$0xff]
  %v160 = vld [vmem:[%s0 + $0x338] sm:$0xff]
  %v161 = vld [vmem:[%s0 + $0x340] sm:$0xff]
  %v162 = vld [vmem:[%s0 + $0x348] sm:$0xff]
  %v163 = vld [vmem:[%s0 + $0x350] sm:$0xff]
  %v164 = vld [vmem:[%s0 + $0x358] sm:$0xff]
  %v165 = vld [vmem:[%s0 + $0x360] sm:$0xff]
  %v166 = vld [vmem:[%s0 + $0x368] sm:$0xff]
  %v167 = vld [vmem:[%s0 + $0x370] sm:$0xff]
  %v168 = vld [vmem:[%s0 + $0x378] sm:$0xff]
  %v169 = vld [vmem:[%s0 + $0x380] sm:$0xff]
  %v170 = vld [vmem:[%s0 + $0x388] sm:$0xff]
  %v171 = vld [vmem:[%s0 + $0x390] sm:$0xff]
  %v172 = vld [vmem:[%s0 + $0x398] sm:$0xff]
  %v173 = vld [vmem:[%s0 + $0x3a0] sm:$0xff]
  %v174 = vld [vmem:[%s0 + $0x3a8] sm:$0xff]
  %v175 = vld [vmem:[%s0 + $0x3b0] sm:$0xff]
  %v176 = vld [vmem:[%s0 + $0x3b8] sm:$0xff]
  %v177 = vld [vmem:[%s0 + $0x3c0] sm:$0xff]
  %v178 = vld [vmem:[%s0 + $0x3c8] sm:$0xff]
  %v179 = vld [vmem:[%s0 + $0x3d0] sm:$0xff]
  %v180 = vld [vmem:[%s0 + $0x3d8] sm:$0xff]
  %v181 = vld [vmem:[%s0 + $0x3e0] sm:$0xff]
  %v182 = vld [vmem:[%s0 + $0x3e8] sm:$0xff]
  %v183 = vld [vmem:[%s0 + $0x3f0] sm:$0xff]
  %v184 = vld [vmem:[%s0 + $0x3f8] sm:$0xff]
  %v185 = vld [vmem:[%s1] sm:$0xf]
  %v186 = vld [vmem:[%s1 + $0x4] sm:$0xf]
  %v187 = vld [vmem:[%s1 + $0x8] sm:$0xf]
  %v188 = vld [vmem:[%s1 + $0xc] sm:$0xf]
  %v189 = vld [vmem:[%s1 + $0x10] sm:$0xf]
  %v190 = vld [vmem:[%s1 + $0x14] sm:$0xf]
  %v191 = vld [vmem:[%s1 + $0x18] sm:$0xf]
  %v192 = vld [vmem:[%s1 + $0x1c] sm:$0xf]
  %v193 = vld [vmem:[%s1 + $0x20] sm:$0xf]
  %v194 = vld [vmem:[%s1 + $0x24] sm:$0xf]
  %v195 = vld [vmem:[%s1 + $0x28] sm:$0xf]
  %v196 = vld [vmem:[%s1 + $0x2c] sm:$0xf]
  %v197 = vld [vmem:[%s1 + $0x30] sm:$0xf]
  %v198 = vld [vmem:[%s1 + $0x34] sm:$0xf]
  %v199 = vld [vmem:[%s1 + $0x38] sm:$0xf]
  %v200 = vld [vmem:[%s1 + $0x3c] sm:$0xf]
  %v201 = vld [vmem:[%s1 + $0x40] sm:$0xf]
  %v202 = vld [vmem:[%s1 + $0x44] sm:$0xf]
  %v203 = vld [vmem:[%s1 + $0x48] sm:$0xf]
  %v204 = vld [vmem:[%s1 + $0x4c] sm:$0xf]
  %v205 = vld [vmem:[%s1 + $0x50] sm:$0xf]
  %v206 = vld [vmem:[%s1 + $0x54] sm:$0xf]
  %v207 = vld [vmem:[%s1 + $0x58] sm:$0xf]
  %v208 = vld [vmem:[%s1 + $0x5c] sm:$0xf]
  %v209 = vld [vmem:[%s1 + $0x60] sm:$0xf]
  %v210 = vld [vmem:[%s1 + $0x64] sm:$0xf]
  %v211 = vld [vmem:[%s1 + $0x68] sm:$0xf]
  %v212 = vld [vmem:[%s1 + $0x6c] sm:$0xf]
  %v213 = vld [vmem:[%s1 + $0x70] sm:$0xf]
  %v214 = vld [vmem:[%s1 + $0x74] sm:$0xf]
  %v215 = vld [vmem:[%s1 + $0x78] sm:$0xf]
  %v216 = vld [vmem:[%s1 + $0x7c] sm:$0xf]
  %v217 = vld [vmem:[%s1 + $0x80] sm:$0xf]
  %v218 = vld [vmem:[%s1 + $0x84] sm:$0xf]
  %v219 = vld [vmem:[%s1 + $0x88] sm:$0xf]
  %v220 = vld [vmem:[%s1 + $0x8c] sm:$0xf]
  %v221 = vld [vmem:[%s1 + $0x90] sm:$0xf]
  %v222 = vld [vmem:[%s1 + $0x94] sm:$0xf]
  %v223 = vld [vmem:[%s1 + $0x98] sm:$0xf]
  %v224 = vld [vmem:[%s1 + $0x9c] sm:$0xf]
  %v225 = vld [vmem:[%s1 + $0xa0] sm:$0xf]
  %v226 = vld [vmem:[%s1 + $0xa4] sm:$0xf]
  %v227 = vld [vmem:[%s1 + $0xa8] sm:$0xf]
  %v228 = vld [vmem:[%s1 + $0xac] sm:$0xf]
  %v229 = vld [vmem:[%s1 + $0xb0] sm:$0xf]
  %v230 = vld [vmem:[%s1 + $0xb4] sm:$0xf]
  %v231 = vld [vmem:[%s1 + $0xb8] sm:$0xf]
  %v232 = vld [vmem:[%s1 + $0xbc] sm:$0xf]
  %v233 = vld [vmem:[%s1 + $0xc0] sm:$0xf]
  %v234 = vld [vmem:[%s1 + $0xc4] sm:$0xf]
  %v235 = vld [vmem:[%s1 + $0xc8] sm:$0xf]
  %v236 = vld [vmem:[%s1 + $0xcc] sm:$0xf]
  %v237 = vld [vmem:[%s1 + $0xd0] sm:$0xf]
  %v238 = vld [vmem:[%s1 + $0xd4] sm:$0xf]
  %v239 = vld [vmem:[%s1 + $0xd8] sm:$0xf]
  %v240 = vld [vmem:[%s1 + $0xdc] sm:$0xf]
  %v241 = vld [vmem:[%s1 + $0xe0] sm:$0xf]
  %v242 = vld [vmem:[%s1 + $0xe4] sm:$0xf]
  %v243 = vld [vmem:[%s1 + $0xe8] sm:$0xf]
  %v244 = vld [vmem:[%s1 + $0xec] sm:$0xf]
  %v245 = vld [vmem:[%s1 + $0xf0] sm:$0xf]
  %v246 = vld [vmem:[%s1 + $0xf4] sm:$0xf]
  %v247 = vld [vmem:[%s1 + $0xf8] sm:$0xf]
  %v248 = vld [vmem:[%s1 + $0xfc] sm:$0xf]
  %v249 = vld [vmem:[%s1 + $0x100] sm:$0xf]
  %v250 = vld [vmem:[%s1 + $0x104] sm:$0xf]
  %v251 = vld [vmem:[%s1 + $0x108] sm:$0xf]
  %v252 = vld [vmem:[%s1 + $0x10c] sm:$0xf]
  %v253 = vld [vmem:[%s1 + $0x110] sm:$0xf]
  %v254 = vld [vmem:[%s1 + $0x114] sm:$0xf]
  %v255 = vld [vmem:[%s1 + $0x118] sm:$0xf]
  %v256 = vld [vmem:[%s1 + $0x11c] sm:$0xf]
  %v257 = vld [vmem:[%s1 + $0x120] sm:$0xf]
  %v258 = vld [vmem:[%s1 + $0x124] sm:$0xf]
  %v259 = vld [vmem:[%s1 + $0x128] sm:$0xf]
  %v260 = vld [vmem:[%s1 + $0x12c] sm:$0xf]
  %v261 = vld [vmem:[%s1 + $0x130] sm:$0xf]
  %v262 = vld [vmem:[%s1 + $0x134] sm:$0xf]
  %v263 = vld [vmem:[%s1 + $0x138] sm:$0xf]
  %v264 = vld [vmem:[%s1 + $0x13c] sm:$0xf]
  %v265 = vld [vmem:[%s1 + $0x140] sm:$0xf]
  %v266 = vld [vmem:[%s1 + $0x144] sm:$0xf]
  %v267 = vld [vmem:[%s1 + $0x148] sm:$0xf]
  %v268 = vld [vmem:[%s1 + $0x14c] sm:$0xf]
  %v269 = vld [vmem:[%s1 + $0x150] sm:$0xf]
  %v270 = vld [vmem:[%s1 + $0x154] sm:$0xf]
  %v271 = vld [vmem:[%s1 + $0x158] sm:$0xf]
  %v272 = vld [vmem:[%s1 + $0x15c] sm:$0xf]
  %v273 = vld [vmem:[%s1 + $0x160] sm:$0xf]
  %v274 = vld [vmem:[%s1 + $0x164] sm:$0xf]
  %v275 = vld [vmem:[%s1 + $0x168] sm:$0xf]
  %v276 = vld [vmem:[%s1 + $0x16c] sm:$0xf]
  %v277 = vld [vmem:[%s1 + $0x170] sm:$0xf]
  %v278 = vld [vmem:[%s1 + $0x174] sm:$0xf]
  %v279 = vld [vmem:[%s1 + $0x178] sm:$0xf]
  %v280 = vld [vmem:[%s1 + $0x17c] sm:$0xf]
  %v281 = vld [vmem:[%s1 + $0x180] sm:$0xf]
  %v282 = vld [vmem:[%s1 + $0x184] sm:$0xf]
  %v283 = vld [vmem:[%s1 + $0x188] sm:$0xf]
  %v284 = vld [vmem:[%s1 + $0x18c] sm:$0xf]
  %v285 = vld [vmem:[%s1 + $0x190] sm:$0xf]
  %v286 = vld [vmem:[%s1 + $0x194] sm:$0xf]
  %v287 = vld [vmem:[%s1 + $0x198] sm:$0xf]
  %v288 = vld [vmem:[%s1 + $0x19c] sm:$0xf]
  %v289 = vld [vmem:[%s1 + $0x1a0] sm:$0xf]
  %v290 = vld [vmem:[%s1 + $0x1a4] sm:$0xf]
  %v291 = vld [vmem:[%s1 + $0x1a8] sm:$0xf]
  %v292 = vld [vmem:[%s1 + $0x1ac] sm:$0xf]
  %v293 = vld [vmem:[%s1 + $0x1b0] sm:$0xf]
  %v294 = vld [vmem:[%s1 + $0x1b4] sm:$0xf]
  %v295 = vld [vmem:[%s1 + $0x1b8] sm:$0xf]
  %v296 = vld [vmem:[%s1 + $0x1bc] sm:$0xf]
  %v297 = vld [vmem:[%s1 + $0x1c0] sm:$0xf]
  %v298 = vld [vmem:[%s1 + $0x1c4] sm:$0xf]
  %v299 = vld [vmem:[%s1 + $0x1c8] sm:$0xf]
  %v300 = vld [vmem:[%s1 + $0x1cc] sm:$0xf]
  %v301 = vld [vmem:[%s1 + $0x1d0] sm:$0xf]
  %v302 = vld [vmem:[%s1 + $0x1d4] sm:$0xf]
  %v303 = vld [vmem:[%s1 + $0x1d8] sm:$0xf]
  %v304 = vld [vmem:[%s1 + $0x1dc] sm:$0xf]
  %v305 = vld [vmem:[%s1 + $0x1e0] sm:$0xf]
  %v306 = vld [vmem:[%s1 + $0x1e4] sm:$0xf]
  %v307 = vld [vmem:[%s1 + $0x1e8] sm:$0xf]
  %v308 = vld [vmem:[%s1 + $0x1ec] sm:$0xf]
  %v309 = vld [vmem:[%s1 + $0x1f0] sm:$0xf]
  %v310 = vld [vmem:[%s1 + $0x1f4] sm:$0xf]
  %v311 = vld [vmem:[%s1 + $0x1f8] sm:$0xf]
  %v312 = vld [vmem:[%s1 + $0x1fc] sm:$0xf]
  %v313 = vld [vmem:[%s1 + $0x200] sm:$0xf]
  %v314 = vld [vmem:[%s1 + $0x204] sm:$0xf]
  %v315 = vld [vmem:[%s1 + $0x208] sm:$0xf]
  %v316 = vld [vmem:[%s1 + $0x20c] sm:$0xf]
  %v317 = vld [vmem:[%s1 + $0x210] sm:$0xf]
  %v318 = vld [vmem:[%s1 + $0x214] sm:$0xf]
  %v319 = vld [vmem:[%s1 + $0x218] sm:$0xf]
  %v320 = vld [vmem:[%s1 + $0x21c] sm:$0xf]
  %v321 = vld [vmem:[%s1 + $0x220] sm:$0xf]
  %v322 = vld [vmem:[%s1 + $0x224] sm:$0xf]
  %v323 = vld [vmem:[%s1 + $0x228] sm:$0xf]
  %v324 = vld [vmem:[%s1 + $0x22c] sm:$0xf]
  %v325 = vld [vmem:[%s1 + $0x230] sm:$0xf]
  %v326 = vld [vmem:[%s1 + $0x234] sm:$0xf]
  %v327 = vld [vmem:[%s1 + $0x238] sm:$0xf]
  %v328 = vld [vmem:[%s1 + $0x23c] sm:$0xf]
  %v329 = vld [vmem:[%s1 + $0x240] sm:$0xf]
  %v330 = vld [vmem:[%s1 + $0x244] sm:$0xf]
  %v331 = vld [vmem:[%s1 + $0x248] sm:$0xf]
  %v332 = vld [vmem:[%s1 + $0x24c] sm:$0xf]
  %v333 = vld [vmem:[%s1 + $0x250] sm:$0xf]
  %v334 = vld [vmem:[%s1 + $0x254] sm:$0xf]
  %v335 = vld [vmem:[%s1 + $0x258] sm:$0xf]
  %v336 = vld [vmem:[%s1 + $0x25c] sm:$0xf]
  %v337 = vld [vmem:[%s1 + $0x260] sm:$0xf]
  %v338 = vld [vmem:[%s1 + $0x264] sm:$0xf]
  %v339 = vld [vmem:[%s1 + $0x268] sm:$0xf]
  %v340 = vld [vmem:[%s1 + $0x26c] sm:$0xf]
  %v341 = vld [vmem:[%s1 + $0x270] sm:$0xf]
  %v342 = vld [vmem:[%s1 + $0x274] sm:$0xf]
  %v343 = vld [vmem:[%s1 + $0x278] sm:$0xf]
  %v344 = vld [vmem:[%s1 + $0x27c] sm:$0xf]
  %v345 = vld [vmem:[%s1 + $0x280] sm:$0xf]
  %v346 = vld [vmem:[%s1 + $0x284] sm:$0xf]
  %v347 = vld [vmem:[%s1 + $0x288] sm:$0xf]
  %v348 = vld [vmem:[%s1 + $0x28c] sm:$0xf]
  %v349 = vld [vmem:[%s1 + $0x290] sm:$0xf]
  %v350 = vld [vmem:[%s1 + $0x294] sm:$0xf]
  %v351 = vld [vmem:[%s1 + $0x298] sm:$0xf]
  %v352 = vld [vmem:[%s1 + $0x29c] sm:$0xf]
  %v353 = vld [vmem:[%s1 + $0x2a0] sm:$0xf]
  %v354 = vld [vmem:[%s1 + $0x2a4] sm:$0xf]
  %v355 = vld [vmem:[%s1 + $0x2a8] sm:$0xf]
  %v356 = vld [vmem:[%s1 + $0x2ac] sm:$0xf]
  %v357 = vld [vmem:[%s1 + $0x2b0] sm:$0xf]
  %v358 = vld [vmem:[%s1 + $0x2b4] sm:$0xf]
  %v359 = vld [vmem:[%s1 + $0x2b8] sm:$0xf]
  %v360 = vld [vmem:[%s1 + $0x2bc] sm:$0xf]
  %v361 = vld [vmem:[%s1 + $0x2c0] sm:$0xf]
  %v362 = vld [vmem:[%s1 + $0x2c4] sm:$0xf]
  %v363 = vld [vmem:[%s1 + $0x2c8] sm:$0xf]
  %v364 = vld [vmem:[%s1 + $0x2cc] sm:$0xf]
  %v365 = vld [vmem:[%s1 + $0x2d0] sm:$0xf]
  %v366 = vld [vmem:[%s1 + $0x2d4] sm:$0xf]
  %v367 = vld [vmem:[%s1 + $0x2d8] sm:$0xf]
  %v368 = vld [vmem:[%s1 + $0x2dc] sm:$0xf]
  %v369 = vld [vmem:[%s1 + $0x2e0] sm:$0xf]
  %v370 = vld [vmem:[%s1 + $0x2e4] sm:$0xf]
  %v371 = vld [vmem:[%s1 + $0x2e8] sm:$0xf]
  %v372 = vld [vmem:[%s1 + $0x2ec] sm:$0xf]
  %v373 = vld [vmem:[%s1 + $0x2f0] sm:$0xf]
  %v374 = vld [vmem:[%s1 + $0x2f4] sm:$0xf]
  %v375 = vld [vmem:[%s1 + $0x2f8] sm:$0xf]
  %v376 = vld [vmem:[%s1 + $0x2fc] sm:$0xf]
  %v377 = vld [vmem:[%s1 + $0x300] sm:$0xf]
  %v378 = vld [vmem:[%s1 + $0x304] sm:$0xf]
  %v379 = vld [vmem:[%s1 + $0x308] sm:$0xf]
  %v380 = vld [vmem:[%s1 + $0x30c] sm:$0xf]
  %v381 = vld [vmem:[%s1 + $0x310] sm:$0xf]
  %v382 = vld [vmem:[%s1 + $0x314] sm:$0xf]
  %v383 = vld [vmem:[%s1 + $0x318] sm:$0xf]
  %v384 = vld [vmem:[%s1 + $0x31c] sm:$0xf]
  %v385 = vld [vmem:[%s1 + $0x320] sm:$0xf]
  %v386 = vld [vmem:[%s1 + $0x324] sm:$0xf]
  %v387 = vld [vmem:[%s1 + $0x328] sm:$0xf]
  %v388 = vld [vmem:[%s1 + $0x32c] sm:$0xf]
  %v389 = vld [vmem:[%s1 + $0x330] sm:$0xf]
  %v390 = vld [vmem:[%s1 + $0x334] sm:$0xf]
  %v391 = vld [vmem:[%s1 + $0x338] sm:$0xf]
  %v392 = vld [vmem:[%s1 + $0x33c] sm:$0xf]
  %v393 = vld [vmem:[%s1 + $0x340] sm:$0xf]
  %v394 = vld [vmem:[%s1 + $0x344] sm:$0xf]
  %v395 = vld [vmem:[%s1 + $0x348] sm:$0xf]
  %v396 = vld [vmem:[%s1 + $0x34c] sm:$0xf]
  %v397 = vld [vmem:[%s1 + $0x350] sm:$0xf]
  %v398 = vld [vmem:[%s1 + $0x354] sm:$0xf]
  %v399 = vld [vmem:[%s1 + $0x358] sm:$0xf]
  %v400 = vld [vmem:[%s1 + $0x35c] sm:$0xf]
  %v401 = vld [vmem:[%s1 + $0x360] sm:$0xf]
  %v402 = vld [vmem:[%s1 + $0x364] sm:$0xf]
  %v403 = vld [vmem:[%s1 + $0x368] sm:$0xf]
  %v404 = vld [vmem:[%s1 + $0x36c] sm:$0xf]
  %v405 = vld [vmem:[%s1 + $0x370] sm:$0xf]
  %v406 = vld [vmem:[%s1 + $0x374] sm:$0xf]
  %v407 = vld [vmem:[%s1 + $0x378] sm:$0xf]
  %v408 = vld [vmem:[%s1 + $0x37c] sm:$0xf]
  %v409 = vld [vmem:[%s1 + $0x380] sm:$0xf]
  %v410 = vld [vmem:[%s1 + $0x384] sm:$0xf]
  %v411 = vld [vmem:[%s1 + $0x388] sm:$0xf]
  %v412 = vld [vmem:[%s1 + $0x38c] sm:$0xf]
  %v413 = vld [vmem:[%s1 + $0x390] sm:$0xf]
  %v414 = vld [vmem:[%s1 + $0x394] sm:$0xf]
  %v415 = vld [vmem:[%s1 + $0x398] sm:$0xf]
  %v416 = vld [vmem:[%s1 + $0x39c] sm:$0xf]
  %v417 = vld [vmem:[%s1 + $0x3a0] sm:$0xf]
  %v418 = vld [vmem:[%s1 + $0x3a4] sm:$0xf]
  %v419 = vld [vmem:[%s1 + $0x3a8] sm:$0xf]
  %v420 = vld [vmem:[%s1 + $0x3ac] sm:$0xf]
  %v421 = vld [vmem:[%s1 + $0x3b0] sm:$0xf]
  %v422 = vld [vmem:[%s1 + $0x3b4] sm:$0xf]
  %v423 = vld [vmem:[%s1 + $0x3b8] sm:$0xf]
  %v424 = vld [vmem:[%s1 + $0x3bc] sm:$0xf]
  %v425 = vld [vmem:[%s1 + $0x3c0] sm:$0xf]
  %v426 = vld [vmem:[%s1 + $0x3c4] sm:$0xf]
  %v427 = vld [vmem:[%s1 + $0x3c8] sm:$0xf]
  %v428 = vld [vmem:[%s1 + $0x3cc] sm:$0xf]
  %v429 = vld [vmem:[%s1 + $0x3d0] sm:$0xf]
  %v430 = vld [vmem:[%s1 + $0x3d4] sm:$0xf]
  %v431 = vld [vmem:[%s1 + $0x3d8] sm:$0xf]
  %v432 = vld [vmem:[%s1 + $0x3dc] sm:$0xf]
  %v433 = vld [vmem:[%s1 + $0x3e0] sm:$0xf]
  %v434 = vld [vmem:[%s1 + $0x3e4] sm:$0xf]
  %v435 = vld [vmem:[%s1 + $0x3e8] sm:$0xf]
  %v436 = vld [vmem:[%s1 + $0x3ec] sm:$0xf]
  %v437 = vld [vmem:[%s1 + $0x3f0] sm:$0xf]
  %v438 = vld [vmem:[%s1 + $0x3f4] sm:$0xf]
  %v439 = vld [vmem:[%s1 + $0x3f8] sm:$0xf]
  %v440 = vld [vmem:[%s1 + $0x3fc] sm:$0xf]
  %v569 = vunpack.c.l.b16 %v57
  %v570 = vunpack.c.h.b16 %v57
  %v571 = vunpack.c.l.b16 %v58
  %v572 = vunpack.c.h.b16 %v58
  %v573 = vunpack.c.l.b16 %v59
  %v574 = vunpack.c.h.b16 %v59
  %v575 = vunpack.c.l.b16 %v60
  %v576 = vunpack.c.h.b16 %v60
  %v577 = vunpack.c.l.b16 %v61
  %v578 = vunpack.c.h.b16 %v61
  %v579 = vunpack.c.l.b16 %v62
  %v580 = vunpack.c.h.b16 %v62
  %v581 = vunpack.c.l.b16 %v63
  %v582 = vunpack.c.h.b16 %v63
  %v583 = vunpack.c.l.b16 %v64
  %v584 = vunpack.c.h.b16 %v64
  %v585 = vunpack.c.l.b16 %v65
  %v586 = vunpack.c.h.b16 %v65
  %v587 = vunpack.c.l.b16 %v66
  %v588 = vunpack.c.h.b16 %v66
  %v589 = vunpack.c.l.b16 %v67
  %v590 = vunpack.c.h.b16 %v67
  %v591 = vunpack.c.l.b16 %v68
  %v592 = vunpack.c.h.b16 %v68
  %v593 = vunpack.c.l.b16 %v69
  %v594 = vunpack.c.h.b16 %v69
  %v595 = vunpack.c.l.b16 %v70
  %v596 = vunpack.c.h.b16 %v70
  %v597 = vunpack.c.l.b16 %v71
  %v598 = vunpack.c.h.b16 %v71
  %v599 = vunpack.c.l.b16 %v72
  %v600 = vunpack.c.h.b16 %v72
  %v601 = vunpack.c.l.b16 %v73
  %v602 = vunpack.c.h.b16 %v73
  %v603 = vunpack.c.l.b16 %v74
  %v604 = vunpack.c.h.b16 %v74
  %v605 = vunpack.c.l.b16 %v75
  %v606 = vunpack.c.h.b16 %v75
  %v607 = vunpack.c.l.b16 %v76
  %v608 = vunpack.c.h.b16 %v76
  %v609 = vunpack.c.l.b16 %v77
  %v610 = vunpack.c.h.b16 %v77
  %v611 = vunpack.c.l.b16 %v78
  %v612 = vunpack.c.h.b16 %v78
  %v613 = vunpack.c.l.b16 %v79
  %v614 = vunpack.c.h.b16 %v79
  %v615 = vunpack.c.l.b16 %v80
  %v616 = vunpack.c.h.b16 %v80
  %v617 = vunpack.c.l.b16 %v81
  %v618 = vunpack.c.h.b16 %v81
  %v619 = vunpack.c.l.b16 %v82
  %v620 = vunpack.c.h.b16 %v82
  %v621 = vunpack.c.l.b16 %v83
  %v622 = vunpack.c.h.b16 %v83
  %v623 = vunpack.c.l.b16 %v84
  %v624 = vunpack.c.h.b16 %v84
  %v625 = vunpack.c.l.b16 %v85
  %v626 = vunpack.c.h.b16 %v85
  %v627 = vunpack.c.l.b16 %v86
  %v628 = vunpack.c.h.b16 %v86
  %v629 = vunpack.c.l.b16 %v87
  %v630 = vunpack.c.h.b16 %v87
  %v631 = vunpack.c.l.b16 %v88
  %v632 = vunpack.c.h.b16 %v88
  %v633 = vunpack.c.l.b16 %v89
  %v634 = vunpack.c.h.b16 %v89
  %v635 = vunpack.c.l.b16 %v90
  %v636 = vunpack.c.h.b16 %v90
  %v637 = vunpack.c.l.b16 %v91
  %v638 = vunpack.c.h.b16 %v91
  %v639 = vunpack.c.l.b16 %v92
  %v640 = vunpack.c.h.b16 %v92
  %v641 = vunpack.c.l.b16 %v93
  %v642 = vunpack.c.h.b16 %v93
  %v643 = vunpack.c.l.b16 %v94
  %v644 = vunpack.c.h.b16 %v94
  %v645 = vunpack.c.l.b16 %v95
  %v646 = vunpack.c.h.b16 %v95
  %v647 = vunpack.c.l.b16 %v96
  %v648 = vunpack.c.h.b16 %v96
  %v649 = vunpack.c.l.b16 %v97
  %v650 = vunpack.c.h.b16 %v97
  %v651 = vunpack.c.l.b16 %v98
  %v652 = vunpack.c.h.b16 %v98
  %v653 = vunpack.c.l.b16 %v99
  %v654 = vunpack.c.h.b16 %v99
  %v655 = vunpack.c.l.b16 %v100
  %v656 = vunpack.c.h.b16 %v100
  %v657 = vunpack.c.l.b16 %v101
  %v658 = vunpack.c.h.b16 %v101
  %v659 = vunpack.c.l.b16 %v102
  %v660 = vunpack.c.h.b16 %v102
  %v661 = vunpack.c.l.b16 %v103
  %v662 = vunpack.c.h.b16 %v103
  %v663 = vunpack.c.l.b16 %v104
  %v664 = vunpack.c.h.b16 %v104
  %v665 = vunpack.c.l.b16 %v105
  %v666 = vunpack.c.h.b16 %v105
  %v667 = vunpack.c.l.b16 %v106
  %v668 = vunpack.c.h.b16 %v106
  %v669 = vunpack.c.l.b16 %v107
  %v670 = vunpack.c.h.b16 %v107
  %v671 = vunpack.c.l.b16 %v108
  %v672 = vunpack.c.h.b16 %v108
  %v673 = vunpack.c.l.b16 %v109
  %v674 = vunpack.c.h.b16 %v109
  %v675 = vunpack.c.l.b16 %v110
  %v676 = vunpack.c.h.b16 %v110
  %v677 = vunpack.c.l.b16 %v111
  %v678 = vunpack.c.h.b16 %v111
  %v679 = vunpack.c.l.b16 %v112
  %v680 = vunpack.c.h.b16 %v112
  %v681 = vunpack.c.l.b16 %v113
  %v682 = vunpack.c.h.b16 %v113
  %v683 = vunpack.c.l.b16 %v114
  %v684 = vunpack.c.h.b16 %v114
  %v685 = vunpack.c.l.b16 %v115
  %v686 = vunpack.c.h.b16 %v115
  %v687 = vunpack.c.l.b16 %v116
  %v688 = vunpack.c.h.b16 %v116
  %v689 = vunpack.c.l.b16 %v117
  %v690 = vunpack.c.h.b16 %v117
  %v691 = vunpack.c.l.b16 %v118
  %v692 = vunpack.c.h.b16 %v118
  %v693 = vunpack.c.l.b16 %v119
  %v694 = vunpack.c.h.b16 %v119
  %v695 = vunpack.c.l.b16 %v120
  %v696 = vunpack.c.h.b16 %v120
  %v697 = vunpack.c.l.b16 %v121
  %v698 = vunpack.c.h.b16 %v121
  %v699 = vunpack.c.l.b16 %v122
  %v700 = vunpack.c.h.b16 %v122
  %v701 = vunpack.c.l.b16 %v123
  %v702 = vunpack.c.h.b16 %v123
  %v703 = vunpack.c.l.b16 %v124
  %v704 = vunpack.c.h.b16 %v124
  %v705 = vunpack.c.l.b16 %v125
  %v706 = vunpack.c.h.b16 %v125
  %v707 = vunpack.c.l.b16 %v126
  %v708 = vunpack.c.h.b16 %v126
  %v709 = vunpack.c.l.b16 %v127
  %v710 = vunpack.c.h.b16 %v127
  %v711 = vunpack.c.l.b16 %v128
  %v712 = vunpack.c.h.b16 %v128
  %v713 = vunpack.c.l.b16 %v129
  %v714 = vunpack.c.h.b16 %v129
  %v715 = vunpack.c.l.b16 %v130
  %v716 = vunpack.c.h.b16 %v130
  %v717 = vunpack.c.l.b16 %v131
  %v718 = vunpack.c.h.b16 %v131
  %v719 = vunpack.c.l.b16 %v132
  %v720 = vunpack.c.h.b16 %v132
  %v721 = vunpack.c.l.b16 %v133
  %v722 = vunpack.c.h.b16 %v133
  %v723 = vunpack.c.l.b16 %v134
  %v724 = vunpack.c.h.b16 %v134
  %v725 = vunpack.c.l.b16 %v135
  %v726 = vunpack.c.h.b16 %v135
  %v727 = vunpack.c.l.b16 %v136
  %v728 = vunpack.c.h.b16 %v136
  %v729 = vunpack.c.l.b16 %v137
  %v730 = vunpack.c.h.b16 %v137
  %v731 = vunpack.c.l.b16 %v138
  %v732 = vunpack.c.h.b16 %v138
  %v733 = vunpack.c.l.b16 %v139
  %v734 = vunpack.c.h.b16 %v139
  %v735 = vunpack.c.l.b16 %v140
  %v736 = vunpack.c.h.b16 %v140
  %v737 = vunpack.c.l.b16 %v141
  %v738 = vunpack.c.h.b16 %v141
  %v739 = vunpack.c.l.b16 %v142
  %v740 = vunpack.c.h.b16 %v142
  %v741 = vunpack.c.l.b16 %v143
  %v742 = vunpack.c.h.b16 %v143
  %v743 = vunpack.c.l.b16 %v144
  %v744 = vunpack.c.h.b16 %v144
  %v745 = vunpack.c.l.b16 %v145
  %v746 = vunpack.c.h.b16 %v145
  %v747 = vunpack.c.l.b16 %v146
  %v748 = vunpack.c.h.b16 %v146
  %v749 = vunpack.c.l.b16 %v147
  %v750 = vunpack.c.h.b16 %v147
  %v751 = vunpack.c.l.b16 %v148
  %v752 = vunpack.c.h.b16 %v148
  %v753 = vunpack.c.l.b16 %v149
  %v754 = vunpack.c.h.b16 %v149
  %v755 = vunpack.c.l.b16 %v150
  %v756 = vunpack.c.h.b16 %v150
  %v757 = vunpack.c.l.b16 %v151
  %v758 = vunpack.c.h.b16 %v151
  %v759 = vunpack.c.l.b16 %v152
  %v760 = vunpack.c.h.b16 %v152
  %v761 = vunpack.c.l.b16 %v153
  %v762 = vunpack.c.h.b16 %v153
  %v763 = vunpack.c.l.b16 %v154
  %v764 = vunpack.c.h.b16 %v154
  %v765 = vunpack.c.l.b16 %v155
  %v766 = vunpack.c.h.b16 %v155
  %v767 = vunpack.c.l.b16 %v156
  %v768 = vunpack.c.h.b16 %v156
  %v769 = vunpack.c.l.b16 %v157
  %v770 = vunpack.c.h.b16 %v157
  %v771 = vunpack.c.l.b16 %v158
  %v772 = vunpack.c.h.b16 %v158
  %v773 = vunpack.c.l.b16 %v159
  %v774 = vunpack.c.h.b16 %v159
  %v775 = vunpack.c.l.b16 %v160
  %v776 = vunpack.c.h.b16 %v160
  %v777 = vunpack.c.l.b16 %v161
  %v778 = vunpack.c.h.b16 %v161
  %v779 = vunpack.c.l.b16 %v162
  %v780 = vunpack.c.h.b16 %v162
  %v781 = vunpack.c.l.b16 %v163
  %v782 = vunpack.c.h.b16 %v163
  %v783 = vunpack.c.l.b16 %v164
  %v784 = vunpack.c.h.b16 %v164
  %v785 = vunpack.c.l.b16 %v165
  %v786 = vunpack.c.h.b16 %v165
  %v787 = vunpack.c.l.b16 %v166
  %v788 = vunpack.c.h.b16 %v166
  %v789 = vunpack.c.l.b16 %v167
  %v790 = vunpack.c.h.b16 %v167
  %v791 = vunpack.c.l.b16 %v168
  %v792 = vunpack.c.h.b16 %v168
  %v793 = vunpack.c.l.b16 %v169
  %v794 = vunpack.c.h.b16 %v169
  %v795 = vunpack.c.l.b16 %v170
  %v796 = vunpack.c.h.b16 %v170
  %v797 = vunpack.c.l.b16 %v171
  %v798 = vunpack.c.h.b16 %v171
  %v799 = vunpack.c.l.b16 %v172
  %v800 = vunpack.c.h.b16 %v172
  %v801 = vunpack.c.l.b16 %v173
  %v802 = vunpack.c.h.b16 %v173
  %v803 = vunpack.c.l.b16 %v174
  %v804 = vunpack.c.h.b16 %v174
  %v805 = vunpack.c.l.b16 %v175
  %v806 = vunpack.c.h.b16 %v175
  %v807 = vunpack.c.l.b16 %v176
  %v808 = vunpack.c.h.b16 %v176
  %v809 = vunpack.c.l.b16 %v177
  %v810 = vunpack.c.h.b16 %v177
  %v811 = vunpack.c.l.b16 %v178
  %v812 = vunpack.c.h.b16 %v178
  %v813 = vunpack.c.l.b16 %v179
  %v814 = vunpack.c.h.b16 %v179
  %v815 = vunpack.c.l.b16 %v180
  %v816 = vunpack.c.h.b16 %v180
  %v817 = vunpack.c.l.b16 %v181
  %v818 = vunpack.c.h.b16 %v181
  %v819 = vunpack.c.l.b16 %v182
  %v820 = vunpack.c.h.b16 %v182
  %v821 = vunpack.c.l.b16 %v183
  %v822 = vunpack.c.h.b16 %v183
  %v823 = vunpack.c.l.b16 %v184
  %v824 = vunpack.c.h.b16 %v184
  %v825 = vpack.c.b16 %v585, %v569
  %v826 = vpack.c.b16 %v586, %v570
  %v827 = vpack.c.b16 %v587, %v571
  %v828 = vpack.c.b16 %v588, %v572
  %v829 = vpack.c.b16 %v589, %v573
  %v830 = vpack.c.b16 %v590, %v574
  %v831 = vpack.c.b16 %v591, %v575
  %v832 = vpack.c.b16 %v592, %v576
  %v833 = vpack.c.b16 %v593, %v577
  %v834 = vpack.c.b16 %v594, %v578
  %v835 = vpack.c.b16 %v595, %v579
  %v836 = vpack.c.b16 %v596, %v580
  %v837 = vpack.c.b16 %v597, %v581
  %v838 = vpack.c.b16 %v598, %v582
  %v839 = vpack.c.b16 %v599, %v583
  %v840 = vpack.c.b16 %v600, %v584
  %v841 = vpack.c.b16 %v617, %v601
  %v842 = vpack.c.b16 %v618, %v602
  %v843 = vpack.c.b16 %v619, %v603
  %v844 = vpack.c.b16 %v620, %v604
  %v845 = vpack.c.b16 %v621, %v605
  %v846 = vpack.c.b16 %v622, %v606
  %v847 = vpack.c.b16 %v623, %v607
  %v848 = vpack.c.b16 %v624, %v608
  %v849 = vpack.c.b16 %v625, %v609
  %v850 = vpack.c.b16 %v626, %v610
  %v851 = vpack.c.b16 %v627, %v611
  %v852 = vpack.c.b16 %v628, %v612
  %v853 = vpack.c.b16 %v629, %v613
  %v854 = vpack.c.b16 %v630, %v614
  %v855 = vpack.c.b16 %v631, %v615
  %v856 = vpack.c.b16 %v632, %v616
  %v857 = vpack.c.b16 %v649, %v633
  %v858 = vpack.c.b16 %v650, %v634
  %v859 = vpack.c.b16 %v651, %v635
  %v860 = vpack.c.b16 %v652, %v636
  %v861 = vpack.c.b16 %v653, %v637
  %v862 = vpack.c.b16 %v654, %v638
  %v863 = vpack.c.b16 %v655, %v639
  %v864 = vpack.c.b16 %v656, %v640
  %v865 = vpack.c.b16 %v657, %v641
  %v866 = vpack.c.b16 %v658, %v642
  %v867 = vpack.c.b16 %v659, %v643
  %v868 = vpack.c.b16 %v660, %v644
  %v869 = vpack.c.b16 %v661, %v645
  %v870 = vpack.c.b16 %v662, %v646
  %v871 = vpack.c.b16 %v663, %v647
  %v872 = vpack.c.b16 %v664, %v648
  %v873 = vpack.c.b16 %v681, %v665
  %v874 = vpack.c.b16 %v682, %v666
  %v875 = vpack.c.b16 %v683, %v667
  %v876 = vpack.c.b16 %v684, %v668
  %v877 = vpack.c.b16 %v685, %v669
  %v878 = vpack.c.b16 %v686, %v670
  %v879 = vpack.c.b16 %v687, %v671
  %v880 = vpack.c.b16 %v688, %v672
  %v881 = vpack.c.b16 %v689, %v673
  %v882 = vpack.c.b16 %v690, %v674
  %v883 = vpack.c.b16 %v691, %v675
  %v884 = vpack.c.b16 %v692, %v676
  %v885 = vpack.c.b16 %v693, %v677
  %v886 = vpack.c.b16 %v694, %v678
  %v887 = vpack.c.b16 %v695, %v679
  %v888 = vpack.c.b16 %v696, %v680
  %v889 = vpack.c.b16 %v713, %v697
  %v890 = vpack.c.b16 %v714, %v698
  %v891 = vpack.c.b16 %v715, %v699
  %v892 = vpack.c.b16 %v716, %v700
  %v893 = vpack.c.b16 %v717, %v701
  %v894 = vpack.c.b16 %v718, %v702
  %v895 = vpack.c.b16 %v719, %v703
  %v896 = vpack.c.b16 %v720, %v704
  %v897 = vpack.c.b16 %v721, %v705
  %v898 = vpack.c.b16 %v722, %v706
  %v899 = vpack.c.b16 %v723, %v707
  %v900 = vpack.c.b16 %v724, %v708
  %v901 = vpack.c.b16 %v725, %v709
  %v902 = vpack.c.b16 %v726, %v710
  %v903 = vpack.c.b16 %v727, %v711
  %v904 = vpack.c.b16 %v728, %v712
  %v905 = vpack.c.b16 %v745, %v729
  %v906 = vpack.c.b16 %v746, %v730
  %v907 = vpack.c.b16 %v747, %v731
  %v908 = vpack.c.b16 %v748, %v732
  %v909 = vpack.c.b16 %v749, %v733
  %v910 = vpack.c.b16 %v750, %v734
  %v911 = vpack.c.b16 %v751, %v735
  %v912 = vpack.c.b16 %v752, %v736
  %v913 = vpack.c.b16 %v753, %v737
  %v914 = vpack.c.b16 %v754, %v738
  %v915 = vpack.c.b16 %v755, %v739
  %v916 = vpack.c.b16 %v756, %v740
  %v917 = vpack.c.b16 %v757, %v741
  %v918 = vpack.c.b16 %v758, %v742
  %v919 = vpack.c.b16 %v759, %v743
  %v920 = vpack.c.b16 %v760, %v744
  %v921 = vpack.c.b16 %v777, %v761
  %v922 = vpack.c.b16 %v778, %v762
  %v923 = vpack.c.b16 %v779, %v763
  %v924 = vpack.c.b16 %v780, %v764
  %v925 = vpack.c.b16 %v781, %v765
  %v926 = vpack.c.b16 %v782, %v766
  %v927 = vpack.c.b16 %v783, %v767
  %v928 = vpack.c.b16 %v784, %v768
  %v929 = vpack.c.b16 %v785, %v769
  %v930 = vpack.c.b16 %v786, %v770
  %v931 = vpack.c.b16 %v787, %v771
  %v932 = vpack.c.b16 %v788, %v772
  %v933 = vpack.c.b16 %v789, %v773
  %v934 = vpack.c.b16 %v790, %v774
  %v935 = vpack.c.b16 %v791, %v775
  %v936 = vpack.c.b16 %v792, %v776
  %v937 = vpack.c.b16 %v809, %v793
  %v938 = vpack.c.b16 %v810, %v794
  %v939 = vpack.c.b16 %v811, %v795
  %v940 = vpack.c.b16 %v812, %v796
  %v941 = vpack.c.b16 %v813, %v797
  %v942 = vpack.c.b16 %v814, %v798
  %v943 = vpack.c.b16 %v815, %v799
  %v944 = vpack.c.b16 %v816, %v800
  %v945 = vpack.c.b16 %v817, %v801
  %v946 = vpack.c.b16 %v818, %v802
  %v947 = vpack.c.b16 %v819, %v803
  %v948 = vpack.c.b16 %v820, %v804
  %v949 = vpack.c.b16 %v821, %v805
  %v950 = vpack.c.b16 %v822, %v806
  %v951 = vpack.c.b16 %v823, %v807
  %v952 = vpack.c.b16 %v824, %v808
  %v1337 = vunpack.c.l.b16 %v185
  %v1338 = vunpack.c.l.b16 %v186
  %v1339 = vunpack.c.l.b16 %v187
  %v1340 = vunpack.c.l.b16 %v188
  %v1341 = vunpack.c.l.b16 %v189
  %v1342 = vunpack.c.l.b16 %v190
  %v1343 = vunpack.c.l.b16 %v191
  %v1344 = vunpack.c.l.b16 %v192
  %v1345 = vunpack.c.l.b16 %v193
  %v1346 = vunpack.c.l.b16 %v194
  %v1347 = vunpack.c.l.b16 %v195
  %v1348 = vunpack.c.l.b16 %v196
  %v1349 = vunpack.c.l.b16 %v197
  %v1350 = vunpack.c.l.b16 %v198
  %v1351 = vunpack.c.l.b16 %v199
  %v1352 = vunpack.c.l.b16 %v200
  %v1353 = vunpack.c.l.b16 %v201
  %v1354 = vunpack.c.l.b16 %v202
  %v1355 = vunpack.c.l.b16 %v203
  %v1356 = vunpack.c.l.b16 %v204
  %v1357 = vunpack.c.l.b16 %v205
  %v1358 = vunpack.c.l.b16 %v206
  %v1359 = vunpack.c.l.b16 %v207
  %v1360 = vunpack.c.l.b16 %v208
  %v1361 = vunpack.c.l.b16 %v209
  %v1362 = vunpack.c.l.b16 %v210
  %v1363 = vunpack.c.l.b16 %v211
  %v1364 = vunpack.c.l.b16 %v212
  %v1365 = vunpack.c.l.b16 %v213
  %v1366 = vunpack.c.l.b16 %v214
  %v1367 = vunpack.c.l.b16 %v215
  %v1368 = vunpack.c.l.b16 %v216
  %v1369 = vunpack.c.l.b16 %v217
  %v1370 = vunpack.c.l.b16 %v218
  %v1371 = vunpack.c.l.b16 %v219
  %v1372 = vunpack.c.l.b16 %v220
  %v1373 = vunpack.c.l.b16 %v221
  %v1374 = vunpack.c.l.b16 %v222
  %v1375 = vunpack.c.l.b16 %v223
  %v1376 = vunpack.c.l.b16 %v224
  %v1377 = vunpack.c.l.b16 %v225
  %v1378 = vunpack.c.l.b16 %v226
  %v1379 = vunpack.c.l.b16 %v227
  %v1380 = vunpack.c.l.b16 %v228
  %v1381 = vunpack.c.l.b16 %v229
  %v1382 = vunpack.c.l.b16 %v230
  %v1383 = vunpack.c.l.b16 %v231
  %v1384 = vunpack.c.l.b16 %v232
  %v1385 = vunpack.c.l.b16 %v233
  %v1386 = vunpack.c.l.b16 %v234
  %v1387 = vunpack.c.l.b16 %v235
  %v1388 = vunpack.c.l.b16 %v236
  %v1389 = vunpack.c.l.b16 %v237
  %v1390 = vunpack.c.l.b16 %v238
  %v1391 = vunpack.c.l.b16 %v239
  %v1392 = vunpack.c.l.b16 %v240
  %v1393 = vunpack.c.l.b16 %v241
  %v1394 = vunpack.c.l.b16 %v242
  %v1395 = vunpack.c.l.b16 %v243
  %v1396 = vunpack.c.l.b16 %v244
  %v1397 = vunpack.c.l.b16 %v245
  %v1398 = vunpack.c.l.b16 %v246
  %v1399 = vunpack.c.l.b16 %v247
  %v1400 = vunpack.c.l.b16 %v248
  %v1401 = vunpack.c.l.b16 %v249
  %v1402 = vunpack.c.l.b16 %v250
  %v1403 = vunpack.c.l.b16 %v251
  %v1404 = vunpack.c.l.b16 %v252
  %v1405 = vunpack.c.l.b16 %v253
  %v1406 = vunpack.c.l.b16 %v254
  %v1407 = vunpack.c.l.b16 %v255
  %v1408 = vunpack.c.l.b16 %v256
  %v1409 = vunpack.c.l.b16 %v257
  %v1410 = vunpack.c.l.b16 %v258
  %v1411 = vunpack.c.l.b16 %v259
  %v1412 = vunpack.c.l.b16 %v260
  %v1413 = vunpack.c.l.b16 %v261
  %v1414 = vunpack.c.l.b16 %v262
  %v1415 = vunpack.c.l.b16 %v263
  %v1416 = vunpack.c.l.b16 %v264
  %v1417 = vunpack.c.l.b16 %v265
  %v1418 = vunpack.c.l.b16 %v266
  %v1419 = vunpack.c.l.b16 %v267
  %v1420 = vunpack.c.l.b16 %v268
  %v1421 = vunpack.c.l.b16 %v269
  %v1422 = vunpack.c.l.b16 %v270
  %v1423 = vunpack.c.l.b16 %v271
  %v1424 = vunpack.c.l.b16 %v272
  %v1425 = vunpack.c.l.b16 %v273
  %v1426 = vunpack.c.l.b16 %v274
  %v1427 = vunpack.c.l.b16 %v275
  %v1428 = vunpack.c.l.b16 %v276
  %v1429 = vunpack.c.l.b16 %v277
  %v1430 = vunpack.c.l.b16 %v278
  %v1431 = vunpack.c.l.b16 %v279
  %v1432 = vunpack.c.l.b16 %v280
  %v1433 = vunpack.c.l.b16 %v281
  %v1434 = vunpack.c.l.b16 %v282
  %v1435 = vunpack.c.l.b16 %v283
  %v1436 = vunpack.c.l.b16 %v284
  %v1437 = vunpack.c.l.b16 %v285
  %v1438 = vunpack.c.l.b16 %v286
  %v1439 = vunpack.c.l.b16 %v287
  %v1440 = vunpack.c.l.b16 %v288
  %v1441 = vunpack.c.l.b16 %v289
  %v1442 = vunpack.c.l.b16 %v290
  %v1443 = vunpack.c.l.b16 %v291
  %v1444 = vunpack.c.l.b16 %v292
  %v1445 = vunpack.c.l.b16 %v293
  %v1446 = vunpack.c.l.b16 %v294
  %v1447 = vunpack.c.l.b16 %v295
  %v1448 = vunpack.c.l.b16 %v296
  %v1449 = vunpack.c.l.b16 %v297
  %v1450 = vunpack.c.l.b16 %v298
  %v1451 = vunpack.c.l.b16 %v299
  %v1452 = vunpack.c.l.b16 %v300
  %v1453 = vunpack.c.l.b16 %v301
  %v1454 = vunpack.c.l.b16 %v302
  %v1455 = vunpack.c.l.b16 %v303
  %v1456 = vunpack.c.l.b16 %v304
  %v1457 = vunpack.c.l.b16 %v305
  %v1458 = vunpack.c.l.b16 %v306
  %v1459 = vunpack.c.l.b16 %v307
  %v1460 = vunpack.c.l.b16 %v308
  %v1461 = vunpack.c.l.b16 %v309
  %v1462 = vunpack.c.l.b16 %v310
  %v1463 = vunpack.c.l.b16 %v311
  %v1464 = vunpack.c.l.b16 %v312
  %v1465 = vunpack.c.l.b16 %v313
  %v1466 = vunpack.c.l.b16 %v314
  %v1467 = vunpack.c.l.b16 %v315
  %v1468 = vunpack.c.l.b16 %v316
  %v1469 = vunpack.c.l.b16 %v317
  %v1470 = vunpack.c.l.b16 %v318
  %v1471 = vunpack.c.l.b16 %v319
  %v1472 = vunpack.c.l.b16 %v320
  %v1473 = vunpack.c.l.b16 %v321
  %v1474 = vunpack.c.l.b16 %v322
  %v1475 = vunpack.c.l.b16 %v323
  %v1476 = vunpack.c.l.b16 %v324
  %v1477 = vunpack.c.l.b16 %v325
  %v1478 = vunpack.c.l.b16 %v326
  %v1479 = vunpack.c.l.b16 %v327
  %v1480 = vunpack.c.l.b16 %v328
  %v1481 = vunpack.c.l.b16 %v329
  %v1482 = vunpack.c.l.b16 %v330
  %v1483 = vunpack.c.l.b16 %v331
  %v1484 = vunpack.c.l.b16 %v332
  %v1485 = vunpack.c.l.b16 %v333
  %v1486 = vunpack.c.l.b16 %v334
  %v1487 = vunpack.c.l.b16 %v335
  %v1488 = vunpack.c.l.b16 %v336
  %v1489 = vunpack.c.l.b16 %v337
  %v1490 = vunpack.c.l.b16 %v338
  %v1491 = vunpack.c.l.b16 %v339
  %v1492 = vunpack.c.l.b16 %v340
  %v1493 = vunpack.c.l.b16 %v341
  %v1494 = vunpack.c.l.b16 %v342
  %v1495 = vunpack.c.l.b16 %v343
  %v1496 = vunpack.c.l.b16 %v344
  %v1497 = vunpack.c.l.b16 %v345
  %v1498 = vunpack.c.l.b16 %v346
  %v1499 = vunpack.c.l.b16 %v347
  %v1500 = vunpack.c.l.b16 %v348
  %v1501 = vunpack.c.l.b16 %v349
  %v1502 = vunpack.c.l.b16 %v350
  %v1503 = vunpack.c.l.b16 %v351
  %v1504 = vunpack.c.l.b16 %v352
  %v1505 = vunpack.c.l.b16 %v353
  %v1506 = vunpack.c.l.b16 %v354
  %v1507 = vunpack.c.l.b16 %v355
  %v1508 = vunpack.c.l.b16 %v356
  %v1509 = vunpack.c.l.b16 %v357
  %v1510 = vunpack.c.l.b16 %v358
  %v1511 = vunpack.c.l.b16 %v359
  %v1512 = vunpack.c.l.b16 %v360
  %v1513 = vunpack.c.l.b16 %v361
  %v1514 = vunpack.c.l.b16 %v362
  %v1515 = vunpack.c.l.b16 %v363
  %v1516 = vunpack.c.l.b16 %v364
  %v1517 = vunpack.c.l.b16 %v365
  %v1518 = vunpack.c.l.b16 %v366
  %v1519 = vunpack.c.l.b16 %v367
  %v1520 = vunpack.c.l.b16 %v368
  %v1521 = vunpack.c.l.b16 %v369
  %v1522 = vunpack.c.l.b16 %v370
  %v1523 = vunpack.c.l.b16 %v371
  %v1524 = vunpack.c.l.b16 %v372
  %v1525 = vunpack.c.l.b16 %v373
  %v1526 = vunpack.c.l.b16 %v374
  %v1527 = vunpack.c.l.b16 %v375
  %v1528 = vunpack.c.l.b16 %v376
  %v1529 = vunpack.c.l.b16 %v377
  %v1530 = vunpack.c.l.b16 %v378
  %v1531 = vunpack.c.l.b16 %v379
  %v1532 = vunpack.c.l.b16 %v380
  %v1533 = vunpack.c.l.b16 %v381
  %v1534 = vunpack.c.l.b16 %v382
  %v1535 = vunpack.c.l.b16 %v383
  %v1536 = vunpack.c.l.b16 %v384
  %v1537 = vunpack.c.l.b16 %v385
  %v1538 = vunpack.c.l.b16 %v386
  %v1539 = vunpack.c.l.b16 %v387
  %v1540 = vunpack.c.l.b16 %v388
  %v1541 = vunpack.c.l.b16 %v389
  %v1542 = vunpack.c.l.b16 %v390
  %v1543 = vunpack.c.l.b16 %v391
  %v1544 = vunpack.c.l.b16 %v392
  %v1545 = vunpack.c.l.b16 %v393
  %v1546 = vunpack.c.l.b16 %v394
  %v1547 = vunpack.c.l.b16 %v395
  %v1548 = vunpack.c.l.b16 %v396
  %v1549 = vunpack.c.l.b16 %v397
  %v1550 = vunpack.c.l.b16 %v398
  %v1551 = vunpack.c.l.b16 %v399
  %v1552 = vunpack.c.l.b16 %v400
  %v1553 = vunpack.c.l.b16 %v401
  %v1554 = vunpack.c.l.b16 %v402
  %v1555 = vunpack.c.l.b16 %v403
  %v1556 = vunpack.c.l.b16 %v404
  %v1557 = vunpack.c.l.b16 %v405
  %v1558 = vunpack.c.l.b16 %v406
  %v1559 = vunpack.c.l.b16 %v407
  %v1560 = vunpack.c.l.b16 %v408
  %v1561 = vunpack.c.l.b16 %v409
  %v1562 = vunpack.c.l.b16 %v410
  %v1563 = vunpack.c.l.b16 %v411
  %v1564 = vunpack.c.l.b16 %v412
  %v1565 = vunpack.c.l.b16 %v413
  %v1566 = vunpack.c.l.b16 %v414
  %v1567 = vunpack.c.l.b16 %v415
  %v1568 = vunpack.c.l.b16 %v416
  %v1569 = vunpack.c.l.b16 %v417
  %v1570 = vunpack.c.l.b16 %v418
  %v1571 = vunpack.c.l.b16 %v419
  %v1572 = vunpack.c.l.b16 %v420
  %v1573 = vunpack.c.l.b16 %v421
  %v1574 = vunpack.c.l.b16 %v422
  %v1575 = vunpack.c.l.b16 %v423
  %v1576 = vunpack.c.l.b16 %v424
  %v1577 = vunpack.c.l.b16 %v425
  %v1578 = vunpack.c.l.b16 %v426
  %v1579 = vunpack.c.l.b16 %v427
  %v1580 = vunpack.c.l.b16 %v428
  %v1581 = vunpack.c.l.b16 %v429
  %v1582 = vunpack.c.l.b16 %v430
  %v1583 = vunpack.c.l.b16 %v431
  %v1584 = vunpack.c.l.b16 %v432
  %v1585 = vunpack.c.l.b16 %v433
  %v1586 = vunpack.c.l.b16 %v434
  %v1587 = vunpack.c.l.b16 %v435
  %v1588 = vunpack.c.l.b16 %v436
  %v1589 = vunpack.c.l.b16 %v437
  %v1590 = vunpack.c.l.b16 %v438
  %v1591 = vunpack.c.l.b16 %v439
  %v1592 = vunpack.c.l.b16 %v440
  %v1593 = vpack.c.b16 %v1338, %v1337
  %v1594 = vpack.c.b16 %v1340, %v1339
  %v1595 = vpack.c.b16 %v1342, %v1341
  %v1596 = vpack.c.b16 %v1344, %v1343
  %v1597 = vpack.c.b16 %v1346, %v1345
  %v1598 = vpack.c.b16 %v1348, %v1347
  %v1599 = vpack.c.b16 %v1350, %v1349
  %v1600 = vpack.c.b16 %v1352, %v1351
  %v1601 = vpack.c.b16 %v1354, %v1353
  %v1602 = vpack.c.b16 %v1356, %v1355
  %v1603 = vpack.c.b16 %v1358, %v1357
  %v1604 = vpack.c.b16 %v1360, %v1359
  %v1605 = vpack.c.b16 %v1362, %v1361
  %v1606 = vpack.c.b16 %v1364, %v1363
  %v1607 = vpack.c.b16 %v1366, %v1365
  %v1608 = vpack.c.b16 %v1368, %v1367
  %v1609 = vpack.c.b16 %v1370, %v1369
  %v1610 = vpack.c.b16 %v1372, %v1371
  %v1611 = vpack.c.b16 %v1374, %v1373
  %v1612 = vpack.c.b16 %v1376, %v1375
  %v1613 = vpack.c.b16 %v1378, %v1377
  %v1614 = vpack.c.b16 %v1380, %v1379
  %v1615 = vpack.c.b16 %v1382, %v1381
  %v1616 = vpack.c.b16 %v1384, %v1383
  %v1617 = vpack.c.b16 %v1386, %v1385
  %v1618 = vpack.c.b16 %v1388, %v1387
  %v1619 = vpack.c.b16 %v1390, %v1389
  %v1620 = vpack.c.b16 %v1392, %v1391
  %v1621 = vpack.c.b16 %v1394, %v1393
  %v1622 = vpack.c.b16 %v1396, %v1395
  %v1623 = vpack.c.b16 %v1398, %v1397
  %v1624 = vpack.c.b16 %v1400, %v1399
  %v1625 = vpack.c.b16 %v1402, %v1401
  %v1626 = vpack.c.b16 %v1404, %v1403
  %v1627 = vpack.c.b16 %v1406, %v1405
  %v1628 = vpack.c.b16 %v1408, %v1407
  %v1629 = vpack.c.b16 %v1410, %v1409
  %v1630 = vpack.c.b16 %v1412, %v1411
  %v1631 = vpack.c.b16 %v1414, %v1413
  %v1632 = vpack.c.b16 %v1416, %v1415
  %v1633 = vpack.c.b16 %v1418, %v1417
  %v1634 = vpack.c.b16 %v1420, %v1419
  %v1635 = vpack.c.b16 %v1422, %v1421
  %v1636 = vpack.c.b16 %v1424, %v1423
  %v1637 = vpack.c.b16 %v1426, %v1425
  %v1638 = vpack.c.b16 %v1428, %v1427
  %v1639 = vpack.c.b16 %v1430, %v1429
  %v1640 = vpack.c.b16 %v1432, %v1431
  %v1641 = vpack.c.b16 %v1434, %v1433
  %v1642 = vpack.c.b16 %v1436, %v1435
  %v1643 = vpack.c.b16 %v1438, %v1437
  %v1644 = vpack.c.b16 %v1440, %v1439
  %v1645 = vpack.c.b16 %v1442, %v1441
  %v1646 = vpack.c.b16 %v1444, %v1443
  %v1647 = vpack.c.b16 %v1446, %v1445
  %v1648 = vpack.c.b16 %v1448, %v1447
  %v1649 = vpack.c.b16 %v1450, %v1449
  %v1650 = vpack.c.b16 %v1452, %v1451
  %v1651 = vpack.c.b16 %v1454, %v1453
  %v1652 = vpack.c.b16 %v1456, %v1455
  %v1653 = vpack.c.b16 %v1458, %v1457
  %v1654 = vpack.c.b16 %v1460, %v1459
  %v1655 = vpack.c.b16 %v1462, %v1461
  %v1656 = vpack.c.b16 %v1464, %v1463
  %v1657 = vpack.c.b16 %v1466, %v1465
  %v1658 = vpack.c.b16 %v1468, %v1467
  %v1659 = vpack.c.b16 %v1470, %v1469
  %v1660 = vpack.c.b16 %v1472, %v1471
  %v1661 = vpack.c.b16 %v1474, %v1473
  %v1662 = vpack.c.b16 %v1476, %v1475
  %v1663 = vpack.c.b16 %v1478, %v1477
  %v1664 = vpack.c.b16 %v1480, %v1479
  %v1665 = vpack.c.b16 %v1482, %v1481
  %v1666 = vpack.c.b16 %v1484, %v1483
  %v1667 = vpack.c.b16 %v1486, %v1485
  %v1668 = vpack.c.b16 %v1488, %v1487
  %v1669 = vpack.c.b16 %v1490, %v1489
  %v1670 = vpack.c.b16 %v1492, %v1491
  %v1671 = vpack.c.b16 %v1494, %v1493
  %v1672 = vpack.c.b16 %v1496, %v1495
  %v1673 = vpack.c.b16 %v1498, %v1497
  %v1674 = vpack.c.b16 %v1500, %v1499
  %v1675 = vpack.c.b16 %v1502, %v1501
  %v1676 = vpack.c.b16 %v1504, %v1503
  %v1677 = vpack.c.b16 %v1506, %v1505
  %v1678 = vpack.c.b16 %v1508, %v1507
  %v1679 = vpack.c.b16 %v1510, %v1509
  %v1680 = vpack.c.b16 %v1512, %v1511
  %v1681 = vpack.c.b16 %v1514, %v1513
  %v1682 = vpack.c.b16 %v1516, %v1515
  %v1683 = vpack.c.b16 %v1518, %v1517
  %v1684 = vpack.c.b16 %v1520, %v1519
  %v1685 = vpack.c.b16 %v1522, %v1521
  %v1686 = vpack.c.b16 %v1524, %v1523
  %v1687 = vpack.c.b16 %v1526, %v1525
  %v1688 = vpack.c.b16 %v1528, %v1527
  %v1689 = vpack.c.b16 %v1530, %v1529
  %v1690 = vpack.c.b16 %v1532, %v1531
  %v1691 = vpack.c.b16 %v1534, %v1533
  %v1692 = vpack.c.b16 %v1536, %v1535
  %v1693 = vpack.c.b16 %v1538, %v1537
  %v1694 = vpack.c.b16 %v1540, %v1539
  %v1695 = vpack.c.b16 %v1542, %v1541
  %v1696 = vpack.c.b16 %v1544, %v1543
  %v1697 = vpack.c.b16 %v1546, %v1545
  %v1698 = vpack.c.b16 %v1548, %v1547
  %v1699 = vpack.c.b16 %v1550, %v1549
  %v1700 = vpack.c.b16 %v1552, %v1551
  %v1701 = vpack.c.b16 %v1554, %v1553
  %v1702 = vpack.c.b16 %v1556, %v1555
  %v1703 = vpack.c.b16 %v1558, %v1557
  %v1704 = vpack.c.b16 %v1560, %v1559
  %v1705 = vpack.c.b16 %v1562, %v1561
  %v1706 = vpack.c.b16 %v1564, %v1563
  %v1707 = vpack.c.b16 %v1566, %v1565
  %v1708 = vpack.c.b16 %v1568, %v1567
  %v1709 = vpack.c.b16 %v1570, %v1569
  %v1710 = vpack.c.b16 %v1572, %v1571
  %v1711 = vpack.c.b16 %v1574, %v1573
  %v1712 = vpack.c.b16 %v1576, %v1575
  %v1713 = vpack.c.b16 %v1578, %v1577
  %v1714 = vpack.c.b16 %v1580, %v1579
  %v1715 = vpack.c.b16 %v1582, %v1581
  %v1716 = vpack.c.b16 %v1584, %v1583
  %v1717 = vpack.c.b16 %v1586, %v1585
  %v1718 = vpack.c.b16 %v1588, %v1587
  %v1719 = vpack.c.b16 %v1590, %v1589
  %v1720 = vpack.c.b16 %v1592, %v1591
  %1849 = vmatpush.bf16.msra.mxu0 %v1600
  %1850 = vmatpush.bf16.msra.mxu0 %v1599
  %1851 = vmatpush.bf16.msra.mxu0 %v1598
  %1852 = vmatpush.bf16.msra.mxu0 %v1597
  %1853 = vmatpush.bf16.msra.mxu0 %v1596
  %1854 = vmatpush.bf16.msra.mxu0 %v1595
  %1855 = vmatpush.bf16.msra.mxu0 %v1594
  %1856 = vmatpush.bf16.msra.mxu0 %v1593
  %1857 = vmatmul.bf16.gmra.mxu0 %v825
  %v1858 = vpop.f32.mrf.mxu0
  %v1859 = vadd.f32 0.0, %v1858
  %v1860 = vpop.f32.mrf.mxu0
  %v1861 = vadd.f32 0.0, %v1860
  %1862 = vmatmul.bf16.gmra.mxu0 %v841
  %v1863 = vpop.f32.mrf.mxu0
  %v1864 = vadd.f32 0.0, %v1863
  %v1865 = vpop.f32.mrf.mxu0
  %v1866 = vadd.f32 0.0, %v1865
  %1867 = vmatmul.bf16.gmra.mxu0 %v857
  %v1868 = vpop.f32.mrf.mxu0
  %v1869 = vadd.f32 0.0, %v1868
  %v1870 = vpop.f32.mrf.mxu0
  %v1871 = vadd.f32 0.0, %v1870
  %1872 = vmatmul.bf16.gmra.mxu0 %v873
  %v1873 = vpop.f32.mrf.mxu0
  %v1874 = vadd.f32 0.0, %v1873
  %v1875 = vpop.f32.mrf.mxu0
  %v1876 = vadd.f32 0.0, %v1875
  %1877 = vmatmul.bf16.gmra.mxu0 %v889
  %v1878 = vpop.f32.mrf.mxu0
  %v1879 = vadd.f32 0.0, %v1878
  %v1880 = vpop.f32.mrf.mxu0
  %v1881 = vadd.f32 0.0, %v1880
  %1882 = vmatmul.bf16.gmra.mxu0 %v905
  %v1883 = vpop.f32.mrf.mxu0
  %v1884 = vadd.f32 0.0, %v1883
  %v1885 = vpop.f32.mrf.mxu0
  %v1886 = vadd.f32 0.0, %v1885
  %1887 = vmatmul.bf16.gmra.mxu0 %v921
  %v1888 = vpop.f32.mrf.mxu0
  %v1889 = vadd.f32 0.0, %v1888
  %v1890 = vpop.f32.mrf.mxu0
  %v1891 = vadd.f32 0.0, %v1890
  %1892 = vmatmul.bf16.gmra.mxu0 %v937
  %v1893 = vpop.f32.mrf.mxu0
  %v1894 = vadd.f32 0.0, %v1893
  %v1895 = vpop.f32.mrf.mxu0
  %v1896 = vadd.f32 0.0, %v1895
  %1897 = vdwg.mxu0
  %1898 = vmatpush.bf16.msra.mxu0 %v1608
  %1899 = vmatpush.bf16.msra.mxu0 %v1607
  %1900 = vmatpush.bf16.msra.mxu0 %v1606
  %1901 = vmatpush.bf16.msra.mxu0 %v1605
  %1902 = vmatpush.bf16.msra.mxu0 %v1604
  %1903 = vmatpush.bf16.msra.mxu0 %v1603
  %1904 = vmatpush.bf16.msra.mxu0 %v1602
  %1905 = vmatpush.bf16.msra.mxu0 %v1601
  %1906 = vmatmul.bf16.gmra.mxu0 %v826
  %v1907 = vpop.f32.mrf.mxu0
  %v1908 = vadd.f32 %v1859, %v1907
  %v1909 = vpop.f32.mrf.mxu0
  %v1910 = vadd.f32 %v1861, %v1909
  %1911 = vmatmul.bf16.gmra.mxu0 %v842
  %v1912 = vpop.f32.mrf.mxu0
  %v1913 = vadd.f32 %v1864, %v1912
  %v1914 = vpop.f32.mrf.mxu0
  %v1915 = vadd.f32 %v1866, %v1914
  %1916 = vmatmul.bf16.gmra.mxu0 %v858
  %v1917 = vpop.f32.mrf.mxu0
  %v1918 = vadd.f32 %v1869, %v1917
  %v1919 = vpop.f32.mrf.mxu0
  %v1920 = vadd.f32 %v1871, %v1919
  %1921 = vmatmul.bf16.gmra.mxu0 %v874
  %v1922 = vpop.f32.mrf.mxu0
  %v1923 = vadd.f32 %v1874, %v1922
  %v1924 = vpop.f32.mrf.mxu0
  %v1925 = vadd.f32 %v1876, %v1924
  %1926 = vmatmul.bf16.gmra.mxu0 %v890
  %v1927 = vpop.f32.mrf.mxu0
  %v1928 = vadd.f32 %v1879, %v1927
  %v1929 = vpop.f32.mrf.mxu0
  %v1930 = vadd.f32 %v1881, %v1929
  %1931 = vmatmul.bf16.gmra.mxu0 %v906
  %v1932 = vpop.f32.mrf.mxu0
  %v1933 = vadd.f32 %v1884, %v1932
  %v1934 = vpop.f32.mrf.mxu0
  %v1935 = vadd.f32 %v1886, %v1934
  %1936 = vmatmul.bf16.gmra.mxu0 %v922
  %v1937 = vpop.f32.mrf.mxu0
  %v1938 = vadd.f32 %v1889, %v1937
  %v1939 = vpop.f32.mrf.mxu0
  %v1940 = vadd.f32 %v1891, %v1939
  %1941 = vmatmul.bf16.gmra.mxu0 %v938
  %v1942 = vpop.f32.mrf.mxu0
  %v1943 = vadd.f32 %v1894, %v1942
  %v1944 = vpop.f32.mrf.mxu0
  %v1945 = vadd.f32 %v1896, %v1944
  %1946 = vdwg.mxu0
  %1947 = vmatpush.bf16.msra.mxu0 %v1616
  %1948 = vmatpush.bf16.msra.mxu0 %v1615
  %1949 = vmatpush.bf16.msra.mxu0 %v1614
  %1950 = vmatpush.bf16.msra.mxu0 %v1613
  %1951 = vmatpush.bf16.msra.mxu0 %v1612
  %1952 = vmatpush.bf16.msra.mxu0 %v1611
  %1953 = vmatpush.bf16.msra.mxu0 %v1610
  %1954 = vmatpush.bf16.msra.mxu0 %v1609
  %1955 = vmatmul.bf16.gmra.mxu0 %v827
  %v1956 = vpop.f32.mrf.mxu0
  %v1957 = vadd.f32 %v1908, %v1956
  %v1958 = vpop.f32.mrf.mxu0
  %v1959 = vadd.f32 %v1910, %v1958
  %1960 = vmatmul.bf16.gmra.mxu0 %v843
  %v1961 = vpop.f32.mrf.mxu0
  %v1962 = vadd.f32 %v1913, %v1961
  %v1963 = vpop.f32.mrf.mxu0
  %v1964 = vadd.f32 %v1915, %v1963
  %1965 = vmatmul.bf16.gmra.mxu0 %v859
  %v1966 = vpop.f32.mrf.mxu0
  %v1967 = vadd.f32 %v1918, %v1966
  %v1968 = vpop.f32.mrf.mxu0
  %v1969 = vadd.f32 %v1920, %v1968
  %1970 = vmatmul.bf16.gmra.mxu0 %v875
  %v1971 = vpop.f32.mrf.mxu0
  %v1972 = vadd.f32 %v1923, %v1971
  %v1973 = vpop.f32.mrf.mxu0
  %v1974 = vadd.f32 %v1925, %v1973
  %1975 = vmatmul.bf16.gmra.mxu0 %v891
  %v1976 = vpop.f32.mrf.mxu0
  %v1977 = vadd.f32 %v1928, %v1976
  %v1978 = vpop.f32.mrf.mxu0
  %v1979 = vadd.f32 %v1930, %v1978
  %1980 = vmatmul.bf16.gmra.mxu0 %v907
  %v1981 = vpop.f32.mrf.mxu0
  %v1982 = vadd.f32 %v1933, %v1981
  %v1983 = vpop.f32.mrf.mxu0
  %v1984 = vadd.f32 %v1935, %v1983
  %1985 = vmatmul.bf16.gmra.mxu0 %v923
  %v1986 = vpop.f32.mrf.mxu0
  %v1987 = vadd.f32 %v1938, %v1986
  %v1988 = vpop.f32.mrf.mxu0
  %v1989 = vadd.f32 %v1940, %v1988
  %1990 = vmatmul.bf16.gmra.mxu0 %v939
  %v1991 = vpop.f32.mrf.mxu0
  %v1992 = vadd.f32 %v1943, %v1991
  %v1993 = vpop.f32.mrf.mxu0
  %v1994 = vadd.f32 %v1945, %v1993
  %1995 = vdwg.mxu0
  %1996 = vmatpush.bf16.msra.mxu0 %v1624
  %1997 = vmatpush.bf16.msra.mxu0 %v1623
  %1998 = vmatpush.bf16.msra.mxu0 %v1622
  %1999 = vmatpush.bf16.msra.mxu0 %v1621
  %2000 = vmatpush.bf16.msra.mxu0 %v1620
  %2001 = vmatpush.bf16.msra.mxu0 %v1619
  %2002 = vmatpush.bf16.msra.mxu0 %v1618
  %2003 = vmatpush.bf16.msra.mxu0 %v1617
  %2004 = vmatmul.bf16.gmra.mxu0 %v828
  %v2005 = vpop.f32.mrf.mxu0
  %v2006 = vadd.f32 %v1957, %v2005
  %v2007 = vpop.f32.mrf.mxu0
  %v2008 = vadd.f32 %v1959, %v2007
  %2009 = vmatmul.bf16.gmra.mxu0 %v844
  %v2010 = vpop.f32.mrf.mxu0
  %v2011 = vadd.f32 %v1962, %v2010
  %v2012 = vpop.f32.mrf.mxu0
  %v2013 = vadd.f32 %v1964, %v2012
  %2014 = vmatmul.bf16.gmra.mxu0 %v860
  %v2015 = vpop.f32.mrf.mxu0
  %v2016 = vadd.f32 %v1967, %v2015
  %v2017 = vpop.f32.mrf.mxu0
  %v2018 = vadd.f32 %v1969, %v2017
  %2019 = vmatmul.bf16.gmra.mxu0 %v876
  %v2020 = vpop.f32.mrf.mxu0
  %v2021 = vadd.f32 %v1972, %v2020
  %v2022 = vpop.f32.mrf.mxu0
  %v2023 = vadd.f32 %v1974, %v2022
  %2024 = vmatmul.bf16.gmra.mxu0 %v892
  %v2025 = vpop.f32.mrf.mxu0
  %v2026 = vadd.f32 %v1977, %v2025
  %v2027 = vpop.f32.mrf.mxu0
  %v2028 = vadd.f32 %v1979, %v2027
  %2029 = vmatmul.bf16.gmra.mxu0 %v908
  %v2030 = vpop.f32.mrf.mxu0
  %v2031 = vadd.f32 %v1982, %v2030
  %v2032 = vpop.f32.mrf.mxu0
  %v2033 = vadd.f32 %v1984, %v2032
  %2034 = vmatmul.bf16.gmra.mxu0 %v924
  %v2035 = vpop.f32.mrf.mxu0
  %v2036 = vadd.f32 %v1987, %v2035
  %v2037 = vpop.f32.mrf.mxu0
  %v2038 = vadd.f32 %v1989, %v2037
  %2039 = vmatmul.bf16.gmra.mxu0 %v940
  %v2040 = vpop.f32.mrf.mxu0
  %v2041 = vadd.f32 %v1992, %v2040
  %v2042 = vpop.f32.mrf.mxu0
  %v2043 = vadd.f32 %v1994, %v2042
  %2044 = vdwg.mxu0
  %2045 = vmatpush.bf16.msra.mxu0 %v1632
  %2046 = vmatpush.bf16.msra.mxu0 %v1631
  %2047 = vmatpush.bf16.msra.mxu0 %v1630
  %2048 = vmatpush.bf16.msra.mxu0 %v1629
  %2049 = vmatpush.bf16.msra.mxu0 %v1628
  %2050 = vmatpush.bf16.msra.mxu0 %v1627
  %2051 = vmatpush.bf16.msra.mxu0 %v1626
  %2052 = vmatpush.bf16.msra.mxu0 %v1625
  %2053 = vmatmul.bf16.gmra.mxu0 %v829
  %v2054 = vpop.f32.mrf.mxu0
  %v2055 = vadd.f32 %v2006, %v2054
  %v2056 = vpop.f32.mrf.mxu0
  %v2057 = vadd.f32 %v2008, %v2056
  %2058 = vmatmul.bf16.gmra.mxu0 %v845
  %v2059 = vpop.f32.mrf.mxu0
  %v2060 = vadd.f32 %v2011, %v2059
  %v2061 = vpop.f32.mrf.mxu0
  %v2062 = vadd.f32 %v2013, %v2061
  %2063 = vmatmul.bf16.gmra.mxu0 %v861
  %v2064 = vpop.f32.mrf.mxu0
  %v2065 = vadd.f32 %v2016, %v2064
  %v2066 = vpop.f32.mrf.mxu0
  %v2067 = vadd.f32 %v2018, %v2066
  %2068 = vmatmul.bf16.gmra.mxu0 %v877
  %v2069 = vpop.f32.mrf.mxu0
  %v2070 = vadd.f32 %v2021, %v2069
  %v2071 = vpop.f32.mrf.mxu0
  %v2072 = vadd.f32 %v2023, %v2071
  %2073 = vmatmul.bf16.gmra.mxu0 %v893
  %v2074 = vpop.f32.mrf.mxu0
  %v2075 = vadd.f32 %v2026, %v2074
  %v2076 = vpop.f32.mrf.mxu0
  %v2077 = vadd.f32 %v2028, %v2076
  %2078 = vmatmul.bf16.gmra.mxu0 %v909
  %v2079 = vpop.f32.mrf.mxu0
  %v2080 = vadd.f32 %v2031, %v2079
  %v2081 = vpop.f32.mrf.mxu0
  %v2082 = vadd.f32 %v2033, %v2081
  %2083 = vmatmul.bf16.gmra.mxu0 %v925
  %v2084 = vpop.f32.mrf.mxu0
  %v2085 = vadd.f32 %v2036, %v2084
  %v2086 = vpop.f32.mrf.mxu0
  %v2087 = vadd.f32 %v2038, %v2086
  %2088 = vmatmul.bf16.gmra.mxu0 %v941
  %v2089 = vpop.f32.mrf.mxu0
  %v2090 = vadd.f32 %v2041, %v2089
  %v2091 = vpop.f32.mrf.mxu0
  %v2092 = vadd.f32 %v2043, %v2091
  %2093 = vdwg.mxu0
  %2094 = vmatpush.bf16.msra.mxu0 %v1640
  %2095 = vmatpush.bf16.msra.mxu0 %v1639
  %2096 = vmatpush.bf16.msra.mxu0 %v1638
  %2097 = vmatpush.bf16.msra.mxu0 %v1637
  %2098 = vmatpush.bf16.msra.mxu0 %v1636
  %2099 = vmatpush.bf16.msra.mxu0 %v1635
  %2100 = vmatpush.bf16.msra.mxu0 %v1634
  %2101 = vmatpush.bf16.msra.mxu0 %v1633
  %2102 = vmatmul.bf16.gmra.mxu0 %v830
  %v2103 = vpop.f32.mrf.mxu0
  %v2104 = vadd.f32 %v2055, %v2103
  %v2105 = vpop.f32.mrf.mxu0
  %v2106 = vadd.f32 %v2057, %v2105
  %2107 = vmatmul.bf16.gmra.mxu0 %v846
  %v2108 = vpop.f32.mrf.mxu0
  %v2109 = vadd.f32 %v2060, %v2108
  %v2110 = vpop.f32.mrf.mxu0
  %v2111 = vadd.f32 %v2062, %v2110
  %2112 = vmatmul.bf16.gmra.mxu0 %v862
  %v2113 = vpop.f32.mrf.mxu0
  %v2114 = vadd.f32 %v2065, %v2113
  %v2115 = vpop.f32.mrf.mxu0
  %v2116 = vadd.f32 %v2067, %v2115
  %2117 = vmatmul.bf16.gmra.mxu0 %v878
  %v2118 = vpop.f32.mrf.mxu0
  %v2119 = vadd.f32 %v2070, %v2118
  %v2120 = vpop.f32.mrf.mxu0
  %v2121 = vadd.f32 %v2072, %v2120
  %2122 = vmatmul.bf16.gmra.mxu0 %v894
  %v2123 = vpop.f32.mrf.mxu0
  %v2124 = vadd.f32 %v2075, %v2123
  %v2125 = vpop.f32.mrf.mxu0
  %v2126 = vadd.f32 %v2077, %v2125
  %2127 = vmatmul.bf16.gmra.mxu0 %v910
  %v2128 = vpop.f32.mrf.mxu0
  %v2129 = vadd.f32 %v2080, %v2128
  %v2130 = vpop.f32.mrf.mxu0
  %v2131 = vadd.f32 %v2082, %v2130
  %2132 = vmatmul.bf16.gmra.mxu0 %v926
  %v2133 = vpop.f32.mrf.mxu0
  %v2134 = vadd.f32 %v2085, %v2133
  %v2135 = vpop.f32.mrf.mxu0
  %v2136 = vadd.f32 %v2087, %v2135
  %2137 = vmatmul.bf16.gmra.mxu0 %v942
  %v2138 = vpop.f32.mrf.mxu0
  %v2139 = vadd.f32 %v2090, %v2138
  %v2140 = vpop.f32.mrf.mxu0
  %v2141 = vadd.f32 %v2092, %v2140
  %2142 = vdwg.mxu0
  %2143 = vmatpush.bf16.msra.mxu0 %v1648
  %2144 = vmatpush.bf16.msra.mxu0 %v1647
  %2145 = vmatpush.bf16.msra.mxu0 %v1646
  %2146 = vmatpush.bf16.msra.mxu0 %v1645
  %2147 = vmatpush.bf16.msra.mxu0 %v1644
  %2148 = vmatpush.bf16.msra.mxu0 %v1643
  %2149 = vmatpush.bf16.msra.mxu0 %v1642
  %2150 = vmatpush.bf16.msra.mxu0 %v1641
  %2151 = vmatmul.bf16.gmra.mxu0 %v831
  %v2152 = vpop.f32.mrf.mxu0
  %v2153 = vadd.f32 %v2104, %v2152
  %v2154 = vpop.f32.mrf.mxu0
  %v2155 = vadd.f32 %v2106, %v2154
  %2156 = vmatmul.bf16.gmra.mxu0 %v847
  %v2157 = vpop.f32.mrf.mxu0
  %v2158 = vadd.f32 %v2109, %v2157
  %v2159 = vpop.f32.mrf.mxu0
  %v2160 = vadd.f32 %v2111, %v2159
  %2161 = vmatmul.bf16.gmra.mxu0 %v863
  %v2162 = vpop.f32.mrf.mxu0
  %v2163 = vadd.f32 %v2114, %v2162
  %v2164 = vpop.f32.mrf.mxu0
  %v2165 = vadd.f32 %v2116, %v2164
  %2166 = vmatmul.bf16.gmra.mxu0 %v879
  %v2167 = vpop.f32.mrf.mxu0
  %v2168 = vadd.f32 %v2119, %v2167
  %v2169 = vpop.f32.mrf.mxu0
  %v2170 = vadd.f32 %v2121, %v2169
  %2171 = vmatmul.bf16.gmra.mxu0 %v895
  %v2172 = vpop.f32.mrf.mxu0
  %v2173 = vadd.f32 %v2124, %v2172
  %v2174 = vpop.f32.mrf.mxu0
  %v2175 = vadd.f32 %v2126, %v2174
  %2176 = vmatmul.bf16.gmra.mxu0 %v911
  %v2177 = vpop.f32.mrf.mxu0
  %v2178 = vadd.f32 %v2129, %v2177
  %v2179 = vpop.f32.mrf.mxu0
  %v2180 = vadd.f32 %v2131, %v2179
  %2181 = vmatmul.bf16.gmra.mxu0 %v927
  %v2182 = vpop.f32.mrf.mxu0
  %v2183 = vadd.f32 %v2134, %v2182
  %v2184 = vpop.f32.mrf.mxu0
  %v2185 = vadd.f32 %v2136, %v2184
  %2186 = vmatmul.bf16.gmra.mxu0 %v943
  %v2187 = vpop.f32.mrf.mxu0
  %v2188 = vadd.f32 %v2139, %v2187
  %v2189 = vpop.f32.mrf.mxu0
  %v2190 = vadd.f32 %v2141, %v2189
  %2191 = vdwg.mxu0
  %2192 = vmatpush.bf16.msra.mxu0 %v1656
  %2193 = vmatpush.bf16.msra.mxu0 %v1655
  %2194 = vmatpush.bf16.msra.mxu0 %v1654
  %2195 = vmatpush.bf16.msra.mxu0 %v1653
  %2196 = vmatpush.bf16.msra.mxu0 %v1652
  %2197 = vmatpush.bf16.msra.mxu0 %v1651
  %2198 = vmatpush.bf16.msra.mxu0 %v1650
  %2199 = vmatpush.bf16.msra.mxu0 %v1649
  %2200 = vmatmul.bf16.gmra.mxu0 %v832
  %v2201 = vpop.f32.mrf.mxu0
  %v2202 = vadd.f32 %v2153, %v2201
  %v2203 = vpop.f32.mrf.mxu0
  %v2204 = vadd.f32 %v2155, %v2203
  %2205 = vmatmul.bf16.gmra.mxu0 %v848
  %v2206 = vpop.f32.mrf.mxu0
  %v2207 = vadd.f32 %v2158, %v2206
  %v2208 = vpop.f32.mrf.mxu0
  %v2209 = vadd.f32 %v2160, %v2208
  %2210 = vmatmul.bf16.gmra.mxu0 %v864
  %v2211 = vpop.f32.mrf.mxu0
  %v2212 = vadd.f32 %v2163, %v2211
  %v2213 = vpop.f32.mrf.mxu0
  %v2214 = vadd.f32 %v2165, %v2213
  %2215 = vmatmul.bf16.gmra.mxu0 %v880
  %v2216 = vpop.f32.mrf.mxu0
  %v2217 = vadd.f32 %v2168, %v2216
  %v2218 = vpop.f32.mrf.mxu0
  %v2219 = vadd.f32 %v2170, %v2218
  %2220 = vmatmul.bf16.gmra.mxu0 %v896
  %v2221 = vpop.f32.mrf.mxu0
  %v2222 = vadd.f32 %v2173, %v2221
  %v2223 = vpop.f32.mrf.mxu0
  %v2224 = vadd.f32 %v2175, %v2223
  %2225 = vmatmul.bf16.gmra.mxu0 %v912
  %v2226 = vpop.f32.mrf.mxu0
  %v2227 = vadd.f32 %v2178, %v2226
  %v2228 = vpop.f32.mrf.mxu0
  %v2229 = vadd.f32 %v2180, %v2228
  %2230 = vmatmul.bf16.gmra.mxu0 %v928
  %v2231 = vpop.f32.mrf.mxu0
  %v2232 = vadd.f32 %v2183, %v2231
  %v2233 = vpop.f32.mrf.mxu0
  %v2234 = vadd.f32 %v2185, %v2233
  %2235 = vmatmul.bf16.gmra.mxu0 %v944
  %v2236 = vpop.f32.mrf.mxu0
  %v2237 = vadd.f32 %v2188, %v2236
  %v2238 = vpop.f32.mrf.mxu0
  %v2239 = vadd.f32 %v2190, %v2238
  %2240 = vdwg.mxu0
  %2241 = vmatpush.bf16.msra.mxu0 %v1664
  %2242 = vmatpush.bf16.msra.mxu0 %v1663
  %2243 = vmatpush.bf16.msra.mxu0 %v1662
  %2244 = vmatpush.bf16.msra.mxu0 %v1661
  %2245 = vmatpush.bf16.msra.mxu0 %v1660
  %2246 = vmatpush.bf16.msra.mxu0 %v1659
  %2247 = vmatpush.bf16.msra.mxu0 %v1658
  %2248 = vmatpush.bf16.msra.mxu0 %v1657
  %2249 = vmatmul.bf16.gmra.mxu0 %v833
  %v2250 = vpop.f32.mrf.mxu0
  %v2251 = vadd.f32 %v2202, %v2250
  %v2252 = vpop.f32.mrf.mxu0
  %v2253 = vadd.f32 %v2204, %v2252
  %2254 = vmatmul.bf16.gmra.mxu0 %v849
  %v2255 = vpop.f32.mrf.mxu0
  %v2256 = vadd.f32 %v2207, %v2255
  %v2257 = vpop.f32.mrf.mxu0
  %v2258 = vadd.f32 %v2209, %v2257
  %2259 = vmatmul.bf16.gmra.mxu0 %v865
  %v2260 = vpop.f32.mrf.mxu0
  %v2261 = vadd.f32 %v2212, %v2260
  %v2262 = vpop.f32.mrf.mxu0
  %v2263 = vadd.f32 %v2214, %v2262
  %2264 = vmatmul.bf16.gmra.mxu0 %v881
  %v2265 = vpop.f32.mrf.mxu0
  %v2266 = vadd.f32 %v2217, %v2265
  %v2267 = vpop.f32.mrf.mxu0
  %v2268 = vadd.f32 %v2219, %v2267
  %2269 = vmatmul.bf16.gmra.mxu0 %v897
  %v2270 = vpop.f32.mrf.mxu0
  %v2271 = vadd.f32 %v2222, %v2270
  %v2272 = vpop.f32.mrf.mxu0
  %v2273 = vadd.f32 %v2224, %v2272
  %2274 = vmatmul.bf16.gmra.mxu0 %v913
  %v2275 = vpop.f32.mrf.mxu0
  %v2276 = vadd.f32 %v2227, %v2275
  %v2277 = vpop.f32.mrf.mxu0
  %v2278 = vadd.f32 %v2229, %v2277
  %2279 = vmatmul.bf16.gmra.mxu0 %v929
  %v2280 = vpop.f32.mrf.mxu0
  %v2281 = vadd.f32 %v2232, %v2280
  %v2282 = vpop.f32.mrf.mxu0
  %v2283 = vadd.f32 %v2234, %v2282
  %2284 = vmatmul.bf16.gmra.mxu0 %v945
  %v2285 = vpop.f32.mrf.mxu0
  %v2286 = vadd.f32 %v2237, %v2285
  %v2287 = vpop.f32.mrf.mxu0
  %v2288 = vadd.f32 %v2239, %v2287
  %2289 = vdwg.mxu0
  %2290 = vmatpush.bf16.msra.mxu0 %v1672
  %2291 = vmatpush.bf16.msra.mxu0 %v1671
  %2292 = vmatpush.bf16.msra.mxu0 %v1670
  %2293 = vmatpush.bf16.msra.mxu0 %v1669
  %2294 = vmatpush.bf16.msra.mxu0 %v1668
  %2295 = vmatpush.bf16.msra.mxu0 %v1667
  %2296 = vmatpush.bf16.msra.mxu0 %v1666
  %2297 = vmatpush.bf16.msra.mxu0 %v1665
  %2298 = vmatmul.bf16.gmra.mxu0 %v834
  %v2299 = vpop.f32.mrf.mxu0
  %v2300 = vadd.f32 %v2251, %v2299
  %v2301 = vpop.f32.mrf.mxu0
  %v2302 = vadd.f32 %v2253, %v2301
  %2303 = vmatmul.bf16.gmra.mxu0 %v850
  %v2304 = vpop.f32.mrf.mxu0
  %v2305 = vadd.f32 %v2256, %v2304
  %v2306 = vpop.f32.mrf.mxu0
  %v2307 = vadd.f32 %v2258, %v2306
  %2308 = vmatmul.bf16.gmra.mxu0 %v866
  %v2309 = vpop.f32.mrf.mxu0
  %v2310 = vadd.f32 %v2261, %v2309
  %v2311 = vpop.f32.mrf.mxu0
  %v2312 = vadd.f32 %v2263, %v2311
  %2313 = vmatmul.bf16.gmra.mxu0 %v882
  %v2314 = vpop.f32.mrf.mxu0
  %v2315 = vadd.f32 %v2266, %v2314
  %v2316 = vpop.f32.mrf.mxu0
  %v2317 = vadd.f32 %v2268, %v2316
  %2318 = vmatmul.bf16.gmra.mxu0 %v898
  %v2319 = vpop.f32.mrf.mxu0
  %v2320 = vadd.f32 %v2271, %v2319
  %v2321 = vpop.f32.mrf.mxu0
  %v2322 = vadd.f32 %v2273, %v2321
  %2323 = vmatmul.bf16.gmra.mxu0 %v914
  %v2324 = vpop.f32.mrf.mxu0
  %v2325 = vadd.f32 %v2276, %v2324
  %v2326 = vpop.f32.mrf.mxu0
  %v2327 = vadd.f32 %v2278, %v2326
  %2328 = vmatmul.bf16.gmra.mxu0 %v930
  %v2329 = vpop.f32.mrf.mxu0
  %v2330 = vadd.f32 %v2281, %v2329
  %v2331 = vpop.f32.mrf.mxu0
  %v2332 = vadd.f32 %v2283, %v2331
  %2333 = vmatmul.bf16.gmra.mxu0 %v946
  %v2334 = vpop.f32.mrf.mxu0
  %v2335 = vadd.f32 %v2286, %v2334
  %v2336 = vpop.f32.mrf.mxu0
  %v2337 = vadd.f32 %v2288, %v2336
  %2338 = vdwg.mxu0
  %2339 = vmatpush.bf16.msra.mxu0 %v1680
  %2340 = vmatpush.bf16.msra.mxu0 %v1679
  %2341 = vmatpush.bf16.msra.mxu0 %v1678
  %2342 = vmatpush.bf16.msra.mxu0 %v1677
  %2343 = vmatpush.bf16.msra.mxu0 %v1676
  %2344 = vmatpush.bf16.msra.mxu0 %v1675
  %2345 = vmatpush.bf16.msra.mxu0 %v1674
  %2346 = vmatpush.bf16.msra.mxu0 %v1673
  %2347 = vmatmul.bf16.gmra.mxu0 %v835
  %v2348 = vpop.f32.mrf.mxu0
  %v2349 = vadd.f32 %v2300, %v2348
  %v2350 = vpop.f32.mrf.mxu0
  %v2351 = vadd.f32 %v2302, %v2350
  %2352 = vmatmul.bf16.gmra.mxu0 %v851
  %v2353 = vpop.f32.mrf.mxu0
  %v2354 = vadd.f32 %v2305, %v2353
  %v2355 = vpop.f32.mrf.mxu0
  %v2356 = vadd.f32 %v2307, %v2355
  %2357 = vmatmul.bf16.gmra.mxu0 %v867
  %v2358 = vpop.f32.mrf.mxu0
  %v2359 = vadd.f32 %v2310, %v2358
  %v2360 = vpop.f32.mrf.mxu0
  %v2361 = vadd.f32 %v2312, %v2360
  %2362 = vmatmul.bf16.gmra.mxu0 %v883
  %v2363 = vpop.f32.mrf.mxu0
  %v2364 = vadd.f32 %v2315, %v2363
  %v2365 = vpop.f32.mrf.mxu0
  %v2366 = vadd.f32 %v2317, %v2365
  %2367 = vmatmul.bf16.gmra.mxu0 %v899
  %v2368 = vpop.f32.mrf.mxu0
  %v2369 = vadd.f32 %v2320, %v2368
  %v2370 = vpop.f32.mrf.mxu0
  %v2371 = vadd.f32 %v2322, %v2370
  %2372 = vmatmul.bf16.gmra.mxu0 %v915
  %v2373 = vpop.f32.mrf.mxu0
  %v2374 = vadd.f32 %v2325, %v2373
  %v2375 = vpop.f32.mrf.mxu0
  %v2376 = vadd.f32 %v2327, %v2375
  %2377 = vmatmul.bf16.gmra.mxu0 %v931
  %v2378 = vpop.f32.mrf.mxu0
  %v2379 = vadd.f32 %v2330, %v2378
  %v2380 = vpop.f32.mrf.mxu0
  %v2381 = vadd.f32 %v2332, %v2380
  %2382 = vmatmul.bf16.gmra.mxu0 %v947
  %v2383 = vpop.f32.mrf.mxu0
  %v2384 = vadd.f32 %v2335, %v2383
  %v2385 = vpop.f32.mrf.mxu0
  %v2386 = vadd.f32 %v2337, %v2385
  %2387 = vdwg.mxu0
  %2388 = vmatpush.bf16.msra.mxu0 %v1688
  %2389 = vmatpush.bf16.msra.mxu0 %v1687
  %2390 = vmatpush.bf16.msra.mxu0 %v1686
  %2391 = vmatpush.bf16.msra.mxu0 %v1685
  %2392 = vmatpush.bf16.msra.mxu0 %v1684
  %2393 = vmatpush.bf16.msra.mxu0 %v1683
  %2394 = vmatpush.bf16.msra.mxu0 %v1682
  %2395 = vmatpush.bf16.msra.mxu0 %v1681
  %2396 = vmatmul.bf16.gmra.mxu0 %v836
  %v2397 = vpop.f32.mrf.mxu0
  %v2398 = vadd.f32 %v2349, %v2397
  %v2399 = vpop.f32.mrf.mxu0
  %v2400 = vadd.f32 %v2351, %v2399
  %2401 = vmatmul.bf16.gmra.mxu0 %v852
  %v2402 = vpop.f32.mrf.mxu0
  %v2403 = vadd.f32 %v2354, %v2402
  %v2404 = vpop.f32.mrf.mxu0
  %v2405 = vadd.f32 %v2356, %v2404
  %2406 = vmatmul.bf16.gmra.mxu0 %v868
  %v2407 = vpop.f32.mrf.mxu0
  %v2408 = vadd.f32 %v2359, %v2407
  %v2409 = vpop.f32.mrf.mxu0
  %v2410 = vadd.f32 %v2361, %v2409
  %2411 = vmatmul.bf16.gmra.mxu0 %v884
  %v2412 = vpop.f32.mrf.mxu0
  %v2413 = vadd.f32 %v2364, %v2412
  %v2414 = vpop.f32.mrf.mxu0
  %v2415 = vadd.f32 %v2366, %v2414
  %2416 = vmatmul.bf16.gmra.mxu0 %v900
  %v2417 = vpop.f32.mrf.mxu0
  %v2418 = vadd.f32 %v2369, %v2417
  %v2419 = vpop.f32.mrf.mxu0
  %v2420 = vadd.f32 %v2371, %v2419
  %2421 = vmatmul.bf16.gmra.mxu0 %v916
  %v2422 = vpop.f32.mrf.mxu0
  %v2423 = vadd.f32 %v2374, %v2422
  %v2424 = vpop.f32.mrf.mxu0
  %v2425 = vadd.f32 %v2376, %v2424
  %2426 = vmatmul.bf16.gmra.mxu0 %v932
  %v2427 = vpop.f32.mrf.mxu0
  %v2428 = vadd.f32 %v2379, %v2427
  %v2429 = vpop.f32.mrf.mxu0
  %v2430 = vadd.f32 %v2381, %v2429
  %2431 = vmatmul.bf16.gmra.mxu0 %v948
  %v2432 = vpop.f32.mrf.mxu0
  %v2433 = vadd.f32 %v2384, %v2432
  %v2434 = vpop.f32.mrf.mxu0
  %v2435 = vadd.f32 %v2386, %v2434
  %2436 = vdwg.mxu0
  %2437 = vmatpush.bf16.msra.mxu0 %v1696
  %2438 = vmatpush.bf16.msra.mxu0 %v1695
  %2439 = vmatpush.bf16.msra.mxu0 %v1694
  %2440 = vmatpush.bf16.msra.mxu0 %v1693
  %2441 = vmatpush.bf16.msra.mxu0 %v1692
  %2442 = vmatpush.bf16.msra.mxu0 %v1691
  %2443 = vmatpush.bf16.msra.mxu0 %v1690
  %2444 = vmatpush.bf16.msra.mxu0 %v1689
  %2445 = vmatmul.bf16.gmra.mxu0 %v837
  %v2446 = vpop.f32.mrf.mxu0
  %v2447 = vadd.f32 %v2398, %v2446
  %v2448 = vpop.f32.mrf.mxu0
  %v2449 = vadd.f32 %v2400, %v2448
  %2450 = vmatmul.bf16.gmra.mxu0 %v853
  %v2451 = vpop.f32.mrf.mxu0
  %v2452 = vadd.f32 %v2403, %v2451
  %v2453 = vpop.f32.mrf.mxu0
  %v2454 = vadd.f32 %v2405, %v2453
  %2455 = vmatmul.bf16.gmra.mxu0 %v869
  %v2456 = vpop.f32.mrf.mxu0
  %v2457 = vadd.f32 %v2408, %v2456
  %v2458 = vpop.f32.mrf.mxu0
  %v2459 = vadd.f32 %v2410, %v2458
  %2460 = vmatmul.bf16.gmra.mxu0 %v885
  %v2461 = vpop.f32.mrf.mxu0
  %v2462 = vadd.f32 %v2413, %v2461
  %v2463 = vpop.f32.mrf.mxu0
  %v2464 = vadd.f32 %v2415, %v2463
  %2465 = vmatmul.bf16.gmra.mxu0 %v901
  %v2466 = vpop.f32.mrf.mxu0
  %v2467 = vadd.f32 %v2418, %v2466
  %v2468 = vpop.f32.mrf.mxu0
  %v2469 = vadd.f32 %v2420, %v2468
  %2470 = vmatmul.bf16.gmra.mxu0 %v917
  %v2471 = vpop.f32.mrf.mxu0
  %v2472 = vadd.f32 %v2423, %v2471
  %v2473 = vpop.f32.mrf.mxu0
  %v2474 = vadd.f32 %v2425, %v2473
  %2475 = vmatmul.bf16.gmra.mxu0 %v933
  %v2476 = vpop.f32.mrf.mxu0
  %v2477 = vadd.f32 %v2428, %v2476
  %v2478 = vpop.f32.mrf.mxu0
  %v2479 = vadd.f32 %v2430, %v2478
  %2480 = vmatmul.bf16.gmra.mxu0 %v949
  %v2481 = vpop.f32.mrf.mxu0
  %v2482 = vadd.f32 %v2433, %v2481
  %v2483 = vpop.f32.mrf.mxu0
  %v2484 = vadd.f32 %v2435, %v2483
  %2485 = vdwg.mxu0
  %2486 = vmatpush.bf16.msra.mxu0 %v1704
  %2487 = vmatpush.bf16.msra.mxu0 %v1703
  %2488 = vmatpush.bf16.msra.mxu0 %v1702
  %2489 = vmatpush.bf16.msra.mxu0 %v1701
  %2490 = vmatpush.bf16.msra.mxu0 %v1700
  %2491 = vmatpush.bf16.msra.mxu0 %v1699
  %2492 = vmatpush.bf16.msra.mxu0 %v1698
  %2493 = vmatpush.bf16.msra.mxu0 %v1697
  %2494 = vmatmul.bf16.gmra.mxu0 %v838
  %v2495 = vpop.f32.mrf.mxu0
  %v2496 = vadd.f32 %v2447, %v2495
  %v2497 = vpop.f32.mrf.mxu0
  %v2498 = vadd.f32 %v2449, %v2497
  %2499 = vmatmul.bf16.gmra.mxu0 %v854
  %v2500 = vpop.f32.mrf.mxu0
  %v2501 = vadd.f32 %v2452, %v2500
  %v2502 = vpop.f32.mrf.mxu0
  %v2503 = vadd.f32 %v2454, %v2502
  %2504 = vmatmul.bf16.gmra.mxu0 %v870
  %v2505 = vpop.f32.mrf.mxu0
  %v2506 = vadd.f32 %v2457, %v2505
  %v2507 = vpop.f32.mrf.mxu0
  %v2508 = vadd.f32 %v2459, %v2507
  %2509 = vmatmul.bf16.gmra.mxu0 %v886
  %v2510 = vpop.f32.mrf.mxu0
  %v2511 = vadd.f32 %v2462, %v2510
  %v2512 = vpop.f32.mrf.mxu0
  %v2513 = vadd.f32 %v2464, %v2512
  %2514 = vmatmul.bf16.gmra.mxu0 %v902
  %v2515 = vpop.f32.mrf.mxu0
  %v2516 = vadd.f32 %v2467, %v2515
  %v2517 = vpop.f32.mrf.mxu0
  %v2518 = vadd.f32 %v2469, %v2517
  %2519 = vmatmul.bf16.gmra.mxu0 %v918
  %v2520 = vpop.f32.mrf.mxu0
  %v2521 = vadd.f32 %v2472, %v2520
  %v2522 = vpop.f32.mrf.mxu0
  %v2523 = vadd.f32 %v2474, %v2522
  %2524 = vmatmul.bf16.gmra.mxu0 %v934
  %v2525 = vpop.f32.mrf.mxu0
  %v2526 = vadd.f32 %v2477, %v2525
  %v2527 = vpop.f32.mrf.mxu0
  %v2528 = vadd.f32 %v2479, %v2527
  %2529 = vmatmul.bf16.gmra.mxu0 %v950
  %v2530 = vpop.f32.mrf.mxu0
  %v2531 = vadd.f32 %v2482, %v2530
  %v2532 = vpop.f32.mrf.mxu0
  %v2533 = vadd.f32 %v2484, %v2532
  %2534 = vdwg.mxu0
  %2535 = vmatpush.bf16.msra.mxu0 %v1712
  %2536 = vmatpush.bf16.msra.mxu0 %v1711
  %2537 = vmatpush.bf16.msra.mxu0 %v1710
  %2538 = vmatpush.bf16.msra.mxu0 %v1709
  %2539 = vmatpush.bf16.msra.mxu0 %v1708
  %2540 = vmatpush.bf16.msra.mxu0 %v1707
  %2541 = vmatpush.bf16.msra.mxu0 %v1706
  %2542 = vmatpush.bf16.msra.mxu0 %v1705
  %2543 = vmatmul.bf16.gmra.mxu0 %v839
  %v2544 = vpop.f32.mrf.mxu0
  %v2545 = vadd.f32 %v2496, %v2544
  %v2546 = vpop.f32.mrf.mxu0
  %v2547 = vadd.f32 %v2498, %v2546
  %2548 = vmatmul.bf16.gmra.mxu0 %v855
  %v2549 = vpop.f32.mrf.mxu0
  %v2550 = vadd.f32 %v2501, %v2549
  %v2551 = vpop.f32.mrf.mxu0
  %v2552 = vadd.f32 %v2503, %v2551
  %2553 = vmatmul.bf16.gmra.mxu0 %v871
  %v2554 = vpop.f32.mrf.mxu0
  %v2555 = vadd.f32 %v2506, %v2554
  %v2556 = vpop.f32.mrf.mxu0
  %v2557 = vadd.f32 %v2508, %v2556
  %2558 = vmatmul.bf16.gmra.mxu0 %v887
  %v2559 = vpop.f32.mrf.mxu0
  %v2560 = vadd.f32 %v2511, %v2559
  %v2561 = vpop.f32.mrf.mxu0
  %v2562 = vadd.f32 %v2513, %v2561
  %2563 = vmatmul.bf16.gmra.mxu0 %v903
  %v2564 = vpop.f32.mrf.mxu0
  %v2565 = vadd.f32 %v2516, %v2564
  %v2566 = vpop.f32.mrf.mxu0
  %v2567 = vadd.f32 %v2518, %v2566
  %2568 = vmatmul.bf16.gmra.mxu0 %v919
  %v2569 = vpop.f32.mrf.mxu0
  %v2570 = vadd.f32 %v2521, %v2569
  %v2571 = vpop.f32.mrf.mxu0
  %v2572 = vadd.f32 %v2523, %v2571
  %2573 = vmatmul.bf16.gmra.mxu0 %v935
  %v2574 = vpop.f32.mrf.mxu0
  %v2575 = vadd.f32 %v2526, %v2574
  %v2576 = vpop.f32.mrf.mxu0
  %v2577 = vadd.f32 %v2528, %v2576
  %2578 = vmatmul.bf16.gmra.mxu0 %v951
  %v2579 = vpop.f32.mrf.mxu0
  %v2580 = vadd.f32 %v2531, %v2579
  %v2581 = vpop.f32.mrf.mxu0
  %v2582 = vadd.f32 %v2533, %v2581
  %2583 = vdwg.mxu0
  %2584 = vmatpush.bf16.msra.mxu0 %v1720
  %2585 = vmatpush.bf16.msra.mxu0 %v1719
  %2586 = vmatpush.bf16.msra.mxu0 %v1718
  %2587 = vmatpush.bf16.msra.mxu0 %v1717
  %2588 = vmatpush.bf16.msra.mxu0 %v1716
  %2589 = vmatpush.bf16.msra.mxu0 %v1715
  %2590 = vmatpush.bf16.msra.mxu0 %v1714
  %2591 = vmatpush.bf16.msra.mxu0 %v1713
  %2592 = vmatmul.bf16.gmra.mxu0 %v840
  %v2593 = vpop.f32.mrf.mxu0
  %v2594 = vadd.f32 %v2545, %v2593
  %v2595 = vpop.f32.mrf.mxu0
  %v2596 = vadd.f32 %v2547, %v2595
  %2597 = vmatmul.bf16.gmra.mxu0 %v856
  %v2598 = vpop.f32.mrf.mxu0
  %v2599 = vadd.f32 %v2550, %v2598
  %v2600 = vpop.f32.mrf.mxu0
  %v2601 = vadd.f32 %v2552, %v2600
  %2602 = vmatmul.bf16.gmra.mxu0 %v872
  %v2603 = vpop.f32.mrf.mxu0
  %v2604 = vadd.f32 %v2555, %v2603
  %v2605 = vpop.f32.mrf.mxu0
  %v2606 = vadd.f32 %v2557, %v2605
  %2607 = vmatmul.bf16.gmra.mxu0 %v888
  %v2608 = vpop.f32.mrf.mxu0
  %v2609 = vadd.f32 %v2560, %v2608
  %v2610 = vpop.f32.mrf.mxu0
  %v2611 = vadd.f32 %v2562, %v2610
  %2612 = vmatmul.bf16.gmra.mxu0 %v904
  %v2613 = vpop.f32.mrf.mxu0
  %v2614 = vadd.f32 %v2565, %v2613
  %v2615 = vpop.f32.mrf.mxu0
  %v2616 = vadd.f32 %v2567, %v2615
  %2617 = vmatmul.bf16.gmra.mxu0 %v920
  %v2618 = vpop.f32.mrf.mxu0
  %v2619 = vadd.f32 %v2570, %v2618
  %v2620 = vpop.f32.mrf.mxu0
  %v2621 = vadd.f32 %v2572, %v2620
  %2622 = vmatmul.bf16.gmra.mxu0 %v936
  %v2623 = vpop.f32.mrf.mxu0
  %v2624 = vadd.f32 %v2575, %v2623
  %v2625 = vpop.f32.mrf.mxu0
  %v2626 = vadd.f32 %v2577, %v2625
  %2627 = vmatmul.bf16.gmra.mxu0 %v952
  %v2628 = vpop.f32.mrf.mxu0
  %v2629 = vadd.f32 %v2580, %v2628
  %v2630 = vpop.f32.mrf.mxu0
  %v2631 = vadd.f32 %v2582, %v2630
  %2632 = vdwg.mxu0
  %v2633 = vadd.f32 %v41, %v2594
  %v2634 = vadd.f32 %v42, %v2596
  %v2635 = vadd.f32 %v43, %v2599
  %v2636 = vadd.f32 %v44, %v2601
  %v2637 = vadd.f32 %v45, %v2604
  %v2638 = vadd.f32 %v46, %v2606
  %v2639 = vadd.f32 %v47, %v2609
  %v2640 = vadd.f32 %v48, %v2611
  %v2641 = vadd.f32 %v49, %v2614
  %v2642 = vadd.f32 %v50, %v2616
  %v2643 = vadd.f32 %v51, %v2619
  %v2644 = vadd.f32 %v52, %v2621
  %v2645 = vadd.f32 %v53, %v2624
  %v2646 = vadd.f32 %v54, %v2626
  %v2647 = vadd.f32 %v55, %v2629
  %v2648 = vadd.f32 %v56, %v2631
  %2649 = vst [vmem:[#allocation2] sm:$0xff] %v2633
  %2650 = vst [vmem:[#allocation2 + $0x8] sm:$0xff] %v2634
  %2651 = vst [vmem:[#allocation2 + $0x10] sm:$0xff] %v2635
  %2652 = vst [vmem:[#allocation2 + $0x18] sm:$0xff] %v2636
  %2653 = vst [vmem:[#allocation2 + $0x20] sm:$0xff] %v2637
  %2654 = vst [vmem:[#allocation2 + $0x28] sm:$0xff] %v2638
  %2655 = vst [vmem:[#allocation2 + $0x30] sm:$0xff] %v2639
  %2656 = vst [vmem:[#allocation2 + $0x38] sm:$0xff] %v2640
  %2657 = vst [vmem:[#allocation2 + $0x40] sm:$0xff] %v2641
  %2658 = vst [vmem:[#allocation2 + $0x48] sm:$0xff] %v2642
  %2659 = vst [vmem:[#allocation2 + $0x50] sm:$0xff] %v2643
  %2660 = vst [vmem:[#allocation2 + $0x58] sm:$0xff] %v2644
  %2661 = vst [vmem:[#allocation2 + $0x60] sm:$0xff] %v2645
  %2662 = vst [vmem:[#allocation2 + $0x68] sm:$0xff] %v2646
  %2663 = vst [vmem:[#allocation2 + $0x70] sm:$0xff] %v2647
  %2664 = vst [vmem:[#allocation2 + $0x78] sm:$0xff] %v2648
  // Predicated region
  $region18: #{conv_down_block_forward.10} parent=0 // pred_check
    %p2665 = pneg %p15
  $region19: #{conv_down_block_forward.10} parent=0 // pred_check_branch
    %2667 = sbr.rel (%p2665) target = $region21
  $region20: #{conv_down_block_forward.10} parent=0 // pred_region
    %v2668 = vld [vmem:[#allocation2] sm:$0xff]
    %v2669 = vld [vmem:[#allocation2 + $0x8] sm:$0xff]
    %v2670 = vld [vmem:[#allocation2 + $0x10] sm:$0xff]
    %v2671 = vld [vmem:[#allocation2 + $0x18] sm:$0xff]
    %v2672 = vld [vmem:[#allocation2 + $0x20] sm:$0xff]
    %v2673 = vld [vmem:[#allocation2 + $0x28] sm:$0xff]
    %v2674 = vld [vmem:[#allocation2 + $0x30] sm:$0xff]
    %v2675 = vld [vmem:[#allocation2 + $0x38] sm:$0xff]
    %v2676 = vld [vmem:[#allocation2 + $0x40] sm:$0xff]
    %v2677 = vld [vmem:[#allocation2 + $0x48] sm:$0xff]
    %v2678 = vld [vmem:[#allocation2 + $0x50] sm:$0xff]
    %v2679 = vld [vmem:[#allocation2 + $0x58] sm:$0xff]
    %v2680 = vld [vmem:[#allocation2 + $0x60] sm:$0xff]
    %v2681 = vld [vmem:[#allocation2 + $0x68] sm:$0xff]
    %v2682 = vld [vmem:[#allocation2 + $0x70] sm:$0xff]
    %v2683 = vld [vmem:[#allocation2 + $0x78] sm:$0xff]
    %2684 = vst [vmem:[%s2] sm:$0xff] %v2668
    %2685 = vst [vmem:[%s2 + $0x8] sm:$0xff] %v2669
    %2686 = vst [vmem:[%s2 + $0x10] sm:$0xff] %v2670
    %2687 = vst [vmem:[%s2 + $0x18] sm:$0xff] %v2671
    %2688 = vst [vmem:[%s2 + $0x20] sm:$0xff] %v2672
    %2689 = vst [vmem:[%s2 + $0x28] sm:$0xff] %v2673
    %2690 = vst [vmem:[%s2 + $0x30] sm:$0xff] %v2674
    %2691 = vst [vmem:[%s2 + $0x38] sm:$0xff] %v2675
    %2692 = vst [vmem:[%s2 + $0x40] sm:$0xff] %v2676
    %2693 = vst [vmem:[%s2 + $0x48] sm:$0xff] %v2677
    %2694 = vst [vmem:[%s2 + $0x50] sm:$0xff] %v2678
    %2695 = vst [vmem:[%s2 + $0x58] sm:$0xff] %v2679
    %2696 = vst [vmem:[%s2 + $0x60] sm:$0xff] %v2680
    %2697 = vst [vmem:[%s2 + $0x68] sm:$0xff] %v2681
    %2698 = vst [vmem:[%s2 + $0x70] sm:$0xff] %v2682
    %2699 = vst [vmem:[%s2 + $0x78] sm:$0xff] %v2683
    %v2700 = vld [vmem:[%s3] sm:$0x1]
    %v2701 = vadd.f32 %v2668, %v2669
    %v2702 = vadd.f32 %v2701, %v2670
    %v2703 = vadd.f32 %v2702, %v2671
    %v2704 = vadd.f32 %v2703, %v2672
    %v2705 = vadd.f32 %v2704, %v2673
    %v2706 = vadd.f32 %v2705, %v2674
    %v2707 = vadd.f32 %v2706, %v2675
    %v2708 = vadd.f32 %v2707, %v2676
    %v2709 = vadd.f32 %v2708, %v2677
    %v2710 = vadd.f32 %v2709, %v2678
    %v2711 = vadd.f32 %v2710, %v2679
    %v2712 = vadd.f32 %v2711, %v2680
    %v2713 = vadd.f32 %v2712, %v2681
    %v2714 = vadd.f32 %v2713, %v2682
    %v2715 = vadd.f32 %v2714, %v2683
    %v2716 = vrot.slane %v2715, 4
    %v2717 = vadd.f32 %v2715, %v2716
    %v2718 = vrot.slane %v2717, 2
    %v2719 = vadd.f32 %v2717, %v2718
    %v2720 = vrot.slane %v2719, 1
    %v2721 = vadd.f32 %v2719, %v2720
    %v2722 = vadd.f32 %v2700, %v2721
    %2723 = vst [vmem:[%s3] sm:$0x1] %v2722
    %v2724 = vld [vmem:[%s4] sm:$0x1]
    %v2725 = vmul.f32 %v2668, %v2668
    %v2726 = vmul.f32 %v2669, %v2669
    %v2727 = vmul.f32 %v2670, %v2670
    %v2728 = vmul.f32 %v2671, %v2671
    %v2729 = vmul.f32 %v2672, %v2672
    %v2730 = vmul.f32 %v2673, %v2673
    %v2731 = vmul.f32 %v2674, %v2674
    %v2732 = vmul.f32 %v2675, %v2675
    %v2733 = vmul.f32 %v2676, %v2676
    %v2734 = vmul.f32 %v2677, %v2677
    %v2735 = vmul.f32 %v2678, %v2678
    %v2736 = vmul.f32 %v2679, %v2679
    %v2737 = vmul.f32 %v2680, %v2680
    %v2738 = vmul.f32 %v2681, %v2681
    %v2739 = vmul.f32 %v2682, %v2682
    %v2740 = vmul.f32 %v2683, %v2683
    %v2741 = vadd.f32 %v2725, %v2726
    %v2742 = vadd.f32 %v2741, %v2727
    %v2743 = vadd.f32 %v2742, %v2728
    %v2744 = vadd.f32 %v2743, %v2729
    %v2745 = vadd.f32 %v2744, %v2730
    %v2746 = vadd.f32 %v2745, %v2731
    %v2747 = vadd.f32 %v2746, %v2732
    %v2748 = vadd.f32 %v2747, %v2733
    %v2749 = vadd.f32 %v2748, %v2734
    %v2750 = vadd.f32 %v2749, %v2735
    %v2751 = vadd.f32 %v2750, %v2736
    %v2752 = vadd.f32 %v2751, %v2737
    %v2753 = vadd.f32 %v2752, %v2738
    %v2754 = vadd.f32 %v2753, %v2739
    %v2755 = vadd.f32 %v2754, %v2740
    %v2756 = vrot.slane %v2755, 4
    %v2757 = vadd.f32 %v2755, %v2756
    %v2758 = vrot.slane %v2757, 2
    %v2759 = vadd.f32 %v2757, %v2758
    %v2760 = vrot.slane %v2759, 1
    %v2761 = vadd.f32 %v2759, %v2760
    %v2762 = vadd.f32 %v2724, %v2761
    %2763 = vst [vmem:[%s4] sm:$0x1] %v2762
  $region21: #{conv_down_block_forward.10} parent=0 // pred_fallthru
    _
  // Predicated region
  $region22: #{conv_down_block_forward.10} parent=0 // pred_check
    _
  $region23: #{conv_down_block_forward.10} parent=0 // pred_check_branch
    %2765 = sbr.rel (0) target = $region25
  $region24: #{conv_down_block_forward.10} parent=0 // pred_region
    _
  $region25: #{conv_down_block_forward.10} parent=0 // pred_fallthru
    _
  // Predicated region
  $region26: #{conv_down_block_forward.10} parent=0 // pred_check
    _
  $region27: #{conv_down_block_forward.10} parent=0 // pred_check_branch
    %2767 = sbr.rel (0) target = $region29
  $region28: #{conv_down_block_forward.10} parent=0 // pred_region
    _
  $region29: #{conv_down_block_forward.10} parent=0 // pred_fallthru
    _
  // Predicated region
  $region30: #{conv_down_block_forward.10} parent=0 // pred_check
    _
  $region31: #{conv_down_block_forward.10} parent=0 // pred_check_branch
    %2769 = sbr.rel (0) target = $region33
  $region32: #{conv_down_block_forward.10} parent=0 // pred_region
    _
  $region33: #{conv_down_block_forward.10} parent=0 // pred_fallthru
    _
  // Predicated region
  $region34: #{conv_down_block_forward.10} parent=0 // pred_check
    _
  $region35: #{conv_down_block_forward.10} parent=0 // pred_check_branch
    %2771 = sbr.rel (0) target = $region37
  $region36: #{conv_down_block_forward.10} parent=0 // pred_region
    _
  $region37: #{conv_down_block_forward.10} parent=0 // pred_fallthru
    _
  // Predicated region
  $region38: #{conv_down_block_forward.10} parent=0 // pred_check
    _
  $region39: #{conv_down_block_forward.10} parent=0 // pred_check_branch
    %2773 = sbr.rel (0) target = $region41
  $region40: #{conv_down_block_forward.10} parent=0 // pred_region
    _
  $region41: #{conv_down_block_forward.10} parent=0 // pred_fallthru
    _
  // Predicated region
  $region42: #{conv_down_block_forward.10} parent=0 // pred_check
    _
  $region43: #{conv_down_block_forward.10} parent=0 // pred_check_branch
    %2775 = sbr.rel (0) target = $region45
  $region44: #{conv_down_block_forward.10} parent=0 // pred_region
    _
  $region45: #{conv_down_block_forward.10} parent=0 // pred_fallthru
    _

</llo_original>
